<compile_context>
chip_gen: v6e
topology: v6e:2x2x1
jax: 0.10.0
libtpu: 0.0.40
codegen_flags: <defaults>
</compile_context>

<pallas_src>
import jax
import jax.numpy as jnp
from jax.experimental import pallas as pl
from jax.experimental.pallas import tpu as pltpu


# ----------------------------- configuration -----------------------------
BS = 2             # batch size
SEQ_IN = 7         # length of q/c/r sequences (before the cat with first col)
T = SEQ_IN + 1     # effective sequence length after torch.cat((q[:, :1], qshft))
N_QUESTION = 16    # number of concepts (n_question)
N_PID = 32         # number of questions (n_pid) -> MLP output dim
EMBED_L = 32       # embedding size
HIDDEN = 32        # LSTM hidden size
NUM_LAYERS = 5     # stacked LSTM layers
MLP_HIDDEN = HIDDEN + EMBED_L   # = 64 (MLP hidden_dim = hidden_size + embed_l)
GATES = 4 * HIDDEN              # = 128 = one full lane vector

_VMEM = pl.BlockSpec(memory_space=pltpu.MemorySpace.VMEM)


# ------------------------------ fused kernel ------------------------------
def _gnn4kt_fused_kernel(qa_ref, qe_ref, wih0_ref, wih_ref, whh_ref, b_ref,
                         w1h_ref, w1q_ref, b1_ref, wo_ref, bo_ref,
                         y_ref, hseq_sc):
    """Fused 5-layer LSTM recurrence + MLP head + sigmoid.

    qa_ref : (T*B, E)        qa_embed_data, time-major rows (t*B + b)
    qe_ref : (T*B, E)        q_embed_data,  time-major rows
    wih0   : (E, 4H)         layer-0 input weights, gate cols in [f|i|o|g] order
    wih    : (L-1, 4H, 4H)   layers 1..4 input weights, rows >= H are zero
    whh    : (L, 4H, 4H)     recurrent weights, rows >= H are zero
    b      : (L, 1, 4H)      b_ih + b_hh, gate-permuted
    w1h    : (4H, 64)        MLP lin rows for the h half (rows >= H zero)
    w1q    : (E, 64)         MLP lin rows for the q_embed half
    b1     : (1, 64)   wo : (64, n_pid)   bo : (1, n_pid)
    y_ref  : ((T-1)*B, n_pid)
    hseq_sc: (T*B, 4H) VMEM scratch; per-layer h sequence, true h in lanes 0:H.
    """
    H = HIDDEN
    lane = jax.lax.broadcasted_iota(jnp.int32, (BS, GATES), 1)
    is_g = lane >= 3 * H            # 'g' gate lanes (tanh); f/i/o lanes -> sigmoid

    x0 = qa_ref[...]                # (T*B, E) layer-0 input

    for layer in range(NUM_LAYERS):
        # Whole-sequence input projection: off the recurrent critical path.
        if layer == 0:
            xw = jnp.dot(x0, wih0_ref[...], preferred_element_type=jnp.float32)
        else:
            xw = jnp.dot(hseq_sc[...], wih_ref[layer - 1],
                         preferred_element_type=jnp.float32)
        xw = xw + b_ref[layer]                        # fold bias in once
        whh = whh_ref[layer]                          # hoisted out of the time loop

        h = jnp.zeros((BS, GATES), jnp.float32)       # true h/c live in lanes 0:H
        c = jnp.zeros((BS, GATES), jnp.float32)
        for t in range(T):                            # static unroll (T = 8)
            pre = xw[t * BS:(t + 1) * BS, :] + jnp.dot(
                h, whh, preferred_element_type=jnp.float32)
            # Full-width activation blend: tanh on g lanes, sigmoid elsewhere.
            act = jnp.where(is_g, jnp.tanh(pre), jax.nn.sigmoid(pre))
            # Gate order [f|i|o|g]:
            #   roll by 2H   -> lanes 0:H hold sigmoid(o)   (direction-agnostic)
            #   act * r64    -> lanes H:2H and 3H:4H both hold sigmoid(i)*tanh(g)
            #   roll by 3H   -> lanes 0:H hold i*g          (either roll direction)
            r64 = pltpu.roll(act, 2 * H, 1)
            ig = pltpu.roll(act * r64, 3 * H, 1)
            c = act * c + ig                          # lanes 0:H = f*c + i*g
            h = r64 * jnp.tanh(c)                     # lanes 0:H = o*tanh(c)
            hseq_sc[t * BS:(t + 1) * BS, :] = h       # lane-dense (128) store

    # --- MLP head on cat(h[:, :-1], q_embed[:, 1:]) + final sigmoid ---
    # TODO(synk): nn.Dropout before the output Linear is identity (eval mode only).
    hpart = hseq_sc[0:(T - 1) * BS, :]                # h_t,    t = 0..T-2
    qpart = qe_ref[BS:T * BS, :]                      # q_emb,  t = 1..T-1
    hid = (jnp.dot(hpart, w1h_ref[...], preferred_element_type=jnp.float32)
           + jnp.dot(qpart, w1q_ref[...], preferred_element_type=jnp.float32)
           + b1_ref[...])
    hid = jnp.maximum(hid, 0.0)
    logits = jnp.dot(hid, wo_ref[...], preferred_element_type=jnp.float32) + bo_ref[...]
    y_ref[...] = jax.nn.sigmoid(logits)


# --------------------------- parameter handling ---------------------------
def _perm_gate_cols(w):
    """Reorder gate columns from torch order [i|f|g|o] to kernel order [f|i|o|g]."""
    i, f, g, o = jnp.split(w, 4, axis=-1)
    return jnp.concatenate([f, i, o, g], axis=-1)


def _pad_rows(w, rows):
    return jnp.pad(w, ((0, rows - w.shape[0]), (0, 0)))


def init_params(key):
    """Raw parameters in torch layout (used by both the kernel prep and the reference)."""
    ks = iter(jax.random.split(key, 32))

    def rnd(shape, scale=0.1):
        return (scale * jax.random.normal(next(ks), shape)).astype(jnp.float32)

    raw = {
        # QueEmb (emb_type='iekt') approximated as two embedding tables.
        "que_emb": rnd((N_PID, EMBED_L)),
        "c_emb": rnd((N_QUESTION, EMBED_L)),
        "qa_emb": rnd((2, EMBED_L)),           # nn.Embedding(2, embed_l)
    }
    lstm = []
    for layer in range(NUM_LAYERS):
        din = EMBED_L if layer == 0 else HIDDEN
        lstm.append((rnd((GATES, din)),        # w_ih (4H, Din)
                     rnd((GATES, HIDDEN)),     # w_hh (4H, H)
                     rnd((GATES,)),            # b_ih
                     rnd((GATES,))))           # b_hh
    raw["lstm"] = lstm
    raw["mlp_w1"] = rnd((MLP_HIDDEN, MLP_HIDDEN))
    raw["mlp_b1"] = rnd((MLP_HIDDEN,))
    raw["mlp_wo"] = rnd((N_PID, MLP_HIDDEN))
    raw["mlp_bo"] = rnd((N_PID,))
    return raw


def prepare_kernel_params(raw):
    """Transpose / gate-permute / zero-row-pad weights into the fused-kernel layout."""
    kp = {"que_emb": raw["que_emb"], "c_emb": raw["c_emb"], "qa_emb": raw["qa_emb"]}
    wih_hi, whh_all, b_all = [], [], []
    for layer, (w_ih, w_hh, b_ih, b_hh) in enumerate(raw["lstm"]):
        wih_t = _perm_gate_cols(w_ih.T)                        # (Din, 4H)
        whh_t = _perm_gate_cols(w_hh.T)                        # (H, 4H)
        bias = _perm_gate_cols((b_ih + b_hh).reshape(1, GATES))
        if layer == 0:
            kp["wih0"] = wih_t                                 # (E, 4H)
        else:
            wih_hi.append(_pad_rows(wih_t, GATES))             # (4H, 4H)
        whh_all.append(_pad_rows(whh_t, GATES))                # (4H, 4H)
        b_all.append(bias)
    kp["wih"] = jnp.stack(wih_hi)                              # (L-1, 4H, 4H)
    kp["whh"] = jnp.stack(whh_all)                             # (L, 4H, 4H)
    kp["b"] = jnp.stack(b_all)                                 # (L, 1, 4H)

    w1t = raw["mlp_w1"].T                                      # (64, 64), input-major rows
    kp["w1h"] = _pad_rows(w1t[:HIDDEN, :], GATES)              # (4H, 64) rows>=H zero
    kp["w1q"] = w1t[HIDDEN:, :]                                # (E, 64)
    kp["b1"] = raw["mlp_b1"].reshape(1, MLP_HIDDEN)
    kp["wo"] = raw["mlp_wo"].T                                 # (64, n_pid)
    kp["bo"] = raw["mlp_bo"].reshape(1, N_PID)
    return kp


# ------------------------------- forward ----------------------------------
@jax.jit
def gnn4kt_forward(kp, q, c, r, qshft, cshft, rshft):
    # pid_data / q_data / target, emitted directly time-major: (T, B)
    pid_data = jnp.concatenate([q[:, 0:1], qshft], axis=1).T
    q_data = jnp.concatenate([c[:, 0:1], cshft], axis=1).T
    target = jnp.concatenate([r[:, 0:1], rshft], axis=1).T

    emb_q = jnp.take(kp["que_emb"], pid_data, axis=0)          # (T, B, E)
    emb_c = jnp.take(kp["c_emb"], q_data, axis=0)
    q_embed = emb_q + emb_c
    qa_embed = q_embed + jnp.take(kp["qa_emb"], target, axis=0)

    qa2 = qa_embed.reshape(T * BS, EMBED_L)                    # metadata-only reshape
    qe2 = q_embed.reshape(T * BS, EMBED_L)

    y2 = pl.pallas_call(
        _gnn4kt_fused_kernel,
        out_shape=jax.ShapeDtypeStruct(((T - 1) * BS, N_PID), jnp.float32),
        in_specs=[_VMEM] * 11,
        out_specs=_VMEM,
        scratch_shapes=[pltpu.VMEM((T * BS, GATES), jnp.float32)],
    )(qa2, qe2, kp["wih0"], kp["wih"], kp["whh"], kp["b"],
      kp["w1h"], kp["w1q"], kp["b1"], kp["wo"], kp["bo"])

    # Kernel rows are time-major (t, b); return torch layout (B, T-1, n_pid).
    return jnp.transpose(y2.reshape(T - 1, BS, N_PID), (1, 0, 2))


# --------------------------- pure-JAX reference ----------------------------
@jax.jit
def reference_forward(raw, q, c, r, qshft, cshft, rshft):
    hp = jax.lax.Precision.HIGHEST
    pid_data = jnp.concatenate([q[:, 0:1], qshft], axis=1)
    q_data = jnp.concatenate([c[:, 0:1], cshft], axis=1)
    target = jnp.concatenate([r[:, 0:1], rshft], axis=1)
    emb_q = jnp.take(raw["que_emb"], pid_data, axis=0)
    emb_c = jnp.take(raw["c_emb"], q_data, axis=0)
    q_embed = emb_q + emb_c
    x = q_embed + jnp.take(raw["qa_emb"], target, axis=0)      # (B, T, E)
    H = HIDDEN
    for (w_ih, w_hh, b_ih, b_hh) in raw["lstm"]:
        def cell(carry, x_t, w_ih=w_ih, w_hh=w_hh, b_ih=b_ih, b_hh=b_hh):
            h, cc = carry
            gates = (jnp.dot(x_t, w_ih.T, precision=hp)
                     + jnp.dot(h, w_hh.T, precision=hp) + b_ih + b_hh)
            i = jax.nn.sigmoid(gates[:, 0:H])
            f = jax.nn.sigmoid(gates[:, H:2 * H])
            g = jnp.tanh(gates[:, 2 * H:3 * H])
            o = jax.nn.sigmoid(gates[:, 3 * H:4 * H])
            cc = f * cc + i * g
            h = o * jnp.tanh(cc)
            return (h, cc), h
        init = (jnp.zeros((x.shape[0], H), jnp.float32),
                jnp.zeros((x.shape[0], H), jnp.float32))
        _, hs = jax.lax.scan(cell, init, jnp.swapaxes(x, 0, 1))
        x = jnp.swapaxes(hs, 0, 1)                             # (B, T, H)
    comb = jnp.concatenate([x[:, :-1, :], q_embed[:, 1:, :]], axis=-1)
    hid = jax.nn.relu(jnp.dot(comb, raw["mlp_w1"].T, precision=hp) + raw["mlp_b1"])
    return jax.nn.sigmoid(jnp.dot(hid, raw["mlp_wo"].T, precision=hp) + raw["mlp_bo"])


# --------------------------------- main ------------------------------------
if __name__ == "__main__":
    key = jax.random.PRNGKey(0)
    k_params, kq, kc, kr, kqs, kcs, krs = jax.random.split(key, 7)

    raw = init_params(k_params)
    kp = prepare_kernel_params(raw)

    q = jax.random.randint(kq, (BS, SEQ_IN), 0, N_PID, dtype=jnp.int32)
    c = jax.random.randint(kc, (BS, SEQ_IN), 0, N_QUESTION, dtype=jnp.int32)
    r = jax.random.randint(kr, (BS, SEQ_IN), 0, 2, dtype=jnp.int32)
    qshft = jax.random.randint(kqs, (BS, SEQ_IN), 0, N_PID, dtype=jnp.int32)
    cshft = jax.random.randint(kcs, (BS, SEQ_IN), 0, N_QUESTION, dtype=jnp.int32)
    rshft = jax.random.randint(krs, (BS, SEQ_IN), 0, 2, dtype=jnp.int32)

    y = gnn4kt_forward(kp, q, c, r, qshft, cshft, rshft)
    y = jax.block_until_ready(y)

    assert y.shape == (BS, T - 1, N_PID), y.shape
    assert bool(jnp.all(jnp.isfinite(y)))
    assert bool(jnp.all((y >= 0.0) & (y <= 1.0)))

    # Cross-check the fused kernel against a pure-JAX reference of the module.
    y_ref = reference_forward(raw, q, c, r, qshft, cshft, rshft)
    assert bool(jnp.allclose(y, y_ref, atol=2e-3, rtol=2e-3)), float(
        jnp.max(jnp.abs(y - y_ref)))

    print("KERNEL_OK")
</pallas_src>

<mosaic_0001>
module attributes {stable_mosaic.version = 11 : i64} {
  func.func @_gnn4kt_fused_kernel(%arg0: memref<16x32xf32, #tpu.memory_space<vmem>>, %arg1: memref<16x32xf32, #tpu.memory_space<vmem>>, %arg2: memref<32x128xf32, #tpu.memory_space<vmem>>, %arg3: memref<4x128x128xf32, #tpu.memory_space<vmem>>, %arg4: memref<5x128x128xf32, #tpu.memory_space<vmem>>, %arg5: memref<5x1x128xf32, #tpu.memory_space<vmem>>, %arg6: memref<128x64xf32, #tpu.memory_space<vmem>>, %arg7: memref<32x64xf32, #tpu.memory_space<vmem>>, %arg8: memref<1x64xf32, #tpu.memory_space<vmem>>, %arg9: memref<64x32xf32, #tpu.memory_space<vmem>>, %arg10: memref<1x32xf32, #tpu.memory_space<vmem>>, %arg11: memref<14x32xf32, #tpu.memory_space<vmem>>, %arg12: memref<16x128xf32, #tpu.memory_space<vmem>>) attributes {dimension_semantics = [], scalar_prefetch = 0 : i64, scratch_operands = 1 : i64, tpu.core_type = #tpu.core_type<tc>} {
    %0 = tpu.iota {dimensions = array<i32: 1>} : vector<2x128xi32>
    %c96_i32 = arith.constant 96 : i32
    %1 = vector.broadcast %c96_i32 : i32 to vector<2x128xi32>
    %2 = arith.cmpi sge, %0, %1 : vector<2x128xi32>
    %c0 = arith.constant 0 : index
    %c0_0 = arith.constant 0 : index
    %3 = vector.load %arg0[%c0, %c0_0] : memref<16x32xf32, #tpu.memory_space<vmem>>, vector<16x32xf32>
    %c0_1 = arith.constant 0 : index
    %c0_2 = arith.constant 0 : index
    %4 = vector.load %arg2[%c0_1, %c0_2] : memref<32x128xf32, #tpu.memory_space<vmem>>, vector<32x128xf32>
    %cst = arith.constant dense<0.000000e+00> : vector<16x128xf32>
    %5 = tpu.matmul %3, %4, %cst {dimension_numbers = #tpu.dot_dimension_numbers<[1], [0], [0], [1], [0, 0, 1, 1], [], []>} : vector<16x32xf32>, vector<32x128xf32>, vector<16x128xf32> -> vector<16x128xf32>
    %c0_3 = arith.constant 0 : index
    %c0_4 = arith.constant 0 : index
    %c0_5 = arith.constant 0 : index
    %6 = vector.load %arg5[%c0_3, %c0_4, %c0_5] : memref<5x1x128xf32, #tpu.memory_space<vmem>>, vector<1x1x128xf32>
    %7 = vector.shape_cast %6 : vector<1x1x128xf32> to vector<1x128xf32>
    %8 = vector.broadcast %7 : vector<1x128xf32> to vector<16x128xf32>
    %9 = arith.addf %5, %8 : vector<16x128xf32>
    %c0_6 = arith.constant 0 : index
    %c0_7 = arith.constant 0 : index
    %c0_8 = arith.constant 0 : index
    %10 = vector.load %arg4[%c0_6, %c0_7, %c0_8] : memref<5x128x128xf32, #tpu.memory_space<vmem>>, vector<1x128x128xf32>
    %11 = vector.shape_cast %10 : vector<1x128x128xf32> to vector<128x128xf32>
    %cst_9 = arith.constant 0.000000e+00 : f32
    %12 = vector.broadcast %cst_9 : f32 to vector<2x128xf32>
    %cst_10 = arith.constant 0.000000e+00 : f32
    %13 = vector.broadcast %cst_10 : f32 to vector<2x128xf32>
    %14 = vector.extract_strided_slice %9 {offsets = [0, 0], sizes = [2, 128], strides = [1, 1]} : vector<16x128xf32> to vector<2x128xf32>
    %cst_11 = arith.constant dense<0.000000e+00> : vector<2x128xf32>
    %15 = tpu.matmul %12, %11, %cst_11 {dimension_numbers = #tpu.dot_dimension_numbers<[1], [0], [0], [1], [0, 0, 1, 1], [], []>} : vector<2x128xf32>, vector<128x128xf32>, vector<2x128xf32> -> vector<2x128xf32>
    %16 = arith.addf %14, %15 : vector<2x128xf32>
    %17 = math.tanh %16 : vector<2x128xf32>
    %18 = arith.negf %16 : vector<2x128xf32>
    %19 = math.exp %18 : vector<2x128xf32>
    %cst_12 = arith.constant 1.000000e+00 : f32
    %20 = vector.broadcast %cst_12 : f32 to vector<2x128xf32>
    %21 = arith.addf %20, %19 : vector<2x128xf32>
    %22 = arith.divf %20, %21 : vector<2x128xf32>
    %23 = arith.select %2, %17, %22 : vector<2x128xi1>, vector<2x128xf32>
    %c64_i32 = arith.constant 64 : i32
    %24 = tpu.dynamic_rotate %23 by %c64_i32 dim 1 : vector<2x128xf32>, i32 -> vector<2x128xf32>
    %25 = arith.mulf %23, %24 : vector<2x128xf32>
    %c96_i32_13 = arith.constant 96 : i32
    %26 = tpu.dynamic_rotate %25 by %c96_i32_13 dim 1 : vector<2x128xf32>, i32 -> vector<2x128xf32>
    %27 = arith.mulf %23, %13 : vector<2x128xf32>
    %28 = arith.addf %27, %26 : vector<2x128xf32>
    %29 = math.tanh %28 : vector<2x128xf32>
    %30 = arith.mulf %24, %29 : vector<2x128xf32>
    %c0_14 = arith.constant 0 : index
    %c0_15 = arith.constant 0 : index
    %31 = vector.load %arg12[%c0_14, %c0_15] : memref<16x128xf32, #tpu.memory_space<vmem>>, vector<2x128xf32>
    tpu.vector_store %arg12[%c0_14, %c0_15], %30 {strides = array<i32>} : memref<16x128xf32, #tpu.memory_space<vmem>>, vector<2x128xf32>,
    %32 = vector.extract_strided_slice %9 {offsets = [2, 0], sizes = [2, 128], strides = [1, 1]} : vector<16x128xf32> to vector<2x128xf32>
    %cst_16 = arith.constant dense<0.000000e+00> : vector<2x128xf32>
    %33 = tpu.matmul %30, %11, %cst_16 {dimension_numbers = #tpu.dot_dimension_numbers<[1], [0], [0], [1], [0, 0, 1, 1], [], []>} : vector<2x128xf32>, vector<128x128xf32>, vector<2x128xf32> -> vector<2x128xf32>
    %34 = arith.addf %32, %33 : vector<2x128xf32>
    %35 = math.tanh %34 : vector<2x128xf32>
    %36 = arith.negf %34 : vector<2x128xf32>
    %37 = math.exp %36 : vector<2x128xf32>
    %cst_17 = arith.constant 1.000000e+00 : f32
    %38 = vector.broadcast %cst_17 : f32 to vector<2x128xf32>
    %39 = arith.addf %38, %37 : vector<2x128xf32>
    %40 = arith.divf %38, %39 : vector<2x128xf32>
    %41 = arith.select %2, %35, %40 : vector<2x128xi1>, vector<2x128xf32>
    %c64_i32_18 = arith.constant 64 : i32
    %42 = tpu.dynamic_rotate %41 by %c64_i32_18 dim 1 : vector<2x128xf32>, i32 -> vector<2x128xf32>
    %43 = arith.mulf %41, %42 : vector<2x128xf32>
    %c96_i32_19 = arith.constant 96 : i32
    %44 = tpu.dynamic_rotate %43 by %c96_i32_19 dim 1 : vector<2x128xf32>, i32 -> vector<2x128xf32>
    %45 = arith.mulf %41, %28 : vector<2x128xf32>
    %46 = arith.addf %45, %44 : vector<2x128xf32>
    %47 = math.tanh %46 : vector<2x128xf32>
    %48 = arith.mulf %42, %47 : vector<2x128xf32>
    %c2 = arith.constant 2 : index
    %c0_20 = arith.constant 0 : index
    %49 = vector.load %arg12[%c2, %c0_20] : memref<16x128xf32, #tpu.memory_space<vmem>>, vector<2x128xf32>
    tpu.vector_store %arg12[%c2, %c0_20], %48 {strides = array<i32>} : memref<16x128xf32, #tpu.memory_space<vmem>>, vector<2x128xf32>,
    %50 = vector.extract_strided_slice %9 {offsets = [4, 0], sizes = [2, 128], strides = [1, 1]} : vector<16x128xf32> to vector<2x128xf32>
    %cst_21 = arith.constant dense<0.000000e+00> : vector<2x128xf32>
    %51 = tpu.matmul %48, %11, %cst_21 {dimension_numbers = #tpu.dot_dimension_numbers<[1], [0], [0], [1], [0, 0, 1, 1], [], []>} : vector<2x128xf32>, vector<128x128xf32>, vector<2x128xf32> -> vector<2x128xf32>
    %52 = arith.addf %50, %51 : vector<2x128xf32>
    %53 = math.tanh %52 : vector<2x128xf32>
    %54 = arith.negf %52 : vector<2x128xf32>
    %55 = math.exp %54 : vector<2x128xf32>
    %cst_22 = arith.constant 1.000000e+00 : f32
    %56 = vector.broadcast %cst_22 : f32 to vector<2x128xf32>
    %57 = arith.addf %56, %55 : vector<2x128xf32>
    %58 = arith.divf %56, %57 : vector<2x128xf32>
    %59 = arith.select %2, %53, %58 : vector<2x128xi1>, vector<2x128xf32>
    %c64_i32_23 = arith.constant 64 : i32
    %60 = tpu.dynamic_rotate %59 by %c64_i32_23 dim 1 : vector<2x128xf32>, i32 -> vector<2x128xf32>
    %61 = arith.mulf %59, %60 : vector<2x128xf32>
    %c96_i32_24 = arith.constant 96 : i32
    %62 = tpu.dynamic_rotate %61 by %c96_i32_24 dim 1 : vector<2x128xf32>, i32 -> vector<2x128xf32>
    %63 = arith.mulf %59, %46 : vector<2x128xf32>
    %64 = arith.addf %63, %62 : vector<2x128xf32>
    %65 = math.tanh %64 : vector<2x128xf32>
    %66 = arith.mulf %60, %65 : vector<2x128xf32>
    %c4 = arith.constant 4 : index
    %c0_25 = arith.constant 0 : index
    %67 = vector.load %arg12[%c4, %c0_25] : memref<16x128xf32, #tpu.memory_space<vmem>>, vector<2x128xf32>
    tpu.vector_store %arg12[%c4, %c0_25], %66 {strides = array<i32>} : memref<16x128xf32, #tpu.memory_space<vmem>>, vector<2x128xf32>,
    %68 = vector.extract_strided_slice %9 {offsets = [6, 0], sizes = [2, 128], strides = [1, 1]} : vector<16x128xf32> to vector<2x128xf32>
    %cst_26 = arith.constant dense<0.000000e+00> : vector<2x128xf32>
    %69 = tpu.matmul %66, %11, %cst_26 {dimension_numbers = #tpu.dot_dimension_numbers<[1], [0], [0], [1], [0, 0, 1, 1], [], []>} : vector<2x128xf32>, vector<128x128xf32>, vector<2x128xf32> -> vector<2x128xf32>
    %70 = arith.addf %68, %69 : vector<2x128xf32>
    %71 = math.tanh %70 : vector<2x128xf32>
    %72 = arith.negf %70 : vector<2x128xf32>
    %73 = math.exp %72 : vector<2x128xf32>
    %cst_27 = arith.constant 1.000000e+00 : f32
    %74 = vector.broadcast %cst_27 : f32 to vector<2x128xf32>
    %75 = arith.addf %74, %73 : vector<2x128xf32>
    %76 = arith.divf %74, %75 : vector<2x128xf32>
    %77 = arith.select %2, %71, %76 : vector<2x128xi1>, vector<2x128xf32>
    %c64_i32_28 = arith.constant 64 : i32
    %78 = tpu.dynamic_rotate %77 by %c64_i32_28 dim 1 : vector<2x128xf32>, i32 -> vector<2x128xf32>
    %79 = arith.mulf %77, %78 : vector<2x128xf32>
    %c96_i32_29 = arith.constant 96 : i32
    %80 = tpu.dynamic_rotate %79 by %c96_i32_29 dim 1 : vector<2x128xf32>, i32 -> vector<2x128xf32>
    %81 = arith.mulf %77, %64 : vector<2x128xf32>
    %82 = arith.addf %81, %80 : vector<2x128xf32>
    %83 = math.tanh %82 : vector<2x128xf32>
    %84 = arith.mulf %78, %83 : vector<2x128xf32>
    %c6 = arith.constant 6 : index
    %c0_30 = arith.constant 0 : index
    %85 = vector.load %arg12[%c6, %c0_30] : memref<16x128xf32, #tpu.memory_space<vmem>>, vector<2x128xf32>
    tpu.vector_store %arg12[%c6, %c0_30], %84 {strides = array<i32>} : memref<16x128xf32, #tpu.memory_space<vmem>>, vector<2x128xf32>,
    %86 = vector.extract_strided_slice %9 {offsets = [8, 0], sizes = [2, 128], strides = [1, 1]} : vector<16x128xf32> to vector<2x128xf32>
    %cst_31 = arith.constant dense<0.000000e+00> : vector<2x128xf32>
    %87 = tpu.matmul %84, %11, %cst_31 {dimension_numbers = #tpu.dot_dimension_numbers<[1], [0], [0], [1], [0, 0, 1, 1], [], []>} : vector<2x128xf32>, vector<128x128xf32>, vector<2x128xf32> -> vector<2x128xf32>
    %88 = arith.addf %86, %87 : vector<2x128xf32>
    %89 = math.tanh %88 : vector<2x128xf32>
    %90 = arith.negf %88 : vector<2x128xf32>
    %91 = math.exp %90 : vector<2x128xf32>
    %cst_32 = arith.constant 1.000000e+00 : f32
    %92 = vector.broadcast %cst_32 : f32 to vector<2x128xf32>
    %93 = arith.addf %92, %91 : vector<2x128xf32>
    %94 = arith.divf %92, %93 : vector<2x128xf32>
    %95 = arith.select %2, %89, %94 : vector<2x128xi1>, vector<2x128xf32>
    %c64_i32_33 = arith.constant 64 : i32
    %96 = tpu.dynamic_rotate %95 by %c64_i32_33 dim 1 : vector<2x128xf32>, i32 -> vector<2x128xf32>
    %97 = arith.mulf %95, %96 : vector<2x128xf32>
    %c96_i32_34 = arith.constant 96 : i32
    %98 = tpu.dynamic_rotate %97 by %c96_i32_34 dim 1 : vector<2x128xf32>, i32 -> vector<2x128xf32>
    %99 = arith.mulf %95, %82 : vector<2x128xf32>
    %100 = arith.addf %99, %98 : vector<2x128xf32>
    %101 = math.tanh %100 : vector<2x128xf32>
    %102 = arith.mulf %96, %101 : vector<2x128xf32>
    %c8 = arith.constant 8 : index
    %c0_35 = arith.constant 0 : index
    %103 = vector.load %arg12[%c8, %c0_35] : memref<16x128xf32, #tpu.memory_space<vmem>>, vector<2x128xf32>
    tpu.vector_store %arg12[%c8, %c0_35], %102 {strides = array<i32>} : memref<16x128xf32, #tpu.memory_space<vmem>>, vector<2x128xf32>,
    %104 = vector.extract_strided_slice %9 {offsets = [10, 0], sizes = [2, 128], strides = [1, 1]} : vector<16x128xf32> to vector<2x128xf32>
    %cst_36 = arith.constant dense<0.000000e+00> : vector<2x128xf32>
    %105 = tpu.matmul %102, %11, %cst_36 {dimension_numbers = #tpu.dot_dimension_numbers<[1], [0], [0], [1], [0, 0, 1, 1], [], []>} : vector<2x128xf32>, vector<128x128xf32>, vector<2x128xf32> -> vector<2x128xf32>
    %106 = arith.addf %104, %105 : vector<2x128xf32>
    %107 = math.tanh %106 : vector<2x128xf32>
    %108 = arith.negf %106 : vector<2x128xf32>
    %109 = math.exp %108 : vector<2x128xf32>
    %cst_37 = arith.constant 1.000000e+00 : f32
    %110 = vector.broadcast %cst_37 : f32 to vector<2x128xf32>
    %111 = arith.addf %110, %109 : vector<2x128xf32>
    %112 = arith.divf %110, %111 : vector<2x128xf32>
    %113 = arith.select %2, %107, %112 : vector<2x128xi1>, vector<2x128xf32>
    %c64_i32_38 = arith.constant 64 : i32
    %114 = tpu.dynamic_rotate %113 by %c64_i32_38 dim 1 : vector<2x128xf32>, i32 -> vector<2x128xf32>
    %115 = arith.mulf %113, %114 : vector<2x128xf32>
    %c96_i32_39 = arith.constant 96 : i32
    %116 = tpu.dynamic_rotate %115 by %c96_i32_39 dim 1 : vector<2x128xf32>, i32 -> vector<2x128xf32>
    %117 = arith.mulf %113, %100 : vector<2x128xf32>
    %118 = arith.addf %117, %116 : vector<2x128xf32>
    %119 = math.tanh %118 : vector<2x128xf32>
    %120 = arith.mulf %114, %119 : vector<2x128xf32>
    %c10 = arith.constant 10 : index
    %c0_40 = arith.constant 0 : index
    %121 = vector.load %arg12[%c10, %c0_40] : memref<16x128xf32, #tpu.memory_space<vmem>>, vector<2x128xf32>
    tpu.vector_store %arg12[%c10, %c0_40], %120 {strides = array<i32>} : memref<16x128xf32, #tpu.memory_space<vmem>>, vector<2x128xf32>,
    %122 = vector.extract_strided_slice %9 {offsets = [12, 0], sizes = [2, 128], strides = [1, 1]} : vector<16x128xf32> to vector<2x128xf32>
    %cst_41 = arith.constant dense<0.000000e+00> : vector<2x128xf32>
    %123 = tpu.matmul %120, %11, %cst_41 {dimension_numbers = #tpu.dot_dimension_numbers<[1], [0], [0], [1], [0, 0, 1, 1], [], []>} : vector<2x128xf32>, vector<128x128xf32>, vector<2x128xf32> -> vector<2x128xf32>
    %124 = arith.addf %122, %123 : vector<2x128xf32>
    %125 = math.tanh %124 : vector<2x128xf32>
    %126 = arith.negf %124 : vector<2x128xf32>
    %127 = math.exp %126 : vector<2x128xf32>
    %cst_42 = arith.constant 1.000000e+00 : f32
    %128 = vector.broadcast %cst_42 : f32 to vector<2x128xf32>
    %129 = arith.addf %128, %127 : vector<2x128xf32>
    %130 = arith.divf %128, %129 : vector<2x128xf32>
    %131 = arith.select %2, %125, %130 : vector<2x128xi1>, vector<2x128xf32>
    %c64_i32_43 = arith.constant 64 : i32
    %132 = tpu.dynamic_rotate %131 by %c64_i32_43 dim 1 : vector<2x128xf32>, i32 -> vector<2x128xf32>
    %133 = arith.mulf %131, %132 : vector<2x128xf32>
    %c96_i32_44 = arith.constant 96 : i32
    %134 = tpu.dynamic_rotate %133 by %c96_i32_44 dim 1 : vector<2x128xf32>, i32 -> vector<2x128xf32>
    %135 = arith.mulf %131, %118 : vector<2x128xf32>
    %136 = arith.addf %135, %134 : vector<2x128xf32>
    %137 = math.tanh %136 : vector<2x128xf32>
    %138 = arith.mulf %132, %137 : vector<2x128xf32>
    %c12 = arith.constant 12 : index
    %c0_45 = arith.constant 0 : index
    %139 = vector.load %arg12[%c12, %c0_45] : memref<16x128xf32, #tpu.memory_space<vmem>>, vector<2x128xf32>
    tpu.vector_store %arg12[%c12, %c0_45], %138 {strides = array<i32>} : memref<16x128xf32, #tpu.memory_space<vmem>>, vector<2x128xf32>,
    %140 = vector.extract_strided_slice %9 {offsets = [14, 0], sizes = [2, 128], strides = [1, 1]} : vector<16x128xf32> to vector<2x128xf32>
    %cst_46 = arith.constant dense<0.000000e+00> : vector<2x128xf32>
    %141 = tpu.matmul %138, %11, %cst_46 {dimension_numbers = #tpu.dot_dimension_numbers<[1], [0], [0], [1], [0, 0, 1, 1], [], []>} : vector<2x128xf32>, vector<128x128xf32>, vector<2x128xf32> -> vector<2x128xf32>
    %142 = arith.addf %140, %141 : vector<2x128xf32>
    %143 = math.tanh %142 : vector<2x128xf32>
    %144 = arith.negf %142 : vector<2x128xf32>
    %145 = math.exp %144 : vector<2x128xf32>
    %cst_47 = arith.constant 1.000000e+00 : f32
    %146 = vector.broadcast %cst_47 : f32 to vector<2x128xf32>
    %147 = arith.addf %146, %145 : vector<2x128xf32>
    %148 = arith.divf %146, %147 : vector<2x128xf32>
    %149 = arith.select %2, %143, %148 : vector<2x128xi1>, vector<2x128xf32>
    %c64_i32_48 = arith.constant 64 : i32
    %150 = tpu.dynamic_rotate %149 by %c64_i32_48 dim 1 : vector<2x128xf32>, i32 -> vector<2x128xf32>
    %151 = arith.mulf %149, %150 : vector<2x128xf32>
    %c96_i32_49 = arith.constant 96 : i32
    %152 = tpu.dynamic_rotate %151 by %c96_i32_49 dim 1 : vector<2x128xf32>, i32 -> vector<2x128xf32>
    %153 = arith.mulf %149, %136 : vector<2x128xf32>
    %154 = arith.addf %153, %152 : vector<2x128xf32>
    %155 = math.tanh %154 : vector<2x128xf32>
    %156 = arith.mulf %150, %155 : vector<2x128xf32>
    %c14 = arith.constant 14 : index
    %c0_50 = arith.constant 0 : index
    %157 = vector.load %arg12[%c14, %c0_50] : memref<16x128xf32, #tpu.memory_space<vmem>>, vector<2x128xf32>
    tpu.vector_store %arg12[%c14, %c0_50], %156 {strides = array<i32>} : memref<16x128xf32, #tpu.memory_space<vmem>>, vector<2x128xf32>,
    %c0_51 = arith.constant 0 : index
    %c0_52 = arith.constant 0 : index
    %158 = vector.load %arg12[%c0_51, %c0_52] : memref<16x128xf32, #tpu.memory_space<vmem>>, vector<16x128xf32>
    %c0_53 = arith.constant 0 : index
    %c0_54 = arith.constant 0 : index
    %c0_55 = arith.constant 0 : index
    %159 = vector.load %arg3[%c0_53, %c0_54, %c0_55] : memref<4x128x128xf32, #tpu.memory_space<vmem>>, vector<1x128x128xf32>
    %160 = vector.shape_cast %159 : vector<1x128x128xf32> to vector<128x128xf32>
    %cst_56 = arith.constant dense<0.000000e+00> : vector<16x128xf32>
    %161 = tpu.matmul %158, %160, %cst_56 {dimension_numbers = #tpu.dot_dimension_numbers<[1], [0], [0], [1], [0, 0, 1, 1], [], []>} : vector<16x128xf32>, vector<128x128xf32>, vector<16x128xf32> -> vector<16x128xf32>
    %c1 = arith.constant 1 : index
    %c0_57 = arith.constant 0 : index
    %c0_58 = arith.constant 0 : index
    %162 = vector.load %arg5[%c1, %c0_57, %c0_58] : memref<5x1x128xf32, #tpu.memory_space<vmem>>, vector<1x1x128xf32>
    %163 = vector.shape_cast %162 : vector<1x1x128xf32> to vector<1x128xf32>
    %164 = vector.broadcast %163 : vector<1x128xf32> to vector<16x128xf32>
    %165 = arith.addf %161, %164 : vector<16x128xf32>
    %c1_59 = arith.constant 1 : index
    %c0_60 = arith.constant 0 : index
    %c0_61 = arith.constant 0 : index
    %166 = vector.load %arg4[%c1_59, %c0_60, %c0_61] : memref<5x128x128xf32, #tpu.memory_space<vmem>>, vector<1x128x128xf32>
    %167 = vector.shape_cast %166 : vector<1x128x128xf32> to vector<128x128xf32>
    %cst_62 = arith.constant 0.000000e+00 : f32
    %168 = vector.broadcast %cst_62 : f32 to vector<2x128xf32>
    %cst_63 = arith.constant 0.000000e+00 : f32
    %169 = vector.broadcast %cst_63 : f32 to vector<2x128xf32>
    %170 = vector.extract_strided_slice %165 {offsets = [0, 0], sizes = [2, 128], strides = [1, 1]} : vector<16x128xf32> to vector<2x128xf32>
    %cst_64 = arith.constant dense<0.000000e+00> : vector<2x128xf32>
    %171 = tpu.matmul %168, %167, %cst_64 {dimension_numbers = #tpu.dot_dimension_numbers<[1], [0], [0], [1], [0, 0, 1, 1], [], []>} : vector<2x128xf32>, vector<128x128xf32>, vector<2x128xf32> -> vector<2x128xf32>
    %172 = arith.addf %170, %171 : vector<2x128xf32>
    %173 = math.tanh %172 : vector<2x128xf32>
    %174 = arith.negf %172 : vector<2x128xf32>
    %175 = math.exp %174 : vector<2x128xf32>
    %cst_65 = arith.constant 1.000000e+00 : f32
    %176 = vector.broadcast %cst_65 : f32 to vector<2x128xf32>
    %177 = arith.addf %176, %175 : vector<2x128xf32>
    %178 = arith.divf %176, %177 : vector<2x128xf32>
    %179 = arith.select %2, %173, %178 : vector<2x128xi1>, vector<2x128xf32>
    %c64_i32_66 = arith.constant 64 : i32
    %180 = tpu.dynamic_rotate %179 by %c64_i32_66 dim 1 : vector<2x128xf32>, i32 -> vector<2x128xf32>
    %181 = arith.mulf %179, %180 : vector<2x128xf32>
    %c96_i32_67 = arith.constant 96 : i32
    %182 = tpu.dynamic_rotate %181 by %c96_i32_67 dim 1 : vector<2x128xf32>, i32 -> vector<2x128xf32>
    %183 = arith.mulf %179, %169 : vector<2x128xf32>
    %184 = arith.addf %183, %182 : vector<2x128xf32>
    %185 = math.tanh %184 : vector<2x128xf32>
    %186 = arith.mulf %180, %185 : vector<2x128xf32>
    %c0_68 = arith.constant 0 : index
    %c0_69 = arith.constant 0 : index
    %187 = vector.load %arg12[%c0_68, %c0_69] : memref<16x128xf32, #tpu.memory_space<vmem>>, vector<2x128xf32>
    tpu.vector_store %arg12[%c0_68, %c0_69], %186 {strides = array<i32>} : memref<16x128xf32, #tpu.memory_space<vmem>>, vector<2x128xf32>,
    %188 = vector.extract_strided_slice %165 {offsets = [2, 0], sizes = [2, 128], strides = [1, 1]} : vector<16x128xf32> to vector<2x128xf32>
    %cst_70 = arith.constant dense<0.000000e+00> : vector<2x128xf32>
    %189 = tpu.matmul %186, %167, %cst_70 {dimension_numbers = #tpu.dot_dimension_numbers<[1], [0], [0], [1], [0, 0, 1, 1], [], []>} : vector<2x128xf32>, vector<128x128xf32>, vector<2x128xf32> -> vector<2x128xf32>
    %190 = arith.addf %188, %189 : vector<2x128xf32>
    %191 = math.tanh %190 : vector<2x128xf32>
    %192 = arith.negf %190 : vector<2x128xf32>
    %193 = math.exp %192 : vector<2x128xf32>
    %cst_71 = arith.constant 1.000000e+00 : f32
    %194 = vector.broadcast %cst_71 : f32 to vector<2x128xf32>
    %195 = arith.addf %194, %193 : vector<2x128xf32>
    %196 = arith.divf %194, %195 : vector<2x128xf32>
    %197 = arith.select %2, %191, %196 : vector<2x128xi1>, vector<2x128xf32>
    %c64_i32_72 = arith.constant 64 : i32
    %198 = tpu.dynamic_rotate %197 by %c64_i32_72 dim 1 : vector<2x128xf32>, i32 -> vector<2x128xf32>
    %199 = arith.mulf %197, %198 : vector<2x128xf32>
    %c96_i32_73 = arith.constant 96 : i32
    %200 = tpu.dynamic_rotate %199 by %c96_i32_73 dim 1 : vector<2x128xf32>, i32 -> vector<2x128xf32>
    %201 = arith.mulf %197, %184 : vector<2x128xf32>
    %202 = arith.addf %201, %200 : vector<2x128xf32>
    %203 = math.tanh %202 : vector<2x128xf32>
    %204 = arith.mulf %198, %203 : vector<2x128xf32>
    %c2_74 = arith.constant 2 : index
    %c0_75 = arith.constant 0 : index
    %205 = vector.load %arg12[%c2_74, %c0_75] : memref<16x128xf32, #tpu.memory_space<vmem>>, vector<2x128xf32>
    tpu.vector_store %arg12[%c2_74, %c0_75], %204 {strides = array<i32>} : memref<16x128xf32, #tpu.memory_space<vmem>>, vector<2x128xf32>,
    %206 = vector.extract_strided_slice %165 {offsets = [4, 0], sizes = [2, 128], strides = [1, 1]} : vector<16x128xf32> to vector<2x128xf32>
    %cst_76 = arith.constant dense<0.000000e+00> : vector<2x128xf32>
    %207 = tpu.matmul %204, %167, %cst_76 {dimension_numbers = #tpu.dot_dimension_numbers<[1], [0], [0], [1], [0, 0, 1, 1], [], []>} : vector<2x128xf32>, vector<128x128xf32>, vector<2x128xf32> -> vector<2x128xf32>
    %208 = arith.addf %206, %207 : vector<2x128xf32>
    %209 = math.tanh %208 : vector<2x128xf32>
    %210 = arith.negf %208 : vector<2x128xf32>
    %211 = math.exp %210 : vector<2x128xf32>
    %cst_77 = arith.constant 1.000000e+00 : f32
    %212 = vector.broadcast %cst_77 : f32 to vector<2x128xf32>
    %213 = arith.addf %212, %211 : vector<2x128xf32>
    %214 = arith.divf %212, %213 : vector<2x128xf32>
    %215 = arith.select %2, %209, %214 : vector<2x128xi1>, vector<2x128xf32>
    %c64_i32_78 = arith.constant 64 : i32
    %216 = tpu.dynamic_rotate %215 by %c64_i32_78 dim 1 : vector<2x128xf32>, i32 -> vector<2x128xf32>
    %217 = arith.mulf %215, %216 : vector<2x128xf32>
    %c96_i32_79 = arith.constant 96 : i32
    %218 = tpu.dynamic_rotate %217 by %c96_i32_79 dim 1 : vector<2x128xf32>, i32 -> vector<2x128xf32>
    %219 = arith.mulf %215, %202 : vector<2x128xf32>
    %220 = arith.addf %219, %218 : vector<2x128xf32>
    %221 = math.tanh %220 : vector<2x128xf32>
    %222 = arith.mulf %216, %221 : vector<2x128xf32>
    %c4_80 = arith.constant 4 : index
    %c0_81 = arith.constant 0 : index
    %223 = vector.load %arg12[%c4_80, %c0_81] : memref<16x128xf32, #tpu.memory_space<vmem>>, vector<2x128xf32>
    tpu.vector_store %arg12[%c4_80, %c0_81], %222 {strides = array<i32>} : memref<16x128xf32, #tpu.memory_space<vmem>>, vector<2x128xf32>,
    %224 = vector.extract_strided_slice %165 {offsets = [6, 0], sizes = [2, 128], strides = [1, 1]} : vector<16x128xf32> to vector<2x128xf32>
    %cst_82 = arith.constant dense<0.000000e+00> : vector<2x128xf32>
    %225 = tpu.matmul %222, %167, %cst_82 {dimension_numbers = #tpu.dot_dimension_numbers<[1], [0], [0], [1], [0, 0, 1, 1], [], []>} : vector<2x128xf32>, vector<128x128xf32>, vector<2x128xf32> -> vector<2x128xf32>
    %226 = arith.addf %224, %225 : vector<2x128xf32>
    %227 = math.tanh %226 : vector<2x128xf32>
    %228 = arith.negf %226 : vector<2x128xf32>
    %229 = math.exp %228 : vector<2x128xf32>
    %cst_83 = arith.constant 1.000000e+00 : f32
    %230 = vector.broadcast %cst_83 : f32 to vector<2x128xf32>
    %231 = arith.addf %230, %229 : vector<2x128xf32>
    %232 = arith.divf %230, %231 : vector<2x128xf32>
    %233 = arith.select %2, %227, %232 : vector<2x128xi1>, vector<2x128xf32>
    %c64_i32_84 = arith.constant 64 : i32
    %234 = tpu.dynamic_rotate %233 by %c64_i32_84 dim 1 : vector<2x128xf32>, i32 -> vector<2x128xf32>
    %235 = arith.mulf %233, %234 : vector<2x128xf32>
    %c96_i32_85 = arith.constant 96 : i32
    %236 = tpu.dynamic_rotate %235 by %c96_i32_85 dim 1 : vector<2x128xf32>, i32 -> vector<2x128xf32>
    %237 = arith.mulf %233, %220 : vector<2x128xf32>
    %238 = arith.addf %237, %236 : vector<2x128xf32>
    %239 = math.tanh %238 : vector<2x128xf32>
    %240 = arith.mulf %234, %239 : vector<2x128xf32>
    %c6_86 = arith.constant 6 : index
    %c0_87 = arith.constant 0 : index
    %241 = vector.load %arg12[%c6_86, %c0_87] : memref<16x128xf32, #tpu.memory_space<vmem>>, vector<2x128xf32>
    tpu.vector_store %arg12[%c6_86, %c0_87], %240 {strides = array<i32>} : memref<16x128xf32, #tpu.memory_space<vmem>>, vector<2x128xf32>,
    %242 = vector.extract_strided_slice %165 {offsets = [8, 0], sizes = [2, 128], strides = [1, 1]} : vector<16x128xf32> to vector<2x128xf32>
    %cst_88 = arith.constant dense<0.000000e+00> : vector<2x128xf32>
    %243 = tpu.matmul %240, %167, %cst_88 {dimension_numbers = #tpu.dot_dimension_numbers<[1], [0], [0], [1], [0, 0, 1, 1], [], []>} : vector<2x128xf32>, vector<128x128xf32>, vector<2x128xf32> -> vector<2x128xf32>
    %244 = arith.addf %242, %243 : vector<2x128xf32>
    %245 = math.tanh %244 : vector<2x128xf32>
    %246 = arith.negf %244 : vector<2x128xf32>
    %247 = math.exp %246 : vector<2x128xf32>
    %cst_89 = arith.constant 1.000000e+00 : f32
    %248 = vector.broadcast %cst_89 : f32 to vector<2x128xf32>
    %249 = arith.addf %248, %247 : vector<2x128xf32>
    %250 = arith.divf %248, %249 : vector<2x128xf32>
    %251 = arith.select %2, %245, %250 : vector<2x128xi1>, vector<2x128xf32>
    %c64_i32_90 = arith.constant 64 : i32
    %252 = tpu.dynamic_rotate %251 by %c64_i32_90 dim 1 : vector<2x128xf32>, i32 -> vector<2x128xf32>
    %253 = arith.mulf %251, %252 : vector<2x128xf32>
    %c96_i32_91 = arith.constant 96 : i32
    %254 = tpu.dynamic_rotate %253 by %c96_i32_91 dim 1 : vector<2x128xf32>, i32 -> vector<2x128xf32>
    %255 = arith.mulf %251, %238 : vector<2x128xf32>
    %256 = arith.addf %255, %254 : vector<2x128xf32>
    %257 = math.tanh %256 : vector<2x128xf32>
    %258 = arith.mulf %252, %257 : vector<2x128xf32>
    %c8_92 = arith.constant 8 : index
    %c0_93 = arith.constant 0 : index
    %259 = vector.load %arg12[%c8_92, %c0_93] : memref<16x128xf32, #tpu.memory_space<vmem>>, vector<2x128xf32>
    tpu.vector_store %arg12[%c8_92, %c0_93], %258 {strides = array<i32>} : memref<16x128xf32, #tpu.memory_space<vmem>>, vector<2x128xf32>,
    %260 = vector.extract_strided_slice %165 {offsets = [10, 0], sizes = [2, 128], strides = [1, 1]} : vector<16x128xf32> to vector<2x128xf32>
    %cst_94 = arith.constant dense<0.000000e+00> : vector<2x128xf32>
    %261 = tpu.matmul %258, %167, %cst_94 {dimension_numbers = #tpu.dot_dimension_numbers<[1], [0], [0], [1], [0, 0, 1, 1], [], []>} : vector<2x128xf32>, vector<128x128xf32>, vector<2x128xf32> -> vector<2x128xf32>
    %262 = arith.addf %260, %261 : vector<2x128xf32>
    %263 = math.tanh %262 : vector<2x128xf32>
    %264 = arith.negf %262 : vector<2x128xf32>
    %265 = math.exp %264 : vector<2x128xf32>
    %cst_95 = arith.constant 1.000000e+00 : f32
    %266 = vector.broadcast %cst_95 : f32 to vector<2x128xf32>
    %267 = arith.addf %266, %265 : vector<2x128xf32>
    %268 = arith.divf %266, %267 : vector<2x128xf32>
    %269 = arith.select %2, %263, %268 : vector<2x128xi1>, vector<2x128xf32>
    %c64_i32_96 = arith.constant 64 : i32
    %270 = tpu.dynamic_rotate %269 by %c64_i32_96 dim 1 : vector<2x128xf32>, i32 -> vector<2x128xf32>
    %271 = arith.mulf %269, %270 : vector<2x128xf32>
    %c96_i32_97 = arith.constant 96 : i32
    %272 = tpu.dynamic_rotate %271 by %c96_i32_97 dim 1 : vector<2x128xf32>, i32 -> vector<2x128xf32>
    %273 = arith.mulf %269, %256 : vector<2x128xf32>
    %274 = arith.addf %273, %272 : vector<2x128xf32>
    %275 = math.tanh %274 : vector<2x128xf32>
    %276 = arith.mulf %270, %275 : vector<2x128xf32>
    %c10_98 = arith.constant 10 : index
    %c0_99 = arith.constant 0 : index
    %277 = vector.load %arg12[%c10_98, %c0_99] : memref<16x128xf32, #tpu.memory_space<vmem>>, vector<2x128xf32>
    tpu.vector_store %arg12[%c10_98, %c0_99], %276 {strides = array<i32>} : memref<16x128xf32, #tpu.memory_space<vmem>>, vector<2x128xf32>,
    %278 = vector.extract_strided_slice %165 {offsets = [12, 0], sizes = [2, 128], strides = [1, 1]} : vector<16x128xf32> to vector<2x128xf32>
    %cst_100 = arith.constant dense<0.000000e+00> : vector<2x128xf32>
    %279 = tpu.matmul %276, %167, %cst_100 {dimension_numbers = #tpu.dot_dimension_numbers<[1], [0], [0], [1], [0, 0, 1, 1], [], []>} : vector<2x128xf32>, vector<128x128xf32>, vector<2x128xf32> -> vector<2x128xf32>
    %280 = arith.addf %278, %279 : vector<2x128xf32>
    %281 = math.tanh %280 : vector<2x128xf32>
    %282 = arith.negf %280 : vector<2x128xf32>
    %283 = math.exp %282 : vector<2x128xf32>
    %cst_101 = arith.constant 1.000000e+00 : f32
    %284 = vector.broadcast %cst_101 : f32 to vector<2x128xf32>
    %285 = arith.addf %284, %283 : vector<2x128xf32>
    %286 = arith.divf %284, %285 : vector<2x128xf32>
    %287 = arith.select %2, %281, %286 : vector<2x128xi1>, vector<2x128xf32>
    %c64_i32_102 = arith.constant 64 : i32
    %288 = tpu.dynamic_rotate %287 by %c64_i32_102 dim 1 : vector<2x128xf32>, i32 -> vector<2x128xf32>
    %289 = arith.mulf %287, %288 : vector<2x128xf32>
    %c96_i32_103 = arith.constant 96 : i32
    %290 = tpu.dynamic_rotate %289 by %c96_i32_103 dim 1 : vector<2x128xf32>, i32 -> vector<2x128xf32>
    %291 = arith.mulf %287, %274 : vector<2x128xf32>
    %292 = arith.addf %291, %290 : vector<2x128xf32>
    %293 = math.tanh %292 : vector<2x128xf32>
    %294 = arith.mulf %288, %293 : vector<2x128xf32>
    %c12_104 = arith.constant 12 : index
    %c0_105 = arith.constant 0 : index
    %295 = vector.load %arg12[%c12_104, %c0_105] : memref<16x128xf32, #tpu.memory_space<vmem>>, vector<2x128xf32>
    tpu.vector_store %arg12[%c12_104, %c0_105], %294 {strides = array<i32>} : memref<16x128xf32, #tpu.memory_space<vmem>>, vector<2x128xf32>,
    %296 = vector.extract_strided_slice %165 {offsets = [14, 0], sizes = [2, 128], strides = [1, 1]} : vector<16x128xf32> to vector<2x128xf32>
    %cst_106 = arith.constant dense<0.000000e+00> : vector<2x128xf32>
    %297 = tpu.matmul %294, %167, %cst_106 {dimension_numbers = #tpu.dot_dimension_numbers<[1], [0], [0], [1], [0, 0, 1, 1], [], []>} : vector<2x128xf32>, vector<128x128xf32>, vector<2x128xf32> -> vector<2x128xf32>
    %298 = arith.addf %296, %297 : vector<2x128xf32>
    %299 = math.tanh %298 : vector<2x128xf32>
    %300 = arith.negf %298 : vector<2x128xf32>
    %301 = math.exp %300 : vector<2x128xf32>
    %cst_107 = arith.constant 1.000000e+00 : f32
    %302 = vector.broadcast %cst_107 : f32 to vector<2x128xf32>
    %303 = arith.addf %302, %301 : vector<2x128xf32>
    %304 = arith.divf %302, %303 : vector<2x128xf32>
    %305 = arith.select %2, %299, %304 : vector<2x128xi1>, vector<2x128xf32>
    %c64_i32_108 = arith.constant 64 : i32
    %306 = tpu.dynamic_rotate %305 by %c64_i32_108 dim 1 : vector<2x128xf32>, i32 -> vector<2x128xf32>
    %307 = arith.mulf %305, %306 : vector<2x128xf32>
    %c96_i32_109 = arith.constant 96 : i32
    %308 = tpu.dynamic_rotate %307 by %c96_i32_109 dim 1 : vector<2x128xf32>, i32 -> vector<2x128xf32>
    %309 = arith.mulf %305, %292 : vector<2x128xf32>
    %310 = arith.addf %309, %308 : vector<2x128xf32>
    %311 = math.tanh %310 : vector<2x128xf32>
    %312 = arith.mulf %306, %311 : vector<2x128xf32>
    %c14_110 = arith.constant 14 : index
    %c0_111 = arith.constant 0 : index
    %313 = vector.load %arg12[%c14_110, %c0_111] : memref<16x128xf32, #tpu.memory_space<vmem>>, vector<2x128xf32>
    tpu.vector_store %arg12[%c14_110, %c0_111], %312 {strides = array<i32>} : memref<16x128xf32, #tpu.memory_space<vmem>>, vector<2x128xf32>,
    %c0_112 = arith.constant 0 : index
    %c0_113 = arith.constant 0 : index
    %314 = vector.load %arg12[%c0_112, %c0_113] : memref<16x128xf32, #tpu.memory_space<vmem>>, vector<16x128xf32>
    %c1_114 = arith.constant 1 : index
    %c0_115 = arith.constant 0 : index
    %c0_116 = arith.constant 0 : index
    %315 = vector.load %arg3[%c1_114, %c0_115, %c0_116] : memref<4x128x128xf32, #tpu.memory_space<vmem>>, vector<1x128x128xf32>
    %316 = vector.shape_cast %315 : vector<1x128x128xf32> to vector<128x128xf32>
    %cst_117 = arith.constant dense<0.000000e+00> : vector<16x128xf32>
    %317 = tpu.matmul %314, %316, %cst_117 {dimension_numbers = #tpu.dot_dimension_numbers<[1], [0], [0], [1], [0, 0, 1, 1], [], []>} : vector<16x128xf32>, vector<128x128xf32>, vector<16x128xf32> -> vector<16x128xf32>
    %c2_118 = arith.constant 2 : index
    %c0_119 = arith.constant 0 : index
    %c0_120 = arith.constant 0 : index
    %318 = vector.load %arg5[%c2_118, %c0_119, %c0_120] : memref<5x1x128xf32, #tpu.memory_space<vmem>>, vector<1x1x128xf32>
    %319 = vector.shape_cast %318 : vector<1x1x128xf32> to vector<1x128xf32>
    %320 = vector.broadcast %319 : vector<1x128xf32> to vector<16x128xf32>
    %321 = arith.addf %317, %320 : vector<16x128xf32>
    %c2_121 = arith.constant 2 : index
    %c0_122 = arith.constant 0 : index
    %c0_123 = arith.constant 0 : index
    %322 = vector.load %arg4[%c2_121, %c0_122, %c0_123] : memref<5x128x128xf32, #tpu.memory_space<vmem>>, vector<1x128x128xf32>
    %323 = vector.shape_cast %322 : vector<1x128x128xf32> to vector<128x128xf32>
    %cst_124 = arith.constant 0.000000e+00 : f32
    %324 = vector.broadcast %cst_124 : f32 to vector<2x128xf32>
    %cst_125 = arith.constant 0.000000e+00 : f32
    %325 = vector.broadcast %cst_125 : f32 to vector<2x128xf32>
    %326 = vector.extract_strided_slice %321 {offsets = [0, 0], sizes = [2, 128], strides = [1, 1]} : vector<16x128xf32> to vector<2x128xf32>
    %cst_126 = arith.constant dense<0.000000e+00> : vector<2x128xf32>
    %327 = tpu.matmul %324, %323, %cst_126 {dimension_numbers = #tpu.dot_dimension_numbers<[1], [0], [0], [1], [0, 0, 1, 1], [], []>} : vector<2x128xf32>, vector<128x128xf32>, vector<2x128xf32> -> vector<2x128xf32>
    %328 = arith.addf %326, %327 : vector<2x128xf32>
    %329 = math.tanh %328 : vector<2x128xf32>
    %330 = arith.negf %328 : vector<2x128xf32>
    %331 = math.exp %330 : vector<2x128xf32>
    %cst_127 = arith.constant 1.000000e+00 : f32
    %332 = vector.broadcast %cst_127 : f32 to vector<2x128xf32>
    %333 = arith.addf %332, %331 : vector<2x128xf32>
    %334 = arith.divf %332, %333 : vector<2x128xf32>
    %335 = arith.select %2, %329, %334 : vector<2x128xi1>, vector<2x128xf32>
    %c64_i32_128 = arith.constant 64 : i32
    %336 = tpu.dynamic_rotate %335 by %c64_i32_128 dim 1 : vector<2x128xf32>, i32 -> vector<2x128xf32>
    %337 = arith.mulf %335, %336 : vector<2x128xf32>
    %c96_i32_129 = arith.constant 96 : i32
    %338 = tpu.dynamic_rotate %337 by %c96_i32_129 dim 1 : vector<2x128xf32>, i32 -> vector<2x128xf32>
    %339 = arith.mulf %335, %325 : vector<2x128xf32>
    %340 = arith.addf %339, %338 : vector<2x128xf32>
    %341 = math.tanh %340 : vector<2x128xf32>
    %342 = arith.mulf %336, %341 : vector<2x128xf32>
    %c0_130 = arith.constant 0 : index
    %c0_131 = arith.constant 0 : index
    %343 = vector.load %arg12[%c0_130, %c0_131] : memref<16x128xf32, #tpu.memory_space<vmem>>, vector<2x128xf32>
    tpu.vector_store %arg12[%c0_130, %c0_131], %342 {strides = array<i32>} : memref<16x128xf32, #tpu.memory_space<vmem>>, vector<2x128xf32>,
    %344 = vector.extract_strided_slice %321 {offsets = [2, 0], sizes = [2, 128], strides = [1, 1]} : vector<16x128xf32> to vector<2x128xf32>
    %cst_132 = arith.constant dense<0.000000e+00> : vector<2x128xf32>
    %345 = tpu.matmul %342, %323, %cst_132 {dimension_numbers = #tpu.dot_dimension_numbers<[1], [0], [0], [1], [0, 0, 1, 1], [], []>} : vector<2x128xf32>, vector<128x128xf32>, vector<2x128xf32> -> vector<2x128xf32>
    %346 = arith.addf %344, %345 : vector<2x128xf32>
    %347 = math.tanh %346 : vector<2x128xf32>
    %348 = arith.negf %346 : vector<2x128xf32>
    %349 = math.exp %348 : vector<2x128xf32>
    %cst_133 = arith.constant 1.000000e+00 : f32
    %350 = vector.broadcast %cst_133 : f32 to vector<2x128xf32>
    %351 = arith.addf %350, %349 : vector<2x128xf32>
    %352 = arith.divf %350, %351 : vector<2x128xf32>
    %353 = arith.select %2, %347, %352 : vector<2x128xi1>, vector<2x128xf32>
    %c64_i32_134 = arith.constant 64 : i32
    %354 = tpu.dynamic_rotate %353 by %c64_i32_134 dim 1 : vector<2x128xf32>, i32 -> vector<2x128xf32>
    %355 = arith.mulf %353, %354 : vector<2x128xf32>
    %c96_i32_135 = arith.constant 96 : i32
    %356 = tpu.dynamic_rotate %355 by %c96_i32_135 dim 1 : vector<2x128xf32>, i32 -> vector<2x128xf32>
    %357 = arith.mulf %353, %340 : vector<2x128xf32>
    %358 = arith.addf %357, %356 : vector<2x128xf32>
    %359 = math.tanh %358 : vector<2x128xf32>
    %360 = arith.mulf %354, %359 : vector<2x128xf32>
    %c2_136 = arith.constant 2 : index
    %c0_137 = arith.constant 0 : index
    %361 = vector.load %arg12[%c2_136, %c0_137] : memref<16x128xf32, #tpu.memory_space<vmem>>, vector<2x128xf32>
    tpu.vector_store %arg12[%c2_136, %c0_137], %360 {strides = array<i32>} : memref<16x128xf32, #tpu.memory_space<vmem>>, vector<2x128xf32>,
    %362 = vector.extract_strided_slice %321 {offsets = [4, 0], sizes = [2, 128], strides = [1, 1]} : vector<16x128xf32> to vector<2x128xf32>
    %cst_138 = arith.constant dense<0.000000e+00> : vector<2x128xf32>
    %363 = tpu.matmul %360, %323, %cst_138 {dimension_numbers = #tpu.dot_dimension_numbers<[1], [0], [0], [1], [0, 0, 1, 1], [], []>} : vector<2x128xf32>, vector<128x128xf32>, vector<2x128xf32> -> vector<2x128xf32>
    %364 = arith.addf %362, %363 : vector<2x128xf32>
    %365 = math.tanh %364 : vector<2x128xf32>
    %366 = arith.negf %364 : vector<2x128xf32>
    %367 = math.exp %366 : vector<2x128xf32>
    %cst_139 = arith.constant 1.000000e+00 : f32
    %368 = vector.broadcast %cst_139 : f32 to vector<2x128xf32>
    %369 = arith.addf %368, %367 : vector<2x128xf32>
    %370 = arith.divf %368, %369 : vector<2x128xf32>
    %371 = arith.select %2, %365, %370 : vector<2x128xi1>, vector<2x128xf32>
    %c64_i32_140 = arith.constant 64 : i32
    %372 = tpu.dynamic_rotate %371 by %c64_i32_140 dim 1 : vector<2x128xf32>, i32 -> vector<2x128xf32>
    %373 = arith.mulf %371, %372 : vector<2x128xf32>
    %c96_i32_141 = arith.constant 96 : i32
    %374 = tpu.dynamic_rotate %373 by %c96_i32_141 dim 1 : vector<2x128xf32>, i32 -> vector<2x128xf32>
    %375 = arith.mulf %371, %358 : vector<2x128xf32>
    %376 = arith.addf %375, %374 : vector<2x128xf32>
    %377 = math.tanh %376 : vector<2x128xf32>
    %378 = arith.mulf %372, %377 : vector<2x128xf32>
    %c4_142 = arith.constant 4 : index
    %c0_143 = arith.constant 0 : index
    %379 = vector.load %arg12[%c4_142, %c0_143] : memref<16x128xf32, #tpu.memory_space<vmem>>, vector<2x128xf32>
    tpu.vector_store %arg12[%c4_142, %c0_143], %378 {strides = array<i32>} : memref<16x128xf32, #tpu.memory_space<vmem>>, vector<2x128xf32>,
    %380 = vector.extract_strided_slice %321 {offsets = [6, 0], sizes = [2, 128], strides = [1, 1]} : vector<16x128xf32> to vector<2x128xf32>
    %cst_144 = arith.constant dense<0.000000e+00> : vector<2x128xf32>
    %381 = tpu.matmul %378, %323, %cst_144 {dimension_numbers = #tpu.dot_dimension_numbers<[1], [0], [0], [1], [0, 0, 1, 1], [], []>} : vector<2x128xf32>, vector<128x128xf32>, vector<2x128xf32> -> vector<2x128xf32>
    %382 = arith.addf %380, %381 : vector<2x128xf32>
    %383 = math.tanh %382 : vector<2x128xf32>
    %384 = arith.negf %382 : vector<2x128xf32>
    %385 = math.exp %384 : vector<2x128xf32>
    %cst_145 = arith.constant 1.000000e+00 : f32
    %386 = vector.broadcast %cst_145 : f32 to vector<2x128xf32>
    %387 = arith.addf %386, %385 : vector<2x128xf32>
    %388 = arith.divf %386, %387 : vector<2x128xf32>
    %389 = arith.select %2, %383, %388 : vector<2x128xi1>, vector<2x128xf32>
    %c64_i32_146 = arith.constant 64 : i32
    %390 = tpu.dynamic_rotate %389 by %c64_i32_146 dim 1 : vector<2x128xf32>, i32 -> vector<2x128xf32>
    %391 = arith.mulf %389, %390 : vector<2x128xf32>
    %c96_i32_147 = arith.constant 96 : i32
    %392 = tpu.dynamic_rotate %391 by %c96_i32_147 dim 1 : vector<2x128xf32>, i32 -> vector<2x128xf32>
    %393 = arith.mulf %389, %376 : vector<2x128xf32>
    %394 = arith.addf %393, %392 : vector<2x128xf32>
    %395 = math.tanh %394 : vector<2x128xf32>
    %396 = arith.mulf %390, %395 : vector<2x128xf32>
    %c6_148 = arith.constant 6 : index
    %c0_149 = arith.constant 0 : index
    %397 = vector.load %arg12[%c6_148, %c0_149] : memref<16x128xf32, #tpu.memory_space<vmem>>, vector<2x128xf32>
    tpu.vector_store %arg12[%c6_148, %c0_149], %396 {strides = array<i32>} : memref<16x128xf32, #tpu.memory_space<vmem>>, vector<2x128xf32>,
    %398 = vector.extract_strided_slice %321 {offsets = [8, 0], sizes = [2, 128], strides = [1, 1]} : vector<16x128xf32> to vector<2x128xf32>
    %cst_150 = arith.constant dense<0.000000e+00> : vector<2x128xf32>
    %399 = tpu.matmul %396, %323, %cst_150 {dimension_numbers = #tpu.dot_dimension_numbers<[1], [0], [0], [1], [0, 0, 1, 1], [], []>} : vector<2x128xf32>, vector<128x128xf32>, vector<2x128xf32> -> vector<2x128xf32>
    %400 = arith.addf %398, %399 : vector<2x128xf32>
    %401 = math.tanh %400 : vector<2x128xf32>
    %402 = arith.negf %400 : vector<2x128xf32>
    %403 = math.exp %402 : vector<2x128xf32>
    %cst_151 = arith.constant 1.000000e+00 : f32
    %404 = vector.broadcast %cst_151 : f32 to vector<2x128xf32>
    %405 = arith.addf %404, %403 : vector<2x128xf32>
    %406 = arith.divf %404, %405 : vector<2x128xf32>
    %407 = arith.select %2, %401, %406 : vector<2x128xi1>, vector<2x128xf32>
    %c64_i32_152 = arith.constant 64 : i32
    %408 = tpu.dynamic_rotate %407 by %c64_i32_152 dim 1 : vector<2x128xf32>, i32 -> vector<2x128xf32>
    %409 = arith.mulf %407, %408 : vector<2x128xf32>
    %c96_i32_153 = arith.constant 96 : i32
    %410 = tpu.dynamic_rotate %409 by %c96_i32_153 dim 1 : vector<2x128xf32>, i32 -> vector<2x128xf32>
    %411 = arith.mulf %407, %394 : vector<2x128xf32>
    %412 = arith.addf %411, %410 : vector<2x128xf32>
    %413 = math.tanh %412 : vector<2x128xf32>
    %414 = arith.mulf %408, %413 : vector<2x128xf32>
    %c8_154 = arith.constant 8 : index
    %c0_155 = arith.constant 0 : index
    %415 = vector.load %arg12[%c8_154, %c0_155] : memref<16x128xf32, #tpu.memory_space<vmem>>, vector<2x128xf32>
    tpu.vector_store %arg12[%c8_154, %c0_155], %414 {strides = array<i32>} : memref<16x128xf32, #tpu.memory_space<vmem>>, vector<2x128xf32>,
    %416 = vector.extract_strided_slice %321 {offsets = [10, 0], sizes = [2, 128], strides = [1, 1]} : vector<16x128xf32> to vector<2x128xf32>
    %cst_156 = arith.constant dense<0.000000e+00> : vector<2x128xf32>
    %417 = tpu.matmul %414, %323, %cst_156 {dimension_numbers = #tpu.dot_dimension_numbers<[1], [0], [0], [1], [0, 0, 1, 1], [], []>} : vector<2x128xf32>, vector<128x128xf32>, vector<2x128xf32> -> vector<2x128xf32>
    %418 = arith.addf %416, %417 : vector<2x128xf32>
    %419 = math.tanh %418 : vector<2x128xf32>
    %420 = arith.negf %418 : vector<2x128xf32>
    %421 = math.exp %420 : vector<2x128xf32>
    %cst_157 = arith.constant 1.000000e+00 : f32
    %422 = vector.broadcast %cst_157 : f32 to vector<2x128xf32>
    %423 = arith.addf %422, %421 : vector<2x128xf32>
    %424 = arith.divf %422, %423 : vector<2x128xf32>
    %425 = arith.select %2, %419, %424 : vector<2x128xi1>, vector<2x128xf32>
    %c64_i32_158 = arith.constant 64 : i32
    %426 = tpu.dynamic_rotate %425 by %c64_i32_158 dim 1 : vector<2x128xf32>, i32 -> vector<2x128xf32>
    %427 = arith.mulf %425, %426 : vector<2x128xf32>
    %c96_i32_159 = arith.constant 96 : i32
    %428 = tpu.dynamic_rotate %427 by %c96_i32_159 dim 1 : vector<2x128xf32>, i32 -> vector<2x128xf32>
    %429 = arith.mulf %425, %412 : vector<2x128xf32>
    %430 = arith.addf %429, %428 : vector<2x128xf32>
    %431 = math.tanh %430 : vector<2x128xf32>
    %432 = arith.mulf %426, %431 : vector<2x128xf32>
    %c10_160 = arith.constant 10 : index
    %c0_161 = arith.constant 0 : index
    %433 = vector.load %arg12[%c10_160, %c0_161] : memref<16x128xf32, #tpu.memory_space<vmem>>, vector<2x128xf32>
    tpu.vector_store %arg12[%c10_160, %c0_161], %432 {strides = array<i32>} : memref<16x128xf32, #tpu.memory_space<vmem>>, vector<2x128xf32>,
    %434 = vector.extract_strided_slice %321 {offsets = [12, 0], sizes = [2, 128], strides = [1, 1]} : vector<16x128xf32> to vector<2x128xf32>
    %cst_162 = arith.constant dense<0.000000e+00> : vector<2x128xf32>
    %435 = tpu.matmul %432, %323, %cst_162 {dimension_numbers = #tpu.dot_dimension_numbers<[1], [0], [0], [1], [0, 0, 1, 1], [], []>} : vector<2x128xf32>, vector<128x128xf32>, vector<2x128xf32> -> vector<2x128xf32>
    %436 = arith.addf %434, %435 : vector<2x128xf32>
    %437 = math.tanh %436 : vector<2x128xf32>
    %438 = arith.negf %436 : vector<2x128xf32>
    %439 = math.exp %438 : vector<2x128xf32>
    %cst_163 = arith.constant 1.000000e+00 : f32
    %440 = vector.broadcast %cst_163 : f32 to vector<2x128xf32>
    %441 = arith.addf %440, %439 : vector<2x128xf32>
    %442 = arith.divf %440, %441 : vector<2x128xf32>
    %443 = arith.select %2, %437, %442 : vector<2x128xi1>, vector<2x128xf32>
    %c64_i32_164 = arith.constant 64 : i32
    %444 = tpu.dynamic_rotate %443 by %c64_i32_164 dim 1 : vector<2x128xf32>, i32 -> vector<2x128xf32>
    %445 = arith.mulf %443, %444 : vector<2x128xf32>
    %c96_i32_165 = arith.constant 96 : i32
    %446 = tpu.dynamic_rotate %445 by %c96_i32_165 dim 1 : vector<2x128xf32>, i32 -> vector<2x128xf32>
    %447 = arith.mulf %443, %430 : vector<2x128xf32>
    %448 = arith.addf %447, %446 : vector<2x128xf32>
    %449 = math.tanh %448 : vector<2x128xf32>
    %450 = arith.mulf %444, %449 : vector<2x128xf32>
    %c12_166 = arith.constant 12 : index
    %c0_167 = arith.constant 0 : index
    %451 = vector.load %arg12[%c12_166, %c0_167] : memref<16x128xf32, #tpu.memory_space<vmem>>, vector<2x128xf32>
    tpu.vector_store %arg12[%c12_166, %c0_167], %450 {strides = array<i32>} : memref<16x128xf32, #tpu.memory_space<vmem>>, vector<2x128xf32>,
    %452 = vector.extract_strided_slice %321 {offsets = [14, 0], sizes = [2, 128], strides = [1, 1]} : vector<16x128xf32> to vector<2x128xf32>
    %cst_168 = arith.constant dense<0.000000e+00> : vector<2x128xf32>
    %453 = tpu.matmul %450, %323, %cst_168 {dimension_numbers = #tpu.dot_dimension_numbers<[1], [0], [0], [1], [0, 0, 1, 1], [], []>} : vector<2x128xf32>, vector<128x128xf32>, vector<2x128xf32> -> vector<2x128xf32>
    %454 = arith.addf %452, %453 : vector<2x128xf32>
    %455 = math.tanh %454 : vector<2x128xf32>
    %456 = arith.negf %454 : vector<2x128xf32>
    %457 = math.exp %456 : vector<2x128xf32>
    %cst_169 = arith.constant 1.000000e+00 : f32
    %458 = vector.broadcast %cst_169 : f32 to vector<2x128xf32>
    %459 = arith.addf %458, %457 : vector<2x128xf32>
    %460 = arith.divf %458, %459 : vector<2x128xf32>
    %461 = arith.select %2, %455, %460 : vector<2x128xi1>, vector<2x128xf32>
    %c64_i32_170 = arith.constant 64 : i32
    %462 = tpu.dynamic_rotate %461 by %c64_i32_170 dim 1 : vector<2x128xf32>, i32 -> vector<2x128xf32>
    %463 = arith.mulf %461, %462 : vector<2x128xf32>
    %c96_i32_171 = arith.constant 96 : i32
    %464 = tpu.dynamic_rotate %463 by %c96_i32_171 dim 1 : vector<2x128xf32>, i32 -> vector<2x128xf32>
    %465 = arith.mulf %461, %448 : vector<2x128xf32>
    %466 = arith.addf %465, %464 : vector<2x128xf32>
    %467 = math.tanh %466 : vector<2x128xf32>
    %468 = arith.mulf %462, %467 : vector<2x128xf32>
    %c14_172 = arith.constant 14 : index
    %c0_173 = arith.constant 0 : index
    %469 = vector.load %arg12[%c14_172, %c0_173] : memref<16x128xf32, #tpu.memory_space<vmem>>, vector<2x128xf32>
    tpu.vector_store %arg12[%c14_172, %c0_173], %468 {strides = array<i32>} : memref<16x128xf32, #tpu.memory_space<vmem>>, vector<2x128xf32>,
    %c0_174 = arith.constant 0 : index
    %c0_175 = arith.constant 0 : index
    %470 = vector.load %arg12[%c0_174, %c0_175] : memref<16x128xf32, #tpu.memory_space<vmem>>, vector<16x128xf32>
    %c2_176 = arith.constant 2 : index
    %c0_177 = arith.constant 0 : index
    %c0_178 = arith.constant 0 : index
    %471 = vector.load %arg3[%c2_176, %c0_177, %c0_178] : memref<4x128x128xf32, #tpu.memory_space<vmem>>, vector<1x128x128xf32>
    %472 = vector.shape_cast %471 : vector<1x128x128xf32> to vector<128x128xf32>
    %cst_179 = arith.constant dense<0.000000e+00> : vector<16x128xf32>
    %473 = tpu.matmul %470, %472, %cst_179 {dimension_numbers = #tpu.dot_dimension_numbers<[1], [0], [0], [1], [0, 0, 1, 1], [], []>} : vector<16x128xf32>, vector<128x128xf32>, vector<16x128xf32> -> vector<16x128xf32>
    %c3 = arith.constant 3 : index
    %c0_180 = arith.constant 0 : index
    %c0_181 = arith.constant 0 : index
    %474 = vector.load %arg5[%c3, %c0_180, %c0_181] : memref<5x1x128xf32, #tpu.memory_space<vmem>>, vector<1x1x128xf32>
    %475 = vector.shape_cast %474 : vector<1x1x128xf32> to vector<1x128xf32>
    %476 = vector.broadcast %475 : vector<1x128xf32> to vector<16x128xf32>
    %477 = arith.addf %473, %476 : vector<16x128xf32>
    %c3_182 = arith.constant 3 : index
    %c0_183 = arith.constant 0 : index
    %c0_184 = arith.constant 0 : index
    %478 = vector.load %arg4[%c3_182, %c0_183, %c0_184] : memref<5x128x128xf32, #tpu.memory_space<vmem>>, vector<1x128x128xf32>
    %479 = vector.shape_cast %478 : vector<1x128x128xf32> to vector<128x128xf32>
    %cst_185 = arith.constant 0.000000e+00 : f32
    %480 = vector.broadcast %cst_185 : f32 to vector<2x128xf32>
    %cst_186 = arith.constant 0.000000e+00 : f32
    %481 = vector.broadcast %cst_186 : f32 to vector<2x128xf32>
    %482 = vector.extract_strided_slice %477 {offsets = [0, 0], sizes = [2, 128], strides = [1, 1]} : vector<16x128xf32> to vector<2x128xf32>
    %cst_187 = arith.constant dense<0.000000e+00> : vector<2x128xf32>
    %483 = tpu.matmul %480, %479, %cst_187 {dimension_numbers = #tpu.dot_dimension_numbers<[1], [0], [0], [1], [0, 0, 1, 1], [], []>} : vector<2x128xf32>, vector<128x128xf32>, vector<2x128xf32> -> vector<2x128xf32>
    %484 = arith.addf %482, %483 : vector<2x128xf32>
    %485 = math.tanh %484 : vector<2x128xf32>
    %486 = arith.negf %484 : vector<2x128xf32>
    %487 = math.exp %486 : vector<2x128xf32>
    %cst_188 = arith.constant 1.000000e+00 : f32
    %488 = vector.broadcast %cst_188 : f32 to vector<2x128xf32>
    %489 = arith.addf %488, %487 : vector<2x128xf32>
    %490 = arith.divf %488, %489 : vector<2x128xf32>
    %491 = arith.select %2, %485, %490 : vector<2x128xi1>, vector<2x128xf32>
    %c64_i32_189 = arith.constant 64 : i32
    %492 = tpu.dynamic_rotate %491 by %c64_i32_189 dim 1 : vector<2x128xf32>, i32 -> vector<2x128xf32>
    %493 = arith.mulf %491, %492 : vector<2x128xf32>
    %c96_i32_190 = arith.constant 96 : i32
    %494 = tpu.dynamic_rotate %493 by %c96_i32_190 dim 1 : vector<2x128xf32>, i32 -> vector<2x128xf32>
    %495 = arith.mulf %491, %481 : vector<2x128xf32>
    %496 = arith.addf %495, %494 : vector<2x128xf32>
    %497 = math.tanh %496 : vector<2x128xf32>
    %498 = arith.mulf %492, %497 : vector<2x128xf32>
    %c0_191 = arith.constant 0 : index
    %c0_192 = arith.constant 0 : index
    %499 = vector.load %arg12[%c0_191, %c0_192] : memref<16x128xf32, #tpu.memory_space<vmem>>, vector<2x128xf32>
    tpu.vector_store %arg12[%c0_191, %c0_192], %498 {strides = array<i32>} : memref<16x128xf32, #tpu.memory_space<vmem>>, vector<2x128xf32>,
    %500 = vector.extract_strided_slice %477 {offsets = [2, 0], sizes = [2, 128], strides = [1, 1]} : vector<16x128xf32> to vector<2x128xf32>
    %cst_193 = arith.constant dense<0.000000e+00> : vector<2x128xf32>
    %501 = tpu.matmul %498, %479, %cst_193 {dimension_numbers = #tpu.dot_dimension_numbers<[1], [0], [0], [1], [0, 0, 1, 1], [], []>} : vector<2x128xf32>, vector<128x128xf32>, vector<2x128xf32> -> vector<2x128xf32>
    %502 = arith.addf %500, %501 : vector<2x128xf32>
    %503 = math.tanh %502 : vector<2x128xf32>
    %504 = arith.negf %502 : vector<2x128xf32>
    %505 = math.exp %504 : vector<2x128xf32>
    %cst_194 = arith.constant 1.000000e+00 : f32
    %506 = vector.broadcast %cst_194 : f32 to vector<2x128xf32>
    %507 = arith.addf %506, %505 : vector<2x128xf32>
    %508 = arith.divf %506, %507 : vector<2x128xf32>
    %509 = arith.select %2, %503, %508 : vector<2x128xi1>, vector<2x128xf32>
    %c64_i32_195 = arith.constant 64 : i32
    %510 = tpu.dynamic_rotate %509 by %c64_i32_195 dim 1 : vector<2x128xf32>, i32 -> vector<2x128xf32>
    %511 = arith.mulf %509, %510 : vector<2x128xf32>
    %c96_i32_196 = arith.constant 96 : i32
    %512 = tpu.dynamic_rotate %511 by %c96_i32_196 dim 1 : vector<2x128xf32>, i32 -> vector<2x128xf32>
    %513 = arith.mulf %509, %496 : vector<2x128xf32>
    %514 = arith.addf %513, %512 : vector<2x128xf32>
    %515 = math.tanh %514 : vector<2x128xf32>
    %516 = arith.mulf %510, %515 : vector<2x128xf32>
    %c2_197 = arith.constant 2 : index
    %c0_198 = arith.constant 0 : index
    %517 = vector.load %arg12[%c2_197, %c0_198] : memref<16x128xf32, #tpu.memory_space<vmem>>, vector<2x128xf32>
    tpu.vector_store %arg12[%c2_197, %c0_198], %516 {strides = array<i32>} : memref<16x128xf32, #tpu.memory_space<vmem>>, vector<2x128xf32>,
    %518 = vector.extract_strided_slice %477 {offsets = [4, 0], sizes = [2, 128], strides = [1, 1]} : vector<16x128xf32> to vector<2x128xf32>
    %cst_199 = arith.constant dense<0.000000e+00> : vector<2x128xf32>
    %519 = tpu.matmul %516, %479, %cst_199 {dimension_numbers = #tpu.dot_dimension_numbers<[1], [0], [0], [1], [0, 0, 1, 1], [], []>} : vector<2x128xf32>, vector<128x128xf32>, vector<2x128xf32> -> vector<2x128xf32>
    %520 = arith.addf %518, %519 : vector<2x128xf32>
    %521 = math.tanh %520 : vector<2x128xf32>
    %522 = arith.negf %520 : vector<2x128xf32>
    %523 = math.exp %522 : vector<2x128xf32>
    %cst_200 = arith.constant 1.000000e+00 : f32
    %524 = vector.broadcast %cst_200 : f32 to vector<2x128xf32>
    %525 = arith.addf %524, %523 : vector<2x128xf32>
    %526 = arith.divf %524, %525 : vector<2x128xf32>
    %527 = arith.select %2, %521, %526 : vector<2x128xi1>, vector<2x128xf32>
    %c64_i32_201 = arith.constant 64 : i32
    %528 = tpu.dynamic_rotate %527 by %c64_i32_201 dim 1 : vector<2x128xf32>, i32 -> vector<2x128xf32>
    %529 = arith.mulf %527, %528 : vector<2x128xf32>
    %c96_i32_202 = arith.constant 96 : i32
    %530 = tpu.dynamic_rotate %529 by %c96_i32_202 dim 1 : vector<2x128xf32>, i32 -> vector<2x128xf32>
    %531 = arith.mulf %527, %514 : vector<2x128xf32>
    %532 = arith.addf %531, %530 : vector<2x128xf32>
    %533 = math.tanh %532 : vector<2x128xf32>
    %534 = arith.mulf %528, %533 : vector<2x128xf32>
    %c4_203 = arith.constant 4 : index
    %c0_204 = arith.constant 0 : index
    %535 = vector.load %arg12[%c4_203, %c0_204] : memref<16x128xf32, #tpu.memory_space<vmem>>, vector<2x128xf32>
    tpu.vector_store %arg12[%c4_203, %c0_204], %534 {strides = array<i32>} : memref<16x128xf32, #tpu.memory_space<vmem>>, vector<2x128xf32>,
    %536 = vector.extract_strided_slice %477 {offsets = [6, 0], sizes = [2, 128], strides = [1, 1]} : vector<16x128xf32> to vector<2x128xf32>
    %cst_205 = arith.constant dense<0.000000e+00> : vector<2x128xf32>
    %537 = tpu.matmul %534, %479, %cst_205 {dimension_numbers = #tpu.dot_dimension_numbers<[1], [0], [0], [1], [0, 0, 1, 1], [], []>} : vector<2x128xf32>, vector<128x128xf32>, vector<2x128xf32> -> vector<2x128xf32>
    %538 = arith.addf %536, %537 : vector<2x128xf32>
    %539 = math.tanh %538 : vector<2x128xf32>
    %540 = arith.negf %538 : vector<2x128xf32>
    %541 = math.exp %540 : vector<2x128xf32>
    %cst_206 = arith.constant 1.000000e+00 : f32
    %542 = vector.broadcast %cst_206 : f32 to vector<2x128xf32>
    %543 = arith.addf %542, %541 : vector<2x128xf32>
    %544 = arith.divf %542, %543 : vector<2x128xf32>
    %545 = arith.select %2, %539, %544 : vector<2x128xi1>, vector<2x128xf32>
    %c64_i32_207 = arith.constant 64 : i32
    %546 = tpu.dynamic_rotate %545 by %c64_i32_207 dim 1 : vector<2x128xf32>, i32 -> vector<2x128xf32>
    %547 = arith.mulf %545, %546 : vector<2x128xf32>
    %c96_i32_208 = arith.constant 96 : i32
    %548 = tpu.dynamic_rotate %547 by %c96_i32_208 dim 1 : vector<2x128xf32>, i32 -> vector<2x128xf32>
    %549 = arith.mulf %545, %532 : vector<2x128xf32>
    %550 = arith.addf %549, %548 : vector<2x128xf32>
    %551 = math.tanh %550 : vector<2x128xf32>
    %552 = arith.mulf %546, %551 : vector<2x128xf32>
    %c6_209 = arith.constant 6 : index
    %c0_210 = arith.constant 0 : index
    %553 = vector.load %arg12[%c6_209, %c0_210] : memref<16x128xf32, #tpu.memory_space<vmem>>, vector<2x128xf32>
    tpu.vector_store %arg12[%c6_209, %c0_210], %552 {strides = array<i32>} : memref<16x128xf32, #tpu.memory_space<vmem>>, vector<2x128xf32>,
    %554 = vector.extract_strided_slice %477 {offsets = [8, 0], sizes = [2, 128], strides = [1, 1]} : vector<16x128xf32> to vector<2x128xf32>
    %cst_211 = arith.constant dense<0.000000e+00> : vector<2x128xf32>
    %555 = tpu.matmul %552, %479, %cst_211 {dimension_numbers = #tpu.dot_dimension_numbers<[1], [0], [0], [1], [0, 0, 1, 1], [], []>} : vector<2x128xf32>, vector<128x128xf32>, vector<2x128xf32> -> vector<2x128xf32>
    %556 = arith.addf %554, %555 : vector<2x128xf32>
    %557 = math.tanh %556 : vector<2x128xf32>
    %558 = arith.negf %556 : vector<2x128xf32>
    %559 = math.exp %558 : vector<2x128xf32>
    %cst_212 = arith.constant 1.000000e+00 : f32
    %560 = vector.broadcast %cst_212 : f32 to vector<2x128xf32>
    %561 = arith.addf %560, %559 : vector<2x128xf32>
    %562 = arith.divf %560, %561 : vector<2x128xf32>
    %563 = arith.select %2, %557, %562 : vector<2x128xi1>, vector<2x128xf32>
    %c64_i32_213 = arith.constant 64 : i32
    %564 = tpu.dynamic_rotate %563 by %c64_i32_213 dim 1 : vector<2x128xf32>, i32 -> vector<2x128xf32>
    %565 = arith.mulf %563, %564 : vector<2x128xf32>
    %c96_i32_214 = arith.constant 96 : i32
    %566 = tpu.dynamic_rotate %565 by %c96_i32_214 dim 1 : vector<2x128xf32>, i32 -> vector<2x128xf32>
    %567 = arith.mulf %563, %550 : vector<2x128xf32>
    %568 = arith.addf %567, %566 : vector<2x128xf32>
    %569 = math.tanh %568 : vector<2x128xf32>
    %570 = arith.mulf %564, %569 : vector<2x128xf32>
    %c8_215 = arith.constant 8 : index
    %c0_216 = arith.constant 0 : index
    %571 = vector.load %arg12[%c8_215, %c0_216] : memref<16x128xf32, #tpu.memory_space<vmem>>, vector<2x128xf32>
    tpu.vector_store %arg12[%c8_215, %c0_216], %570 {strides = array<i32>} : memref<16x128xf32, #tpu.memory_space<vmem>>, vector<2x128xf32>,
    %572 = vector.extract_strided_slice %477 {offsets = [10, 0], sizes = [2, 128], strides = [1, 1]} : vector<16x128xf32> to vector<2x128xf32>
    %cst_217 = arith.constant dense<0.000000e+00> : vector<2x128xf32>
    %573 = tpu.matmul %570, %479, %cst_217 {dimension_numbers = #tpu.dot_dimension_numbers<[1], [0], [0], [1], [0, 0, 1, 1], [], []>} : vector<2x128xf32>, vector<128x128xf32>, vector<2x128xf32> -> vector<2x128xf32>
    %574 = arith.addf %572, %573 : vector<2x128xf32>
    %575 = math.tanh %574 : vector<2x128xf32>
    %576 = arith.negf %574 : vector<2x128xf32>
    %577 = math.exp %576 : vector<2x128xf32>
    %cst_218 = arith.constant 1.000000e+00 : f32
    %578 = vector.broadcast %cst_218 : f32 to vector<2x128xf32>
    %579 = arith.addf %578, %577 : vector<2x128xf32>
    %580 = arith.divf %578, %579 : vector<2x128xf32>
    %581 = arith.select %2, %575, %580 : vector<2x128xi1>, vector<2x128xf32>
    %c64_i32_219 = arith.constant 64 : i32
    %582 = tpu.dynamic_rotate %581 by %c64_i32_219 dim 1 : vector<2x128xf32>, i32 -> vector<2x128xf32>
    %583 = arith.mulf %581, %582 : vector<2x128xf32>
    %c96_i32_220 = arith.constant 96 : i32
    %584 = tpu.dynamic_rotate %583 by %c96_i32_220 dim 1 : vector<2x128xf32>, i32 -> vector<2x128xf32>
    %585 = arith.mulf %581, %568 : vector<2x128xf32>
    %586 = arith.addf %585, %584 : vector<2x128xf32>
    %587 = math.tanh %586 : vector<2x128xf32>
    %588 = arith.mulf %582, %587 : vector<2x128xf32>
    %c10_221 = arith.constant 10 : index
    %c0_222 = arith.constant 0 : index
    %589 = vector.load %arg12[%c10_221, %c0_222] : memref<16x128xf32, #tpu.memory_space<vmem>>, vector<2x128xf32>
    tpu.vector_store %arg12[%c10_221, %c0_222], %588 {strides = array<i32>} : memref<16x128xf32, #tpu.memory_space<vmem>>, vector<2x128xf32>,
    %590 = vector.extract_strided_slice %477 {offsets = [12, 0], sizes = [2, 128], strides = [1, 1]} : vector<16x128xf32> to vector<2x128xf32>
    %cst_223 = arith.constant dense<0.000000e+00> : vector<2x128xf32>
    %591 = tpu.matmul %588, %479, %cst_223 {dimension_numbers = #tpu.dot_dimension_numbers<[1], [0], [0], [1], [0, 0, 1, 1], [], []>} : vector<2x128xf32>, vector<128x128xf32>, vector<2x128xf32> -> vector<2x128xf32>
    %592 = arith.addf %590, %591 : vector<2x128xf32>
    %593 = math.tanh %592 : vector<2x128xf32>
    %594 = arith.negf %592 : vector<2x128xf32>
    %595 = math.exp %594 : vector<2x128xf32>
    %cst_224 = arith.constant 1.000000e+00 : f32
    %596 = vector.broadcast %cst_224 : f32 to vector<2x128xf32>
    %597 = arith.addf %596, %595 : vector<2x128xf32>
    %598 = arith.divf %596, %597 : vector<2x128xf32>
    %599 = arith.select %2, %593, %598 : vector<2x128xi1>, vector<2x128xf32>
    %c64_i32_225 = arith.constant 64 : i32
    %600 = tpu.dynamic_rotate %599 by %c64_i32_225 dim 1 : vector<2x128xf32>, i32 -> vector<2x128xf32>
    %601 = arith.mulf %599, %600 : vector<2x128xf32>
    %c96_i32_226 = arith.constant 96 : i32
    %602 = tpu.dynamic_rotate %601 by %c96_i32_226 dim 1 : vector<2x128xf32>, i32 -> vector<2x128xf32>
    %603 = arith.mulf %599, %586 : vector<2x128xf32>
    %604 = arith.addf %603, %602 : vector<2x128xf32>
    %605 = math.tanh %604 : vector<2x128xf32>
    %606 = arith.mulf %600, %605 : vector<2x128xf32>
    %c12_227 = arith.constant 12 : index
    %c0_228 = arith.constant 0 : index
    %607 = vector.load %arg12[%c12_227, %c0_228] : memref<16x128xf32, #tpu.memory_space<vmem>>, vector<2x128xf32>
    tpu.vector_store %arg12[%c12_227, %c0_228], %606 {strides = array<i32>} : memref<16x128xf32, #tpu.memory_space<vmem>>, vector<2x128xf32>,
    %608 = vector.extract_strided_slice %477 {offsets = [14, 0], sizes = [2, 128], strides = [1, 1]} : vector<16x128xf32> to vector<2x128xf32>
    %cst_229 = arith.constant dense<0.000000e+00> : vector<2x128xf32>
    %609 = tpu.matmul %606, %479, %cst_229 {dimension_numbers = #tpu.dot_dimension_numbers<[1], [0], [0], [1], [0, 0, 1, 1], [], []>} : vector<2x128xf32>, vector<128x128xf32>, vector<2x128xf32> -> vector<2x128xf32>
    %610 = arith.addf %608, %609 : vector<2x128xf32>
    %611 = math.tanh %610 : vector<2x128xf32>
    %612 = arith.negf %610 : vector<2x128xf32>
    %613 = math.exp %612 : vector<2x128xf32>
    %cst_230 = arith.constant 1.000000e+00 : f32
    %614 = vector.broadcast %cst_230 : f32 to vector<2x128xf32>
    %615 = arith.addf %614, %613 : vector<2x128xf32>
    %616 = arith.divf %614, %615 : vector<2x128xf32>
    %617 = arith.select %2, %611, %616 : vector<2x128xi1>, vector<2x128xf32>
    %c64_i32_231 = arith.constant 64 : i32
    %618 = tpu.dynamic_rotate %617 by %c64_i32_231 dim 1 : vector<2x128xf32>, i32 -> vector<2x128xf32>
    %619 = arith.mulf %617, %618 : vector<2x128xf32>
    %c96_i32_232 = arith.constant 96 : i32
    %620 = tpu.dynamic_rotate %619 by %c96_i32_232 dim 1 : vector<2x128xf32>, i32 -> vector<2x128xf32>
    %621 = arith.mulf %617, %604 : vector<2x128xf32>
    %622 = arith.addf %621, %620 : vector<2x128xf32>
    %623 = math.tanh %622 : vector<2x128xf32>
    %624 = arith.mulf %618, %623 : vector<2x128xf32>
    %c14_233 = arith.constant 14 : index
    %c0_234 = arith.constant 0 : index
    %625 = vector.load %arg12[%c14_233, %c0_234] : memref<16x128xf32, #tpu.memory_space<vmem>>, vector<2x128xf32>
    tpu.vector_store %arg12[%c14_233, %c0_234], %624 {strides = array<i32>} : memref<16x128xf32, #tpu.memory_space<vmem>>, vector<2x128xf32>,
    %c0_235 = arith.constant 0 : index
    %c0_236 = arith.constant 0 : index
    %626 = vector.load %arg12[%c0_235, %c0_236] : memref<16x128xf32, #tpu.memory_space<vmem>>, vector<16x128xf32>
    %c3_237 = arith.constant 3 : index
    %c0_238 = arith.constant 0 : index
    %c0_239 = arith.constant 0 : index
    %627 = vector.load %arg3[%c3_237, %c0_238, %c0_239] : memref<4x128x128xf32, #tpu.memory_space<vmem>>, vector<1x128x128xf32>
    %628 = vector.shape_cast %627 : vector<1x128x128xf32> to vector<128x128xf32>
    %cst_240 = arith.constant dense<0.000000e+00> : vector<16x128xf32>
    %629 = tpu.matmul %626, %628, %cst_240 {dimension_numbers = #tpu.dot_dimension_numbers<[1], [0], [0], [1], [0, 0, 1, 1], [], []>} : vector<16x128xf32>, vector<128x128xf32>, vector<16x128xf32> -> vector<16x128xf32>
    %c4_241 = arith.constant 4 : index
    %c0_242 = arith.constant 0 : index
    %c0_243 = arith.constant 0 : index
    %630 = vector.load %arg5[%c4_241, %c0_242, %c0_243] : memref<5x1x128xf32, #tpu.memory_space<vmem>>, vector<1x1x128xf32>
    %631 = vector.shape_cast %630 : vector<1x1x128xf32> to vector<1x128xf32>
    %632 = vector.broadcast %631 : vector<1x128xf32> to vector<16x128xf32>
    %633 = arith.addf %629, %632 : vector<16x128xf32>
    %c4_244 = arith.constant 4 : index
    %c0_245 = arith.constant 0 : index
    %c0_246 = arith.constant 0 : index
    %634 = vector.load %arg4[%c4_244, %c0_245, %c0_246] : memref<5x128x128xf32, #tpu.memory_space<vmem>>, vector<1x128x128xf32>
    %635 = vector.shape_cast %634 : vector<1x128x128xf32> to vector<128x128xf32>
    %cst_247 = arith.constant 0.000000e+00 : f32
    %636 = vector.broadcast %cst_247 : f32 to vector<2x128xf32>
    %cst_248 = arith.constant 0.000000e+00 : f32
    %637 = vector.broadcast %cst_248 : f32 to vector<2x128xf32>
    %638 = vector.extract_strided_slice %633 {offsets = [0, 0], sizes = [2, 128], strides = [1, 1]} : vector<16x128xf32> to vector<2x128xf32>
    %cst_249 = arith.constant dense<0.000000e+00> : vector<2x128xf32>
    %639 = tpu.matmul %636, %635, %cst_249 {dimension_numbers = #tpu.dot_dimension_numbers<[1], [0], [0], [1], [0, 0, 1, 1], [], []>} : vector<2x128xf32>, vector<128x128xf32>, vector<2x128xf32> -> vector<2x128xf32>
    %640 = arith.addf %638, %639 : vector<2x128xf32>
    %641 = math.tanh %640 : vector<2x128xf32>
    %642 = arith.negf %640 : vector<2x128xf32>
    %643 = math.exp %642 : vector<2x128xf32>
    %cst_250 = arith.constant 1.000000e+00 : f32
    %644 = vector.broadcast %cst_250 : f32 to vector<2x128xf32>
    %645 = arith.addf %644, %643 : vector<2x128xf32>
    %646 = arith.divf %644, %645 : vector<2x128xf32>
    %647 = arith.select %2, %641, %646 : vector<2x128xi1>, vector<2x128xf32>
    %c64_i32_251 = arith.constant 64 : i32
    %648 = tpu.dynamic_rotate %647 by %c64_i32_251 dim 1 : vector<2x128xf32>, i32 -> vector<2x128xf32>
    %649 = arith.mulf %647, %648 : vector<2x128xf32>
    %c96_i32_252 = arith.constant 96 : i32
    %650 = tpu.dynamic_rotate %649 by %c96_i32_252 dim 1 : vector<2x128xf32>, i32 -> vector<2x128xf32>
    %651 = arith.mulf %647, %637 : vector<2x128xf32>
    %652 = arith.addf %651, %650 : vector<2x128xf32>
    %653 = math.tanh %652 : vector<2x128xf32>
    %654 = arith.mulf %648, %653 : vector<2x128xf32>
    %c0_253 = arith.constant 0 : index
    %c0_254 = arith.constant 0 : index
    %655 = vector.load %arg12[%c0_253, %c0_254] : memref<16x128xf32, #tpu.memory_space<vmem>>, vector<2x128xf32>
    tpu.vector_store %arg12[%c0_253, %c0_254], %654 {strides = array<i32>} : memref<16x128xf32, #tpu.memory_space<vmem>>, vector<2x128xf32>,
    %656 = vector.extract_strided_slice %633 {offsets = [2, 0], sizes = [2, 128], strides = [1, 1]} : vector<16x128xf32> to vector<2x128xf32>
    %cst_255 = arith.constant dense<0.000000e+00> : vector<2x128xf32>
    %657 = tpu.matmul %654, %635, %cst_255 {dimension_numbers = #tpu.dot_dimension_numbers<[1], [0], [0], [1], [0, 0, 1, 1], [], []>} : vector<2x128xf32>, vector<128x128xf32>, vector<2x128xf32> -> vector<2x128xf32>
    %658 = arith.addf %656, %657 : vector<2x128xf32>
    %659 = math.tanh %658 : vector<2x128xf32>
    %660 = arith.negf %658 : vector<2x128xf32>
    %661 = math.exp %660 : vector<2x128xf32>
    %cst_256 = arith.constant 1.000000e+00 : f32
    %662 = vector.broadcast %cst_256 : f32 to vector<2x128xf32>
    %663 = arith.addf %662, %661 : vector<2x128xf32>
    %664 = arith.divf %662, %663 : vector<2x128xf32>
    %665 = arith.select %2, %659, %664 : vector<2x128xi1>, vector<2x128xf32>
    %c64_i32_257 = arith.constant 64 : i32
    %666 = tpu.dynamic_rotate %665 by %c64_i32_257 dim 1 : vector<2x128xf32>, i32 -> vector<2x128xf32>
    %667 = arith.mulf %665, %666 : vector<2x128xf32>
    %c96_i32_258 = arith.constant 96 : i32
    %668 = tpu.dynamic_rotate %667 by %c96_i32_258 dim 1 : vector<2x128xf32>, i32 -> vector<2x128xf32>
    %669 = arith.mulf %665, %652 : vector<2x128xf32>
    %670 = arith.addf %669, %668 : vector<2x128xf32>
    %671 = math.tanh %670 : vector<2x128xf32>
    %672 = arith.mulf %666, %671 : vector<2x128xf32>
    %c2_259 = arith.constant 2 : index
    %c0_260 = arith.constant 0 : index
    %673 = vector.load %arg12[%c2_259, %c0_260] : memref<16x128xf32, #tpu.memory_space<vmem>>, vector<2x128xf32>
    tpu.vector_store %arg12[%c2_259, %c0_260], %672 {strides = array<i32>} : memref<16x128xf32, #tpu.memory_space<vmem>>, vector<2x128xf32>,
    %674 = vector.extract_strided_slice %633 {offsets = [4, 0], sizes = [2, 128], strides = [1, 1]} : vector<16x128xf32> to vector<2x128xf32>
    %cst_261 = arith.constant dense<0.000000e+00> : vector<2x128xf32>
    %675 = tpu.matmul %672, %635, %cst_261 {dimension_numbers = #tpu.dot_dimension_numbers<[1], [0], [0], [1], [0, 0, 1, 1], [], []>} : vector<2x128xf32>, vector<128x128xf32>, vector<2x128xf32> -> vector<2x128xf32>
    %676 = arith.addf %674, %675 : vector<2x128xf32>
    %677 = math.tanh %676 : vector<2x128xf32>
    %678 = arith.negf %676 : vector<2x128xf32>
    %679 = math.exp %678 : vector<2x128xf32>
    %cst_262 = arith.constant 1.000000e+00 : f32
    %680 = vector.broadcast %cst_262 : f32 to vector<2x128xf32>
    %681 = arith.addf %680, %679 : vector<2x128xf32>
    %682 = arith.divf %680, %681 : vector<2x128xf32>
    %683 = arith.select %2, %677, %682 : vector<2x128xi1>, vector<2x128xf32>
    %c64_i32_263 = arith.constant 64 : i32
    %684 = tpu.dynamic_rotate %683 by %c64_i32_263 dim 1 : vector<2x128xf32>, i32 -> vector<2x128xf32>
    %685 = arith.mulf %683, %684 : vector<2x128xf32>
    %c96_i32_264 = arith.constant 96 : i32
    %686 = tpu.dynamic_rotate %685 by %c96_i32_264 dim 1 : vector<2x128xf32>, i32 -> vector<2x128xf32>
    %687 = arith.mulf %683, %670 : vector<2x128xf32>
    %688 = arith.addf %687, %686 : vector<2x128xf32>
    %689 = math.tanh %688 : vector<2x128xf32>
    %690 = arith.mulf %684, %689 : vector<2x128xf32>
    %c4_265 = arith.constant 4 : index
    %c0_266 = arith.constant 0 : index
    %691 = vector.load %arg12[%c4_265, %c0_266] : memref<16x128xf32, #tpu.memory_space<vmem>>, vector<2x128xf32>
    tpu.vector_store %arg12[%c4_265, %c0_266], %690 {strides = array<i32>} : memref<16x128xf32, #tpu.memory_space<vmem>>, vector<2x128xf32>,
    %692 = vector.extract_strided_slice %633 {offsets = [6, 0], sizes = [2, 128], strides = [1, 1]} : vector<16x128xf32> to vector<2x128xf32>
    %cst_267 = arith.constant dense<0.000000e+00> : vector<2x128xf32>
    %693 = tpu.matmul %690, %635, %cst_267 {dimension_numbers = #tpu.dot_dimension_numbers<[1], [0], [0], [1], [0, 0, 1, 1], [], []>} : vector<2x128xf32>, vector<128x128xf32>, vector<2x128xf32> -> vector<2x128xf32>
    %694 = arith.addf %692, %693 : vector<2x128xf32>
    %695 = math.tanh %694 : vector<2x128xf32>
    %696 = arith.negf %694 : vector<2x128xf32>
    %697 = math.exp %696 : vector<2x128xf32>
    %cst_268 = arith.constant 1.000000e+00 : f32
    %698 = vector.broadcast %cst_268 : f32 to vector<2x128xf32>
    %699 = arith.addf %698, %697 : vector<2x128xf32>
    %700 = arith.divf %698, %699 : vector<2x128xf32>
    %701 = arith.select %2, %695, %700 : vector<2x128xi1>, vector<2x128xf32>
    %c64_i32_269 = arith.constant 64 : i32
    %702 = tpu.dynamic_rotate %701 by %c64_i32_269 dim 1 : vector<2x128xf32>, i32 -> vector<2x128xf32>
    %703 = arith.mulf %701, %702 : vector<2x128xf32>
    %c96_i32_270 = arith.constant 96 : i32
    %704 = tpu.dynamic_rotate %703 by %c96_i32_270 dim 1 : vector<2x128xf32>, i32 -> vector<2x128xf32>
    %705 = arith.mulf %701, %688 : vector<2x128xf32>
    %706 = arith.addf %705, %704 : vector<2x128xf32>
    %707 = math.tanh %706 : vector<2x128xf32>
    %708 = arith.mulf %702, %707 : vector<2x128xf32>
    %c6_271 = arith.constant 6 : index
    %c0_272 = arith.constant 0 : index
    %709 = vector.load %arg12[%c6_271, %c0_272] : memref<16x128xf32, #tpu.memory_space<vmem>>, vector<2x128xf32>
    tpu.vector_store %arg12[%c6_271, %c0_272], %708 {strides = array<i32>} : memref<16x128xf32, #tpu.memory_space<vmem>>, vector<2x128xf32>,
    %710 = vector.extract_strided_slice %633 {offsets = [8, 0], sizes = [2, 128], strides = [1, 1]} : vector<16x128xf32> to vector<2x128xf32>
    %cst_273 = arith.constant dense<0.000000e+00> : vector<2x128xf32>
    %711 = tpu.matmul %708, %635, %cst_273 {dimension_numbers = #tpu.dot_dimension_numbers<[1], [0], [0], [1], [0, 0, 1, 1], [], []>} : vector<2x128xf32>, vector<128x128xf32>, vector<2x128xf32> -> vector<2x128xf32>
    %712 = arith.addf %710, %711 : vector<2x128xf32>
    %713 = math.tanh %712 : vector<2x128xf32>
    %714 = arith.negf %712 : vector<2x128xf32>
    %715 = math.exp %714 : vector<2x128xf32>
    %cst_274 = arith.constant 1.000000e+00 : f32
    %716 = vector.broadcast %cst_274 : f32 to vector<2x128xf32>
    %717 = arith.addf %716, %715 : vector<2x128xf32>
    %718 = arith.divf %716, %717 : vector<2x128xf32>
    %719 = arith.select %2, %713, %718 : vector<2x128xi1>, vector<2x128xf32>
    %c64_i32_275 = arith.constant 64 : i32
    %720 = tpu.dynamic_rotate %719 by %c64_i32_275 dim 1 : vector<2x128xf32>, i32 -> vector<2x128xf32>
    %721 = arith.mulf %719, %720 : vector<2x128xf32>
    %c96_i32_276 = arith.constant 96 : i32
    %722 = tpu.dynamic_rotate %721 by %c96_i32_276 dim 1 : vector<2x128xf32>, i32 -> vector<2x128xf32>
    %723 = arith.mulf %719, %706 : vector<2x128xf32>
    %724 = arith.addf %723, %722 : vector<2x128xf32>
    %725 = math.tanh %724 : vector<2x128xf32>
    %726 = arith.mulf %720, %725 : vector<2x128xf32>
    %c8_277 = arith.constant 8 : index
    %c0_278 = arith.constant 0 : index
    %727 = vector.load %arg12[%c8_277, %c0_278] : memref<16x128xf32, #tpu.memory_space<vmem>>, vector<2x128xf32>
    tpu.vector_store %arg12[%c8_277, %c0_278], %726 {strides = array<i32>} : memref<16x128xf32, #tpu.memory_space<vmem>>, vector<2x128xf32>,
    %728 = vector.extract_strided_slice %633 {offsets = [10, 0], sizes = [2, 128], strides = [1, 1]} : vector<16x128xf32> to vector<2x128xf32>
    %cst_279 = arith.constant dense<0.000000e+00> : vector<2x128xf32>
    %729 = tpu.matmul %726, %635, %cst_279 {dimension_numbers = #tpu.dot_dimension_numbers<[1], [0], [0], [1], [0, 0, 1, 1], [], []>} : vector<2x128xf32>, vector<128x128xf32>, vector<2x128xf32> -> vector<2x128xf32>
    %730 = arith.addf %728, %729 : vector<2x128xf32>
    %731 = math.tanh %730 : vector<2x128xf32>
    %732 = arith.negf %730 : vector<2x128xf32>
    %733 = math.exp %732 : vector<2x128xf32>
    %cst_280 = arith.constant 1.000000e+00 : f32
    %734 = vector.broadcast %cst_280 : f32 to vector<2x128xf32>
    %735 = arith.addf %734, %733 : vector<2x128xf32>
    %736 = arith.divf %734, %735 : vector<2x128xf32>
    %737 = arith.select %2, %731, %736 : vector<2x128xi1>, vector<2x128xf32>
    %c64_i32_281 = arith.constant 64 : i32
    %738 = tpu.dynamic_rotate %737 by %c64_i32_281 dim 1 : vector<2x128xf32>, i32 -> vector<2x128xf32>
    %739 = arith.mulf %737, %738 : vector<2x128xf32>
    %c96_i32_282 = arith.constant 96 : i32
    %740 = tpu.dynamic_rotate %739 by %c96_i32_282 dim 1 : vector<2x128xf32>, i32 -> vector<2x128xf32>
    %741 = arith.mulf %737, %724 : vector<2x128xf32>
    %742 = arith.addf %741, %740 : vector<2x128xf32>
    %743 = math.tanh %742 : vector<2x128xf32>
    %744 = arith.mulf %738, %743 : vector<2x128xf32>
    %c10_283 = arith.constant 10 : index
    %c0_284 = arith.constant 0 : index
    %745 = vector.load %arg12[%c10_283, %c0_284] : memref<16x128xf32, #tpu.memory_space<vmem>>, vector<2x128xf32>
    tpu.vector_store %arg12[%c10_283, %c0_284], %744 {strides = array<i32>} : memref<16x128xf32, #tpu.memory_space<vmem>>, vector<2x128xf32>,
    %746 = vector.extract_strided_slice %633 {offsets = [12, 0], sizes = [2, 128], strides = [1, 1]} : vector<16x128xf32> to vector<2x128xf32>
    %cst_285 = arith.constant dense<0.000000e+00> : vector<2x128xf32>
    %747 = tpu.matmul %744, %635, %cst_285 {dimension_numbers = #tpu.dot_dimension_numbers<[1], [0], [0], [1], [0, 0, 1, 1], [], []>} : vector<2x128xf32>, vector<128x128xf32>, vector<2x128xf32> -> vector<2x128xf32>
    %748 = arith.addf %746, %747 : vector<2x128xf32>
    %749 = math.tanh %748 : vector<2x128xf32>
    %750 = arith.negf %748 : vector<2x128xf32>
    %751 = math.exp %750 : vector<2x128xf32>
    %cst_286 = arith.constant 1.000000e+00 : f32
    %752 = vector.broadcast %cst_286 : f32 to vector<2x128xf32>
    %753 = arith.addf %752, %751 : vector<2x128xf32>
    %754 = arith.divf %752, %753 : vector<2x128xf32>
    %755 = arith.select %2, %749, %754 : vector<2x128xi1>, vector<2x128xf32>
    %c64_i32_287 = arith.constant 64 : i32
    %756 = tpu.dynamic_rotate %755 by %c64_i32_287 dim 1 : vector<2x128xf32>, i32 -> vector<2x128xf32>
    %757 = arith.mulf %755, %756 : vector<2x128xf32>
    %c96_i32_288 = arith.constant 96 : i32
    %758 = tpu.dynamic_rotate %757 by %c96_i32_288 dim 1 : vector<2x128xf32>, i32 -> vector<2x128xf32>
    %759 = arith.mulf %755, %742 : vector<2x128xf32>
    %760 = arith.addf %759, %758 : vector<2x128xf32>
    %761 = math.tanh %760 : vector<2x128xf32>
    %762 = arith.mulf %756, %761 : vector<2x128xf32>
    %c12_289 = arith.constant 12 : index
    %c0_290 = arith.constant 0 : index
    %763 = vector.load %arg12[%c12_289, %c0_290] : memref<16x128xf32, #tpu.memory_space<vmem>>, vector<2x128xf32>
    tpu.vector_store %arg12[%c12_289, %c0_290], %762 {strides = array<i32>} : memref<16x128xf32, #tpu.memory_space<vmem>>, vector<2x128xf32>,
    %764 = vector.extract_strided_slice %633 {offsets = [14, 0], sizes = [2, 128], strides = [1, 1]} : vector<16x128xf32> to vector<2x128xf32>
    %cst_291 = arith.constant dense<0.000000e+00> : vector<2x128xf32>
    %765 = tpu.matmul %762, %635, %cst_291 {dimension_numbers = #tpu.dot_dimension_numbers<[1], [0], [0], [1], [0, 0, 1, 1], [], []>} : vector<2x128xf32>, vector<128x128xf32>, vector<2x128xf32> -> vector<2x128xf32>
    %766 = arith.addf %764, %765 : vector<2x128xf32>
    %767 = math.tanh %766 : vector<2x128xf32>
    %768 = arith.negf %766 : vector<2x128xf32>
    %769 = math.exp %768 : vector<2x128xf32>
    %cst_292 = arith.constant 1.000000e+00 : f32
    %770 = vector.broadcast %cst_292 : f32 to vector<2x128xf32>
    %771 = arith.addf %770, %769 : vector<2x128xf32>
    %772 = arith.divf %770, %771 : vector<2x128xf32>
    %773 = arith.select %2, %767, %772 : vector<2x128xi1>, vector<2x128xf32>
    %c64_i32_293 = arith.constant 64 : i32
    %774 = tpu.dynamic_rotate %773 by %c64_i32_293 dim 1 : vector<2x128xf32>, i32 -> vector<2x128xf32>
    %775 = arith.mulf %773, %774 : vector<2x128xf32>
    %c96_i32_294 = arith.constant 96 : i32
    %776 = tpu.dynamic_rotate %775 by %c96_i32_294 dim 1 : vector<2x128xf32>, i32 -> vector<2x128xf32>
    %777 = arith.mulf %773, %760 : vector<2x128xf32>
    %778 = arith.addf %777, %776 : vector<2x128xf32>
    %779 = math.tanh %778 : vector<2x128xf32>
    %780 = arith.mulf %774, %779 : vector<2x128xf32>
    %c14_295 = arith.constant 14 : index
    %c0_296 = arith.constant 0 : index
    %781 = vector.load %arg12[%c14_295, %c0_296] : memref<16x128xf32, #tpu.memory_space<vmem>>, vector<2x128xf32>
    tpu.vector_store %arg12[%c14_295, %c0_296], %780 {strides = array<i32>} : memref<16x128xf32, #tpu.memory_space<vmem>>, vector<2x128xf32>,
    %c0_297 = arith.constant 0 : index
    %c0_298 = arith.constant 0 : index
    %782 = vector.load %arg12[%c0_297, %c0_298] : memref<16x128xf32, #tpu.memory_space<vmem>>, vector<14x128xf32>
    %c2_299 = arith.constant 2 : index
    %c0_300 = arith.constant 0 : index
    %783 = vector.load %arg1[%c2_299, %c0_300] : memref<16x32xf32, #tpu.memory_space<vmem>>, vector<14x32xf32>
    %c0_301 = arith.constant 0 : index
    %c0_302 = arith.constant 0 : index
    %784 = vector.load %arg6[%c0_301, %c0_302] : memref<128x64xf32, #tpu.memory_space<vmem>>, vector<128x64xf32>
    %cst_303 = arith.constant dense<0.000000e+00> : vector<14x64xf32>
    %785 = tpu.matmul %782, %784, %cst_303 {dimension_numbers = #tpu.dot_dimension_numbers<[1], [0], [0], [1], [0, 0, 1, 1], [], []>} : vector<14x128xf32>, vector<128x64xf32>, vector<14x64xf32> -> vector<14x64xf32>
    %c0_304 = arith.constant 0 : index
    %c0_305 = arith.constant 0 : index
    %786 = vector.load %arg7[%c0_304, %c0_305] : memref<32x64xf32, #tpu.memory_space<vmem>>, vector<32x64xf32>
    %cst_306 = arith.constant dense<0.000000e+00> : vector<14x64xf32>
    %787 = tpu.matmul %783, %786, %cst_306 {dimension_numbers = #tpu.dot_dimension_numbers<[1], [0], [0], [1], [0, 0, 1, 1], [], []>} : vector<14x32xf32>, vector<32x64xf32>, vector<14x64xf32> -> vector<14x64xf32>
    %788 = arith.addf %785, %787 : vector<14x64xf32>
    %c0_307 = arith.constant 0 : index
    %c0_308 = arith.constant 0 : index
    %789 = vector.load %arg8[%c0_307, %c0_308] : memref<1x64xf32, #tpu.memory_space<vmem>>, vector<1x64xf32>
    %790 = vector.broadcast %789 : vector<1x64xf32> to vector<14x64xf32>
    %791 = arith.addf %788, %790 : vector<14x64xf32>
    %cst_309 = arith.constant 0.000000e+00 : f32
    %792 = vector.broadcast %cst_309 : f32 to vector<14x64xf32>
    %793 = arith.maximumf %791, %792 : vector<14x64xf32>
    %c0_310 = arith.constant 0 : index
    %c0_311 = arith.constant 0 : index
    %794 = vector.load %arg9[%c0_310, %c0_311] : memref<64x32xf32, #tpu.memory_space<vmem>>, vector<64x32xf32>
    %cst_312 = arith.constant dense<0.000000e+00> : vector<14x32xf32>
    %795 = tpu.matmul %793, %794, %cst_312 {dimension_numbers = #tpu.dot_dimension_numbers<[1], [0], [0], [1], [0, 0, 1, 1], [], []>} : vector<14x64xf32>, vector<64x32xf32>, vector<14x32xf32> -> vector<14x32xf32>
    %c0_313 = arith.constant 0 : index
    %c0_314 = arith.constant 0 : index
    %796 = vector.load %arg10[%c0_313, %c0_314] : memref<1x32xf32, #tpu.memory_space<vmem>>, vector<1x32xf32>
    %797 = vector.broadcast %796 : vector<1x32xf32> to vector<14x32xf32>
    %798 = arith.addf %795, %797 : vector<14x32xf32>
    %799 = arith.negf %798 : vector<14x32xf32>
    %800 = math.exp %799 : vector<14x32xf32>
    %cst_315 = arith.constant 1.000000e+00 : f32
    %801 = vector.broadcast %cst_315 : f32 to vector<14x32xf32>
    %802 = arith.addf %801, %800 : vector<14x32xf32>
    %803 = arith.divf %801, %802 : vector<14x32xf32>
    %c0_316 = arith.constant 0 : index
    %c0_317 = arith.constant 0 : index
    %804 = vector.load %arg11[%c0_316, %c0_317] : memref<14x32xf32, #tpu.memory_space<vmem>>, vector<14x32xf32>
    tpu.vector_store %arg11[%c0_316, %c0_317], %803 {strides = array<i32>} : memref<14x32xf32, #tpu.memory_space<vmem>>, vector<14x32xf32>,
    return
  }
}

</mosaic_0001>

<llo_original>
// kernel: gnn4kt_forward.1
$region0: #{gnn4kt_forward.1}
  #allocation0 [shape = 'u32[]', space=smem, size = 0x4, offset = 0x4, fixed_abs, tag = 'smem constant byte address 0x4 - core index']
  #allocation1 [shape = 'u32[144,128]{1,0:T(1,128)}', space=vmem, size = 0x12000, scoped, tag = 'internal scratch']
  #allocation2 [shape = 'f32[16,128]{1,0:T(8,128)}', space=vmem, size = 0x2000, scoped, tag = 'scratch operand']
  %s0 = inlined_call_operand.vmem [shape: f32[16,32], index: 0, kind: input, shape index: {}]
  %s1 = inlined_call_operand.vmem [shape: f32[16,32], index: 1, kind: input, shape index: {}]
  %s2 = inlined_call_operand.vmem [shape: f32[32,128], index: 2, kind: input, shape index: {}]
  %s3 = inlined_call_operand.hbm [shape: f32[4,128,128], index: 3, kind: input, shape index: {}]
  %s4 = inlined_call_operand.vmem [shape: f32[5,128,128], index: 4, kind: input, shape index: {}]
  %s5 = inlined_call_operand.vmem [shape: f32[5,1,128], index: 5, kind: input, shape index: {}]
  %s6 = inlined_call_operand.vmem [shape: f32[128,64], index: 6, kind: input, shape index: {}]
  %s7 = inlined_call_operand.vmem [shape: f32[32,64], index: 7, kind: input, shape index: {}]
  %s8 = inlined_call_operand.vmem [shape: f32[1,64], index: 8, kind: input, shape index: {}]
  %s9 = inlined_call_operand.vmem [shape: f32[64,32], index: 9, kind: input, shape index: {}]
  %s10 = inlined_call_operand.vmem [shape: f32[1,32], index: 10, kind: input, shape index: {}]
  %s11 = inlined_call_operand.vmem [shape: f32[14,32], index: 11, kind: output, shape index: {}]
  %s12 = sld [smem:[#allocation0]]
  $region58: #{gnn4kt_forward.1} parent=0
    _
  %s14 = ssub.s32 1, %s12
  %s15 = scalar_select 0, %s14, %s12
  $region1: #{gnn4kt_forward.1} parent=0
    #allocation3 [shape = 'u8[262144]{0}', space=vmem, size = 0x40000, scoped, tag = 'input window, operand 3, single buffered']
    #allocation4 [shape = 's32[1]{0}', space=sflag, size = 0x4, scoped, tag = 'scoped memory for gnn4kt_forward.1']
    %16 = vsyncpa [#allocation4], 0
    // Predicated region
    $region2: #{gnn4kt_forward.1} parent=1 // pred_check
      _
    $region3: #{gnn4kt_forward.1} parent=1 // pred_check_branch
      %18 = sbr.rel (0) target = $region5
    $region4: #{gnn4kt_forward.1} parent=1 // pred_region
      _
    $region5: #{gnn4kt_forward.1} parent=1 // pred_fallthru
      _
    // Predicated region
    $region6: #{gnn4kt_forward.1} parent=1 // pred_check
      _
    $region7: #{gnn4kt_forward.1} parent=1 // pred_check_branch
      %20 = sbr.rel (0) target = $region9
    $region8: #{gnn4kt_forward.1} parent=1 // pred_region
      _
    $region9: #{gnn4kt_forward.1} parent=1 // pred_fallthru
      _
    // Predicated region
    $region10: #{gnn4kt_forward.1} parent=1 // pred_check
      _
    $region11: #{gnn4kt_forward.1} parent=1 // pred_check_branch
      %22 = sbr.rel (0) target = $region13
    $region12: #{gnn4kt_forward.1} parent=1 // pred_region
      _
    $region13: #{gnn4kt_forward.1} parent=1 // pred_fallthru
      _
    // Predicated region
    $region14: #{gnn4kt_forward.1} parent=1 // pred_check
      _
    $region15: #{gnn4kt_forward.1} parent=1 // pred_check_branch
      %24 = sbr.rel (0) target = $region17
    $region16: #{gnn4kt_forward.1} parent=1 // pred_region
      %s26 = ssub.s32 8192, 8192
      %27 = vsyncadd [#allocation4], %s26
      %s28 = sshll.u32 [#allocation3], 4
      %s29 = int_to_ptr.vmem [resolvable:$true] %s28
      %34 = dma.hbm_to_vmem [thread:$0]  %s3, 8192, %s29, [#allocation4], 128, 128, 8
    $region17: #{gnn4kt_forward.1} parent=1 // pred_fallthru
      _
    // Predicated region
    $region18: #{gnn4kt_forward.1} parent=1 // pred_check
      _
    $region19: #{gnn4kt_forward.1} parent=1 // pred_check_branch
      %36 = sbr.rel (0) target = $region21
    $region20: #{gnn4kt_forward.1} parent=1 // pred_region
      _
    $region21: #{gnn4kt_forward.1} parent=1 // pred_fallthru
      _
    // Predicated region
    $region22: #{gnn4kt_forward.1} parent=1 // pred_check
      _
    $region23: #{gnn4kt_forward.1} parent=1 // pred_check_branch
      %38 = sbr.rel (0) target = $region25
    $region24: #{gnn4kt_forward.1} parent=1 // pred_region
      _
    $region25: #{gnn4kt_forward.1} parent=1 // pred_fallthru
      _
    // Predicated region
    $region26: #{gnn4kt_forward.1} parent=1 // pred_check
      _
    $region27: #{gnn4kt_forward.1} parent=1 // pred_check_branch
      %40 = sbr.rel (0) target = $region29
    $region28: #{gnn4kt_forward.1} parent=1 // pred_region
      _
    $region29: #{gnn4kt_forward.1} parent=1 // pred_fallthru
      _
    // Predicated region
    $region30: #{gnn4kt_forward.1} parent=1 // pred_check
      _
    $region31: #{gnn4kt_forward.1} parent=1 // pred_check_branch
      %42 = sbr.rel (0) target = $region33
    $region32: #{gnn4kt_forward.1} parent=1 // pred_region
      _
    $region33: #{gnn4kt_forward.1} parent=1 // pred_fallthru
      _
    // Predicated region
    $region34: #{gnn4kt_forward.1} parent=1 // pred_check
      _
    $region35: #{gnn4kt_forward.1} parent=1 // pred_check_branch
      %44 = sbr.rel (0) target = $region37
    $region36: #{gnn4kt_forward.1} parent=1 // pred_region
      _
    $region37: #{gnn4kt_forward.1} parent=1 // pred_fallthru
      _
    // Predicated region
    $region38: #{gnn4kt_forward.1} parent=1 // pred_check
      _
    $region39: #{gnn4kt_forward.1} parent=1 // pred_check_branch
      %46 = sbr.rel (0) target = $region41
    $region40: #{gnn4kt_forward.1} parent=1 // pred_region
      _
    $region41: #{gnn4kt_forward.1} parent=1 // pred_fallthru
      _
    // Predicated region
    $region42: #{gnn4kt_forward.1} parent=1 // pred_check
      _
    $region43: #{gnn4kt_forward.1} parent=1 // pred_check_branch
      %48 = sbr.rel (0) target = $region45
    $region44: #{gnn4kt_forward.1} parent=1 // pred_region
      _
    $region45: #{gnn4kt_forward.1} parent=1 // pred_fallthru
      _
    // Predicated region
    $region46: #{gnn4kt_forward.1} parent=1 // pred_check
      _
    $region47: #{gnn4kt_forward.1} parent=1 // pred_check_branch
      %50 = sbr.rel (0) target = $region49
    $region48: #{gnn4kt_forward.1} parent=1 // pred_region
      %51 = dma.done [#allocation4], 8192
    $region49: #{gnn4kt_forward.1} parent=1 // pred_fallthru
      _
    %v52 = vlaneseq
    %v53 = vand.u32 %v52, 127
    %vm54 = vcmp.ge.s32.totalorder %v53, 96
    %v55 = vld [vmem:[%s0] sm:$0xff]
    %v56 = vld [vmem:[%s0 + $0x8] sm:$0xff]
    %v57 = vld [vmem:[%s2] sm:$0xff]
    %v58 = vld [vmem:[%s2 + $0x8] sm:$0xff]
    %v59 = vld [vmem:[%s2 + $0x10] sm:$0xff]
    %v60 = vld [vmem:[%s2 + $0x18] sm:$0xff]
    %v61 = vld [vmem:[%s5] sm:$0x1]
    %v63 = vlaneseq
    %v64 = vshrl.u32 %v63, 7
    %v65 = vsub.s32 0, %v64
    %v66 = vrot.slane %v61, %v65
    %vm68 = vcmask 261120
    %v70 = vsel %vm68, %v55, 0
    %v73 = vsel %vm68, %v56, 0
    %75 = vmatprep.subr.mxu0 0.0
    %76 = vmatpush1.msra.mxu0 0.0
    %77 = vmatprep.subr.mxu0 0.0
    %78 = vmatpush1.msra.mxu0 0.0
    %79 = vmatprep.subr.mxu0 0.0
    %80 = vmatpush1.msra.mxu0 0.0
    %81 = vmatprep.subr.mxu0 0.0
    %82 = vmatpush1.msra.mxu0 0.0
    %83 = vmatprep.subr.mxu0 0.0
    %84 = vmatpush1.msra.mxu0 0.0
    %85 = vmatprep.subr.mxu0 0.0
    %86 = vmatpush1.msra.mxu0 0.0
    %87 = vmatprep.subr.mxu0 0.0
    %88 = vmatpush1.msra.mxu0 0.0
    %89 = vmatprep.subr.mxu0 0.0
    %90 = vmatpush1.msra.mxu0 0.0
    %91 = vmatprep.subr.mxu0 0.0
    %92 = vmatpush1.msra.mxu0 0.0
    %93 = vmatprep.subr.mxu0 0.0
    %94 = vmatpush1.msra.mxu0 0.0
    %95 = vmatprep.subr.mxu0 0.0
    %96 = vmatpush1.msra.mxu0 0.0
    %97 = vmatprep.subr.mxu0 0.0
    %98 = vmatpush1.msra.mxu0 0.0
    %99 = vmatprep.subr.mxu0 0.0
    %100 = vmatpush1.msra.mxu0 %v60
    %101 = vmatprep.subr.mxu0 0.0
    %102 = vmatpush1.msra.mxu0 %v59
    %103 = vmatprep.subr.mxu0 0.0
    %104 = vmatpush1.msra.mxu0 %v58
    %105 = vmatprep.subr.mxu0 0.0
    %106 = vmatpush1.msra.mxu0 %v57
    %107 = vmatprep.subr.mxu0 0.0
    %108 = vmatpush2.msra.mxu0 0.0
    %109 = vmatprep.subr.mxu0 0.0
    %110 = vmatpush2.msra.mxu0 0.0
    %111 = vmatprep.subr.mxu0 0.0
    %112 = vmatpush2.msra.mxu0 0.0
    %113 = vmatprep.subr.mxu0 0.0
    %114 = vmatpush2.msra.mxu0 0.0
    %115 = vmatprep.subr.mxu0 0.0
    %116 = vmatpush2.msra.mxu0 0.0
    %117 = vmatprep.subr.mxu0 0.0
    %118 = vmatpush2.msra.mxu0 0.0
    %119 = vmatprep.subr.mxu0 0.0
    %120 = vmatpush2.msra.mxu0 0.0
    %121 = vmatprep.subr.mxu0 0.0
    %122 = vmatpush2.msra.mxu0 0.0
    %123 = vmatprep.subr.mxu0 0.0
    %124 = vmatpush2.msra.mxu0 0.0
    %125 = vmatprep.subr.mxu0 0.0
    %126 = vmatpush2.msra.mxu0 0.0
    %127 = vmatprep.subr.mxu0 0.0
    %128 = vmatpush2.msra.mxu0 0.0
    %129 = vmatprep.subr.mxu0 0.0
    %130 = vmatpush2.msra.mxu0 0.0
    %131 = vmatprep.subr.mxu0 0.0
    %132 = vmatpush2.msra.mxu0 0.0
    %133 = vmatprep.subr.mxu0 0.0
    %134 = vmatpush2.msra.mxu0 0.0
    %135 = vmatprep.subr.mxu0 0.0
    %136 = vmatpush2.msra.mxu0 0.0
    %137 = vmatprep.subr.mxu0 0.0
    %138 = vmatpush2.msra.mxu0 0.0
    %139 = vmatprep.mubr.f32.mxu0 0.0
    %140 = vmatmul.mubr.f32.gmra.mxu0 %v70
    %v141 = vpop.f32.mrf.mxu0
    %v142 = vadd.f32 %v66, %v141
    %v143 = vpop.f32.mrf.mxu0
    %144 = vmatprep.mubr.f32.mxu0 0.0
    %145 = vmatmul.mubr.f32.gmra.mxu0 %v73
    %v146 = vpop.f32.mrf.mxu0
    %v147 = vadd.f32 %v66, %v146
    %v148 = vpop.f32.mrf.mxu0
    %149 = vdwg.mxu0
    %v150 = vld [vmem:[%s4] sm:$0xff]
    %v151 = vld [vmem:[%s4 + $0x8] sm:$0xff]
    %v152 = vld [vmem:[%s4 + $0x10] sm:$0xff]
    %v153 = vld [vmem:[%s4 + $0x18] sm:$0xff]
    %v154 = vld [vmem:[%s4 + $0x20] sm:$0xff]
    %v155 = vld [vmem:[%s4 + $0x28] sm:$0xff]
    %v156 = vld [vmem:[%s4 + $0x30] sm:$0xff]
    %v157 = vld [vmem:[%s4 + $0x38] sm:$0xff]
    %v158 = vld [vmem:[%s4 + $0x40] sm:$0xff]
    %v159 = vld [vmem:[%s4 + $0x48] sm:$0xff]
    %v160 = vld [vmem:[%s4 + $0x50] sm:$0xff]
    %v161 = vld [vmem:[%s4 + $0x58] sm:$0xff]
    %v162 = vld [vmem:[%s4 + $0x60] sm:$0xff]
    %v163 = vld [vmem:[%s4 + $0x68] sm:$0xff]
    %v164 = vld [vmem:[%s4 + $0x70] sm:$0xff]
    %v165 = vld [vmem:[%s4 + $0x78] sm:$0xff]
    %166 = vmatprep.subr.mxu0 0.0
    %167 = vmatpush1.msra.mxu0 %v165
    %168 = vmatprep.subr.mxu0 0.0
    %169 = vmatpush1.msra.mxu0 %v164
    %170 = vmatprep.subr.mxu0 0.0
    %171 = vmatpush1.msra.mxu0 %v163
    %172 = vmatprep.subr.mxu0 0.0
    %173 = vmatpush1.msra.mxu0 %v162
    %174 = vmatprep.subr.mxu0 0.0
    %175 = vmatpush1.msra.mxu0 %v161
    %176 = vmatprep.subr.mxu0 0.0
    %177 = vmatpush1.msra.mxu0 %v160
    %178 = vmatprep.subr.mxu0 0.0
    %179 = vmatpush1.msra.mxu0 %v159
    %180 = vmatprep.subr.mxu0 0.0
    %181 = vmatpush1.msra.mxu0 %v158
    %182 = vmatprep.subr.mxu0 0.0
    %183 = vmatpush1.msra.mxu0 %v157
    %184 = vmatprep.subr.mxu0 0.0
    %185 = vmatpush1.msra.mxu0 %v156
    %186 = vmatprep.subr.mxu0 0.0
    %187 = vmatpush1.msra.mxu0 %v155
    %188 = vmatprep.subr.mxu0 0.0
    %189 = vmatpush1.msra.mxu0 %v154
    %190 = vmatprep.subr.mxu0 0.0
    %191 = vmatpush1.msra.mxu0 %v153
    %192 = vmatprep.subr.mxu0 0.0
    %193 = vmatpush1.msra.mxu0 %v152
    %194 = vmatprep.subr.mxu0 0.0
    %195 = vmatpush1.msra.mxu0 %v151
    %196 = vmatprep.subr.mxu0 0.0
    %197 = vmatpush1.msra.mxu0 %v150
    %198 = vmatprep.subr.mxu0 0.0
    %199 = vmatpush2.msra.mxu0 0.0
    %200 = vmatprep.subr.mxu0 0.0
    %201 = vmatpush2.msra.mxu0 0.0
    %202 = vmatprep.subr.mxu0 0.0
    %203 = vmatpush2.msra.mxu0 0.0
    %204 = vmatprep.subr.mxu0 0.0
    %205 = vmatpush2.msra.mxu0 0.0
    %206 = vmatprep.subr.mxu0 0.0
    %207 = vmatpush2.msra.mxu0 0.0
    %208 = vmatprep.subr.mxu0 0.0
    %209 = vmatpush2.msra.mxu0 0.0
    %210 = vmatprep.subr.mxu0 0.0
    %211 = vmatpush2.msra.mxu0 0.0
    %212 = vmatprep.subr.mxu0 0.0
    %213 = vmatpush2.msra.mxu0 0.0
    %214 = vmatprep.subr.mxu0 0.0
    %215 = vmatpush2.msra.mxu0 0.0
    %216 = vmatprep.subr.mxu0 0.0
    %217 = vmatpush2.msra.mxu0 0.0
    %218 = vmatprep.subr.mxu0 0.0
    %219 = vmatpush2.msra.mxu0 0.0
    %220 = vmatprep.subr.mxu0 0.0
    %221 = vmatpush2.msra.mxu0 0.0
    %222 = vmatprep.subr.mxu0 0.0
    %223 = vmatpush2.msra.mxu0 0.0
    %224 = vmatprep.subr.mxu0 0.0
    %225 = vmatpush2.msra.mxu0 0.0
    %226 = vmatprep.subr.mxu0 0.0
    %227 = vmatpush2.msra.mxu0 0.0
    %228 = vmatprep.subr.mxu0 0.0
    %229 = vmatpush2.msra.mxu0 0.0
    %230 = vmatprep.mubr.f32.mxu0 0.0
    %231 = vmatmul.mubr.f32.gmra.mxu0 0.0
    %v232 = vpop.f32.mrf.mxu0
    %v233 = vadd.f32 0.0, %v232
    %v234 = vpop.f32.mrf.mxu0
    %235 = vdwg.mxu0
    %v236 = vadd.f32 %v142, %v233
    %v237 = vtanh.pop %v236
    %v238 = vxor.u32 %v236, 2147483648
    %v239 = vmul.f32 %v238, 1.442695
    %v240 = vpow.pop %v239
    %v241 = vadd.f32 %v240, 1.0
    %v242 = vrcp.pop %v241
    %v243 = vmul.f32 1.0, %v242
    %v244 = vsel %vm54, %v237, %v243
    %245 = vrot.lane.b32.xlu0 %v244, 64
    %v246 = vpop.permute.xlu0 %245
    %v247 = vmul.f32 %v244, %v246
    %248 = vrot.lane.b32.xlu0 %v247, 96
    %v249 = vpop.permute.xlu0 %248
    %v250 = vmul.f32 %v244, 0.0
    %v251 = vadd.f32 %v250, %v249
    %v252 = vtanh.pop %v251
    %v253 = vmul.f32 %v246, %v252
    %254 = vst [vmem:[#allocation2] sm:$0x3] %v253
    %255 = vmatprep.subr.mxu0 0.0
    %256 = vmatpush1.msra.mxu0 %v165
    %257 = vmatprep.subr.mxu0 0.0
    %258 = vmatpush1.msra.mxu0 %v164
    %259 = vmatprep.subr.mxu0 0.0
    %260 = vmatpush1.msra.mxu0 %v163
    %261 = vmatprep.subr.mxu0 0.0
    %262 = vmatpush1.msra.mxu0 %v162
    %263 = vmatprep.subr.mxu0 0.0
    %264 = vmatpush1.msra.mxu0 %v161
    %265 = vmatprep.subr.mxu0 0.0
    %266 = vmatpush1.msra.mxu0 %v160
    %267 = vmatprep.subr.mxu0 0.0
    %268 = vmatpush1.msra.mxu0 %v159
    %269 = vmatprep.subr.mxu0 0.0
    %270 = vmatpush1.msra.mxu0 %v158
    %271 = vmatprep.subr.mxu0 0.0
    %272 = vmatpush1.msra.mxu0 %v157
    %273 = vmatprep.subr.mxu0 0.0
    %274 = vmatpush1.msra.mxu0 %v156
    %275 = vmatprep.subr.mxu0 0.0
    %276 = vmatpush1.msra.mxu0 %v155
    %277 = vmatprep.subr.mxu0 0.0
    %278 = vmatpush1.msra.mxu0 %v154
    %279 = vmatprep.subr.mxu0 0.0
    %280 = vmatpush1.msra.mxu0 %v153
    %281 = vmatprep.subr.mxu0 0.0
    %282 = vmatpush1.msra.mxu0 %v152
    %283 = vmatprep.subr.mxu0 0.0
    %284 = vmatpush1.msra.mxu0 %v151
    %285 = vmatprep.subr.mxu0 0.0
    %286 = vmatpush1.msra.mxu0 %v150
    %287 = vmatprep.subr.mxu0 0.0
    %288 = vmatpush2.msra.mxu0 0.0
    %289 = vmatprep.subr.mxu0 0.0
    %290 = vmatpush2.msra.mxu0 0.0
    %291 = vmatprep.subr.mxu0 0.0
    %292 = vmatpush2.msra.mxu0 0.0
    %293 = vmatprep.subr.mxu0 0.0
    %294 = vmatpush2.msra.mxu0 0.0
    %295 = vmatprep.subr.mxu0 0.0
    %296 = vmatpush2.msra.mxu0 0.0
    %297 = vmatprep.subr.mxu0 0.0
    %298 = vmatpush2.msra.mxu0 0.0
    %299 = vmatprep.subr.mxu0 0.0
    %300 = vmatpush2.msra.mxu0 0.0
    %301 = vmatprep.subr.mxu0 0.0
    %302 = vmatpush2.msra.mxu0 0.0
    %303 = vmatprep.subr.mxu0 0.0
    %304 = vmatpush2.msra.mxu0 0.0
    %305 = vmatprep.subr.mxu0 0.0
    %306 = vmatpush2.msra.mxu0 0.0
    %307 = vmatprep.subr.mxu0 0.0
    %308 = vmatpush2.msra.mxu0 0.0
    %309 = vmatprep.subr.mxu0 0.0
    %310 = vmatpush2.msra.mxu0 0.0
    %311 = vmatprep.subr.mxu0 0.0
    %312 = vmatpush2.msra.mxu0 0.0
    %313 = vmatprep.subr.mxu0 0.0
    %314 = vmatpush2.msra.mxu0 0.0
    %315 = vmatprep.subr.mxu0 0.0
    %316 = vmatpush2.msra.mxu0 0.0
    %317 = vmatprep.subr.mxu0 0.0
    %318 = vmatpush2.msra.mxu0 0.0
    %319 = vmatprep.mubr.f32.mxu0 0.0
    %320 = vmatmul.mubr.f32.gmra.mxu0 %v253
    %v321 = vpop.f32.mrf.mxu0
    %v322 = vadd.f32 0.0, %v321
    %v323 = vpop.f32.mrf.mxu0
    %324 = vdwg.mxu0
    %v326 = vrot.slane %v322, 6
    %v328 = vadd.f32 %v142, %v326
    %v329 = vtanh.pop %v328
    %v330 = vxor.u32 %v328, 2147483648
    %v331 = vmul.f32 %v330, 1.442695
    %v332 = vpow.pop %v331
    %v333 = vadd.f32 %v332, 1.0
    %v334 = vrcp.pop %v333
    %v335 = vmul.f32 1.0, %v334
    %v336 = vsel %vm54, %v329, %v335
    %v338 = vrot.slane %v336, 2
    %340 = vrot.lane.b32.xlu0 %v338, 64
    %v341 = vpop.permute.xlu0 %340
    %v343 = vrot.slane %v341, 6
    %v345 = vmul.f32 %v336, %v343
    %v347 = vrot.slane %v345, 2
    %349 = vrot.lane.b32.xlu0 %v347, 96
    %v350 = vpop.permute.xlu0 %349
    %v352 = vrot.slane %v251, 6
    %v354 = vmul.f32 %v336, %v352
    %v356 = vrot.slane %v350, 6
    %v358 = vadd.f32 %v354, %v356
    %v359 = vtanh.pop %v358
    %v361 = vrot.slane %v359, 2
    %v363 = vmul.f32 %v341, %v361
    %364 = vst [vmem:[#allocation2 + $0x2] sm:$0x3] %v363
    %365 = vmatprep.subr.mxu0 0.0
    %366 = vmatpush1.msra.mxu0 %v165
    %367 = vmatprep.subr.mxu0 0.0
    %368 = vmatpush1.msra.mxu0 %v164
    %369 = vmatprep.subr.mxu0 0.0
    %370 = vmatpush1.msra.mxu0 %v163
    %371 = vmatprep.subr.mxu0 0.0
    %372 = vmatpush1.msra.mxu0 %v162
    %373 = vmatprep.subr.mxu0 0.0
    %374 = vmatpush1.msra.mxu0 %v161
    %375 = vmatprep.subr.mxu0 0.0
    %376 = vmatpush1.msra.mxu0 %v160
    %377 = vmatprep.subr.mxu0 0.0
    %378 = vmatpush1.msra.mxu0 %v159
    %379 = vmatprep.subr.mxu0 0.0
    %380 = vmatpush1.msra.mxu0 %v158
    %381 = vmatprep.subr.mxu0 0.0
    %382 = vmatpush1.msra.mxu0 %v157
    %383 = vmatprep.subr.mxu0 0.0
    %384 = vmatpush1.msra.mxu0 %v156
    %385 = vmatprep.subr.mxu0 0.0
    %386 = vmatpush1.msra.mxu0 %v155
    %387 = vmatprep.subr.mxu0 0.0
    %388 = vmatpush1.msra.mxu0 %v154
    %389 = vmatprep.subr.mxu0 0.0
    %390 = vmatpush1.msra.mxu0 %v153
    %391 = vmatprep.subr.mxu0 0.0
    %392 = vmatpush1.msra.mxu0 %v152
    %393 = vmatprep.subr.mxu0 0.0
    %394 = vmatpush1.msra.mxu0 %v151
    %395 = vmatprep.subr.mxu0 0.0
    %396 = vmatpush1.msra.mxu0 %v150
    %397 = vmatprep.subr.mxu0 0.0
    %398 = vmatpush2.msra.mxu0 0.0
    %399 = vmatprep.subr.mxu0 0.0
    %400 = vmatpush2.msra.mxu0 0.0
    %401 = vmatprep.subr.mxu0 0.0
    %402 = vmatpush2.msra.mxu0 0.0
    %403 = vmatprep.subr.mxu0 0.0
    %404 = vmatpush2.msra.mxu0 0.0
    %405 = vmatprep.subr.mxu0 0.0
    %406 = vmatpush2.msra.mxu0 0.0
    %407 = vmatprep.subr.mxu0 0.0
    %408 = vmatpush2.msra.mxu0 0.0
    %409 = vmatprep.subr.mxu0 0.0
    %410 = vmatpush2.msra.mxu0 0.0
    %411 = vmatprep.subr.mxu0 0.0
    %412 = vmatpush2.msra.mxu0 0.0
    %413 = vmatprep.subr.mxu0 0.0
    %414 = vmatpush2.msra.mxu0 0.0
    %415 = vmatprep.subr.mxu0 0.0
    %416 = vmatpush2.msra.mxu0 0.0
    %417 = vmatprep.subr.mxu0 0.0
    %418 = vmatpush2.msra.mxu0 0.0
    %419 = vmatprep.subr.mxu0 0.0
    %420 = vmatpush2.msra.mxu0 0.0
    %421 = vmatprep.subr.mxu0 0.0
    %422 = vmatpush2.msra.mxu0 0.0
    %423 = vmatprep.subr.mxu0 0.0
    %424 = vmatpush2.msra.mxu0 0.0
    %425 = vmatprep.subr.mxu0 0.0
    %426 = vmatpush2.msra.mxu0 0.0
    %427 = vmatprep.subr.mxu0 0.0
    %428 = vmatpush2.msra.mxu0 0.0
    %429 = vmatprep.mubr.f32.mxu0 0.0
    %430 = vmatmul.mubr.f32.gmra.mxu0 %v363
    %v431 = vpop.f32.mrf.mxu0
    %v432 = vadd.f32 0.0, %v431
    %v433 = vpop.f32.mrf.mxu0
    %434 = vdwg.mxu0
    %v436 = vrot.slane %v432, 4
    %v438 = vadd.f32 %v142, %v436
    %v439 = vtanh.pop %v438
    %v440 = vxor.u32 %v438, 2147483648
    %v441 = vmul.f32 %v440, 1.442695
    %v442 = vpow.pop %v441
    %v443 = vadd.f32 %v442, 1.0
    %v444 = vrcp.pop %v443
    %v445 = vmul.f32 1.0, %v444
    %v446 = vsel %vm54, %v439, %v445
    %v448 = vrot.slane %v446, 4
    %450 = vrot.lane.b32.xlu0 %v448, 64
    %v451 = vpop.permute.xlu0 %450
    %v453 = vrot.slane %v451, 4
    %v455 = vmul.f32 %v446, %v453
    %v457 = vrot.slane %v455, 4
    %459 = vrot.lane.b32.xlu0 %v457, 96
    %v460 = vpop.permute.xlu0 %459
    %v462 = vrot.slane %v358, 6
    %v464 = vmul.f32 %v446, %v462
    %v466 = vrot.slane %v460, 4
    %v468 = vadd.f32 %v464, %v466
    %v469 = vtanh.pop %v468
    %v471 = vrot.slane %v469, 4
    %v473 = vmul.f32 %v451, %v471
    %474 = vst [vmem:[#allocation2 + $0x4] sm:$0x3] %v473
    %475 = vmatprep.subr.mxu0 0.0
    %476 = vmatpush1.msra.mxu0 %v165
    %477 = vmatprep.subr.mxu0 0.0
    %478 = vmatpush1.msra.mxu0 %v164
    %479 = vmatprep.subr.mxu0 0.0
    %480 = vmatpush1.msra.mxu0 %v163
    %481 = vmatprep.subr.mxu0 0.0
    %482 = vmatpush1.msra.mxu0 %v162
    %483 = vmatprep.subr.mxu0 0.0
    %484 = vmatpush1.msra.mxu0 %v161
    %485 = vmatprep.subr.mxu0 0.0
    %486 = vmatpush1.msra.mxu0 %v160
    %487 = vmatprep.subr.mxu0 0.0
    %488 = vmatpush1.msra.mxu0 %v159
    %489 = vmatprep.subr.mxu0 0.0
    %490 = vmatpush1.msra.mxu0 %v158
    %491 = vmatprep.subr.mxu0 0.0
    %492 = vmatpush1.msra.mxu0 %v157
    %493 = vmatprep.subr.mxu0 0.0
    %494 = vmatpush1.msra.mxu0 %v156
    %495 = vmatprep.subr.mxu0 0.0
    %496 = vmatpush1.msra.mxu0 %v155
    %497 = vmatprep.subr.mxu0 0.0
    %498 = vmatpush1.msra.mxu0 %v154
    %499 = vmatprep.subr.mxu0 0.0
    %500 = vmatpush1.msra.mxu0 %v153
    %501 = vmatprep.subr.mxu0 0.0
    %502 = vmatpush1.msra.mxu0 %v152
    %503 = vmatprep.subr.mxu0 0.0
    %504 = vmatpush1.msra.mxu0 %v151
    %505 = vmatprep.subr.mxu0 0.0
    %506 = vmatpush1.msra.mxu0 %v150
    %507 = vmatprep.subr.mxu0 0.0
    %508 = vmatpush2.msra.mxu0 0.0
    %509 = vmatprep.subr.mxu0 0.0
    %510 = vmatpush2.msra.mxu0 0.0
    %511 = vmatprep.subr.mxu0 0.0
    %512 = vmatpush2.msra.mxu0 0.0
    %513 = vmatprep.subr.mxu0 0.0
    %514 = vmatpush2.msra.mxu0 0.0
    %515 = vmatprep.subr.mxu0 0.0
    %516 = vmatpush2.msra.mxu0 0.0
    %517 = vmatprep.subr.mxu0 0.0
    %518 = vmatpush2.msra.mxu0 0.0
    %519 = vmatprep.subr.mxu0 0.0
    %520 = vmatpush2.msra.mxu0 0.0
    %521 = vmatprep.subr.mxu0 0.0
    %522 = vmatpush2.msra.mxu0 0.0
    %523 = vmatprep.subr.mxu0 0.0
    %524 = vmatpush2.msra.mxu0 0.0
    %525 = vmatprep.subr.mxu0 0.0
    %526 = vmatpush2.msra.mxu0 0.0
    %527 = vmatprep.subr.mxu0 0.0
    %528 = vmatpush2.msra.mxu0 0.0
    %529 = vmatprep.subr.mxu0 0.0
    %530 = vmatpush2.msra.mxu0 0.0
    %531 = vmatprep.subr.mxu0 0.0
    %532 = vmatpush2.msra.mxu0 0.0
    %533 = vmatprep.subr.mxu0 0.0
    %534 = vmatpush2.msra.mxu0 0.0
    %535 = vmatprep.subr.mxu0 0.0
    %536 = vmatpush2.msra.mxu0 0.0
    %537 = vmatprep.subr.mxu0 0.0
    %538 = vmatpush2.msra.mxu0 0.0
    %539 = vmatprep.mubr.f32.mxu0 0.0
    %540 = vmatmul.mubr.f32.gmra.mxu0 %v473
    %v541 = vpop.f32.mrf.mxu0
    %v542 = vadd.f32 0.0, %v541
    %v543 = vpop.f32.mrf.mxu0
    %544 = vdwg.mxu0
    %v546 = vrot.slane %v542, 2
    %v548 = vadd.f32 %v142, %v546
    %v549 = vtanh.pop %v548
    %v550 = vxor.u32 %v548, 2147483648
    %v551 = vmul.f32 %v550, 1.442695
    %v552 = vpow.pop %v551
    %v553 = vadd.f32 %v552, 1.0
    %v554 = vrcp.pop %v553
    %v555 = vmul.f32 1.0, %v554
    %v556 = vsel %vm54, %v549, %v555
    %v558 = vrot.slane %v556, 6
    %560 = vrot.lane.b32.xlu0 %v558, 64
    %v561 = vpop.permute.xlu0 %560
    %v563 = vrot.slane %v561, 2
    %v565 = vmul.f32 %v556, %v563
    %v567 = vrot.slane %v565, 6
    %569 = vrot.lane.b32.xlu0 %v567, 96
    %v570 = vpop.permute.xlu0 %569
    %v572 = vrot.slane %v468, 6
    %v574 = vmul.f32 %v556, %v572
    %v576 = vrot.slane %v570, 2
    %v578 = vadd.f32 %v574, %v576
    %v579 = vtanh.pop %v578
    %v581 = vrot.slane %v579, 6
    %v583 = vmul.f32 %v561, %v581
    %584 = vst [vmem:[#allocation2 + $0x6] sm:$0x3] %v583
    %585 = vmatprep.subr.mxu0 0.0
    %586 = vmatpush1.msra.mxu0 %v165
    %587 = vmatprep.subr.mxu0 0.0
    %588 = vmatpush1.msra.mxu0 %v164
    %589 = vmatprep.subr.mxu0 0.0
    %590 = vmatpush1.msra.mxu0 %v163
    %591 = vmatprep.subr.mxu0 0.0
    %592 = vmatpush1.msra.mxu0 %v162
    %593 = vmatprep.subr.mxu0 0.0
    %594 = vmatpush1.msra.mxu0 %v161
    %595 = vmatprep.subr.mxu0 0.0
    %596 = vmatpush1.msra.mxu0 %v160
    %597 = vmatprep.subr.mxu0 0.0
    %598 = vmatpush1.msra.mxu0 %v159
    %599 = vmatprep.subr.mxu0 0.0
    %600 = vmatpush1.msra.mxu0 %v158
    %601 = vmatprep.subr.mxu0 0.0
    %602 = vmatpush1.msra.mxu0 %v157
    %603 = vmatprep.subr.mxu0 0.0
    %604 = vmatpush1.msra.mxu0 %v156
    %605 = vmatprep.subr.mxu0 0.0
    %606 = vmatpush1.msra.mxu0 %v155
    %607 = vmatprep.subr.mxu0 0.0
    %608 = vmatpush1.msra.mxu0 %v154
    %609 = vmatprep.subr.mxu0 0.0
    %610 = vmatpush1.msra.mxu0 %v153
    %611 = vmatprep.subr.mxu0 0.0
    %612 = vmatpush1.msra.mxu0 %v152
    %613 = vmatprep.subr.mxu0 0.0
    %614 = vmatpush1.msra.mxu0 %v151
    %615 = vmatprep.subr.mxu0 0.0
    %616 = vmatpush1.msra.mxu0 %v150
    %617 = vmatprep.subr.mxu0 0.0
    %618 = vmatpush2.msra.mxu0 0.0
    %619 = vmatprep.subr.mxu0 0.0
    %620 = vmatpush2.msra.mxu0 0.0
    %621 = vmatprep.subr.mxu0 0.0
    %622 = vmatpush2.msra.mxu0 0.0
    %623 = vmatprep.subr.mxu0 0.0
    %624 = vmatpush2.msra.mxu0 0.0
    %625 = vmatprep.subr.mxu0 0.0
    %626 = vmatpush2.msra.mxu0 0.0
    %627 = vmatprep.subr.mxu0 0.0
    %628 = vmatpush2.msra.mxu0 0.0
    %629 = vmatprep.subr.mxu0 0.0
    %630 = vmatpush2.msra.mxu0 0.0
    %631 = vmatprep.subr.mxu0 0.0
    %632 = vmatpush2.msra.mxu0 0.0
    %633 = vmatprep.subr.mxu0 0.0
    %634 = vmatpush2.msra.mxu0 0.0
    %635 = vmatprep.subr.mxu0 0.0
    %636 = vmatpush2.msra.mxu0 0.0
    %637 = vmatprep.subr.mxu0 0.0
    %638 = vmatpush2.msra.mxu0 0.0
    %639 = vmatprep.subr.mxu0 0.0
    %640 = vmatpush2.msra.mxu0 0.0
    %641 = vmatprep.subr.mxu0 0.0
    %642 = vmatpush2.msra.mxu0 0.0
    %643 = vmatprep.subr.mxu0 0.0
    %644 = vmatpush2.msra.mxu0 0.0
    %645 = vmatprep.subr.mxu0 0.0
    %646 = vmatpush2.msra.mxu0 0.0
    %647 = vmatprep.subr.mxu0 0.0
    %648 = vmatpush2.msra.mxu0 0.0
    %649 = vmatprep.mubr.f32.mxu0 0.0
    %650 = vmatmul.mubr.f32.gmra.mxu0 %v583
    %v651 = vpop.f32.mrf.mxu0
    %v652 = vadd.f32 0.0, %v651
    %v653 = vpop.f32.mrf.mxu0
    %654 = vdwg.mxu0
    %v655 = vadd.f32 %v147, %v652
    %v656 = vtanh.pop %v655
    %v657 = vxor.u32 %v655, 2147483648
    %v658 = vmul.f32 %v657, 1.442695
    %v659 = vpow.pop %v658
    %v660 = vadd.f32 %v659, 1.0
    %v661 = vrcp.pop %v660
    %v662 = vmul.f32 1.0, %v661
    %v663 = vsel %vm54, %v656, %v662
    %664 = vrot.lane.b32.xlu0 %v663, 64
    %v665 = vpop.permute.xlu0 %664
    %v666 = vmul.f32 %v663, %v665
    %667 = vrot.lane.b32.xlu0 %v666, 96
    %v668 = vpop.permute.xlu0 %667
    %v670 = vrot.slane %v578, 6
    %v672 = vmul.f32 %v663, %v670
    %v673 = vadd.f32 %v672, %v668
    %v674 = vtanh.pop %v673
    %v675 = vmul.f32 %v665, %v674
    %676 = vst [vmem:[#allocation2 + $0x8] sm:$0x3] %v675
    %677 = vmatprep.subr.mxu0 0.0
    %678 = vmatpush1.msra.mxu0 %v165
    %679 = vmatprep.subr.mxu0 0.0
    %680 = vmatpush1.msra.mxu0 %v164
    %681 = vmatprep.subr.mxu0 0.0
    %682 = vmatpush1.msra.mxu0 %v163
    %683 = vmatprep.subr.mxu0 0.0
    %684 = vmatpush1.msra.mxu0 %v162
    %685 = vmatprep.subr.mxu0 0.0
    %686 = vmatpush1.msra.mxu0 %v161
    %687 = vmatprep.subr.mxu0 0.0
    %688 = vmatpush1.msra.mxu0 %v160
    %689 = vmatprep.subr.mxu0 0.0
    %690 = vmatpush1.msra.mxu0 %v159
    %691 = vmatprep.subr.mxu0 0.0
    %692 = vmatpush1.msra.mxu0 %v158
    %693 = vmatprep.subr.mxu0 0.0
    %694 = vmatpush1.msra.mxu0 %v157
    %695 = vmatprep.subr.mxu0 0.0
    %696 = vmatpush1.msra.mxu0 %v156
    %697 = vmatprep.subr.mxu0 0.0
    %698 = vmatpush1.msra.mxu0 %v155
    %699 = vmatprep.subr.mxu0 0.0
    %700 = vmatpush1.msra.mxu0 %v154
    %701 = vmatprep.subr.mxu0 0.0
    %702 = vmatpush1.msra.mxu0 %v153
    %703 = vmatprep.subr.mxu0 0.0
    %704 = vmatpush1.msra.mxu0 %v152
    %705 = vmatprep.subr.mxu0 0.0
    %706 = vmatpush1.msra.mxu0 %v151
    %707 = vmatprep.subr.mxu0 0.0
    %708 = vmatpush1.msra.mxu0 %v150
    %709 = vmatprep.subr.mxu0 0.0
    %710 = vmatpush2.msra.mxu0 0.0
    %711 = vmatprep.subr.mxu0 0.0
    %712 = vmatpush2.msra.mxu0 0.0
    %713 = vmatprep.subr.mxu0 0.0
    %714 = vmatpush2.msra.mxu0 0.0
    %715 = vmatprep.subr.mxu0 0.0
    %716 = vmatpush2.msra.mxu0 0.0
    %717 = vmatprep.subr.mxu0 0.0
    %718 = vmatpush2.msra.mxu0 0.0
    %719 = vmatprep.subr.mxu0 0.0
    %720 = vmatpush2.msra.mxu0 0.0
    %721 = vmatprep.subr.mxu0 0.0
    %722 = vmatpush2.msra.mxu0 0.0
    %723 = vmatprep.subr.mxu0 0.0
    %724 = vmatpush2.msra.mxu0 0.0
    %725 = vmatprep.subr.mxu0 0.0
    %726 = vmatpush2.msra.mxu0 0.0
    %727 = vmatprep.subr.mxu0 0.0
    %728 = vmatpush2.msra.mxu0 0.0
    %729 = vmatprep.subr.mxu0 0.0
    %730 = vmatpush2.msra.mxu0 0.0
    %731 = vmatprep.subr.mxu0 0.0
    %732 = vmatpush2.msra.mxu0 0.0
    %733 = vmatprep.subr.mxu0 0.0
    %734 = vmatpush2.msra.mxu0 0.0
    %735 = vmatprep.subr.mxu0 0.0
    %736 = vmatpush2.msra.mxu0 0.0
    %737 = vmatprep.subr.mxu0 0.0
    %738 = vmatpush2.msra.mxu0 0.0
    %739 = vmatprep.subr.mxu0 0.0
    %740 = vmatpush2.msra.mxu0 0.0
    %741 = vmatprep.mubr.f32.mxu0 0.0
    %742 = vmatmul.mubr.f32.gmra.mxu0 %v675
    %v743 = vpop.f32.mrf.mxu0
    %v744 = vadd.f32 0.0, %v743
    %v745 = vpop.f32.mrf.mxu0
    %746 = vdwg.mxu0
    %v748 = vrot.slane %v744, 6
    %v750 = vadd.f32 %v147, %v748
    %v751 = vtanh.pop %v750
    %v752 = vxor.u32 %v750, 2147483648
    %v753 = vmul.f32 %v752, 1.442695
    %v754 = vpow.pop %v753
    %v755 = vadd.f32 %v754, 1.0
    %v756 = vrcp.pop %v755
    %v757 = vmul.f32 1.0, %v756
    %v758 = vsel %vm54, %v751, %v757
    %v760 = vrot.slane %v758, 2
    %762 = vrot.lane.b32.xlu0 %v760, 64
    %v763 = vpop.permute.xlu0 %762
    %v765 = vrot.slane %v763, 6
    %v767 = vmul.f32 %v758, %v765
    %v769 = vrot.slane %v767, 2
    %771 = vrot.lane.b32.xlu0 %v769, 96
    %v772 = vpop.permute.xlu0 %771
    %v774 = vrot.slane %v673, 6
    %v776 = vmul.f32 %v758, %v774
    %v778 = vrot.slane %v772, 6
    %v780 = vadd.f32 %v776, %v778
    %v781 = vtanh.pop %v780
    %v783 = vrot.slane %v781, 2
    %v785 = vmul.f32 %v763, %v783
    %786 = vst [vmem:[#allocation2 + $0xa] sm:$0x3] %v785
    %787 = vmatprep.subr.mxu0 0.0
    %788 = vmatpush1.msra.mxu0 %v165
    %789 = vmatprep.subr.mxu0 0.0
    %790 = vmatpush1.msra.mxu0 %v164
    %791 = vmatprep.subr.mxu0 0.0
    %792 = vmatpush1.msra.mxu0 %v163
    %793 = vmatprep.subr.mxu0 0.0
    %794 = vmatpush1.msra.mxu0 %v162
    %795 = vmatprep.subr.mxu0 0.0
    %796 = vmatpush1.msra.mxu0 %v161
    %797 = vmatprep.subr.mxu0 0.0
    %798 = vmatpush1.msra.mxu0 %v160
    %799 = vmatprep.subr.mxu0 0.0
    %800 = vmatpush1.msra.mxu0 %v159
    %801 = vmatprep.subr.mxu0 0.0
    %802 = vmatpush1.msra.mxu0 %v158
    %803 = vmatprep.subr.mxu0 0.0
    %804 = vmatpush1.msra.mxu0 %v157
    %805 = vmatprep.subr.mxu0 0.0
    %806 = vmatpush1.msra.mxu0 %v156
    %807 = vmatprep.subr.mxu0 0.0
    %808 = vmatpush1.msra.mxu0 %v155
    %809 = vmatprep.subr.mxu0 0.0
    %810 = vmatpush1.msra.mxu0 %v154
    %811 = vmatprep.subr.mxu0 0.0
    %812 = vmatpush1.msra.mxu0 %v153
    %813 = vmatprep.subr.mxu0 0.0
    %814 = vmatpush1.msra.mxu0 %v152
    %815 = vmatprep.subr.mxu0 0.0
    %816 = vmatpush1.msra.mxu0 %v151
    %817 = vmatprep.subr.mxu0 0.0
    %818 = vmatpush1.msra.mxu0 %v150
    %819 = vmatprep.subr.mxu0 0.0
    %820 = vmatpush2.msra.mxu0 0.0
    %821 = vmatprep.subr.mxu0 0.0
    %822 = vmatpush2.msra.mxu0 0.0
    %823 = vmatprep.subr.mxu0 0.0
    %824 = vmatpush2.msra.mxu0 0.0
    %825 = vmatprep.subr.mxu0 0.0
    %826 = vmatpush2.msra.mxu0 0.0
    %827 = vmatprep.subr.mxu0 0.0
    %828 = vmatpush2.msra.mxu0 0.0
    %829 = vmatprep.subr.mxu0 0.0
    %830 = vmatpush2.msra.mxu0 0.0
    %831 = vmatprep.subr.mxu0 0.0
    %832 = vmatpush2.msra.mxu0 0.0
    %833 = vmatprep.subr.mxu0 0.0
    %834 = vmatpush2.msra.mxu0 0.0
    %835 = vmatprep.subr.mxu0 0.0
    %836 = vmatpush2.msra.mxu0 0.0
    %837 = vmatprep.subr.mxu0 0.0
    %838 = vmatpush2.msra.mxu0 0.0
    %839 = vmatprep.subr.mxu0 0.0
    %840 = vmatpush2.msra.mxu0 0.0
    %841 = vmatprep.subr.mxu0 0.0
    %842 = vmatpush2.msra.mxu0 0.0
    %843 = vmatprep.subr.mxu0 0.0
    %844 = vmatpush2.msra.mxu0 0.0
    %845 = vmatprep.subr.mxu0 0.0
    %846 = vmatpush2.msra.mxu0 0.0
    %847 = vmatprep.subr.mxu0 0.0
    %848 = vmatpush2.msra.mxu0 0.0
    %849 = vmatprep.subr.mxu0 0.0
    %850 = vmatpush2.msra.mxu0 0.0
    %851 = vmatprep.mubr.f32.mxu0 0.0
    %852 = vmatmul.mubr.f32.gmra.mxu0 %v785
    %v853 = vpop.f32.mrf.mxu0
    %v854 = vadd.f32 0.0, %v853
    %v855 = vpop.f32.mrf.mxu0
    %856 = vdwg.mxu0
    %v858 = vrot.slane %v854, 4
    %v860 = vadd.f32 %v147, %v858
    %v861 = vtanh.pop %v860
    %v862 = vxor.u32 %v860, 2147483648
    %v863 = vmul.f32 %v862, 1.442695
    %v864 = vpow.pop %v863
    %v865 = vadd.f32 %v864, 1.0
    %v866 = vrcp.pop %v865
    %v867 = vmul.f32 1.0, %v866
    %v868 = vsel %vm54, %v861, %v867
    %v870 = vrot.slane %v868, 4
    %872 = vrot.lane.b32.xlu0 %v870, 64
    %v873 = vpop.permute.xlu0 %872
    %v875 = vrot.slane %v873, 4
    %v877 = vmul.f32 %v868, %v875
    %v879 = vrot.slane %v877, 4
    %881 = vrot.lane.b32.xlu0 %v879, 96
    %v882 = vpop.permute.xlu0 %881
    %v884 = vrot.slane %v780, 6
    %v886 = vmul.f32 %v868, %v884
    %v888 = vrot.slane %v882, 4
    %v890 = vadd.f32 %v886, %v888
    %v891 = vtanh.pop %v890
    %v893 = vrot.slane %v891, 4
    %v895 = vmul.f32 %v873, %v893
    %896 = vst [vmem:[#allocation2 + $0xc] sm:$0x3] %v895
    %897 = vmatprep.subr.mxu0 0.0
    %898 = vmatpush1.msra.mxu0 %v165
    %899 = vmatprep.subr.mxu0 0.0
    %900 = vmatpush1.msra.mxu0 %v164
    %901 = vmatprep.subr.mxu0 0.0
    %902 = vmatpush1.msra.mxu0 %v163
    %903 = vmatprep.subr.mxu0 0.0
    %904 = vmatpush1.msra.mxu0 %v162
    %905 = vmatprep.subr.mxu0 0.0
    %906 = vmatpush1.msra.mxu0 %v161
    %907 = vmatprep.subr.mxu0 0.0
    %908 = vmatpush1.msra.mxu0 %v160
    %909 = vmatprep.subr.mxu0 0.0
    %910 = vmatpush1.msra.mxu0 %v159
    %911 = vmatprep.subr.mxu0 0.0
    %912 = vmatpush1.msra.mxu0 %v158
    %913 = vmatprep.subr.mxu0 0.0
    %914 = vmatpush1.msra.mxu0 %v157
    %915 = vmatprep.subr.mxu0 0.0
    %916 = vmatpush1.msra.mxu0 %v156
    %917 = vmatprep.subr.mxu0 0.0
    %918 = vmatpush1.msra.mxu0 %v155
    %919 = vmatprep.subr.mxu0 0.0
    %920 = vmatpush1.msra.mxu0 %v154
    %921 = vmatprep.subr.mxu0 0.0
    %922 = vmatpush1.msra.mxu0 %v153
    %923 = vmatprep.subr.mxu0 0.0
    %924 = vmatpush1.msra.mxu0 %v152
    %925 = vmatprep.subr.mxu0 0.0
    %926 = vmatpush1.msra.mxu0 %v151
    %927 = vmatprep.subr.mxu0 0.0
    %928 = vmatpush1.msra.mxu0 %v150
    %929 = vmatprep.subr.mxu0 0.0
    %930 = vmatpush2.msra.mxu0 0.0
    %931 = vmatprep.subr.mxu0 0.0
    %932 = vmatpush2.msra.mxu0 0.0
    %933 = vmatprep.subr.mxu0 0.0
    %934 = vmatpush2.msra.mxu0 0.0
    %935 = vmatprep.subr.mxu0 0.0
    %936 = vmatpush2.msra.mxu0 0.0
    %937 = vmatprep.subr.mxu0 0.0
    %938 = vmatpush2.msra.mxu0 0.0
    %939 = vmatprep.subr.mxu0 0.0
    %940 = vmatpush2.msra.mxu0 0.0
    %941 = vmatprep.subr.mxu0 0.0
    %942 = vmatpush2.msra.mxu0 0.0
    %943 = vmatprep.subr.mxu0 0.0
    %944 = vmatpush2.msra.mxu0 0.0
    %945 = vmatprep.subr.mxu0 0.0
    %946 = vmatpush2.msra.mxu0 0.0
    %947 = vmatprep.subr.mxu0 0.0
    %948 = vmatpush2.msra.mxu0 0.0
    %949 = vmatprep.subr.mxu0 0.0
    %950 = vmatpush2.msra.mxu0 0.0
    %951 = vmatprep.subr.mxu0 0.0
    %952 = vmatpush2.msra.mxu0 0.0
    %953 = vmatprep.subr.mxu0 0.0
    %954 = vmatpush2.msra.mxu0 0.0
    %955 = vmatprep.subr.mxu0 0.0
    %956 = vmatpush2.msra.mxu0 0.0
    %957 = vmatprep.subr.mxu0 0.0
    %958 = vmatpush2.msra.mxu0 0.0
    %959 = vmatprep.subr.mxu0 0.0
    %960 = vmatpush2.msra.mxu0 0.0
    %961 = vmatprep.mubr.f32.mxu0 0.0
    %962 = vmatmul.mubr.f32.gmra.mxu0 %v895
    %v963 = vpop.f32.mrf.mxu0
    %v964 = vadd.f32 0.0, %v963
    %v965 = vpop.f32.mrf.mxu0
    %966 = vdwg.mxu0
    %v968 = vrot.slane %v964, 2
    %v970 = vadd.f32 %v147, %v968
    %v971 = vtanh.pop %v970
    %v972 = vxor.u32 %v970, 2147483648
    %v973 = vmul.f32 %v972, 1.442695
    %v974 = vpow.pop %v973
    %v975 = vadd.f32 %v974, 1.0
    %v976 = vrcp.pop %v975
    %v977 = vmul.f32 1.0, %v976
    %v978 = vsel %vm54, %v971, %v977
    %v980 = vrot.slane %v978, 6
    %982 = vrot.lane.b32.xlu0 %v980, 64
    %v983 = vpop.permute.xlu0 %982
    %v985 = vrot.slane %v983, 2
    %v987 = vmul.f32 %v978, %v985
    %v989 = vrot.slane %v987, 6
    %991 = vrot.lane.b32.xlu0 %v989, 96
    %v992 = vpop.permute.xlu0 %991
    %v994 = vrot.slane %v890, 6
    %v996 = vmul.f32 %v978, %v994
    %v998 = vrot.slane %v992, 2
    %v1000 = vadd.f32 %v996, %v998
    %v1001 = vtanh.pop %v1000
    %v1003 = vrot.slane %v1001, 6
    %v1005 = vmul.f32 %v983, %v1003
    %1006 = vst [vmem:[#allocation2 + $0xe] sm:$0x3] %v1005
    %v1007 = vld [vmem:[#allocation2] sm:$0xff]
    %v1008 = vld [vmem:[#allocation2 + $0x8] sm:$0xff]
    %v1009 = vld [vmem:[#allocation3] sm:$0xff]
    %v1010 = vld [vmem:[#allocation3 + $0x8] sm:$0xff]
    %v1011 = vld [vmem:[#allocation3 + $0x10] sm:$0xff]
    %v1012 = vld [vmem:[#allocation3 + $0x18] sm:$0xff]
    %v1013 = vld [vmem:[#allocation3 + $0x20] sm:$0xff]
    %v1014 = vld [vmem:[#allocation3 + $0x28] sm:$0xff]
    %v1015 = vld [vmem:[#allocation3 + $0x30] sm:$0xff]
    %v1016 = vld [vmem:[#allocation3 + $0x38] sm:$0xff]
    %v1017 = vld [vmem:[#allocation3 + $0x40] sm:$0xff]
    %v1018 = vld [vmem:[#allocation3 + $0x48] sm:$0xff]
    %v1019 = vld [vmem:[#allocation3 + $0x50] sm:$0xff]
    %v1020 = vld [vmem:[#allocation3 + $0x58] sm:$0xff]
    %v1021 = vld [vmem:[#allocation3 + $0x60] sm:$0xff]
    %v1022 = vld [vmem:[#allocation3 + $0x68] sm:$0xff]
    %v1023 = vld [vmem:[#allocation3 + $0x70] sm:$0xff]
    %v1024 = vld [vmem:[#allocation3 + $0x78] sm:$0xff]
    %s1025 = scalar_lea.vmem %s5, 1
    %v1026 = vld [vmem:[%s1025] sm:$0x1]
    %v1028 = vlaneseq
    %v1029 = vshrl.u32 %v1028, 7
    %v1030 = vsub.s32 0, %v1029
    %v1031 = vrot.slane %v1026, %v1030
    %1033 = vmatprep.subr.mxu0 0.0
    %1034 = vmatpush1.msra.mxu0 %v1024
    %1035 = vmatprep.subr.mxu0 0.0
    %1036 = vmatpush1.msra.mxu0 %v1023
    %1037 = vmatprep.subr.mxu0 0.0
    %1038 = vmatpush1.msra.mxu0 %v1022
    %1039 = vmatprep.subr.mxu0 0.0
    %1040 = vmatpush1.msra.mxu0 %v1021
    %1041 = vmatprep.subr.mxu0 0.0
    %1042 = vmatpush1.msra.mxu0 %v1020
    %1043 = vmatprep.subr.mxu0 0.0
    %1044 = vmatpush1.msra.mxu0 %v1019
    %1045 = vmatprep.subr.mxu0 0.0
    %1046 = vmatpush1.msra.mxu0 %v1018
    %1047 = vmatprep.subr.mxu0 0.0
    %1048 = vmatpush1.msra.mxu0 %v1017
    %1049 = vmatprep.subr.mxu0 0.0
    %1050 = vmatpush1.msra.mxu0 %v1016
    %1051 = vmatprep.subr.mxu0 0.0
    %1052 = vmatpush1.msra.mxu0 %v1015
    %1053 = vmatprep.subr.mxu0 0.0
    %1054 = vmatpush1.msra.mxu0 %v1014
    %1055 = vmatprep.subr.mxu0 0.0
    %1056 = vmatpush1.msra.mxu0 %v1013
    %1057 = vmatprep.subr.mxu0 0.0
    %1058 = vmatpush1.msra.mxu0 %v1012
    %1059 = vmatprep.subr.mxu0 0.0
    %1060 = vmatpush1.msra.mxu0 %v1011
    %1061 = vmatprep.subr.mxu0 0.0
    %1062 = vmatpush1.msra.mxu0 %v1010
    %1063 = vmatprep.subr.mxu0 0.0
    %1064 = vmatpush1.msra.mxu0 %v1009
    %1065 = vmatprep.subr.mxu0 0.0
    %1066 = vmatpush2.msra.mxu0 0.0
    %1067 = vmatprep.subr.mxu0 0.0
    %1068 = vmatpush2.msra.mxu0 0.0
    %1069 = vmatprep.subr.mxu0 0.0
    %1070 = vmatpush2.msra.mxu0 0.0
    %1071 = vmatprep.subr.mxu0 0.0
    %1072 = vmatpush2.msra.mxu0 0.0
    %1073 = vmatprep.subr.mxu0 0.0
    %1074 = vmatpush2.msra.mxu0 0.0
    %1075 = vmatprep.subr.mxu0 0.0
    %1076 = vmatpush2.msra.mxu0 0.0
    %1077 = vmatprep.subr.mxu0 0.0
    %1078 = vmatpush2.msra.mxu0 0.0
    %1079 = vmatprep.subr.mxu0 0.0
    %1080 = vmatpush2.msra.mxu0 0.0
    %1081 = vmatprep.subr.mxu0 0.0
    %1082 = vmatpush2.msra.mxu0 0.0
    %1083 = vmatprep.subr.mxu0 0.0
    %1084 = vmatpush2.msra.mxu0 0.0
    %1085 = vmatprep.subr.mxu0 0.0
    %1086 = vmatpush2.msra.mxu0 0.0
    %1087 = vmatprep.subr.mxu0 0.0
    %1088 = vmatpush2.msra.mxu0 0.0
    %1089 = vmatprep.subr.mxu0 0.0
    %1090 = vmatpush2.msra.mxu0 0.0
    %1091 = vmatprep.subr.mxu0 0.0
    %1092 = vmatpush2.msra.mxu0 0.0
    %1093 = vmatprep.subr.mxu0 0.0
    %1094 = vmatpush2.msra.mxu0 0.0
    %1095 = vmatprep.subr.mxu0 0.0
    %1096 = vmatpush2.msra.mxu0 0.0
    %1097 = vmatprep.mubr.f32.mxu0 0.0
    %1098 = vmatmul.mubr.f32.gmra.mxu0 %v1007
    %v1099 = vpop.f32.mrf.mxu0
    %v1100 = vadd.f32 %v1031, %v1099
    %v1101 = vpop.f32.mrf.mxu0
    %1102 = vmatprep.mubr.f32.mxu0 0.0
    %1103 = vmatmul.mubr.f32.gmra.mxu0 %v1008
    %v1104 = vpop.f32.mrf.mxu0
    %v1105 = vadd.f32 %v1031, %v1104
    %v1106 = vpop.f32.mrf.mxu0
    %1107 = vdwg.mxu0
    %s1108 = scalar_lea.vmem %s4, 128
    %v1109 = vld [vmem:[%s1108] sm:$0xff]
    %v1110 = vld [vmem:[%s1108 + $0x8] sm:$0xff]
    %v1111 = vld [vmem:[%s1108 + $0x10] sm:$0xff]
    %v1112 = vld [vmem:[%s1108 + $0x18] sm:$0xff]
    %v1113 = vld [vmem:[%s1108 + $0x20] sm:$0xff]
    %v1114 = vld [vmem:[%s1108 + $0x28] sm:$0xff]
    %v1115 = vld [vmem:[%s1108 + $0x30] sm:$0xff]
    %v1116 = vld [vmem:[%s1108 + $0x38] sm:$0xff]
    %v1117 = vld [vmem:[%s1108 + $0x40] sm:$0xff]
    %v1118 = vld [vmem:[%s1108 + $0x48] sm:$0xff]
    %v1119 = vld [vmem:[%s1108 + $0x50] sm:$0xff]
    %v1120 = vld [vmem:[%s1108 + $0x58] sm:$0xff]
    %v1121 = vld [vmem:[%s1108 + $0x60] sm:$0xff]
    %v1122 = vld [vmem:[%s1108 + $0x68] sm:$0xff]
    %v1123 = vld [vmem:[%s1108 + $0x70] sm:$0xff]
    %v1124 = vld [vmem:[%s1108 + $0x78] sm:$0xff]
    %1125 = vmatprep.subr.mxu0 0.0
    %1126 = vmatpush1.msra.mxu0 %v1124
    %1127 = vmatprep.subr.mxu0 0.0
    %1128 = vmatpush1.msra.mxu0 %v1123
    %1129 = vmatprep.subr.mxu0 0.0
    %1130 = vmatpush1.msra.mxu0 %v1122
    %1131 = vmatprep.subr.mxu0 0.0
    %1132 = vmatpush1.msra.mxu0 %v1121
    %1133 = vmatprep.subr.mxu0 0.0
    %1134 = vmatpush1.msra.mxu0 %v1120
    %1135 = vmatprep.subr.mxu0 0.0
    %1136 = vmatpush1.msra.mxu0 %v1119
    %1137 = vmatprep.subr.mxu0 0.0
    %1138 = vmatpush1.msra.mxu0 %v1118
    %1139 = vmatprep.subr.mxu0 0.0
    %1140 = vmatpush1.msra.mxu0 %v1117
    %1141 = vmatprep.subr.mxu0 0.0
    %1142 = vmatpush1.msra.mxu0 %v1116
    %1143 = vmatprep.subr.mxu0 0.0
    %1144 = vmatpush1.msra.mxu0 %v1115
    %1145 = vmatprep.subr.mxu0 0.0
    %1146 = vmatpush1.msra.mxu0 %v1114
    %1147 = vmatprep.subr.mxu0 0.0
    %1148 = vmatpush1.msra.mxu0 %v1113
    %1149 = vmatprep.subr.mxu0 0.0
    %1150 = vmatpush1.msra.mxu0 %v1112
    %1151 = vmatprep.subr.mxu0 0.0
    %1152 = vmatpush1.msra.mxu0 %v1111
    %1153 = vmatprep.subr.mxu0 0.0
    %1154 = vmatpush1.msra.mxu0 %v1110
    %1155 = vmatprep.subr.mxu0 0.0
    %1156 = vmatpush1.msra.mxu0 %v1109
    %1157 = vmatprep.subr.mxu0 0.0
    %1158 = vmatpush2.msra.mxu0 0.0
    %1159 = vmatprep.subr.mxu0 0.0
    %1160 = vmatpush2.msra.mxu0 0.0
    %1161 = vmatprep.subr.mxu0 0.0
    %1162 = vmatpush2.msra.mxu0 0.0
    %1163 = vmatprep.subr.mxu0 0.0
    %1164 = vmatpush2.msra.mxu0 0.0
    %1165 = vmatprep.subr.mxu0 0.0
    %1166 = vmatpush2.msra.mxu0 0.0
    %1167 = vmatprep.subr.mxu0 0.0
    %1168 = vmatpush2.msra.mxu0 0.0
    %1169 = vmatprep.subr.mxu0 0.0
    %1170 = vmatpush2.msra.mxu0 0.0
    %1171 = vmatprep.subr.mxu0 0.0
    %1172 = vmatpush2.msra.mxu0 0.0
    %1173 = vmatprep.subr.mxu0 0.0
    %1174 = vmatpush2.msra.mxu0 0.0
    %1175 = vmatprep.subr.mxu0 0.0
    %1176 = vmatpush2.msra.mxu0 0.0
    %1177 = vmatprep.subr.mxu0 0.0
    %1178 = vmatpush2.msra.mxu0 0.0
    %1179 = vmatprep.subr.mxu0 0.0
    %1180 = vmatpush2.msra.mxu0 0.0
    %1181 = vmatprep.subr.mxu0 0.0
    %1182 = vmatpush2.msra.mxu0 0.0
    %1183 = vmatprep.subr.mxu0 0.0
    %1184 = vmatpush2.msra.mxu0 0.0
    %1185 = vmatprep.subr.mxu0 0.0
    %1186 = vmatpush2.msra.mxu0 0.0
    %1187 = vmatprep.subr.mxu0 0.0
    %1188 = vmatpush2.msra.mxu0 0.0
    %1189 = vmatprep.mubr.f32.mxu0 0.0
    %1190 = vmatmul.mubr.f32.gmra.mxu0 0.0
    %v1191 = vpop.f32.mrf.mxu0
    %v1192 = vadd.f32 0.0, %v1191
    %v1193 = vpop.f32.mrf.mxu0
    %1194 = vdwg.mxu0
    %v1195 = vadd.f32 %v1100, %v1192
    %v1196 = vtanh.pop %v1195
    %v1197 = vxor.u32 %v1195, 2147483648
    %v1198 = vmul.f32 %v1197, 1.442695
    %v1199 = vpow.pop %v1198
    %v1200 = vadd.f32 %v1199, 1.0
    %v1201 = vrcp.pop %v1200
    %v1202 = vmul.f32 1.0, %v1201
    %v1203 = vsel %vm54, %v1196, %v1202
    %1204 = vrot.lane.b32.xlu0 %v1203, 64
    %v1205 = vpop.permute.xlu0 %1204
    %v1206 = vmul.f32 %v1203, %v1205
    %1207 = vrot.lane.b32.xlu0 %v1206, 96
    %v1208 = vpop.permute.xlu0 %1207
    %v1209 = vmul.f32 %v1203, 0.0
    %v1210 = vadd.f32 %v1209, %v1208
    %v1211 = vtanh.pop %v1210
    %v1212 = vmul.f32 %v1205, %v1211
    %1213 = vst [vmem:[#allocation2] sm:$0x3] %v1212
    %1214 = vmatprep.subr.mxu0 0.0
    %1215 = vmatpush1.msra.mxu0 %v1124
    %1216 = vmatprep.subr.mxu0 0.0
    %1217 = vmatpush1.msra.mxu0 %v1123
    %1218 = vmatprep.subr.mxu0 0.0
    %1219 = vmatpush1.msra.mxu0 %v1122
    %1220 = vmatprep.subr.mxu0 0.0
    %1221 = vmatpush1.msra.mxu0 %v1121
    %1222 = vmatprep.subr.mxu0 0.0
    %1223 = vmatpush1.msra.mxu0 %v1120
    %1224 = vmatprep.subr.mxu0 0.0
    %1225 = vmatpush1.msra.mxu0 %v1119
    %1226 = vmatprep.subr.mxu0 0.0
    %1227 = vmatpush1.msra.mxu0 %v1118
    %1228 = vmatprep.subr.mxu0 0.0
    %1229 = vmatpush1.msra.mxu0 %v1117
    %1230 = vmatprep.subr.mxu0 0.0
    %1231 = vmatpush1.msra.mxu0 %v1116
    %1232 = vmatprep.subr.mxu0 0.0
    %1233 = vmatpush1.msra.mxu0 %v1115
    %1234 = vmatprep.subr.mxu0 0.0
    %1235 = vmatpush1.msra.mxu0 %v1114
    %1236 = vmatprep.subr.mxu0 0.0
    %1237 = vmatpush1.msra.mxu0 %v1113
    %1238 = vmatprep.subr.mxu0 0.0
    %1239 = vmatpush1.msra.mxu0 %v1112
    %1240 = vmatprep.subr.mxu0 0.0
    %1241 = vmatpush1.msra.mxu0 %v1111
    %1242 = vmatprep.subr.mxu0 0.0
    %1243 = vmatpush1.msra.mxu0 %v1110
    %1244 = vmatprep.subr.mxu0 0.0
    %1245 = vmatpush1.msra.mxu0 %v1109
    %1246 = vmatprep.subr.mxu0 0.0
    %1247 = vmatpush2.msra.mxu0 0.0
    %1248 = vmatprep.subr.mxu0 0.0
    %1249 = vmatpush2.msra.mxu0 0.0
    %1250 = vmatprep.subr.mxu0 0.0
    %1251 = vmatpush2.msra.mxu0 0.0
    %1252 = vmatprep.subr.mxu0 0.0
    %1253 = vmatpush2.msra.mxu0 0.0
    %1254 = vmatprep.subr.mxu0 0.0
    %1255 = vmatpush2.msra.mxu0 0.0
    %1256 = vmatprep.subr.mxu0 0.0
    %1257 = vmatpush2.msra.mxu0 0.0
    %1258 = vmatprep.subr.mxu0 0.0
    %1259 = vmatpush2.msra.mxu0 0.0
    %1260 = vmatprep.subr.mxu0 0.0
    %1261 = vmatpush2.msra.mxu0 0.0
    %1262 = vmatprep.subr.mxu0 0.0
    %1263 = vmatpush2.msra.mxu0 0.0
    %1264 = vmatprep.subr.mxu0 0.0
    %1265 = vmatpush2.msra.mxu0 0.0
    %1266 = vmatprep.subr.mxu0 0.0
    %1267 = vmatpush2.msra.mxu0 0.0
    %1268 = vmatprep.subr.mxu0 0.0
    %1269 = vmatpush2.msra.mxu0 0.0
    %1270 = vmatprep.subr.mxu0 0.0
    %1271 = vmatpush2.msra.mxu0 0.0
    %1272 = vmatprep.subr.mxu0 0.0
    %1273 = vmatpush2.msra.mxu0 0.0
    %1274 = vmatprep.subr.mxu0 0.0
    %1275 = vmatpush2.msra.mxu0 0.0
    %1276 = vmatprep.subr.mxu0 0.0
    %1277 = vmatpush2.msra.mxu0 0.0
    %1278 = vmatprep.mubr.f32.mxu0 0.0
    %1279 = vmatmul.mubr.f32.gmra.mxu0 %v1212
    %v1280 = vpop.f32.mrf.mxu0
    %v1281 = vadd.f32 0.0, %v1280
    %v1282 = vpop.f32.mrf.mxu0
    %1283 = vdwg.mxu0
    %v1285 = vrot.slane %v1281, 6
    %v1287 = vadd.f32 %v1100, %v1285
    %v1288 = vtanh.pop %v1287
    %v1289 = vxor.u32 %v1287, 2147483648
    %v1290 = vmul.f32 %v1289, 1.442695
    %v1291 = vpow.pop %v1290
    %v1292 = vadd.f32 %v1291, 1.0
    %v1293 = vrcp.pop %v1292
    %v1294 = vmul.f32 1.0, %v1293
    %v1295 = vsel %vm54, %v1288, %v1294
    %v1297 = vrot.slane %v1295, 2
    %1299 = vrot.lane.b32.xlu0 %v1297, 64
    %v1300 = vpop.permute.xlu0 %1299
    %v1302 = vrot.slane %v1300, 6
    %v1304 = vmul.f32 %v1295, %v1302
    %v1306 = vrot.slane %v1304, 2
    %1308 = vrot.lane.b32.xlu0 %v1306, 96
    %v1309 = vpop.permute.xlu0 %1308
    %v1311 = vrot.slane %v1210, 6
    %v1313 = vmul.f32 %v1295, %v1311
    %v1315 = vrot.slane %v1309, 6
    %v1317 = vadd.f32 %v1313, %v1315
    %v1318 = vtanh.pop %v1317
    %v1320 = vrot.slane %v1318, 2
    %v1322 = vmul.f32 %v1300, %v1320
    %1323 = vst [vmem:[#allocation2 + $0x2] sm:$0x3] %v1322
    %1324 = vmatprep.subr.mxu0 0.0
    %1325 = vmatpush1.msra.mxu0 %v1124
    %1326 = vmatprep.subr.mxu0 0.0
    %1327 = vmatpush1.msra.mxu0 %v1123
    %1328 = vmatprep.subr.mxu0 0.0
    %1329 = vmatpush1.msra.mxu0 %v1122
    %1330 = vmatprep.subr.mxu0 0.0
    %1331 = vmatpush1.msra.mxu0 %v1121
    %1332 = vmatprep.subr.mxu0 0.0
    %1333 = vmatpush1.msra.mxu0 %v1120
    %1334 = vmatprep.subr.mxu0 0.0
    %1335 = vmatpush1.msra.mxu0 %v1119
    %1336 = vmatprep.subr.mxu0 0.0
    %1337 = vmatpush1.msra.mxu0 %v1118
    %1338 = vmatprep.subr.mxu0 0.0
    %1339 = vmatpush1.msra.mxu0 %v1117
    %1340 = vmatprep.subr.mxu0 0.0
    %1341 = vmatpush1.msra.mxu0 %v1116
    %1342 = vmatprep.subr.mxu0 0.0
    %1343 = vmatpush1.msra.mxu0 %v1115
    %1344 = vmatprep.subr.mxu0 0.0
    %1345 = vmatpush1.msra.mxu0 %v1114
    %1346 = vmatprep.subr.mxu0 0.0
    %1347 = vmatpush1.msra.mxu0 %v1113
    %1348 = vmatprep.subr.mxu0 0.0
    %1349 = vmatpush1.msra.mxu0 %v1112
    %1350 = vmatprep.subr.mxu0 0.0
    %1351 = vmatpush1.msra.mxu0 %v1111
    %1352 = vmatprep.subr.mxu0 0.0
    %1353 = vmatpush1.msra.mxu0 %v1110
    %1354 = vmatprep.subr.mxu0 0.0
    %1355 = vmatpush1.msra.mxu0 %v1109
    %1356 = vmatprep.subr.mxu0 0.0
    %1357 = vmatpush2.msra.mxu0 0.0
    %1358 = vmatprep.subr.mxu0 0.0
    %1359 = vmatpush2.msra.mxu0 0.0
    %1360 = vmatprep.subr.mxu0 0.0
    %1361 = vmatpush2.msra.mxu0 0.0
    %1362 = vmatprep.subr.mxu0 0.0
    %1363 = vmatpush2.msra.mxu0 0.0
    %1364 = vmatprep.subr.mxu0 0.0
    %1365 = vmatpush2.msra.mxu0 0.0
    %1366 = vmatprep.subr.mxu0 0.0
    %1367 = vmatpush2.msra.mxu0 0.0
    %1368 = vmatprep.subr.mxu0 0.0
    %1369 = vmatpush2.msra.mxu0 0.0
    %1370 = vmatprep.subr.mxu0 0.0
    %1371 = vmatpush2.msra.mxu0 0.0
    %1372 = vmatprep.subr.mxu0 0.0
    %1373 = vmatpush2.msra.mxu0 0.0
    %1374 = vmatprep.subr.mxu0 0.0
    %1375 = vmatpush2.msra.mxu0 0.0
    %1376 = vmatprep.subr.mxu0 0.0
    %1377 = vmatpush2.msra.mxu0 0.0
    %1378 = vmatprep.subr.mxu0 0.0
    %1379 = vmatpush2.msra.mxu0 0.0
    %1380 = vmatprep.subr.mxu0 0.0
    %1381 = vmatpush2.msra.mxu0 0.0
    %1382 = vmatprep.subr.mxu0 0.0
    %1383 = vmatpush2.msra.mxu0 0.0
    %1384 = vmatprep.subr.mxu0 0.0
    %1385 = vmatpush2.msra.mxu0 0.0
    %1386 = vmatprep.subr.mxu0 0.0
    %1387 = vmatpush2.msra.mxu0 0.0
    %1388 = vmatprep.mubr.f32.mxu0 0.0
    %1389 = vmatmul.mubr.f32.gmra.mxu0 %v1322
    %v1390 = vpop.f32.mrf.mxu0
    %v1391 = vadd.f32 0.0, %v1390
    %v1392 = vpop.f32.mrf.mxu0
    %1393 = vdwg.mxu0
    %v1395 = vrot.slane %v1391, 4
    %v1397 = vadd.f32 %v1100, %v1395
    %v1398 = vtanh.pop %v1397
    %v1399 = vxor.u32 %v1397, 2147483648
    %v1400 = vmul.f32 %v1399, 1.442695
    %v1401 = vpow.pop %v1400
    %v1402 = vadd.f32 %v1401, 1.0
    %v1403 = vrcp.pop %v1402
    %v1404 = vmul.f32 1.0, %v1403
    %v1405 = vsel %vm54, %v1398, %v1404
    %v1407 = vrot.slane %v1405, 4
    %1409 = vrot.lane.b32.xlu0 %v1407, 64
    %v1410 = vpop.permute.xlu0 %1409
    %v1412 = vrot.slane %v1410, 4
    %v1414 = vmul.f32 %v1405, %v1412
    %v1416 = vrot.slane %v1414, 4
    %1418 = vrot.lane.b32.xlu0 %v1416, 96
    %v1419 = vpop.permute.xlu0 %1418
    %v1421 = vrot.slane %v1317, 6
    %v1423 = vmul.f32 %v1405, %v1421
    %v1425 = vrot.slane %v1419, 4
    %v1427 = vadd.f32 %v1423, %v1425
    %v1428 = vtanh.pop %v1427
    %v1430 = vrot.slane %v1428, 4
    %v1432 = vmul.f32 %v1410, %v1430
    %1433 = vst [vmem:[#allocation2 + $0x4] sm:$0x3] %v1432
    %1434 = vmatprep.subr.mxu0 0.0
    %1435 = vmatpush1.msra.mxu0 %v1124
    %1436 = vmatprep.subr.mxu0 0.0
    %1437 = vmatpush1.msra.mxu0 %v1123
    %1438 = vmatprep.subr.mxu0 0.0
    %1439 = vmatpush1.msra.mxu0 %v1122
    %1440 = vmatprep.subr.mxu0 0.0
    %1441 = vmatpush1.msra.mxu0 %v1121
    %1442 = vmatprep.subr.mxu0 0.0
    %1443 = vmatpush1.msra.mxu0 %v1120
    %1444 = vmatprep.subr.mxu0 0.0
    %1445 = vmatpush1.msra.mxu0 %v1119
    %1446 = vmatprep.subr.mxu0 0.0
    %1447 = vmatpush1.msra.mxu0 %v1118
    %1448 = vmatprep.subr.mxu0 0.0
    %1449 = vmatpush1.msra.mxu0 %v1117
    %1450 = vmatprep.subr.mxu0 0.0
    %1451 = vmatpush1.msra.mxu0 %v1116
    %1452 = vmatprep.subr.mxu0 0.0
    %1453 = vmatpush1.msra.mxu0 %v1115
    %1454 = vmatprep.subr.mxu0 0.0
    %1455 = vmatpush1.msra.mxu0 %v1114
    %1456 = vmatprep.subr.mxu0 0.0
    %1457 = vmatpush1.msra.mxu0 %v1113
    %1458 = vmatprep.subr.mxu0 0.0
    %1459 = vmatpush1.msra.mxu0 %v1112
    %1460 = vmatprep.subr.mxu0 0.0
    %1461 = vmatpush1.msra.mxu0 %v1111
    %1462 = vmatprep.subr.mxu0 0.0
    %1463 = vmatpush1.msra.mxu0 %v1110
    %1464 = vmatprep.subr.mxu0 0.0
    %1465 = vmatpush1.msra.mxu0 %v1109
    %1466 = vmatprep.subr.mxu0 0.0
    %1467 = vmatpush2.msra.mxu0 0.0
    %1468 = vmatprep.subr.mxu0 0.0
    %1469 = vmatpush2.msra.mxu0 0.0
    %1470 = vmatprep.subr.mxu0 0.0
    %1471 = vmatpush2.msra.mxu0 0.0
    %1472 = vmatprep.subr.mxu0 0.0
    %1473 = vmatpush2.msra.mxu0 0.0
    %1474 = vmatprep.subr.mxu0 0.0
    %1475 = vmatpush2.msra.mxu0 0.0
    %1476 = vmatprep.subr.mxu0 0.0
    %1477 = vmatpush2.msra.mxu0 0.0
    %1478 = vmatprep.subr.mxu0 0.0
    %1479 = vmatpush2.msra.mxu0 0.0
    %1480 = vmatprep.subr.mxu0 0.0
    %1481 = vmatpush2.msra.mxu0 0.0
    %1482 = vmatprep.subr.mxu0 0.0
    %1483 = vmatpush2.msra.mxu0 0.0
    %1484 = vmatprep.subr.mxu0 0.0
    %1485 = vmatpush2.msra.mxu0 0.0
    %1486 = vmatprep.subr.mxu0 0.0
    %1487 = vmatpush2.msra.mxu0 0.0
    %1488 = vmatprep.subr.mxu0 0.0
    %1489 = vmatpush2.msra.mxu0 0.0
    %1490 = vmatprep.subr.mxu0 0.0
    %1491 = vmatpush2.msra.mxu0 0.0
    %1492 = vmatprep.subr.mxu0 0.0
    %1493 = vmatpush2.msra.mxu0 0.0
    %1494 = vmatprep.subr.mxu0 0.0
    %1495 = vmatpush2.msra.mxu0 0.0
    %1496 = vmatprep.subr.mxu0 0.0
    %1497 = vmatpush2.msra.mxu0 0.0
    %1498 = vmatprep.mubr.f32.mxu0 0.0
    %1499 = vmatmul.mubr.f32.gmra.mxu0 %v1432
    %v1500 = vpop.f32.mrf.mxu0
    %v1501 = vadd.f32 0.0, %v1500
    %v1502 = vpop.f32.mrf.mxu0
    %1503 = vdwg.mxu0
    %v1505 = vrot.slane %v1501, 2
    %v1507 = vadd.f32 %v1100, %v1505
    %v1508 = vtanh.pop %v1507
    %v1509 = vxor.u32 %v1507, 2147483648
    %v1510 = vmul.f32 %v1509, 1.442695
    %v1511 = vpow.pop %v1510
    %v1512 = vadd.f32 %v1511, 1.0
    %v1513 = vrcp.pop %v1512
    %v1514 = vmul.f32 1.0, %v1513
    %v1515 = vsel %vm54, %v1508, %v1514
    %v1517 = vrot.slane %v1515, 6
    %1519 = vrot.lane.b32.xlu0 %v1517, 64
    %v1520 = vpop.permute.xlu0 %1519
    %v1522 = vrot.slane %v1520, 2
    %v1524 = vmul.f32 %v1515, %v1522
    %v1526 = vrot.slane %v1524, 6
    %1528 = vrot.lane.b32.xlu0 %v1526, 96
    %v1529 = vpop.permute.xlu0 %1528
    %v1531 = vrot.slane %v1427, 6
    %v1533 = vmul.f32 %v1515, %v1531
    %v1535 = vrot.slane %v1529, 2
    %v1537 = vadd.f32 %v1533, %v1535
    %v1538 = vtanh.pop %v1537
    %v1540 = vrot.slane %v1538, 6
    %v1542 = vmul.f32 %v1520, %v1540
    %1543 = vst [vmem:[#allocation2 + $0x6] sm:$0x3] %v1542
    %1544 = vmatprep.subr.mxu0 0.0
    %1545 = vmatpush1.msra.mxu0 %v1124
    %1546 = vmatprep.subr.mxu0 0.0
    %1547 = vmatpush1.msra.mxu0 %v1123
    %1548 = vmatprep.subr.mxu0 0.0
    %1549 = vmatpush1.msra.mxu0 %v1122
    %1550 = vmatprep.subr.mxu0 0.0
    %1551 = vmatpush1.msra.mxu0 %v1121
    %1552 = vmatprep.subr.mxu0 0.0
    %1553 = vmatpush1.msra.mxu0 %v1120
    %1554 = vmatprep.subr.mxu0 0.0
    %1555 = vmatpush1.msra.mxu0 %v1119
    %1556 = vmatprep.subr.mxu0 0.0
    %1557 = vmatpush1.msra.mxu0 %v1118
    %1558 = vmatprep.subr.mxu0 0.0
    %1559 = vmatpush1.msra.mxu0 %v1117
    %1560 = vmatprep.subr.mxu0 0.0
    %1561 = vmatpush1.msra.mxu0 %v1116
    %1562 = vmatprep.subr.mxu0 0.0
    %1563 = vmatpush1.msra.mxu0 %v1115
    %1564 = vmatprep.subr.mxu0 0.0
    %1565 = vmatpush1.msra.mxu0 %v1114
    %1566 = vmatprep.subr.mxu0 0.0
    %1567 = vmatpush1.msra.mxu0 %v1113
    %1568 = vmatprep.subr.mxu0 0.0
    %1569 = vmatpush1.msra.mxu0 %v1112
    %1570 = vmatprep.subr.mxu0 0.0
    %1571 = vmatpush1.msra.mxu0 %v1111
    %1572 = vmatprep.subr.mxu0 0.0
    %1573 = vmatpush1.msra.mxu0 %v1110
    %1574 = vmatprep.subr.mxu0 0.0
    %1575 = vmatpush1.msra.mxu0 %v1109
    %1576 = vmatprep.subr.mxu0 0.0
    %1577 = vmatpush2.msra.mxu0 0.0
    %1578 = vmatprep.subr.mxu0 0.0
    %1579 = vmatpush2.msra.mxu0 0.0
    %1580 = vmatprep.subr.mxu0 0.0
    %1581 = vmatpush2.msra.mxu0 0.0
    %1582 = vmatprep.subr.mxu0 0.0
    %1583 = vmatpush2.msra.mxu0 0.0
    %1584 = vmatprep.subr.mxu0 0.0
    %1585 = vmatpush2.msra.mxu0 0.0
    %1586 = vmatprep.subr.mxu0 0.0
    %1587 = vmatpush2.msra.mxu0 0.0
    %1588 = vmatprep.subr.mxu0 0.0
    %1589 = vmatpush2.msra.mxu0 0.0
    %1590 = vmatprep.subr.mxu0 0.0
    %1591 = vmatpush2.msra.mxu0 0.0
    %1592 = vmatprep.subr.mxu0 0.0
    %1593 = vmatpush2.msra.mxu0 0.0
    %1594 = vmatprep.subr.mxu0 0.0
    %1595 = vmatpush2.msra.mxu0 0.0
    %1596 = vmatprep.subr.mxu0 0.0
    %1597 = vmatpush2.msra.mxu0 0.0
    %1598 = vmatprep.subr.mxu0 0.0
    %1599 = vmatpush2.msra.mxu0 0.0
    %1600 = vmatprep.subr.mxu0 0.0
    %1601 = vmatpush2.msra.mxu0 0.0
    %1602 = vmatprep.subr.mxu0 0.0
    %1603 = vmatpush2.msra.mxu0 0.0
    %1604 = vmatprep.subr.mxu0 0.0
    %1605 = vmatpush2.msra.mxu0 0.0
    %1606 = vmatprep.subr.mxu0 0.0
    %1607 = vmatpush2.msra.mxu0 0.0
    %1608 = vmatprep.mubr.f32.mxu0 0.0
    %1609 = vmatmul.mubr.f32.gmra.mxu0 %v1542
    %v1610 = vpop.f32.mrf.mxu0
    %v1611 = vadd.f32 0.0, %v1610
    %v1612 = vpop.f32.mrf.mxu0
    %1613 = vdwg.mxu0
    %v1614 = vadd.f32 %v1105, %v1611
    %v1615 = vtanh.pop %v1614
    %v1616 = vxor.u32 %v1614, 2147483648
    %v1617 = vmul.f32 %v1616, 1.442695
    %v1618 = vpow.pop %v1617
    %v1619 = vadd.f32 %v1618, 1.0
    %v1620 = vrcp.pop %v1619
    %v1621 = vmul.f32 1.0, %v1620
    %v1622 = vsel %vm54, %v1615, %v1621
    %1623 = vrot.lane.b32.xlu0 %v1622, 64
    %v1624 = vpop.permute.xlu0 %1623
    %v1625 = vmul.f32 %v1622, %v1624
    %1626 = vrot.lane.b32.xlu0 %v1625, 96
    %v1627 = vpop.permute.xlu0 %1626
    %v1629 = vrot.slane %v1537, 6
    %v1631 = vmul.f32 %v1622, %v1629
    %v1632 = vadd.f32 %v1631, %v1627
    %v1633 = vtanh.pop %v1632
    %v1634 = vmul.f32 %v1624, %v1633
    %1635 = vst [vmem:[#allocation2 + $0x8] sm:$0x3] %v1634
    %1636 = vmatprep.subr.mxu0 0.0
    %1637 = vmatpush1.msra.mxu0 %v1124
    %1638 = vmatprep.subr.mxu0 0.0
    %1639 = vmatpush1.msra.mxu0 %v1123
    %1640 = vmatprep.subr.mxu0 0.0
    %1641 = vmatpush1.msra.mxu0 %v1122
    %1642 = vmatprep.subr.mxu0 0.0
    %1643 = vmatpush1.msra.mxu0 %v1121
    %1644 = vmatprep.subr.mxu0 0.0
    %1645 = vmatpush1.msra.mxu0 %v1120
    %1646 = vmatprep.subr.mxu0 0.0
    %1647 = vmatpush1.msra.mxu0 %v1119
    %1648 = vmatprep.subr.mxu0 0.0
    %1649 = vmatpush1.msra.mxu0 %v1118
    %1650 = vmatprep.subr.mxu0 0.0
    %1651 = vmatpush1.msra.mxu0 %v1117
    %1652 = vmatprep.subr.mxu0 0.0
    %1653 = vmatpush1.msra.mxu0 %v1116
    %1654 = vmatprep.subr.mxu0 0.0
    %1655 = vmatpush1.msra.mxu0 %v1115
    %1656 = vmatprep.subr.mxu0 0.0
    %1657 = vmatpush1.msra.mxu0 %v1114
    %1658 = vmatprep.subr.mxu0 0.0
    %1659 = vmatpush1.msra.mxu0 %v1113
    %1660 = vmatprep.subr.mxu0 0.0
    %1661 = vmatpush1.msra.mxu0 %v1112
    %1662 = vmatprep.subr.mxu0 0.0
    %1663 = vmatpush1.msra.mxu0 %v1111
    %1664 = vmatprep.subr.mxu0 0.0
    %1665 = vmatpush1.msra.mxu0 %v1110
    %1666 = vmatprep.subr.mxu0 0.0
    %1667 = vmatpush1.msra.mxu0 %v1109
    %1668 = vmatprep.subr.mxu0 0.0
    %1669 = vmatpush2.msra.mxu0 0.0
    %1670 = vmatprep.subr.mxu0 0.0
    %1671 = vmatpush2.msra.mxu0 0.0
    %1672 = vmatprep.subr.mxu0 0.0
    %1673 = vmatpush2.msra.mxu0 0.0
    %1674 = vmatprep.subr.mxu0 0.0
    %1675 = vmatpush2.msra.mxu0 0.0
    %1676 = vmatprep.subr.mxu0 0.0
    %1677 = vmatpush2.msra.mxu0 0.0
    %1678 = vmatprep.subr.mxu0 0.0
    %1679 = vmatpush2.msra.mxu0 0.0
    %1680 = vmatprep.subr.mxu0 0.0
    %1681 = vmatpush2.msra.mxu0 0.0
    %1682 = vmatprep.subr.mxu0 0.0
    %1683 = vmatpush2.msra.mxu0 0.0
    %1684 = vmatprep.subr.mxu0 0.0
    %1685 = vmatpush2.msra.mxu0 0.0
    %1686 = vmatprep.subr.mxu0 0.0
    %1687 = vmatpush2.msra.mxu0 0.0
    %1688 = vmatprep.subr.mxu0 0.0
    %1689 = vmatpush2.msra.mxu0 0.0
    %1690 = vmatprep.subr.mxu0 0.0
    %1691 = vmatpush2.msra.mxu0 0.0
    %1692 = vmatprep.subr.mxu0 0.0
    %1693 = vmatpush2.msra.mxu0 0.0
    %1694 = vmatprep.subr.mxu0 0.0
    %1695 = vmatpush2.msra.mxu0 0.0
    %1696 = vmatprep.subr.mxu0 0.0
    %1697 = vmatpush2.msra.mxu0 0.0
    %1698 = vmatprep.subr.mxu0 0.0
    %1699 = vmatpush2.msra.mxu0 0.0
    %1700 = vmatprep.mubr.f32.mxu0 0.0
    %1701 = vmatmul.mubr.f32.gmra.mxu0 %v1634
    %v1702 = vpop.f32.mrf.mxu0
    %v1703 = vadd.f32 0.0, %v1702
    %v1704 = vpop.f32.mrf.mxu0
    %1705 = vdwg.mxu0
    %v1707 = vrot.slane %v1703, 6
    %v1709 = vadd.f32 %v1105, %v1707
    %v1710 = vtanh.pop %v1709
    %v1711 = vxor.u32 %v1709, 2147483648
    %v1712 = vmul.f32 %v1711, 1.442695
    %v1713 = vpow.pop %v1712
    %v1714 = vadd.f32 %v1713, 1.0
    %v1715 = vrcp.pop %v1714
    %v1716 = vmul.f32 1.0, %v1715
    %v1717 = vsel %vm54, %v1710, %v1716
    %v1719 = vrot.slane %v1717, 2
    %1721 = vrot.lane.b32.xlu0 %v1719, 64
    %v1722 = vpop.permute.xlu0 %1721
    %v1724 = vrot.slane %v1722, 6
    %v1726 = vmul.f32 %v1717, %v1724
    %v1728 = vrot.slane %v1726, 2
    %1730 = vrot.lane.b32.xlu0 %v1728, 96
    %v1731 = vpop.permute.xlu0 %1730
    %v1733 = vrot.slane %v1632, 6
    %v1735 = vmul.f32 %v1717, %v1733
    %v1737 = vrot.slane %v1731, 6
    %v1739 = vadd.f32 %v1735, %v1737
    %v1740 = vtanh.pop %v1739
    %v1742 = vrot.slane %v1740, 2
    %v1744 = vmul.f32 %v1722, %v1742
    %1745 = vst [vmem:[#allocation2 + $0xa] sm:$0x3] %v1744
    %1746 = vmatprep.subr.mxu0 0.0
    %1747 = vmatpush1.msra.mxu0 %v1124
    %1748 = vmatprep.subr.mxu0 0.0
    %1749 = vmatpush1.msra.mxu0 %v1123
    %1750 = vmatprep.subr.mxu0 0.0
    %1751 = vmatpush1.msra.mxu0 %v1122
    %1752 = vmatprep.subr.mxu0 0.0
    %1753 = vmatpush1.msra.mxu0 %v1121
    %1754 = vmatprep.subr.mxu0 0.0
    %1755 = vmatpush1.msra.mxu0 %v1120
    %1756 = vmatprep.subr.mxu0 0.0
    %1757 = vmatpush1.msra.mxu0 %v1119
    %1758 = vmatprep.subr.mxu0 0.0
    %1759 = vmatpush1.msra.mxu0 %v1118
    %1760 = vmatprep.subr.mxu0 0.0
    %1761 = vmatpush1.msra.mxu0 %v1117
    %1762 = vmatprep.subr.mxu0 0.0
    %1763 = vmatpush1.msra.mxu0 %v1116
    %1764 = vmatprep.subr.mxu0 0.0
    %1765 = vmatpush1.msra.mxu0 %v1115
    %1766 = vmatprep.subr.mxu0 0.0
    %1767 = vmatpush1.msra.mxu0 %v1114
    %1768 = vmatprep.subr.mxu0 0.0
    %1769 = vmatpush1.msra.mxu0 %v1113
    %1770 = vmatprep.subr.mxu0 0.0
    %1771 = vmatpush1.msra.mxu0 %v1112
    %1772 = vmatprep.subr.mxu0 0.0
    %1773 = vmatpush1.msra.mxu0 %v1111
    %1774 = vmatprep.subr.mxu0 0.0
    %1775 = vmatpush1.msra.mxu0 %v1110
    %1776 = vmatprep.subr.mxu0 0.0
    %1777 = vmatpush1.msra.mxu0 %v1109
    %1778 = vmatprep.subr.mxu0 0.0
    %1779 = vmatpush2.msra.mxu0 0.0
    %1780 = vmatprep.subr.mxu0 0.0
    %1781 = vmatpush2.msra.mxu0 0.0
    %1782 = vmatprep.subr.mxu0 0.0
    %1783 = vmatpush2.msra.mxu0 0.0
    %1784 = vmatprep.subr.mxu0 0.0
    %1785 = vmatpush2.msra.mxu0 0.0
    %1786 = vmatprep.subr.mxu0 0.0
    %1787 = vmatpush2.msra.mxu0 0.0
    %1788 = vmatprep.subr.mxu0 0.0
    %1789 = vmatpush2.msra.mxu0 0.0
    %1790 = vmatprep.subr.mxu0 0.0
    %1791 = vmatpush2.msra.mxu0 0.0
    %1792 = vmatprep.subr.mxu0 0.0
    %1793 = vmatpush2.msra.mxu0 0.0
    %1794 = vmatprep.subr.mxu0 0.0
    %1795 = vmatpush2.msra.mxu0 0.0
    %1796 = vmatprep.subr.mxu0 0.0
    %1797 = vmatpush2.msra.mxu0 0.0
    %1798 = vmatprep.subr.mxu0 0.0
    %1799 = vmatpush2.msra.mxu0 0.0
    %1800 = vmatprep.subr.mxu0 0.0
    %1801 = vmatpush2.msra.mxu0 0.0
    %1802 = vmatprep.subr.mxu0 0.0
    %1803 = vmatpush2.msra.mxu0 0.0
    %1804 = vmatprep.subr.mxu0 0.0
    %1805 = vmatpush2.msra.mxu0 0.0
    %1806 = vmatprep.subr.mxu0 0.0
    %1807 = vmatpush2.msra.mxu0 0.0
    %1808 = vmatprep.subr.mxu0 0.0
    %1809 = vmatpush2.msra.mxu0 0.0
    %1810 = vmatprep.mubr.f32.mxu0 0.0
    %1811 = vmatmul.mubr.f32.gmra.mxu0 %v1744
    %v1812 = vpop.f32.mrf.mxu0
    %v1813 = vadd.f32 0.0, %v1812
    %v1814 = vpop.f32.mrf.mxu0
    %1815 = vdwg.mxu0
    %v1817 = vrot.slane %v1813, 4
    %v1819 = vadd.f32 %v1105, %v1817
    %v1820 = vtanh.pop %v1819
    %v1821 = vxor.u32 %v1819, 2147483648
    %v1822 = vmul.f32 %v1821, 1.442695
    %v1823 = vpow.pop %v1822
    %v1824 = vadd.f32 %v1823, 1.0
    %v1825 = vrcp.pop %v1824
    %v1826 = vmul.f32 1.0, %v1825
    %v1827 = vsel %vm54, %v1820, %v1826
    %v1829 = vrot.slane %v1827, 4
    %1831 = vrot.lane.b32.xlu0 %v1829, 64
    %v1832 = vpop.permute.xlu0 %1831
    %v1834 = vrot.slane %v1832, 4
    %v1836 = vmul.f32 %v1827, %v1834
    %v1838 = vrot.slane %v1836, 4
    %1840 = vrot.lane.b32.xlu0 %v1838, 96
    %v1841 = vpop.permute.xlu0 %1840
    %v1843 = vrot.slane %v1739, 6
    %v1845 = vmul.f32 %v1827, %v1843
    %v1847 = vrot.slane %v1841, 4
    %v1849 = vadd.f32 %v1845, %v1847
    %v1850 = vtanh.pop %v1849
    %v1852 = vrot.slane %v1850, 4
    %v1854 = vmul.f32 %v1832, %v1852
    %1855 = vst [vmem:[#allocation2 + $0xc] sm:$0x3] %v1854
    %1856 = vmatprep.subr.mxu0 0.0
    %1857 = vmatpush1.msra.mxu0 %v1124
    %1858 = vmatprep.subr.mxu0 0.0
    %1859 = vmatpush1.msra.mxu0 %v1123
    %1860 = vmatprep.subr.mxu0 0.0
    %1861 = vmatpush1.msra.mxu0 %v1122
    %1862 = vmatprep.subr.mxu0 0.0
    %1863 = vmatpush1.msra.mxu0 %v1121
    %1864 = vmatprep.subr.mxu0 0.0
    %1865 = vmatpush1.msra.mxu0 %v1120
    %1866 = vmatprep.subr.mxu0 0.0
    %1867 = vmatpush1.msra.mxu0 %v1119
    %1868 = vmatprep.subr.mxu0 0.0
    %1869 = vmatpush1.msra.mxu0 %v1118
    %1870 = vmatprep.subr.mxu0 0.0
    %1871 = vmatpush1.msra.mxu0 %v1117
    %1872 = vmatprep.subr.mxu0 0.0
    %1873 = vmatpush1.msra.mxu0 %v1116
    %1874 = vmatprep.subr.mxu0 0.0
    %1875 = vmatpush1.msra.mxu0 %v1115
    %1876 = vmatprep.subr.mxu0 0.0
    %1877 = vmatpush1.msra.mxu0 %v1114
    %1878 = vmatprep.subr.mxu0 0.0
    %1879 = vmatpush1.msra.mxu0 %v1113
    %1880 = vmatprep.subr.mxu0 0.0
    %1881 = vmatpush1.msra.mxu0 %v1112
    %1882 = vmatprep.subr.mxu0 0.0
    %1883 = vmatpush1.msra.mxu0 %v1111
    %1884 = vmatprep.subr.mxu0 0.0
    %1885 = vmatpush1.msra.mxu0 %v1110
    %1886 = vmatprep.subr.mxu0 0.0
    %1887 = vmatpush1.msra.mxu0 %v1109
    %1888 = vmatprep.subr.mxu0 0.0
    %1889 = vmatpush2.msra.mxu0 0.0
    %1890 = vmatprep.subr.mxu0 0.0
    %1891 = vmatpush2.msra.mxu0 0.0
    %1892 = vmatprep.subr.mxu0 0.0
    %1893 = vmatpush2.msra.mxu0 0.0
    %1894 = vmatprep.subr.mxu0 0.0
    %1895 = vmatpush2.msra.mxu0 0.0
    %1896 = vmatprep.subr.mxu0 0.0
    %1897 = vmatpush2.msra.mxu0 0.0
    %1898 = vmatprep.subr.mxu0 0.0
    %1899 = vmatpush2.msra.mxu0 0.0
    %1900 = vmatprep.subr.mxu0 0.0
    %1901 = vmatpush2.msra.mxu0 0.0
    %1902 = vmatprep.subr.mxu0 0.0
    %1903 = vmatpush2.msra.mxu0 0.0
    %1904 = vmatprep.subr.mxu0 0.0
    %1905 = vmatpush2.msra.mxu0 0.0
    %1906 = vmatprep.subr.mxu0 0.0
    %1907 = vmatpush2.msra.mxu0 0.0
    %1908 = vmatprep.subr.mxu0 0.0
    %1909 = vmatpush2.msra.mxu0 0.0
    %1910 = vmatprep.subr.mxu0 0.0
    %1911 = vmatpush2.msra.mxu0 0.0
    %1912 = vmatprep.subr.mxu0 0.0
    %1913 = vmatpush2.msra.mxu0 0.0
    %1914 = vmatprep.subr.mxu0 0.0
    %1915 = vmatpush2.msra.mxu0 0.0
    %1916 = vmatprep.subr.mxu0 0.0
    %1917 = vmatpush2.msra.mxu0 0.0
    %1918 = vmatprep.subr.mxu0 0.0
    %1919 = vmatpush2.msra.mxu0 0.0
    %1920 = vmatprep.mubr.f32.mxu0 0.0
    %1921 = vmatmul.mubr.f32.gmra.mxu0 %v1854
    %v1922 = vpop.f32.mrf.mxu0
    %v1923 = vadd.f32 0.0, %v1922
    %v1924 = vpop.f32.mrf.mxu0
    %1925 = vdwg.mxu0
    %v1927 = vrot.slane %v1923, 2
    %v1929 = vadd.f32 %v1105, %v1927
    %v1930 = vtanh.pop %v1929
    %v1931 = vxor.u32 %v1929, 2147483648
    %v1932 = vmul.f32 %v1931, 1.442695
    %v1933 = vpow.pop %v1932
    %v1934 = vadd.f32 %v1933, 1.0
    %v1935 = vrcp.pop %v1934
    %v1936 = vmul.f32 1.0, %v1935
    %v1937 = vsel %vm54, %v1930, %v1936
    %v1939 = vrot.slane %v1937, 6
    %1941 = vrot.lane.b32.xlu0 %v1939, 64
    %v1942 = vpop.permute.xlu0 %1941
    %v1944 = vrot.slane %v1942, 2
    %v1946 = vmul.f32 %v1937, %v1944
    %v1948 = vrot.slane %v1946, 6
    %1950 = vrot.lane.b32.xlu0 %v1948, 96
    %v1951 = vpop.permute.xlu0 %1950
    %v1953 = vrot.slane %v1849, 6
    %v1955 = vmul.f32 %v1937, %v1953
    %v1957 = vrot.slane %v1951, 2
    %v1959 = vadd.f32 %v1955, %v1957
    %v1960 = vtanh.pop %v1959
    %v1962 = vrot.slane %v1960, 6
    %v1964 = vmul.f32 %v1942, %v1962
    %1965 = vst [vmem:[#allocation2 + $0xe] sm:$0x3] %v1964
    %v1966 = vld [vmem:[#allocation2] sm:$0xff]
    %v1967 = vld [vmem:[#allocation2 + $0x8] sm:$0xff]
    %s1968 = scalar_lea.vmem [#allocation3], 128
    %v1969 = vld [vmem:[%s1968] sm:$0xff]
    %v1970 = vld [vmem:[%s1968 + $0x8] sm:$0xff]
    %v1971 = vld [vmem:[%s1968 + $0x10] sm:$0xff]
    %v1972 = vld [vmem:[%s1968 + $0x18] sm:$0xff]
    %v1973 = vld [vmem:[%s1968 + $0x20] sm:$0xff]
    %v1974 = vld [vmem:[%s1968 + $0x28] sm:$0xff]
    %v1975 = vld [vmem:[%s1968 + $0x30] sm:$0xff]
    %v1976 = vld [vmem:[%s1968 + $0x38] sm:$0xff]
    %v1977 = vld [vmem:[%s1968 + $0x40] sm:$0xff]
    %v1978 = vld [vmem:[%s1968 + $0x48] sm:$0xff]
    %v1979 = vld [vmem:[%s1968 + $0x50] sm:$0xff]
    %v1980 = vld [vmem:[%s1968 + $0x58] sm:$0xff]
    %v1981 = vld [vmem:[%s1968 + $0x60] sm:$0xff]
    %v1982 = vld [vmem:[%s1968 + $0x68] sm:$0xff]
    %v1983 = vld [vmem:[%s1968 + $0x70] sm:$0xff]
    %v1984 = vld [vmem:[%s1968 + $0x78] sm:$0xff]
    %s1985 = scalar_lea.vmem %s5, 2
    %v1986 = vld [vmem:[%s1985] sm:$0x1]
    %v1988 = vlaneseq
    %v1989 = vshrl.u32 %v1988, 7
    %v1990 = vsub.s32 0, %v1989
    %v1991 = vrot.slane %v1986, %v1990
    %1993 = vmatprep.subr.mxu0 0.0
    %1994 = vmatpush1.msra.mxu0 %v1984
    %1995 = vmatprep.subr.mxu0 0.0
    %1996 = vmatpush1.msra.mxu0 %v1983
    %1997 = vmatprep.subr.mxu0 0.0
    %1998 = vmatpush1.msra.mxu0 %v1982
    %1999 = vmatprep.subr.mxu0 0.0
    %2000 = vmatpush1.msra.mxu0 %v1981
    %2001 = vmatprep.subr.mxu0 0.0
    %2002 = vmatpush1.msra.mxu0 %v1980
    %2003 = vmatprep.subr.mxu0 0.0
    %2004 = vmatpush1.msra.mxu0 %v1979
    %2005 = vmatprep.subr.mxu0 0.0
    %2006 = vmatpush1.msra.mxu0 %v1978
    %2007 = vmatprep.subr.mxu0 0.0
    %2008 = vmatpush1.msra.mxu0 %v1977
    %2009 = vmatprep.subr.mxu0 0.0
    %2010 = vmatpush1.msra.mxu0 %v1976
    %2011 = vmatprep.subr.mxu0 0.0
    %2012 = vmatpush1.msra.mxu0 %v1975
    %2013 = vmatprep.subr.mxu0 0.0
    %2014 = vmatpush1.msra.mxu0 %v1974
    %2015 = vmatprep.subr.mxu0 0.0
    %2016 = vmatpush1.msra.mxu0 %v1973
    %2017 = vmatprep.subr.mxu0 0.0
    %2018 = vmatpush1.msra.mxu0 %v1972
    %2019 = vmatprep.subr.mxu0 0.0
    %2020 = vmatpush1.msra.mxu0 %v1971
    %2021 = vmatprep.subr.mxu0 0.0
    %2022 = vmatpush1.msra.mxu0 %v1970
    %2023 = vmatprep.subr.mxu0 0.0
    %2024 = vmatpush1.msra.mxu0 %v1969
    %2025 = vmatprep.subr.mxu0 0.0
    %2026 = vmatpush2.msra.mxu0 0.0
    %2027 = vmatprep.subr.mxu0 0.0
    %2028 = vmatpush2.msra.mxu0 0.0
    %2029 = vmatprep.subr.mxu0 0.0
    %2030 = vmatpush2.msra.mxu0 0.0
    %2031 = vmatprep.subr.mxu0 0.0
    %2032 = vmatpush2.msra.mxu0 0.0
    %2033 = vmatprep.subr.mxu0 0.0
    %2034 = vmatpush2.msra.mxu0 0.0
    %2035 = vmatprep.subr.mxu0 0.0
    %2036 = vmatpush2.msra.mxu0 0.0
    %2037 = vmatprep.subr.mxu0 0.0
    %2038 = vmatpush2.msra.mxu0 0.0
    %2039 = vmatprep.subr.mxu0 0.0
    %2040 = vmatpush2.msra.mxu0 0.0
    %2041 = vmatprep.subr.mxu0 0.0
    %2042 = vmatpush2.msra.mxu0 0.0
    %2043 = vmatprep.subr.mxu0 0.0
    %2044 = vmatpush2.msra.mxu0 0.0
    %2045 = vmatprep.subr.mxu0 0.0
    %2046 = vmatpush2.msra.mxu0 0.0
    %2047 = vmatprep.subr.mxu0 0.0
    %2048 = vmatpush2.msra.mxu0 0.0
    %2049 = vmatprep.subr.mxu0 0.0
    %2050 = vmatpush2.msra.mxu0 0.0
    %2051 = vmatprep.subr.mxu0 0.0
    %2052 = vmatpush2.msra.mxu0 0.0
    %2053 = vmatprep.subr.mxu0 0.0
    %2054 = vmatpush2.msra.mxu0 0.0
    %2055 = vmatprep.subr.mxu0 0.0
    %2056 = vmatpush2.msra.mxu0 0.0
    %2057 = vmatprep.mubr.f32.mxu0 0.0
    %2058 = vmatmul.mubr.f32.gmra.mxu0 %v1966
    %v2059 = vpop.f32.mrf.mxu0
    %v2060 = vadd.f32 %v1991, %v2059
    %v2061 = vpop.f32.mrf.mxu0
    %2062 = vmatprep.mubr.f32.mxu0 0.0
    %2063 = vmatmul.mubr.f32.gmra.mxu0 %v1967
    %v2064 = vpop.f32.mrf.mxu0
    %v2065 = vadd.f32 %v1991, %v2064
    %v2066 = vpop.f32.mrf.mxu0
    %2067 = vdwg.mxu0
    %s2068 = scalar_lea.vmem %s4, 256
    %v2069 = vld [vmem:[%s2068] sm:$0xff]
    %v2070 = vld [vmem:[%s2068 + $0x8] sm:$0xff]
    %v2071 = vld [vmem:[%s2068 + $0x10] sm:$0xff]
    %v2072 = vld [vmem:[%s2068 + $0x18] sm:$0xff]
    %v2073 = vld [vmem:[%s2068 + $0x20] sm:$0xff]
    %v2074 = vld [vmem:[%s2068 + $0x28] sm:$0xff]
    %v2075 = vld [vmem:[%s2068 + $0x30] sm:$0xff]
    %v2076 = vld [vmem:[%s2068 + $0x38] sm:$0xff]
    %v2077 = vld [vmem:[%s2068 + $0x40] sm:$0xff]
    %v2078 = vld [vmem:[%s2068 + $0x48] sm:$0xff]
    %v2079 = vld [vmem:[%s2068 + $0x50] sm:$0xff]
    %v2080 = vld [vmem:[%s2068 + $0x58] sm:$0xff]
    %v2081 = vld [vmem:[%s2068 + $0x60] sm:$0xff]
    %v2082 = vld [vmem:[%s2068 + $0x68] sm:$0xff]
    %v2083 = vld [vmem:[%s2068 + $0x70] sm:$0xff]
    %v2084 = vld [vmem:[%s2068 + $0x78] sm:$0xff]
    %2085 = vmatprep.subr.mxu0 0.0
    %2086 = vmatpush1.msra.mxu0 %v2084
    %2087 = vmatprep.subr.mxu0 0.0
    %2088 = vmatpush1.msra.mxu0 %v2083
    %2089 = vmatprep.subr.mxu0 0.0
    %2090 = vmatpush1.msra.mxu0 %v2082
    %2091 = vmatprep.subr.mxu0 0.0
    %2092 = vmatpush1.msra.mxu0 %v2081
    %2093 = vmatprep.subr.mxu0 0.0
    %2094 = vmatpush1.msra.mxu0 %v2080
    %2095 = vmatprep.subr.mxu0 0.0
    %2096 = vmatpush1.msra.mxu0 %v2079
    %2097 = vmatprep.subr.mxu0 0.0
    %2098 = vmatpush1.msra.mxu0 %v2078
    %2099 = vmatprep.subr.mxu0 0.0
    %2100 = vmatpush1.msra.mxu0 %v2077
    %2101 = vmatprep.subr.mxu0 0.0
    %2102 = vmatpush1.msra.mxu0 %v2076
    %2103 = vmatprep.subr.mxu0 0.0
    %2104 = vmatpush1.msra.mxu0 %v2075
    %2105 = vmatprep.subr.mxu0 0.0
    %2106 = vmatpush1.msra.mxu0 %v2074
    %2107 = vmatprep.subr.mxu0 0.0
    %2108 = vmatpush1.msra.mxu0 %v2073
    %2109 = vmatprep.subr.mxu0 0.0
    %2110 = vmatpush1.msra.mxu0 %v2072
    %2111 = vmatprep.subr.mxu0 0.0
    %2112 = vmatpush1.msra.mxu0 %v2071
    %2113 = vmatprep.subr.mxu0 0.0
    %2114 = vmatpush1.msra.mxu0 %v2070
    %2115 = vmatprep.subr.mxu0 0.0
    %2116 = vmatpush1.msra.mxu0 %v2069
    %2117 = vmatprep.subr.mxu0 0.0
    %2118 = vmatpush2.msra.mxu0 0.0
    %2119 = vmatprep.subr.mxu0 0.0
    %2120 = vmatpush2.msra.mxu0 0.0
    %2121 = vmatprep.subr.mxu0 0.0
    %2122 = vmatpush2.msra.mxu0 0.0
    %2123 = vmatprep.subr.mxu0 0.0
    %2124 = vmatpush2.msra.mxu0 0.0
    %2125 = vmatprep.subr.mxu0 0.0
    %2126 = vmatpush2.msra.mxu0 0.0
    %2127 = vmatprep.subr.mxu0 0.0
    %2128 = vmatpush2.msra.mxu0 0.0
    %2129 = vmatprep.subr.mxu0 0.0
    %2130 = vmatpush2.msra.mxu0 0.0
    %2131 = vmatprep.subr.mxu0 0.0
    %2132 = vmatpush2.msra.mxu0 0.0
    %2133 = vmatprep.subr.mxu0 0.0
    %2134 = vmatpush2.msra.mxu0 0.0
    %2135 = vmatprep.subr.mxu0 0.0
    %2136 = vmatpush2.msra.mxu0 0.0
    %2137 = vmatprep.subr.mxu0 0.0
    %2138 = vmatpush2.msra.mxu0 0.0
    %2139 = vmatprep.subr.mxu0 0.0
    %2140 = vmatpush2.msra.mxu0 0.0
    %2141 = vmatprep.subr.mxu0 0.0
    %2142 = vmatpush2.msra.mxu0 0.0
    %2143 = vmatprep.subr.mxu0 0.0
    %2144 = vmatpush2.msra.mxu0 0.0
    %2145 = vmatprep.subr.mxu0 0.0
    %2146 = vmatpush2.msra.mxu0 0.0
    %2147 = vmatprep.subr.mxu0 0.0
    %2148 = vmatpush2.msra.mxu0 0.0
    %2149 = vmatprep.mubr.f32.mxu0 0.0
    %2150 = vmatmul.mubr.f32.gmra.mxu0 0.0
    %v2151 = vpop.f32.mrf.mxu0
    %v2152 = vadd.f32 0.0, %v2151
    %v2153 = vpop.f32.mrf.mxu0
    %2154 = vdwg.mxu0
    %v2155 = vadd.f32 %v2060, %v2152
    %v2156 = vtanh.pop %v2155
    %v2157 = vxor.u32 %v2155, 2147483648
    %v2158 = vmul.f32 %v2157, 1.442695
    %v2159 = vpow.pop %v2158
    %v2160 = vadd.f32 %v2159, 1.0
    %v2161 = vrcp.pop %v2160
    %v2162 = vmul.f32 1.0, %v2161
    %v2163 = vsel %vm54, %v2156, %v2162
    %2164 = vrot.lane.b32.xlu0 %v2163, 64
    %v2165 = vpop.permute.xlu0 %2164
    %v2166 = vmul.f32 %v2163, %v2165
    %2167 = vrot.lane.b32.xlu0 %v2166, 96
    %v2168 = vpop.permute.xlu0 %2167
    %v2169 = vmul.f32 %v2163, 0.0
    %v2170 = vadd.f32 %v2169, %v2168
    %v2171 = vtanh.pop %v2170
    %v2172 = vmul.f32 %v2165, %v2171
    %2173 = vst [vmem:[#allocation2] sm:$0x3] %v2172
    %2174 = vmatprep.subr.mxu0 0.0
    %2175 = vmatpush1.msra.mxu0 %v2084
    %2176 = vmatprep.subr.mxu0 0.0
    %2177 = vmatpush1.msra.mxu0 %v2083
    %2178 = vmatprep.subr.mxu0 0.0
    %2179 = vmatpush1.msra.mxu0 %v2082
    %2180 = vmatprep.subr.mxu0 0.0
    %2181 = vmatpush1.msra.mxu0 %v2081
    %2182 = vmatprep.subr.mxu0 0.0
    %2183 = vmatpush1.msra.mxu0 %v2080
    %2184 = vmatprep.subr.mxu0 0.0
    %2185 = vmatpush1.msra.mxu0 %v2079
    %2186 = vmatprep.subr.mxu0 0.0
    %2187 = vmatpush1.msra.mxu0 %v2078
    %2188 = vmatprep.subr.mxu0 0.0
    %2189 = vmatpush1.msra.mxu0 %v2077
    %2190 = vmatprep.subr.mxu0 0.0
    %2191 = vmatpush1.msra.mxu0 %v2076
    %2192 = vmatprep.subr.mxu0 0.0
    %2193 = vmatpush1.msra.mxu0 %v2075
    %2194 = vmatprep.subr.mxu0 0.0
    %2195 = vmatpush1.msra.mxu0 %v2074
    %2196 = vmatprep.subr.mxu0 0.0
    %2197 = vmatpush1.msra.mxu0 %v2073
    %2198 = vmatprep.subr.mxu0 0.0
    %2199 = vmatpush1.msra.mxu0 %v2072
    %2200 = vmatprep.subr.mxu0 0.0
    %2201 = vmatpush1.msra.mxu0 %v2071
    %2202 = vmatprep.subr.mxu0 0.0
    %2203 = vmatpush1.msra.mxu0 %v2070
    %2204 = vmatprep.subr.mxu0 0.0
    %2205 = vmatpush1.msra.mxu0 %v2069
    %2206 = vmatprep.subr.mxu0 0.0
    %2207 = vmatpush2.msra.mxu0 0.0
    %2208 = vmatprep.subr.mxu0 0.0
    %2209 = vmatpush2.msra.mxu0 0.0
    %2210 = vmatprep.subr.mxu0 0.0
    %2211 = vmatpush2.msra.mxu0 0.0
    %2212 = vmatprep.subr.mxu0 0.0
    %2213 = vmatpush2.msra.mxu0 0.0
    %2214 = vmatprep.subr.mxu0 0.0
    %2215 = vmatpush2.msra.mxu0 0.0
    %2216 = vmatprep.subr.mxu0 0.0
    %2217 = vmatpush2.msra.mxu0 0.0
    %2218 = vmatprep.subr.mxu0 0.0
    %2219 = vmatpush2.msra.mxu0 0.0
    %2220 = vmatprep.subr.mxu0 0.0
    %2221 = vmatpush2.msra.mxu0 0.0
    %2222 = vmatprep.subr.mxu0 0.0
    %2223 = vmatpush2.msra.mxu0 0.0
    %2224 = vmatprep.subr.mxu0 0.0
    %2225 = vmatpush2.msra.mxu0 0.0
    %2226 = vmatprep.subr.mxu0 0.0
    %2227 = vmatpush2.msra.mxu0 0.0
    %2228 = vmatprep.subr.mxu0 0.0
    %2229 = vmatpush2.msra.mxu0 0.0
    %2230 = vmatprep.subr.mxu0 0.0
    %2231 = vmatpush2.msra.mxu0 0.0
    %2232 = vmatprep.subr.mxu0 0.0
    %2233 = vmatpush2.msra.mxu0 0.0
    %2234 = vmatprep.subr.mxu0 0.0
    %2235 = vmatpush2.msra.mxu0 0.0
    %2236 = vmatprep.subr.mxu0 0.0
    %2237 = vmatpush2.msra.mxu0 0.0
    %2238 = vmatprep.mubr.f32.mxu0 0.0
    %2239 = vmatmul.mubr.f32.gmra.mxu0 %v2172
    %v2240 = vpop.f32.mrf.mxu0
    %v2241 = vadd.f32 0.0, %v2240
    %v2242 = vpop.f32.mrf.mxu0
    %2243 = vdwg.mxu0
    %v2245 = vrot.slane %v2241, 6
    %v2247 = vadd.f32 %v2060, %v2245
    %v2248 = vtanh.pop %v2247
    %v2249 = vxor.u32 %v2247, 2147483648
    %v2250 = vmul.f32 %v2249, 1.442695
    %v2251 = vpow.pop %v2250
    %v2252 = vadd.f32 %v2251, 1.0
    %v2253 = vrcp.pop %v2252
    %v2254 = vmul.f32 1.0, %v2253
    %v2255 = vsel %vm54, %v2248, %v2254
    %v2257 = vrot.slane %v2255, 2
    %2259 = vrot.lane.b32.xlu0 %v2257, 64
    %v2260 = vpop.permute.xlu0 %2259
    %v2262 = vrot.slane %v2260, 6
    %v2264 = vmul.f32 %v2255, %v2262
    %v2266 = vrot.slane %v2264, 2
    %2268 = vrot.lane.b32.xlu0 %v2266, 96
    %v2269 = vpop.permute.xlu0 %2268
    %v2271 = vrot.slane %v2170, 6
    %v2273 = vmul.f32 %v2255, %v2271
    %v2275 = vrot.slane %v2269, 6
    %v2277 = vadd.f32 %v2273, %v2275
    %v2278 = vtanh.pop %v2277
    %v2280 = vrot.slane %v2278, 2
    %v2282 = vmul.f32 %v2260, %v2280
    %2283 = vst [vmem:[#allocation2 + $0x2] sm:$0x3] %v2282
    %2284 = vmatprep.subr.mxu0 0.0
    %2285 = vmatpush1.msra.mxu0 %v2084
    %2286 = vmatprep.subr.mxu0 0.0
    %2287 = vmatpush1.msra.mxu0 %v2083
    %2288 = vmatprep.subr.mxu0 0.0
    %2289 = vmatpush1.msra.mxu0 %v2082
    %2290 = vmatprep.subr.mxu0 0.0
    %2291 = vmatpush1.msra.mxu0 %v2081
    %2292 = vmatprep.subr.mxu0 0.0
    %2293 = vmatpush1.msra.mxu0 %v2080
    %2294 = vmatprep.subr.mxu0 0.0
    %2295 = vmatpush1.msra.mxu0 %v2079
    %2296 = vmatprep.subr.mxu0 0.0
    %2297 = vmatpush1.msra.mxu0 %v2078
    %2298 = vmatprep.subr.mxu0 0.0
    %2299 = vmatpush1.msra.mxu0 %v2077
    %2300 = vmatprep.subr.mxu0 0.0
    %2301 = vmatpush1.msra.mxu0 %v2076
    %2302 = vmatprep.subr.mxu0 0.0
    %2303 = vmatpush1.msra.mxu0 %v2075
    %2304 = vmatprep.subr.mxu0 0.0
    %2305 = vmatpush1.msra.mxu0 %v2074
    %2306 = vmatprep.subr.mxu0 0.0
    %2307 = vmatpush1.msra.mxu0 %v2073
    %2308 = vmatprep.subr.mxu0 0.0
    %2309 = vmatpush1.msra.mxu0 %v2072
    %2310 = vmatprep.subr.mxu0 0.0
    %2311 = vmatpush1.msra.mxu0 %v2071
    %2312 = vmatprep.subr.mxu0 0.0
    %2313 = vmatpush1.msra.mxu0 %v2070
    %2314 = vmatprep.subr.mxu0 0.0
    %2315 = vmatpush1.msra.mxu0 %v2069
    %2316 = vmatprep.subr.mxu0 0.0
    %2317 = vmatpush2.msra.mxu0 0.0
    %2318 = vmatprep.subr.mxu0 0.0
    %2319 = vmatpush2.msra.mxu0 0.0
    %2320 = vmatprep.subr.mxu0 0.0
    %2321 = vmatpush2.msra.mxu0 0.0
    %2322 = vmatprep.subr.mxu0 0.0
    %2323 = vmatpush2.msra.mxu0 0.0
    %2324 = vmatprep.subr.mxu0 0.0
    %2325 = vmatpush2.msra.mxu0 0.0
    %2326 = vmatprep.subr.mxu0 0.0
    %2327 = vmatpush2.msra.mxu0 0.0
    %2328 = vmatprep.subr.mxu0 0.0
    %2329 = vmatpush2.msra.mxu0 0.0
    %2330 = vmatprep.subr.mxu0 0.0
    %2331 = vmatpush2.msra.mxu0 0.0
    %2332 = vmatprep.subr.mxu0 0.0
    %2333 = vmatpush2.msra.mxu0 0.0
    %2334 = vmatprep.subr.mxu0 0.0
    %2335 = vmatpush2.msra.mxu0 0.0
    %2336 = vmatprep.subr.mxu0 0.0
    %2337 = vmatpush2.msra.mxu0 0.0
    %2338 = vmatprep.subr.mxu0 0.0
    %2339 = vmatpush2.msra.mxu0 0.0
    %2340 = vmatprep.subr.mxu0 0.0
    %2341 = vmatpush2.msra.mxu0 0.0
    %2342 = vmatprep.subr.mxu0 0.0
    %2343 = vmatpush2.msra.mxu0 0.0
    %2344 = vmatprep.subr.mxu0 0.0
    %2345 = vmatpush2.msra.mxu0 0.0
    %2346 = vmatprep.subr.mxu0 0.0
    %2347 = vmatpush2.msra.mxu0 0.0
    %2348 = vmatprep.mubr.f32.mxu0 0.0
    %2349 = vmatmul.mubr.f32.gmra.mxu0 %v2282
    %v2350 = vpop.f32.mrf.mxu0
    %v2351 = vadd.f32 0.0, %v2350
    %v2352 = vpop.f32.mrf.mxu0
    %2353 = vdwg.mxu0
    %v2355 = vrot.slane %v2351, 4
    %v2357 = vadd.f32 %v2060, %v2355
    %v2358 = vtanh.pop %v2357
    %v2359 = vxor.u32 %v2357, 2147483648
    %v2360 = vmul.f32 %v2359, 1.442695
    %v2361 = vpow.pop %v2360
    %v2362 = vadd.f32 %v2361, 1.0
    %v2363 = vrcp.pop %v2362
    %v2364 = vmul.f32 1.0, %v2363
    %v2365 = vsel %vm54, %v2358, %v2364
    %v2367 = vrot.slane %v2365, 4
    %2369 = vrot.lane.b32.xlu0 %v2367, 64
    %v2370 = vpop.permute.xlu0 %2369
    %v2372 = vrot.slane %v2370, 4
    %v2374 = vmul.f32 %v2365, %v2372
    %v2376 = vrot.slane %v2374, 4
    %2378 = vrot.lane.b32.xlu0 %v2376, 96
    %v2379 = vpop.permute.xlu0 %2378
    %v2381 = vrot.slane %v2277, 6
    %v2383 = vmul.f32 %v2365, %v2381
    %v2385 = vrot.slane %v2379, 4
    %v2387 = vadd.f32 %v2383, %v2385
    %v2388 = vtanh.pop %v2387
    %v2390 = vrot.slane %v2388, 4
    %v2392 = vmul.f32 %v2370, %v2390
    %2393 = vst [vmem:[#allocation2 + $0x4] sm:$0x3] %v2392
    %2394 = vmatprep.subr.mxu0 0.0
    %2395 = vmatpush1.msra.mxu0 %v2084
    %2396 = vmatprep.subr.mxu0 0.0
    %2397 = vmatpush1.msra.mxu0 %v2083
    %2398 = vmatprep.subr.mxu0 0.0
    %2399 = vmatpush1.msra.mxu0 %v2082
    %2400 = vmatprep.subr.mxu0 0.0
    %2401 = vmatpush1.msra.mxu0 %v2081
    %2402 = vmatprep.subr.mxu0 0.0
    %2403 = vmatpush1.msra.mxu0 %v2080
    %2404 = vmatprep.subr.mxu0 0.0
    %2405 = vmatpush1.msra.mxu0 %v2079
    %2406 = vmatprep.subr.mxu0 0.0
    %2407 = vmatpush1.msra.mxu0 %v2078
    %2408 = vmatprep.subr.mxu0 0.0
    %2409 = vmatpush1.msra.mxu0 %v2077
    %2410 = vmatprep.subr.mxu0 0.0
    %2411 = vmatpush1.msra.mxu0 %v2076
    %2412 = vmatprep.subr.mxu0 0.0
    %2413 = vmatpush1.msra.mxu0 %v2075
    %2414 = vmatprep.subr.mxu0 0.0
    %2415 = vmatpush1.msra.mxu0 %v2074
    %2416 = vmatprep.subr.mxu0 0.0
    %2417 = vmatpush1.msra.mxu0 %v2073
    %2418 = vmatprep.subr.mxu0 0.0
    %2419 = vmatpush1.msra.mxu0 %v2072
    %2420 = vmatprep.subr.mxu0 0.0
    %2421 = vmatpush1.msra.mxu0 %v2071
    %2422 = vmatprep.subr.mxu0 0.0
    %2423 = vmatpush1.msra.mxu0 %v2070
    %2424 = vmatprep.subr.mxu0 0.0
    %2425 = vmatpush1.msra.mxu0 %v2069
    %2426 = vmatprep.subr.mxu0 0.0
    %2427 = vmatpush2.msra.mxu0 0.0
    %2428 = vmatprep.subr.mxu0 0.0
    %2429 = vmatpush2.msra.mxu0 0.0
    %2430 = vmatprep.subr.mxu0 0.0
    %2431 = vmatpush2.msra.mxu0 0.0
    %2432 = vmatprep.subr.mxu0 0.0
    %2433 = vmatpush2.msra.mxu0 0.0
    %2434 = vmatprep.subr.mxu0 0.0
    %2435 = vmatpush2.msra.mxu0 0.0
    %2436 = vmatprep.subr.mxu0 0.0
    %2437 = vmatpush2.msra.mxu0 0.0
    %2438 = vmatprep.subr.mxu0 0.0
    %2439 = vmatpush2.msra.mxu0 0.0
    %2440 = vmatprep.subr.mxu0 0.0
    %2441 = vmatpush2.msra.mxu0 0.0
    %2442 = vmatprep.subr.mxu0 0.0
    %2443 = vmatpush2.msra.mxu0 0.0
    %2444 = vmatprep.subr.mxu0 0.0
    %2445 = vmatpush2.msra.mxu0 0.0
    %2446 = vmatprep.subr.mxu0 0.0
    %2447 = vmatpush2.msra.mxu0 0.0
    %2448 = vmatprep.subr.mxu0 0.0
    %2449 = vmatpush2.msra.mxu0 0.0
    %2450 = vmatprep.subr.mxu0 0.0
    %2451 = vmatpush2.msra.mxu0 0.0
    %2452 = vmatprep.subr.mxu0 0.0
    %2453 = vmatpush2.msra.mxu0 0.0
    %2454 = vmatprep.subr.mxu0 0.0
    %2455 = vmatpush2.msra.mxu0 0.0
    %2456 = vmatprep.subr.mxu0 0.0
    %2457 = vmatpush2.msra.mxu0 0.0
    %2458 = vmatprep.mubr.f32.mxu0 0.0
    %2459 = vmatmul.mubr.f32.gmra.mxu0 %v2392
    %v2460 = vpop.f32.mrf.mxu0
    %v2461 = vadd.f32 0.0, %v2460
    %v2462 = vpop.f32.mrf.mxu0
    %2463 = vdwg.mxu0
    %v2465 = vrot.slane %v2461, 2
    %v2467 = vadd.f32 %v2060, %v2465
    %v2468 = vtanh.pop %v2467
    %v2469 = vxor.u32 %v2467, 2147483648
    %v2470 = vmul.f32 %v2469, 1.442695
    %v2471 = vpow.pop %v2470
    %v2472 = vadd.f32 %v2471, 1.0
    %v2473 = vrcp.pop %v2472
    %v2474 = vmul.f32 1.0, %v2473
    %v2475 = vsel %vm54, %v2468, %v2474
    %v2477 = vrot.slane %v2475, 6
    %2479 = vrot.lane.b32.xlu0 %v2477, 64
    %v2480 = vpop.permute.xlu0 %2479
    %v2482 = vrot.slane %v2480, 2
    %v2484 = vmul.f32 %v2475, %v2482
    %v2486 = vrot.slane %v2484, 6
    %2488 = vrot.lane.b32.xlu0 %v2486, 96
    %v2489 = vpop.permute.xlu0 %2488
    %v2491 = vrot.slane %v2387, 6
    %v2493 = vmul.f32 %v2475, %v2491
    %v2495 = vrot.slane %v2489, 2
    %v2497 = vadd.f32 %v2493, %v2495
    %v2498 = vtanh.pop %v2497
    %v2500 = vrot.slane %v2498, 6
    %v2502 = vmul.f32 %v2480, %v2500
    %2503 = vst [vmem:[#allocation2 + $0x6] sm:$0x3] %v2502
    %2504 = vmatprep.subr.mxu0 0.0
    %2505 = vmatpush1.msra.mxu0 %v2084
    %2506 = vmatprep.subr.mxu0 0.0
    %2507 = vmatpush1.msra.mxu0 %v2083
    %2508 = vmatprep.subr.mxu0 0.0
    %2509 = vmatpush1.msra.mxu0 %v2082
    %2510 = vmatprep.subr.mxu0 0.0
    %2511 = vmatpush1.msra.mxu0 %v2081
    %2512 = vmatprep.subr.mxu0 0.0
    %2513 = vmatpush1.msra.mxu0 %v2080
    %2514 = vmatprep.subr.mxu0 0.0
    %2515 = vmatpush1.msra.mxu0 %v2079
    %2516 = vmatprep.subr.mxu0 0.0
    %2517 = vmatpush1.msra.mxu0 %v2078
    %2518 = vmatprep.subr.mxu0 0.0
    %2519 = vmatpush1.msra.mxu0 %v2077
    %2520 = vmatprep.subr.mxu0 0.0
    %2521 = vmatpush1.msra.mxu0 %v2076
    %2522 = vmatprep.subr.mxu0 0.0
    %2523 = vmatpush1.msra.mxu0 %v2075
    %2524 = vmatprep.subr.mxu0 0.0
    %2525 = vmatpush1.msra.mxu0 %v2074
    %2526 = vmatprep.subr.mxu0 0.0
    %2527 = vmatpush1.msra.mxu0 %v2073
    %2528 = vmatprep.subr.mxu0 0.0
    %2529 = vmatpush1.msra.mxu0 %v2072
    %2530 = vmatprep.subr.mxu0 0.0
    %2531 = vmatpush1.msra.mxu0 %v2071
    %2532 = vmatprep.subr.mxu0 0.0
    %2533 = vmatpush1.msra.mxu0 %v2070
    %2534 = vmatprep.subr.mxu0 0.0
    %2535 = vmatpush1.msra.mxu0 %v2069
    %2536 = vmatprep.subr.mxu0 0.0
    %2537 = vmatpush2.msra.mxu0 0.0
    %2538 = vmatprep.subr.mxu0 0.0
    %2539 = vmatpush2.msra.mxu0 0.0
    %2540 = vmatprep.subr.mxu0 0.0
    %2541 = vmatpush2.msra.mxu0 0.0
    %2542 = vmatprep.subr.mxu0 0.0
    %2543 = vmatpush2.msra.mxu0 0.0
    %2544 = vmatprep.subr.mxu0 0.0
    %2545 = vmatpush2.msra.mxu0 0.0
    %2546 = vmatprep.subr.mxu0 0.0
    %2547 = vmatpush2.msra.mxu0 0.0
    %2548 = vmatprep.subr.mxu0 0.0
    %2549 = vmatpush2.msra.mxu0 0.0
    %2550 = vmatprep.subr.mxu0 0.0
    %2551 = vmatpush2.msra.mxu0 0.0
    %2552 = vmatprep.subr.mxu0 0.0
    %2553 = vmatpush2.msra.mxu0 0.0
    %2554 = vmatprep.subr.mxu0 0.0
    %2555 = vmatpush2.msra.mxu0 0.0
    %2556 = vmatprep.subr.mxu0 0.0
    %2557 = vmatpush2.msra.mxu0 0.0
    %2558 = vmatprep.subr.mxu0 0.0
    %2559 = vmatpush2.msra.mxu0 0.0
    %2560 = vmatprep.subr.mxu0 0.0
    %2561 = vmatpush2.msra.mxu0 0.0
    %2562 = vmatprep.subr.mxu0 0.0
    %2563 = vmatpush2.msra.mxu0 0.0
    %2564 = vmatprep.subr.mxu0 0.0
    %2565 = vmatpush2.msra.mxu0 0.0
    %2566 = vmatprep.subr.mxu0 0.0
    %2567 = vmatpush2.msra.mxu0 0.0
    %2568 = vmatprep.mubr.f32.mxu0 0.0
    %2569 = vmatmul.mubr.f32.gmra.mxu0 %v2502
    %v2570 = vpop.f32.mrf.mxu0
    %v2571 = vadd.f32 0.0, %v2570
    %v2572 = vpop.f32.mrf.mxu0
    %2573 = vdwg.mxu0
    %v2574 = vadd.f32 %v2065, %v2571
    %v2575 = vtanh.pop %v2574
    %v2576 = vxor.u32 %v2574, 2147483648
    %v2577 = vmul.f32 %v2576, 1.442695
    %v2578 = vpow.pop %v2577
    %v2579 = vadd.f32 %v2578, 1.0
    %v2580 = vrcp.pop %v2579
    %v2581 = vmul.f32 1.0, %v2580
    %v2582 = vsel %vm54, %v2575, %v2581
    %2583 = vrot.lane.b32.xlu0 %v2582, 64
    %v2584 = vpop.permute.xlu0 %2583
    %v2585 = vmul.f32 %v2582, %v2584
    %2586 = vrot.lane.b32.xlu0 %v2585, 96
    %v2587 = vpop.permute.xlu0 %2586
    %v2589 = vrot.slane %v2497, 6
    %v2591 = vmul.f32 %v2582, %v2589
    %v2592 = vadd.f32 %v2591, %v2587
    %v2593 = vtanh.pop %v2592
    %v2594 = vmul.f32 %v2584, %v2593
    %2595 = vst [vmem:[#allocation2 + $0x8] sm:$0x3] %v2594
    %2596 = vmatprep.subr.mxu0 0.0
    %2597 = vmatpush1.msra.mxu0 %v2084
    %2598 = vmatprep.subr.mxu0 0.0
    %2599 = vmatpush1.msra.mxu0 %v2083
    %2600 = vmatprep.subr.mxu0 0.0
    %2601 = vmatpush1.msra.mxu0 %v2082
    %2602 = vmatprep.subr.mxu0 0.0
    %2603 = vmatpush1.msra.mxu0 %v2081
    %2604 = vmatprep.subr.mxu0 0.0
    %2605 = vmatpush1.msra.mxu0 %v2080
    %2606 = vmatprep.subr.mxu0 0.0
    %2607 = vmatpush1.msra.mxu0 %v2079
    %2608 = vmatprep.subr.mxu0 0.0
    %2609 = vmatpush1.msra.mxu0 %v2078
    %2610 = vmatprep.subr.mxu0 0.0
    %2611 = vmatpush1.msra.mxu0 %v2077
    %2612 = vmatprep.subr.mxu0 0.0
    %2613 = vmatpush1.msra.mxu0 %v2076
    %2614 = vmatprep.subr.mxu0 0.0
    %2615 = vmatpush1.msra.mxu0 %v2075
    %2616 = vmatprep.subr.mxu0 0.0
    %2617 = vmatpush1.msra.mxu0 %v2074
    %2618 = vmatprep.subr.mxu0 0.0
    %2619 = vmatpush1.msra.mxu0 %v2073
    %2620 = vmatprep.subr.mxu0 0.0
    %2621 = vmatpush1.msra.mxu0 %v2072
    %2622 = vmatprep.subr.mxu0 0.0
    %2623 = vmatpush1.msra.mxu0 %v2071
    %2624 = vmatprep.subr.mxu0 0.0
    %2625 = vmatpush1.msra.mxu0 %v2070
    %2626 = vmatprep.subr.mxu0 0.0
    %2627 = vmatpush1.msra.mxu0 %v2069
    %2628 = vmatprep.subr.mxu0 0.0
    %2629 = vmatpush2.msra.mxu0 0.0
    %2630 = vmatprep.subr.mxu0 0.0
    %2631 = vmatpush2.msra.mxu0 0.0
    %2632 = vmatprep.subr.mxu0 0.0
    %2633 = vmatpush2.msra.mxu0 0.0
    %2634 = vmatprep.subr.mxu0 0.0
    %2635 = vmatpush2.msra.mxu0 0.0
    %2636 = vmatprep.subr.mxu0 0.0
    %2637 = vmatpush2.msra.mxu0 0.0
    %2638 = vmatprep.subr.mxu0 0.0
    %2639 = vmatpush2.msra.mxu0 0.0
    %2640 = vmatprep.subr.mxu0 0.0
    %2641 = vmatpush2.msra.mxu0 0.0
    %2642 = vmatprep.subr.mxu0 0.0
    %2643 = vmatpush2.msra.mxu0 0.0
    %2644 = vmatprep.subr.mxu0 0.0
    %2645 = vmatpush2.msra.mxu0 0.0
    %2646 = vmatprep.subr.mxu0 0.0
    %2647 = vmatpush2.msra.mxu0 0.0
    %2648 = vmatprep.subr.mxu0 0.0
    %2649 = vmatpush2.msra.mxu0 0.0
    %2650 = vmatprep.subr.mxu0 0.0
    %2651 = vmatpush2.msra.mxu0 0.0
    %2652 = vmatprep.subr.mxu0 0.0
    %2653 = vmatpush2.msra.mxu0 0.0
    %2654 = vmatprep.subr.mxu0 0.0
    %2655 = vmatpush2.msra.mxu0 0.0
    %2656 = vmatprep.subr.mxu0 0.0
    %2657 = vmatpush2.msra.mxu0 0.0
    %2658 = vmatprep.subr.mxu0 0.0
    %2659 = vmatpush2.msra.mxu0 0.0
    %2660 = vmatprep.mubr.f32.mxu0 0.0
    %2661 = vmatmul.mubr.f32.gmra.mxu0 %v2594
    %v2662 = vpop.f32.mrf.mxu0
    %v2663 = vadd.f32 0.0, %v2662
    %v2664 = vpop.f32.mrf.mxu0
    %2665 = vdwg.mxu0
    %v2667 = vrot.slane %v2663, 6
    %v2669 = vadd.f32 %v2065, %v2667
    %v2670 = vtanh.pop %v2669
    %v2671 = vxor.u32 %v2669, 2147483648
    %v2672 = vmul.f32 %v2671, 1.442695
    %v2673 = vpow.pop %v2672
    %v2674 = vadd.f32 %v2673, 1.0
    %v2675 = vrcp.pop %v2674
    %v2676 = vmul.f32 1.0, %v2675
    %v2677 = vsel %vm54, %v2670, %v2676
    %v2679 = vrot.slane %v2677, 2
    %2681 = vrot.lane.b32.xlu0 %v2679, 64
    %v2682 = vpop.permute.xlu0 %2681
    %v2684 = vrot.slane %v2682, 6
    %v2686 = vmul.f32 %v2677, %v2684
    %v2688 = vrot.slane %v2686, 2
    %2690 = vrot.lane.b32.xlu0 %v2688, 96
    %v2691 = vpop.permute.xlu0 %2690
    %v2693 = vrot.slane %v2592, 6
    %v2695 = vmul.f32 %v2677, %v2693
    %v2697 = vrot.slane %v2691, 6
    %v2699 = vadd.f32 %v2695, %v2697
    %v2700 = vtanh.pop %v2699
    %v2702 = vrot.slane %v2700, 2
    %v2704 = vmul.f32 %v2682, %v2702
    %2705 = vst [vmem:[#allocation2 + $0xa] sm:$0x3] %v2704
    %2706 = vmatprep.subr.mxu0 0.0
    %2707 = vmatpush1.msra.mxu0 %v2084
    %2708 = vmatprep.subr.mxu0 0.0
    %2709 = vmatpush1.msra.mxu0 %v2083
    %2710 = vmatprep.subr.mxu0 0.0
    %2711 = vmatpush1.msra.mxu0 %v2082
    %2712 = vmatprep.subr.mxu0 0.0
    %2713 = vmatpush1.msra.mxu0 %v2081
    %2714 = vmatprep.subr.mxu0 0.0
    %2715 = vmatpush1.msra.mxu0 %v2080
    %2716 = vmatprep.subr.mxu0 0.0
    %2717 = vmatpush1.msra.mxu0 %v2079
    %2718 = vmatprep.subr.mxu0 0.0
    %2719 = vmatpush1.msra.mxu0 %v2078
    %2720 = vmatprep.subr.mxu0 0.0
    %2721 = vmatpush1.msra.mxu0 %v2077
    %2722 = vmatprep.subr.mxu0 0.0
    %2723 = vmatpush1.msra.mxu0 %v2076
    %2724 = vmatprep.subr.mxu0 0.0
    %2725 = vmatpush1.msra.mxu0 %v2075
    %2726 = vmatprep.subr.mxu0 0.0
    %2727 = vmatpush1.msra.mxu0 %v2074
    %2728 = vmatprep.subr.mxu0 0.0
    %2729 = vmatpush1.msra.mxu0 %v2073
    %2730 = vmatprep.subr.mxu0 0.0
    %2731 = vmatpush1.msra.mxu0 %v2072
    %2732 = vmatprep.subr.mxu0 0.0
    %2733 = vmatpush1.msra.mxu0 %v2071
    %2734 = vmatprep.subr.mxu0 0.0
    %2735 = vmatpush1.msra.mxu0 %v2070
    %2736 = vmatprep.subr.mxu0 0.0
    %2737 = vmatpush1.msra.mxu0 %v2069
    %2738 = vmatprep.subr.mxu0 0.0
    %2739 = vmatpush2.msra.mxu0 0.0
    %2740 = vmatprep.subr.mxu0 0.0
    %2741 = vmatpush2.msra.mxu0 0.0
    %2742 = vmatprep.subr.mxu0 0.0
    %2743 = vmatpush2.msra.mxu0 0.0
    %2744 = vmatprep.subr.mxu0 0.0
    %2745 = vmatpush2.msra.mxu0 0.0
    %2746 = vmatprep.subr.mxu0 0.0
    %2747 = vmatpush2.msra.mxu0 0.0
    %2748 = vmatprep.subr.mxu0 0.0
    %2749 = vmatpush2.msra.mxu0 0.0
    %2750 = vmatprep.subr.mxu0 0.0
    %2751 = vmatpush2.msra.mxu0 0.0
    %2752 = vmatprep.subr.mxu0 0.0
    %2753 = vmatpush2.msra.mxu0 0.0
    %2754 = vmatprep.subr.mxu0 0.0
    %2755 = vmatpush2.msra.mxu0 0.0
    %2756 = vmatprep.subr.mxu0 0.0
    %2757 = vmatpush2.msra.mxu0 0.0
    %2758 = vmatprep.subr.mxu0 0.0
    %2759 = vmatpush2.msra.mxu0 0.0
    %2760 = vmatprep.subr.mxu0 0.0
    %2761 = vmatpush2.msra.mxu0 0.0
    %2762 = vmatprep.subr.mxu0 0.0
    %2763 = vmatpush2.msra.mxu0 0.0
    %2764 = vmatprep.subr.mxu0 0.0
    %2765 = vmatpush2.msra.mxu0 0.0
    %2766 = vmatprep.subr.mxu0 0.0
    %2767 = vmatpush2.msra.mxu0 0.0
    %2768 = vmatprep.subr.mxu0 0.0
    %2769 = vmatpush2.msra.mxu0 0.0
    %2770 = vmatprep.mubr.f32.mxu0 0.0
    %2771 = vmatmul.mubr.f32.gmra.mxu0 %v2704
    %v2772 = vpop.f32.mrf.mxu0
    %v2773 = vadd.f32 0.0, %v2772
    %v2774 = vpop.f32.mrf.mxu0
    %2775 = vdwg.mxu0
    %v2777 = vrot.slane %v2773, 4
    %v2779 = vadd.f32 %v2065, %v2777
    %v2780 = vtanh.pop %v2779
    %v2781 = vxor.u32 %v2779, 2147483648
    %v2782 = vmul.f32 %v2781, 1.442695
    %v2783 = vpow.pop %v2782
    %v2784 = vadd.f32 %v2783, 1.0
    %v2785 = vrcp.pop %v2784
    %v2786 = vmul.f32 1.0, %v2785
    %v2787 = vsel %vm54, %v2780, %v2786
    %v2789 = vrot.slane %v2787, 4
    %2791 = vrot.lane.b32.xlu0 %v2789, 64
    %v2792 = vpop.permute.xlu0 %2791
    %v2794 = vrot.slane %v2792, 4
    %v2796 = vmul.f32 %v2787, %v2794
    %v2798 = vrot.slane %v2796, 4
    %2800 = vrot.lane.b32.xlu0 %v2798, 96
    %v2801 = vpop.permute.xlu0 %2800
    %v2803 = vrot.slane %v2699, 6
    %v2805 = vmul.f32 %v2787, %v2803
    %v2807 = vrot.slane %v2801, 4
    %v2809 = vadd.f32 %v2805, %v2807
    %v2810 = vtanh.pop %v2809
    %v2812 = vrot.slane %v2810, 4
    %v2814 = vmul.f32 %v2792, %v2812
    %2815 = vst [vmem:[#allocation2 + $0xc] sm:$0x3] %v2814
    %2816 = vmatprep.subr.mxu0 0.0
    %2817 = vmatpush1.msra.mxu0 %v2084
    %2818 = vmatprep.subr.mxu0 0.0
    %2819 = vmatpush1.msra.mxu0 %v2083
    %2820 = vmatprep.subr.mxu0 0.0
    %2821 = vmatpush1.msra.mxu0 %v2082
    %2822 = vmatprep.subr.mxu0 0.0
    %2823 = vmatpush1.msra.mxu0 %v2081
    %2824 = vmatprep.subr.mxu0 0.0
    %2825 = vmatpush1.msra.mxu0 %v2080
    %2826 = vmatprep.subr.mxu0 0.0
    %2827 = vmatpush1.msra.mxu0 %v2079
    %2828 = vmatprep.subr.mxu0 0.0
    %2829 = vmatpush1.msra.mxu0 %v2078
    %2830 = vmatprep.subr.mxu0 0.0
    %2831 = vmatpush1.msra.mxu0 %v2077
    %2832 = vmatprep.subr.mxu0 0.0
    %2833 = vmatpush1.msra.mxu0 %v2076
    %2834 = vmatprep.subr.mxu0 0.0
    %2835 = vmatpush1.msra.mxu0 %v2075
    %2836 = vmatprep.subr.mxu0 0.0
    %2837 = vmatpush1.msra.mxu0 %v2074
    %2838 = vmatprep.subr.mxu0 0.0
    %2839 = vmatpush1.msra.mxu0 %v2073
    %2840 = vmatprep.subr.mxu0 0.0
    %2841 = vmatpush1.msra.mxu0 %v2072
    %2842 = vmatprep.subr.mxu0 0.0
    %2843 = vmatpush1.msra.mxu0 %v2071
    %2844 = vmatprep.subr.mxu0 0.0
    %2845 = vmatpush1.msra.mxu0 %v2070
    %2846 = vmatprep.subr.mxu0 0.0
    %2847 = vmatpush1.msra.mxu0 %v2069
    %2848 = vmatprep.subr.mxu0 0.0
    %2849 = vmatpush2.msra.mxu0 0.0
    %2850 = vmatprep.subr.mxu0 0.0
    %2851 = vmatpush2.msra.mxu0 0.0
    %2852 = vmatprep.subr.mxu0 0.0
    %2853 = vmatpush2.msra.mxu0 0.0
    %2854 = vmatprep.subr.mxu0 0.0
    %2855 = vmatpush2.msra.mxu0 0.0
    %2856 = vmatprep.subr.mxu0 0.0
    %2857 = vmatpush2.msra.mxu0 0.0
    %2858 = vmatprep.subr.mxu0 0.0
    %2859 = vmatpush2.msra.mxu0 0.0
    %2860 = vmatprep.subr.mxu0 0.0
    %2861 = vmatpush2.msra.mxu0 0.0
    %2862 = vmatprep.subr.mxu0 0.0
    %2863 = vmatpush2.msra.mxu0 0.0
    %2864 = vmatprep.subr.mxu0 0.0
    %2865 = vmatpush2.msra.mxu0 0.0
    %2866 = vmatprep.subr.mxu0 0.0
    %2867 = vmatpush2.msra.mxu0 0.0
    %2868 = vmatprep.subr.mxu0 0.0
    %2869 = vmatpush2.msra.mxu0 0.0
    %2870 = vmatprep.subr.mxu0 0.0
    %2871 = vmatpush2.msra.mxu0 0.0
    %2872 = vmatprep.subr.mxu0 0.0
    %2873 = vmatpush2.msra.mxu0 0.0
    %2874 = vmatprep.subr.mxu0 0.0
    %2875 = vmatpush2.msra.mxu0 0.0
    %2876 = vmatprep.subr.mxu0 0.0
    %2877 = vmatpush2.msra.mxu0 0.0
    %2878 = vmatprep.subr.mxu0 0.0
    %2879 = vmatpush2.msra.mxu0 0.0
    %2880 = vmatprep.mubr.f32.mxu0 0.0
    %2881 = vmatmul.mubr.f32.gmra.mxu0 %v2814
    %v2882 = vpop.f32.mrf.mxu0
    %v2883 = vadd.f32 0.0, %v2882
    %v2884 = vpop.f32.mrf.mxu0
    %2885 = vdwg.mxu0
    %v2887 = vrot.slane %v2883, 2
    %v2889 = vadd.f32 %v2065, %v2887
    %v2890 = vtanh.pop %v2889
    %v2891 = vxor.u32 %v2889, 2147483648
    %v2892 = vmul.f32 %v2891, 1.442695
    %v2893 = vpow.pop %v2892
    %v2894 = vadd.f32 %v2893, 1.0
    %v2895 = vrcp.pop %v2894
    %v2896 = vmul.f32 1.0, %v2895
    %v2897 = vsel %vm54, %v2890, %v2896
    %v2899 = vrot.slane %v2897, 6
    %2901 = vrot.lane.b32.xlu0 %v2899, 64
    %v2902 = vpop.permute.xlu0 %2901
    %v2904 = vrot.slane %v2902, 2
    %v2906 = vmul.f32 %v2897, %v2904
    %v2908 = vrot.slane %v2906, 6
    %2910 = vrot.lane.b32.xlu0 %v2908, 96
    %v2911 = vpop.permute.xlu0 %2910
    %v2913 = vrot.slane %v2809, 6
    %v2915 = vmul.f32 %v2897, %v2913
    %v2917 = vrot.slane %v2911, 2
    %v2919 = vadd.f32 %v2915, %v2917
    %v2920 = vtanh.pop %v2919
    %v2922 = vrot.slane %v2920, 6
    %v2924 = vmul.f32 %v2902, %v2922
    %2925 = vst [vmem:[#allocation2 + $0xe] sm:$0x3] %v2924
    %v2926 = vld [vmem:[#allocation2] sm:$0xff]
    %v2927 = vld [vmem:[#allocation2 + $0x8] sm:$0xff]
    %s2928 = scalar_lea.vmem [#allocation3], 256
    %v2929 = vld [vmem:[%s2928] sm:$0xff]
    %v2930 = vld [vmem:[%s2928 + $0x8] sm:$0xff]
    %v2931 = vld [vmem:[%s2928 + $0x10] sm:$0xff]
    %v2932 = vld [vmem:[%s2928 + $0x18] sm:$0xff]
    %v2933 = vld [vmem:[%s2928 + $0x20] sm:$0xff]
    %v2934 = vld [vmem:[%s2928 + $0x28] sm:$0xff]
    %v2935 = vld [vmem:[%s2928 + $0x30] sm:$0xff]
    %v2936 = vld [vmem:[%s2928 + $0x38] sm:$0xff]
    %v2937 = vld [vmem:[%s2928 + $0x40] sm:$0xff]
    %v2938 = vld [vmem:[%s2928 + $0x48] sm:$0xff]
    %v2939 = vld [vmem:[%s2928 + $0x50] sm:$0xff]
    %v2940 = vld [vmem:[%s2928 + $0x58] sm:$0xff]
    %v2941 = vld [vmem:[%s2928 + $0x60] sm:$0xff]
    %v2942 = vld [vmem:[%s2928 + $0x68] sm:$0xff]
    %v2943 = vld [vmem:[%s2928 + $0x70] sm:$0xff]
    %v2944 = vld [vmem:[%s2928 + $0x78] sm:$0xff]
    %s2945 = scalar_lea.vmem %s5, 3
    %v2946 = vld [vmem:[%s2945] sm:$0x1]
    %v2948 = vlaneseq
    %v2949 = vshrl.u32 %v2948, 7
    %v2950 = vsub.s32 0, %v2949
    %v2951 = vrot.slane %v2946, %v2950
    %2953 = vmatprep.subr.mxu0 0.0
    %2954 = vmatpush1.msra.mxu0 %v2944
    %2955 = vmatprep.subr.mxu0 0.0
    %2956 = vmatpush1.msra.mxu0 %v2943
    %2957 = vmatprep.subr.mxu0 0.0
    %2958 = vmatpush1.msra.mxu0 %v2942
    %2959 = vmatprep.subr.mxu0 0.0
    %2960 = vmatpush1.msra.mxu0 %v2941
    %2961 = vmatprep.subr.mxu0 0.0
    %2962 = vmatpush1.msra.mxu0 %v2940
    %2963 = vmatprep.subr.mxu0 0.0
    %2964 = vmatpush1.msra.mxu0 %v2939
    %2965 = vmatprep.subr.mxu0 0.0
    %2966 = vmatpush1.msra.mxu0 %v2938
    %2967 = vmatprep.subr.mxu0 0.0
    %2968 = vmatpush1.msra.mxu0 %v2937
    %2969 = vmatprep.subr.mxu0 0.0
    %2970 = vmatpush1.msra.mxu0 %v2936
    %2971 = vmatprep.subr.mxu0 0.0
    %2972 = vmatpush1.msra.mxu0 %v2935
    %2973 = vmatprep.subr.mxu0 0.0
    %2974 = vmatpush1.msra.mxu0 %v2934
    %2975 = vmatprep.subr.mxu0 0.0
    %2976 = vmatpush1.msra.mxu0 %v2933
    %2977 = vmatprep.subr.mxu0 0.0
    %2978 = vmatpush1.msra.mxu0 %v2932
    %2979 = vmatprep.subr.mxu0 0.0
    %2980 = vmatpush1.msra.mxu0 %v2931
    %2981 = vmatprep.subr.mxu0 0.0
    %2982 = vmatpush1.msra.mxu0 %v2930
    %2983 = vmatprep.subr.mxu0 0.0
    %2984 = vmatpush1.msra.mxu0 %v2929
    %2985 = vmatprep.subr.mxu0 0.0
    %2986 = vmatpush2.msra.mxu0 0.0
    %2987 = vmatprep.subr.mxu0 0.0
    %2988 = vmatpush2.msra.mxu0 0.0
    %2989 = vmatprep.subr.mxu0 0.0
    %2990 = vmatpush2.msra.mxu0 0.0
    %2991 = vmatprep.subr.mxu0 0.0
    %2992 = vmatpush2.msra.mxu0 0.0
    %2993 = vmatprep.subr.mxu0 0.0
    %2994 = vmatpush2.msra.mxu0 0.0
    %2995 = vmatprep.subr.mxu0 0.0
    %2996 = vmatpush2.msra.mxu0 0.0
    %2997 = vmatprep.subr.mxu0 0.0
    %2998 = vmatpush2.msra.mxu0 0.0
    %2999 = vmatprep.subr.mxu0 0.0
    %3000 = vmatpush2.msra.mxu0 0.0
    %3001 = vmatprep.subr.mxu0 0.0
    %3002 = vmatpush2.msra.mxu0 0.0
    %3003 = vmatprep.subr.mxu0 0.0
    %3004 = vmatpush2.msra.mxu0 0.0
    %3005 = vmatprep.subr.mxu0 0.0
    %3006 = vmatpush2.msra.mxu0 0.0
    %3007 = vmatprep.subr.mxu0 0.0
    %3008 = vmatpush2.msra.mxu0 0.0
    %3009 = vmatprep.subr.mxu0 0.0
    %3010 = vmatpush2.msra.mxu0 0.0
    %3011 = vmatprep.subr.mxu0 0.0
    %3012 = vmatpush2.msra.mxu0 0.0
    %3013 = vmatprep.subr.mxu0 0.0
    %3014 = vmatpush2.msra.mxu0 0.0
    %3015 = vmatprep.subr.mxu0 0.0
    %3016 = vmatpush2.msra.mxu0 0.0
    %3017 = vmatprep.mubr.f32.mxu0 0.0
    %3018 = vmatmul.mubr.f32.gmra.mxu0 %v2926
    %v3019 = vpop.f32.mrf.mxu0
    %v3020 = vadd.f32 %v2951, %v3019
    %v3021 = vpop.f32.mrf.mxu0
    %3022 = vmatprep.mubr.f32.mxu0 0.0
    %3023 = vmatmul.mubr.f32.gmra.mxu0 %v2927
    %v3024 = vpop.f32.mrf.mxu0
    %v3025 = vadd.f32 %v2951, %v3024
    %v3026 = vpop.f32.mrf.mxu0
    %3027 = vdwg.mxu0
    %s3028 = scalar_lea.vmem %s4, 384
    %v3029 = vld [vmem:[%s3028] sm:$0xff]
    %v3030 = vld [vmem:[%s3028 + $0x8] sm:$0xff]
    %v3031 = vld [vmem:[%s3028 + $0x10] sm:$0xff]
    %v3032 = vld [vmem:[%s3028 + $0x18] sm:$0xff]
    %v3033 = vld [vmem:[%s3028 + $0x20] sm:$0xff]
    %v3034 = vld [vmem:[%s3028 + $0x28] sm:$0xff]
    %v3035 = vld [vmem:[%s3028 + $0x30] sm:$0xff]
    %v3036 = vld [vmem:[%s3028 + $0x38] sm:$0xff]
    %v3037 = vld [vmem:[%s3028 + $0x40] sm:$0xff]
    %v3038 = vld [vmem:[%s3028 + $0x48] sm:$0xff]
    %v3039 = vld [vmem:[%s3028 + $0x50] sm:$0xff]
    %v3040 = vld [vmem:[%s3028 + $0x58] sm:$0xff]
    %v3041 = vld [vmem:[%s3028 + $0x60] sm:$0xff]
    %v3042 = vld [vmem:[%s3028 + $0x68] sm:$0xff]
    %v3043 = vld [vmem:[%s3028 + $0x70] sm:$0xff]
    %v3044 = vld [vmem:[%s3028 + $0x78] sm:$0xff]
    %3045 = vmatprep.subr.mxu0 0.0
    %3046 = vmatpush1.msra.mxu0 %v3044
    %3047 = vmatprep.subr.mxu0 0.0
    %3048 = vmatpush1.msra.mxu0 %v3043
    %3049 = vmatprep.subr.mxu0 0.0
    %3050 = vmatpush1.msra.mxu0 %v3042
    %3051 = vmatprep.subr.mxu0 0.0
    %3052 = vmatpush1.msra.mxu0 %v3041
    %3053 = vmatprep.subr.mxu0 0.0
    %3054 = vmatpush1.msra.mxu0 %v3040
    %3055 = vmatprep.subr.mxu0 0.0
    %3056 = vmatpush1.msra.mxu0 %v3039
    %3057 = vmatprep.subr.mxu0 0.0
    %3058 = vmatpush1.msra.mxu0 %v3038
    %3059 = vmatprep.subr.mxu0 0.0
    %3060 = vmatpush1.msra.mxu0 %v3037
    %3061 = vmatprep.subr.mxu0 0.0
    %3062 = vmatpush1.msra.mxu0 %v3036
    %3063 = vmatprep.subr.mxu0 0.0
    %3064 = vmatpush1.msra.mxu0 %v3035
    %3065 = vmatprep.subr.mxu0 0.0
    %3066 = vmatpush1.msra.mxu0 %v3034
    %3067 = vmatprep.subr.mxu0 0.0
    %3068 = vmatpush1.msra.mxu0 %v3033
    %3069 = vmatprep.subr.mxu0 0.0
    %3070 = vmatpush1.msra.mxu0 %v3032
    %3071 = vmatprep.subr.mxu0 0.0
    %3072 = vmatpush1.msra.mxu0 %v3031
    %3073 = vmatprep.subr.mxu0 0.0
    %3074 = vmatpush1.msra.mxu0 %v3030
    %3075 = vmatprep.subr.mxu0 0.0
    %3076 = vmatpush1.msra.mxu0 %v3029
    %3077 = vmatprep.subr.mxu0 0.0
    %3078 = vmatpush2.msra.mxu0 0.0
    %3079 = vmatprep.subr.mxu0 0.0
    %3080 = vmatpush2.msra.mxu0 0.0
    %3081 = vmatprep.subr.mxu0 0.0
    %3082 = vmatpush2.msra.mxu0 0.0
    %3083 = vmatprep.subr.mxu0 0.0
    %3084 = vmatpush2.msra.mxu0 0.0
    %3085 = vmatprep.subr.mxu0 0.0
    %3086 = vmatpush2.msra.mxu0 0.0
    %3087 = vmatprep.subr.mxu0 0.0
    %3088 = vmatpush2.msra.mxu0 0.0
    %3089 = vmatprep.subr.mxu0 0.0
    %3090 = vmatpush2.msra.mxu0 0.0
    %3091 = vmatprep.subr.mxu0 0.0
    %3092 = vmatpush2.msra.mxu0 0.0
    %3093 = vmatprep.subr.mxu0 0.0
    %3094 = vmatpush2.msra.mxu0 0.0
    %3095 = vmatprep.subr.mxu0 0.0
    %3096 = vmatpush2.msra.mxu0 0.0
    %3097 = vmatprep.subr.mxu0 0.0
    %3098 = vmatpush2.msra.mxu0 0.0
    %3099 = vmatprep.subr.mxu0 0.0
    %3100 = vmatpush2.msra.mxu0 0.0
    %3101 = vmatprep.subr.mxu0 0.0
    %3102 = vmatpush2.msra.mxu0 0.0
    %3103 = vmatprep.subr.mxu0 0.0
    %3104 = vmatpush2.msra.mxu0 0.0
    %3105 = vmatprep.subr.mxu0 0.0
    %3106 = vmatpush2.msra.mxu0 0.0
    %3107 = vmatprep.subr.mxu0 0.0
    %3108 = vmatpush2.msra.mxu0 0.0
    %3109 = vmatprep.mubr.f32.mxu0 0.0
    %3110 = vmatmul.mubr.f32.gmra.mxu0 0.0
    %v3111 = vpop.f32.mrf.mxu0
    %v3112 = vadd.f32 0.0, %v3111
    %v3113 = vpop.f32.mrf.mxu0
    %3114 = vdwg.mxu0
    %v3115 = vadd.f32 %v3020, %v3112
    %v3116 = vtanh.pop %v3115
    %v3117 = vxor.u32 %v3115, 2147483648
    %v3118 = vmul.f32 %v3117, 1.442695
    %v3119 = vpow.pop %v3118
    %v3120 = vadd.f32 %v3119, 1.0
    %v3121 = vrcp.pop %v3120
    %v3122 = vmul.f32 1.0, %v3121
    %v3123 = vsel %vm54, %v3116, %v3122
    %3124 = vrot.lane.b32.xlu0 %v3123, 64
    %v3125 = vpop.permute.xlu0 %3124
    %v3126 = vmul.f32 %v3123, %v3125
    %3127 = vrot.lane.b32.xlu0 %v3126, 96
    %v3128 = vpop.permute.xlu0 %3127
    %v3129 = vmul.f32 %v3123, 0.0
    %v3130 = vadd.f32 %v3129, %v3128
    %v3131 = vtanh.pop %v3130
    %v3132 = vmul.f32 %v3125, %v3131
    %3133 = vst [vmem:[#allocation2] sm:$0x3] %v3132
    %3134 = vmatprep.subr.mxu0 0.0
    %3135 = vmatpush1.msra.mxu0 %v3044
    %3136 = vmatprep.subr.mxu0 0.0
    %3137 = vmatpush1.msra.mxu0 %v3043
    %3138 = vmatprep.subr.mxu0 0.0
    %3139 = vmatpush1.msra.mxu0 %v3042
    %3140 = vmatprep.subr.mxu0 0.0
    %3141 = vmatpush1.msra.mxu0 %v3041
    %3142 = vmatprep.subr.mxu0 0.0
    %3143 = vmatpush1.msra.mxu0 %v3040
    %3144 = vmatprep.subr.mxu0 0.0
    %3145 = vmatpush1.msra.mxu0 %v3039
    %3146 = vmatprep.subr.mxu0 0.0
    %3147 = vmatpush1.msra.mxu0 %v3038
    %3148 = vmatprep.subr.mxu0 0.0
    %3149 = vmatpush1.msra.mxu0 %v3037
    %3150 = vmatprep.subr.mxu0 0.0
    %3151 = vmatpush1.msra.mxu0 %v3036
    %3152 = vmatprep.subr.mxu0 0.0
    %3153 = vmatpush1.msra.mxu0 %v3035
    %3154 = vmatprep.subr.mxu0 0.0
    %3155 = vmatpush1.msra.mxu0 %v3034
    %3156 = vmatprep.subr.mxu0 0.0
    %3157 = vmatpush1.msra.mxu0 %v3033
    %3158 = vmatprep.subr.mxu0 0.0
    %3159 = vmatpush1.msra.mxu0 %v3032
    %3160 = vmatprep.subr.mxu0 0.0
    %3161 = vmatpush1.msra.mxu0 %v3031
    %3162 = vmatprep.subr.mxu0 0.0
    %3163 = vmatpush1.msra.mxu0 %v3030
    %3164 = vmatprep.subr.mxu0 0.0
    %3165 = vmatpush1.msra.mxu0 %v3029
    %3166 = vmatprep.subr.mxu0 0.0
    %3167 = vmatpush2.msra.mxu0 0.0
    %3168 = vmatprep.subr.mxu0 0.0
    %3169 = vmatpush2.msra.mxu0 0.0
    %3170 = vmatprep.subr.mxu0 0.0
    %3171 = vmatpush2.msra.mxu0 0.0
    %3172 = vmatprep.subr.mxu0 0.0
    %3173 = vmatpush2.msra.mxu0 0.0
    %3174 = vmatprep.subr.mxu0 0.0
    %3175 = vmatpush2.msra.mxu0 0.0
    %3176 = vmatprep.subr.mxu0 0.0
    %3177 = vmatpush2.msra.mxu0 0.0
    %3178 = vmatprep.subr.mxu0 0.0
    %3179 = vmatpush2.msra.mxu0 0.0
    %3180 = vmatprep.subr.mxu0 0.0
    %3181 = vmatpush2.msra.mxu0 0.0
    %3182 = vmatprep.subr.mxu0 0.0
    %3183 = vmatpush2.msra.mxu0 0.0
    %3184 = vmatprep.subr.mxu0 0.0
    %3185 = vmatpush2.msra.mxu0 0.0
    %3186 = vmatprep.subr.mxu0 0.0
    %3187 = vmatpush2.msra.mxu0 0.0
    %3188 = vmatprep.subr.mxu0 0.0
    %3189 = vmatpush2.msra.mxu0 0.0
    %3190 = vmatprep.subr.mxu0 0.0
    %3191 = vmatpush2.msra.mxu0 0.0
    %3192 = vmatprep.subr.mxu0 0.0
    %3193 = vmatpush2.msra.mxu0 0.0
    %3194 = vmatprep.subr.mxu0 0.0
    %3195 = vmatpush2.msra.mxu0 0.0
    %3196 = vmatprep.subr.mxu0 0.0
    %3197 = vmatpush2.msra.mxu0 0.0
    %3198 = vmatprep.mubr.f32.mxu0 0.0
    %3199 = vmatmul.mubr.f32.gmra.mxu0 %v3132
    %v3200 = vpop.f32.mrf.mxu0
    %v3201 = vadd.f32 0.0, %v3200
    %v3202 = vpop.f32.mrf.mxu0
    %3203 = vdwg.mxu0
    %v3205 = vrot.slane %v3201, 6
    %v3207 = vadd.f32 %v3020, %v3205
    %v3208 = vtanh.pop %v3207
    %v3209 = vxor.u32 %v3207, 2147483648
    %v3210 = vmul.f32 %v3209, 1.442695
    %v3211 = vpow.pop %v3210
    %v3212 = vadd.f32 %v3211, 1.0
    %v3213 = vrcp.pop %v3212
    %v3214 = vmul.f32 1.0, %v3213
    %v3215 = vsel %vm54, %v3208, %v3214
    %v3217 = vrot.slane %v3215, 2
    %3219 = vrot.lane.b32.xlu0 %v3217, 64
    %v3220 = vpop.permute.xlu0 %3219
    %v3222 = vrot.slane %v3220, 6
    %v3224 = vmul.f32 %v3215, %v3222
    %v3226 = vrot.slane %v3224, 2
    %3228 = vrot.lane.b32.xlu0 %v3226, 96
    %v3229 = vpop.permute.xlu0 %3228
    %v3231 = vrot.slane %v3130, 6
    %v3233 = vmul.f32 %v3215, %v3231
    %v3235 = vrot.slane %v3229, 6
    %v3237 = vadd.f32 %v3233, %v3235
    %v3238 = vtanh.pop %v3237
    %v3240 = vrot.slane %v3238, 2
    %v3242 = vmul.f32 %v3220, %v3240
    %3243 = vst [vmem:[#allocation2 + $0x2] sm:$0x3] %v3242
    %3244 = vmatprep.subr.mxu0 0.0
    %3245 = vmatpush1.msra.mxu0 %v3044
    %3246 = vmatprep.subr.mxu0 0.0
    %3247 = vmatpush1.msra.mxu0 %v3043
    %3248 = vmatprep.subr.mxu0 0.0
    %3249 = vmatpush1.msra.mxu0 %v3042
    %3250 = vmatprep.subr.mxu0 0.0
    %3251 = vmatpush1.msra.mxu0 %v3041
    %3252 = vmatprep.subr.mxu0 0.0
    %3253 = vmatpush1.msra.mxu0 %v3040
    %3254 = vmatprep.subr.mxu0 0.0
    %3255 = vmatpush1.msra.mxu0 %v3039
    %3256 = vmatprep.subr.mxu0 0.0
    %3257 = vmatpush1.msra.mxu0 %v3038
    %3258 = vmatprep.subr.mxu0 0.0
    %3259 = vmatpush1.msra.mxu0 %v3037
    %3260 = vmatprep.subr.mxu0 0.0
    %3261 = vmatpush1.msra.mxu0 %v3036
    %3262 = vmatprep.subr.mxu0 0.0
    %3263 = vmatpush1.msra.mxu0 %v3035
    %3264 = vmatprep.subr.mxu0 0.0
    %3265 = vmatpush1.msra.mxu0 %v3034
    %3266 = vmatprep.subr.mxu0 0.0
    %3267 = vmatpush1.msra.mxu0 %v3033
    %3268 = vmatprep.subr.mxu0 0.0
    %3269 = vmatpush1.msra.mxu0 %v3032
    %3270 = vmatprep.subr.mxu0 0.0
    %3271 = vmatpush1.msra.mxu0 %v3031
    %3272 = vmatprep.subr.mxu0 0.0
    %3273 = vmatpush1.msra.mxu0 %v3030
    %3274 = vmatprep.subr.mxu0 0.0
    %3275 = vmatpush1.msra.mxu0 %v3029
    %3276 = vmatprep.subr.mxu0 0.0
    %3277 = vmatpush2.msra.mxu0 0.0
    %3278 = vmatprep.subr.mxu0 0.0
    %3279 = vmatpush2.msra.mxu0 0.0
    %3280 = vmatprep.subr.mxu0 0.0
    %3281 = vmatpush2.msra.mxu0 0.0
    %3282 = vmatprep.subr.mxu0 0.0
    %3283 = vmatpush2.msra.mxu0 0.0
    %3284 = vmatprep.subr.mxu0 0.0
    %3285 = vmatpush2.msra.mxu0 0.0
    %3286 = vmatprep.subr.mxu0 0.0
    %3287 = vmatpush2.msra.mxu0 0.0
    %3288 = vmatprep.subr.mxu0 0.0
    %3289 = vmatpush2.msra.mxu0 0.0
    %3290 = vmatprep.subr.mxu0 0.0
    %3291 = vmatpush2.msra.mxu0 0.0
    %3292 = vmatprep.subr.mxu0 0.0
    %3293 = vmatpush2.msra.mxu0 0.0
    %3294 = vmatprep.subr.mxu0 0.0
    %3295 = vmatpush2.msra.mxu0 0.0
    %3296 = vmatprep.subr.mxu0 0.0
    %3297 = vmatpush2.msra.mxu0 0.0
    %3298 = vmatprep.subr.mxu0 0.0
    %3299 = vmatpush2.msra.mxu0 0.0
    %3300 = vmatprep.subr.mxu0 0.0
    %3301 = vmatpush2.msra.mxu0 0.0
    %3302 = vmatprep.subr.mxu0 0.0
    %3303 = vmatpush2.msra.mxu0 0.0
    %3304 = vmatprep.subr.mxu0 0.0
    %3305 = vmatpush2.msra.mxu0 0.0
    %3306 = vmatprep.subr.mxu0 0.0
    %3307 = vmatpush2.msra.mxu0 0.0
    %3308 = vmatprep.mubr.f32.mxu0 0.0
    %3309 = vmatmul.mubr.f32.gmra.mxu0 %v3242
    %v3310 = vpop.f32.mrf.mxu0
    %v3311 = vadd.f32 0.0, %v3310
    %v3312 = vpop.f32.mrf.mxu0
    %3313 = vdwg.mxu0
    %v3315 = vrot.slane %v3311, 4
    %v3317 = vadd.f32 %v3020, %v3315
    %v3318 = vtanh.pop %v3317
    %v3319 = vxor.u32 %v3317, 2147483648
    %v3320 = vmul.f32 %v3319, 1.442695
    %v3321 = vpow.pop %v3320
    %v3322 = vadd.f32 %v3321, 1.0
    %v3323 = vrcp.pop %v3322
    %v3324 = vmul.f32 1.0, %v3323
    %v3325 = vsel %vm54, %v3318, %v3324
    %v3327 = vrot.slane %v3325, 4
    %3329 = vrot.lane.b32.xlu0 %v3327, 64
    %v3330 = vpop.permute.xlu0 %3329
    %v3332 = vrot.slane %v3330, 4
    %v3334 = vmul.f32 %v3325, %v3332
    %v3336 = vrot.slane %v3334, 4
    %3338 = vrot.lane.b32.xlu0 %v3336, 96
    %v3339 = vpop.permute.xlu0 %3338
    %v3341 = vrot.slane %v3237, 6
    %v3343 = vmul.f32 %v3325, %v3341
    %v3345 = vrot.slane %v3339, 4
    %v3347 = vadd.f32 %v3343, %v3345
    %v3348 = vtanh.pop %v3347
    %v3350 = vrot.slane %v3348, 4
    %v3352 = vmul.f32 %v3330, %v3350
    %3353 = vst [vmem:[#allocation2 + $0x4] sm:$0x3] %v3352
    %3354 = vmatprep.subr.mxu0 0.0
    %3355 = vmatpush1.msra.mxu0 %v3044
    %3356 = vmatprep.subr.mxu0 0.0
    %3357 = vmatpush1.msra.mxu0 %v3043
    %3358 = vmatprep.subr.mxu0 0.0
    %3359 = vmatpush1.msra.mxu0 %v3042
    %3360 = vmatprep.subr.mxu0 0.0
    %3361 = vmatpush1.msra.mxu0 %v3041
    %3362 = vmatprep.subr.mxu0 0.0
    %3363 = vmatpush1.msra.mxu0 %v3040
    %3364 = vmatprep.subr.mxu0 0.0
    %3365 = vmatpush1.msra.mxu0 %v3039
    %3366 = vmatprep.subr.mxu0 0.0
    %3367 = vmatpush1.msra.mxu0 %v3038
    %3368 = vmatprep.subr.mxu0 0.0
    %3369 = vmatpush1.msra.mxu0 %v3037
    %3370 = vmatprep.subr.mxu0 0.0
    %3371 = vmatpush1.msra.mxu0 %v3036
    %3372 = vmatprep.subr.mxu0 0.0
    %3373 = vmatpush1.msra.mxu0 %v3035
    %3374 = vmatprep.subr.mxu0 0.0
    %3375 = vmatpush1.msra.mxu0 %v3034
    %3376 = vmatprep.subr.mxu0 0.0
    %3377 = vmatpush1.msra.mxu0 %v3033
    %3378 = vmatprep.subr.mxu0 0.0
    %3379 = vmatpush1.msra.mxu0 %v3032
    %3380 = vmatprep.subr.mxu0 0.0
    %3381 = vmatpush1.msra.mxu0 %v3031
    %3382 = vmatprep.subr.mxu0 0.0
    %3383 = vmatpush1.msra.mxu0 %v3030
    %3384 = vmatprep.subr.mxu0 0.0
    %3385 = vmatpush1.msra.mxu0 %v3029
    %3386 = vmatprep.subr.mxu0 0.0
    %3387 = vmatpush2.msra.mxu0 0.0
    %3388 = vmatprep.subr.mxu0 0.0
    %3389 = vmatpush2.msra.mxu0 0.0
    %3390 = vmatprep.subr.mxu0 0.0
    %3391 = vmatpush2.msra.mxu0 0.0
    %3392 = vmatprep.subr.mxu0 0.0
    %3393 = vmatpush2.msra.mxu0 0.0
    %3394 = vmatprep.subr.mxu0 0.0
    %3395 = vmatpush2.msra.mxu0 0.0
    %3396 = vmatprep.subr.mxu0 0.0
    %3397 = vmatpush2.msra.mxu0 0.0
    %3398 = vmatprep.subr.mxu0 0.0
    %3399 = vmatpush2.msra.mxu0 0.0
    %3400 = vmatprep.subr.mxu0 0.0
    %3401 = vmatpush2.msra.mxu0 0.0
    %3402 = vmatprep.subr.mxu0 0.0
    %3403 = vmatpush2.msra.mxu0 0.0
    %3404 = vmatprep.subr.mxu0 0.0
    %3405 = vmatpush2.msra.mxu0 0.0
    %3406 = vmatprep.subr.mxu0 0.0
    %3407 = vmatpush2.msra.mxu0 0.0
    %3408 = vmatprep.subr.mxu0 0.0
    %3409 = vmatpush2.msra.mxu0 0.0
    %3410 = vmatprep.subr.mxu0 0.0
    %3411 = vmatpush2.msra.mxu0 0.0
    %3412 = vmatprep.subr.mxu0 0.0
    %3413 = vmatpush2.msra.mxu0 0.0
    %3414 = vmatprep.subr.mxu0 0.0
    %3415 = vmatpush2.msra.mxu0 0.0
    %3416 = vmatprep.subr.mxu0 0.0
    %3417 = vmatpush2.msra.mxu0 0.0
    %3418 = vmatprep.mubr.f32.mxu0 0.0
    %3419 = vmatmul.mubr.f32.gmra.mxu0 %v3352
    %v3420 = vpop.f32.mrf.mxu0
    %v3421 = vadd.f32 0.0, %v3420
    %v3422 = vpop.f32.mrf.mxu0
    %3423 = vdwg.mxu0
    %v3425 = vrot.slane %v3421, 2
    %v3427 = vadd.f32 %v3020, %v3425
    %v3428 = vtanh.pop %v3427
    %v3429 = vxor.u32 %v3427, 2147483648
    %v3430 = vmul.f32 %v3429, 1.442695
    %v3431 = vpow.pop %v3430
    %v3432 = vadd.f32 %v3431, 1.0
    %v3433 = vrcp.pop %v3432
    %v3434 = vmul.f32 1.0, %v3433
    %v3435 = vsel %vm54, %v3428, %v3434
    %v3437 = vrot.slane %v3435, 6
    %3439 = vrot.lane.b32.xlu0 %v3437, 64
    %v3440 = vpop.permute.xlu0 %3439
    %v3442 = vrot.slane %v3440, 2
    %v3444 = vmul.f32 %v3435, %v3442
    %v3446 = vrot.slane %v3444, 6
    %3448 = vrot.lane.b32.xlu0 %v3446, 96
    %v3449 = vpop.permute.xlu0 %3448
    %v3451 = vrot.slane %v3347, 6
    %v3453 = vmul.f32 %v3435, %v3451
    %v3455 = vrot.slane %v3449, 2
    %v3457 = vadd.f32 %v3453, %v3455
    %v3458 = vtanh.pop %v3457
    %v3460 = vrot.slane %v3458, 6
    %v3462 = vmul.f32 %v3440, %v3460
    %3463 = vst [vmem:[#allocation2 + $0x6] sm:$0x3] %v3462
    %3464 = vmatprep.subr.mxu0 0.0
    %3465 = vmatpush1.msra.mxu0 %v3044
    %3466 = vmatprep.subr.mxu0 0.0
    %3467 = vmatpush1.msra.mxu0 %v3043
    %3468 = vmatprep.subr.mxu0 0.0
    %3469 = vmatpush1.msra.mxu0 %v3042
    %3470 = vmatprep.subr.mxu0 0.0
    %3471 = vmatpush1.msra.mxu0 %v3041
    %3472 = vmatprep.subr.mxu0 0.0
    %3473 = vmatpush1.msra.mxu0 %v3040
    %3474 = vmatprep.subr.mxu0 0.0
    %3475 = vmatpush1.msra.mxu0 %v3039
    %3476 = vmatprep.subr.mxu0 0.0
    %3477 = vmatpush1.msra.mxu0 %v3038
    %3478 = vmatprep.subr.mxu0 0.0
    %3479 = vmatpush1.msra.mxu0 %v3037
    %3480 = vmatprep.subr.mxu0 0.0
    %3481 = vmatpush1.msra.mxu0 %v3036
    %3482 = vmatprep.subr.mxu0 0.0
    %3483 = vmatpush1.msra.mxu0 %v3035
    %3484 = vmatprep.subr.mxu0 0.0
    %3485 = vmatpush1.msra.mxu0 %v3034
    %3486 = vmatprep.subr.mxu0 0.0
    %3487 = vmatpush1.msra.mxu0 %v3033
    %3488 = vmatprep.subr.mxu0 0.0
    %3489 = vmatpush1.msra.mxu0 %v3032
    %3490 = vmatprep.subr.mxu0 0.0
    %3491 = vmatpush1.msra.mxu0 %v3031
    %3492 = vmatprep.subr.mxu0 0.0
    %3493 = vmatpush1.msra.mxu0 %v3030
    %3494 = vmatprep.subr.mxu0 0.0
    %3495 = vmatpush1.msra.mxu0 %v3029
    %3496 = vmatprep.subr.mxu0 0.0
    %3497 = vmatpush2.msra.mxu0 0.0
    %3498 = vmatprep.subr.mxu0 0.0
    %3499 = vmatpush2.msra.mxu0 0.0
    %3500 = vmatprep.subr.mxu0 0.0
    %3501 = vmatpush2.msra.mxu0 0.0
    %3502 = vmatprep.subr.mxu0 0.0
    %3503 = vmatpush2.msra.mxu0 0.0
    %3504 = vmatprep.subr.mxu0 0.0
    %3505 = vmatpush2.msra.mxu0 0.0
    %3506 = vmatprep.subr.mxu0 0.0
    %3507 = vmatpush2.msra.mxu0 0.0
    %3508 = vmatprep.subr.mxu0 0.0
    %3509 = vmatpush2.msra.mxu0 0.0
    %3510 = vmatprep.subr.mxu0 0.0
    %3511 = vmatpush2.msra.mxu0 0.0
    %3512 = vmatprep.subr.mxu0 0.0
    %3513 = vmatpush2.msra.mxu0 0.0
    %3514 = vmatprep.subr.mxu0 0.0
    %3515 = vmatpush2.msra.mxu0 0.0
    %3516 = vmatprep.subr.mxu0 0.0
    %3517 = vmatpush2.msra.mxu0 0.0
    %3518 = vmatprep.subr.mxu0 0.0
    %3519 = vmatpush2.msra.mxu0 0.0
    %3520 = vmatprep.subr.mxu0 0.0
    %3521 = vmatpush2.msra.mxu0 0.0
    %3522 = vmatprep.subr.mxu0 0.0
    %3523 = vmatpush2.msra.mxu0 0.0
    %3524 = vmatprep.subr.mxu0 0.0
    %3525 = vmatpush2.msra.mxu0 0.0
    %3526 = vmatprep.subr.mxu0 0.0
    %3527 = vmatpush2.msra.mxu0 0.0
    %3528 = vmatprep.mubr.f32.mxu0 0.0
    %3529 = vmatmul.mubr.f32.gmra.mxu0 %v3462
    %v3530 = vpop.f32.mrf.mxu0
    %v3531 = vadd.f32 0.0, %v3530
    %v3532 = vpop.f32.mrf.mxu0
    %3533 = vdwg.mxu0
    %v3534 = vadd.f32 %v3025, %v3531
    %v3535 = vtanh.pop %v3534
    %v3536 = vxor.u32 %v3534, 2147483648
    %v3537 = vmul.f32 %v3536, 1.442695
    %v3538 = vpow.pop %v3537
    %v3539 = vadd.f32 %v3538, 1.0
    %v3540 = vrcp.pop %v3539
    %v3541 = vmul.f32 1.0, %v3540
    %v3542 = vsel %vm54, %v3535, %v3541
    %3543 = vrot.lane.b32.xlu0 %v3542, 64
    %v3544 = vpop.permute.xlu0 %3543
    %v3545 = vmul.f32 %v3542, %v3544
    %3546 = vrot.lane.b32.xlu0 %v3545, 96
    %v3547 = vpop.permute.xlu0 %3546
    %v3549 = vrot.slane %v3457, 6
    %v3551 = vmul.f32 %v3542, %v3549
    %v3552 = vadd.f32 %v3551, %v3547
    %v3553 = vtanh.pop %v3552
    %v3554 = vmul.f32 %v3544, %v3553
    %3555 = vst [vmem:[#allocation2 + $0x8] sm:$0x3] %v3554
    %3556 = vmatprep.subr.mxu0 0.0
    %3557 = vmatpush1.msra.mxu0 %v3044
    %3558 = vmatprep.subr.mxu0 0.0
    %3559 = vmatpush1.msra.mxu0 %v3043
    %3560 = vmatprep.subr.mxu0 0.0
    %3561 = vmatpush1.msra.mxu0 %v3042
    %3562 = vmatprep.subr.mxu0 0.0
    %3563 = vmatpush1.msra.mxu0 %v3041
    %3564 = vmatprep.subr.mxu0 0.0
    %3565 = vmatpush1.msra.mxu0 %v3040
    %3566 = vmatprep.subr.mxu0 0.0
    %3567 = vmatpush1.msra.mxu0 %v3039
    %3568 = vmatprep.subr.mxu0 0.0
    %3569 = vmatpush1.msra.mxu0 %v3038
    %3570 = vmatprep.subr.mxu0 0.0
    %3571 = vmatpush1.msra.mxu0 %v3037
    %3572 = vmatprep.subr.mxu0 0.0
    %3573 = vmatpush1.msra.mxu0 %v3036
    %3574 = vmatprep.subr.mxu0 0.0
    %3575 = vmatpush1.msra.mxu0 %v3035
    %3576 = vmatprep.subr.mxu0 0.0
    %3577 = vmatpush1.msra.mxu0 %v3034
    %3578 = vmatprep.subr.mxu0 0.0
    %3579 = vmatpush1.msra.mxu0 %v3033
    %3580 = vmatprep.subr.mxu0 0.0
    %3581 = vmatpush1.msra.mxu0 %v3032
    %3582 = vmatprep.subr.mxu0 0.0
    %3583 = vmatpush1.msra.mxu0 %v3031
    %3584 = vmatprep.subr.mxu0 0.0
    %3585 = vmatpush1.msra.mxu0 %v3030
    %3586 = vmatprep.subr.mxu0 0.0
    %3587 = vmatpush1.msra.mxu0 %v3029
    %3588 = vmatprep.subr.mxu0 0.0
    %3589 = vmatpush2.msra.mxu0 0.0
    %3590 = vmatprep.subr.mxu0 0.0
    %3591 = vmatpush2.msra.mxu0 0.0
    %3592 = vmatprep.subr.mxu0 0.0
    %3593 = vmatpush2.msra.mxu0 0.0
    %3594 = vmatprep.subr.mxu0 0.0
    %3595 = vmatpush2.msra.mxu0 0.0
    %3596 = vmatprep.subr.mxu0 0.0
    %3597 = vmatpush2.msra.mxu0 0.0
    %3598 = vmatprep.subr.mxu0 0.0
    %3599 = vmatpush2.msra.mxu0 0.0
    %3600 = vmatprep.subr.mxu0 0.0
    %3601 = vmatpush2.msra.mxu0 0.0
    %3602 = vmatprep.subr.mxu0 0.0
    %3603 = vmatpush2.msra.mxu0 0.0
    %3604 = vmatprep.subr.mxu0 0.0
    %3605 = vmatpush2.msra.mxu0 0.0
    %3606 = vmatprep.subr.mxu0 0.0
    %3607 = vmatpush2.msra.mxu0 0.0
    %3608 = vmatprep.subr.mxu0 0.0
    %3609 = vmatpush2.msra.mxu0 0.0
    %3610 = vmatprep.subr.mxu0 0.0
    %3611 = vmatpush2.msra.mxu0 0.0
    %3612 = vmatprep.subr.mxu0 0.0
    %3613 = vmatpush2.msra.mxu0 0.0
    %3614 = vmatprep.subr.mxu0 0.0
    %3615 = vmatpush2.msra.mxu0 0.0
    %3616 = vmatprep.subr.mxu0 0.0
    %3617 = vmatpush2.msra.mxu0 0.0
    %3618 = vmatprep.subr.mxu0 0.0
    %3619 = vmatpush2.msra.mxu0 0.0
    %3620 = vmatprep.mubr.f32.mxu0 0.0
    %3621 = vmatmul.mubr.f32.gmra.mxu0 %v3554
    %v3622 = vpop.f32.mrf.mxu0
    %v3623 = vadd.f32 0.0, %v3622
    %v3624 = vpop.f32.mrf.mxu0
    %3625 = vdwg.mxu0
    %v3627 = vrot.slane %v3623, 6
    %v3629 = vadd.f32 %v3025, %v3627
    %v3630 = vtanh.pop %v3629
    %v3631 = vxor.u32 %v3629, 2147483648
    %v3632 = vmul.f32 %v3631, 1.442695
    %v3633 = vpow.pop %v3632
    %v3634 = vadd.f32 %v3633, 1.0
    %v3635 = vrcp.pop %v3634
    %v3636 = vmul.f32 1.0, %v3635
    %v3637 = vsel %vm54, %v3630, %v3636
    %v3639 = vrot.slane %v3637, 2
    %3641 = vrot.lane.b32.xlu0 %v3639, 64
    %v3642 = vpop.permute.xlu0 %3641
    %v3644 = vrot.slane %v3642, 6
    %v3646 = vmul.f32 %v3637, %v3644
    %v3648 = vrot.slane %v3646, 2
    %3650 = vrot.lane.b32.xlu0 %v3648, 96
    %v3651 = vpop.permute.xlu0 %3650
    %v3653 = vrot.slane %v3552, 6
    %v3655 = vmul.f32 %v3637, %v3653
    %v3657 = vrot.slane %v3651, 6
    %v3659 = vadd.f32 %v3655, %v3657
    %v3660 = vtanh.pop %v3659
    %v3662 = vrot.slane %v3660, 2
    %v3664 = vmul.f32 %v3642, %v3662
    %3665 = vst [vmem:[#allocation2 + $0xa] sm:$0x3] %v3664
    %3666 = vmatprep.subr.mxu0 0.0
    %3667 = vmatpush1.msra.mxu0 %v3044
    %3668 = vmatprep.subr.mxu0 0.0
    %3669 = vmatpush1.msra.mxu0 %v3043
    %3670 = vmatprep.subr.mxu0 0.0
    %3671 = vmatpush1.msra.mxu0 %v3042
    %3672 = vmatprep.subr.mxu0 0.0
    %3673 = vmatpush1.msra.mxu0 %v3041
    %3674 = vmatprep.subr.mxu0 0.0
    %3675 = vmatpush1.msra.mxu0 %v3040
    %3676 = vmatprep.subr.mxu0 0.0
    %3677 = vmatpush1.msra.mxu0 %v3039
    %3678 = vmatprep.subr.mxu0 0.0
    %3679 = vmatpush1.msra.mxu0 %v3038
    %3680 = vmatprep.subr.mxu0 0.0
    %3681 = vmatpush1.msra.mxu0 %v3037
    %3682 = vmatprep.subr.mxu0 0.0
    %3683 = vmatpush1.msra.mxu0 %v3036
    %3684 = vmatprep.subr.mxu0 0.0
    %3685 = vmatpush1.msra.mxu0 %v3035
    %3686 = vmatprep.subr.mxu0 0.0
    %3687 = vmatpush1.msra.mxu0 %v3034
    %3688 = vmatprep.subr.mxu0 0.0
    %3689 = vmatpush1.msra.mxu0 %v3033
    %3690 = vmatprep.subr.mxu0 0.0
    %3691 = vmatpush1.msra.mxu0 %v3032
    %3692 = vmatprep.subr.mxu0 0.0
    %3693 = vmatpush1.msra.mxu0 %v3031
    %3694 = vmatprep.subr.mxu0 0.0
    %3695 = vmatpush1.msra.mxu0 %v3030
    %3696 = vmatprep.subr.mxu0 0.0
    %3697 = vmatpush1.msra.mxu0 %v3029
    %3698 = vmatprep.subr.mxu0 0.0
    %3699 = vmatpush2.msra.mxu0 0.0
    %3700 = vmatprep.subr.mxu0 0.0
    %3701 = vmatpush2.msra.mxu0 0.0
    %3702 = vmatprep.subr.mxu0 0.0
    %3703 = vmatpush2.msra.mxu0 0.0
    %3704 = vmatprep.subr.mxu0 0.0
    %3705 = vmatpush2.msra.mxu0 0.0
    %3706 = vmatprep.subr.mxu0 0.0
    %3707 = vmatpush2.msra.mxu0 0.0
    %3708 = vmatprep.subr.mxu0 0.0
    %3709 = vmatpush2.msra.mxu0 0.0
    %3710 = vmatprep.subr.mxu0 0.0
    %3711 = vmatpush2.msra.mxu0 0.0
    %3712 = vmatprep.subr.mxu0 0.0
    %3713 = vmatpush2.msra.mxu0 0.0
    %3714 = vmatprep.subr.mxu0 0.0
    %3715 = vmatpush2.msra.mxu0 0.0
    %3716 = vmatprep.subr.mxu0 0.0
    %3717 = vmatpush2.msra.mxu0 0.0
    %3718 = vmatprep.subr.mxu0 0.0
    %3719 = vmatpush2.msra.mxu0 0.0
    %3720 = vmatprep.subr.mxu0 0.0
    %3721 = vmatpush2.msra.mxu0 0.0
    %3722 = vmatprep.subr.mxu0 0.0
    %3723 = vmatpush2.msra.mxu0 0.0
    %3724 = vmatprep.subr.mxu0 0.0
    %3725 = vmatpush2.msra.mxu0 0.0
    %3726 = vmatprep.subr.mxu0 0.0
    %3727 = vmatpush2.msra.mxu0 0.0
    %3728 = vmatprep.subr.mxu0 0.0
    %3729 = vmatpush2.msra.mxu0 0.0
    %3730 = vmatprep.mubr.f32.mxu0 0.0
    %3731 = vmatmul.mubr.f32.gmra.mxu0 %v3664
    %v3732 = vpop.f32.mrf.mxu0
    %v3733 = vadd.f32 0.0, %v3732
    %v3734 = vpop.f32.mrf.mxu0
    %3735 = vdwg.mxu0
    %v3737 = vrot.slane %v3733, 4
    %v3739 = vadd.f32 %v3025, %v3737
    %v3740 = vtanh.pop %v3739
    %v3741 = vxor.u32 %v3739, 2147483648
    %v3742 = vmul.f32 %v3741, 1.442695
    %v3743 = vpow.pop %v3742
    %v3744 = vadd.f32 %v3743, 1.0
    %v3745 = vrcp.pop %v3744
    %v3746 = vmul.f32 1.0, %v3745
    %v3747 = vsel %vm54, %v3740, %v3746
    %v3749 = vrot.slane %v3747, 4
    %3751 = vrot.lane.b32.xlu0 %v3749, 64
    %v3752 = vpop.permute.xlu0 %3751
    %v3754 = vrot.slane %v3752, 4
    %v3756 = vmul.f32 %v3747, %v3754
    %v3758 = vrot.slane %v3756, 4
    %3760 = vrot.lane.b32.xlu0 %v3758, 96
    %v3761 = vpop.permute.xlu0 %3760
    %v3763 = vrot.slane %v3659, 6
    %v3765 = vmul.f32 %v3747, %v3763
    %v3767 = vrot.slane %v3761, 4
    %v3769 = vadd.f32 %v3765, %v3767
    %v3770 = vtanh.pop %v3769
    %v3772 = vrot.slane %v3770, 4
    %v3774 = vmul.f32 %v3752, %v3772
    %3775 = vst [vmem:[#allocation2 + $0xc] sm:$0x3] %v3774
    %3776 = vmatprep.subr.mxu0 0.0
    %3777 = vmatpush1.msra.mxu0 %v3044
    %3778 = vmatprep.subr.mxu0 0.0
    %3779 = vmatpush1.msra.mxu0 %v3043
    %3780 = vmatprep.subr.mxu0 0.0
    %3781 = vmatpush1.msra.mxu0 %v3042
    %3782 = vmatprep.subr.mxu0 0.0
    %3783 = vmatpush1.msra.mxu0 %v3041
    %3784 = vmatprep.subr.mxu0 0.0
    %3785 = vmatpush1.msra.mxu0 %v3040
    %3786 = vmatprep.subr.mxu0 0.0
    %3787 = vmatpush1.msra.mxu0 %v3039
    %3788 = vmatprep.subr.mxu0 0.0
    %3789 = vmatpush1.msra.mxu0 %v3038
    %3790 = vmatprep.subr.mxu0 0.0
    %3791 = vmatpush1.msra.mxu0 %v3037
    %3792 = vmatprep.subr.mxu0 0.0
    %3793 = vmatpush1.msra.mxu0 %v3036
    %3794 = vmatprep.subr.mxu0 0.0
    %3795 = vmatpush1.msra.mxu0 %v3035
    %3796 = vmatprep.subr.mxu0 0.0
    %3797 = vmatpush1.msra.mxu0 %v3034
    %3798 = vmatprep.subr.mxu0 0.0
    %3799 = vmatpush1.msra.mxu0 %v3033
    %3800 = vmatprep.subr.mxu0 0.0
    %3801 = vmatpush1.msra.mxu0 %v3032
    %3802 = vmatprep.subr.mxu0 0.0
    %3803 = vmatpush1.msra.mxu0 %v3031
    %3804 = vmatprep.subr.mxu0 0.0
    %3805 = vmatpush1.msra.mxu0 %v3030
    %3806 = vmatprep.subr.mxu0 0.0
    %3807 = vmatpush1.msra.mxu0 %v3029
    %3808 = vmatprep.subr.mxu0 0.0
    %3809 = vmatpush2.msra.mxu0 0.0
    %3810 = vmatprep.subr.mxu0 0.0
    %3811 = vmatpush2.msra.mxu0 0.0
    %3812 = vmatprep.subr.mxu0 0.0
    %3813 = vmatpush2.msra.mxu0 0.0
    %3814 = vmatprep.subr.mxu0 0.0
    %3815 = vmatpush2.msra.mxu0 0.0
    %3816 = vmatprep.subr.mxu0 0.0
    %3817 = vmatpush2.msra.mxu0 0.0
    %3818 = vmatprep.subr.mxu0 0.0
    %3819 = vmatpush2.msra.mxu0 0.0
    %3820 = vmatprep.subr.mxu0 0.0
    %3821 = vmatpush2.msra.mxu0 0.0
    %3822 = vmatprep.subr.mxu0 0.0
    %3823 = vmatpush2.msra.mxu0 0.0
    %3824 = vmatprep.subr.mxu0 0.0
    %3825 = vmatpush2.msra.mxu0 0.0
    %3826 = vmatprep.subr.mxu0 0.0
    %3827 = vmatpush2.msra.mxu0 0.0
    %3828 = vmatprep.subr.mxu0 0.0
    %3829 = vmatpush2.msra.mxu0 0.0
    %3830 = vmatprep.subr.mxu0 0.0
    %3831 = vmatpush2.msra.mxu0 0.0
    %3832 = vmatprep.subr.mxu0 0.0
    %3833 = vmatpush2.msra.mxu0 0.0
    %3834 = vmatprep.subr.mxu0 0.0
    %3835 = vmatpush2.msra.mxu0 0.0
    %3836 = vmatprep.subr.mxu0 0.0
    %3837 = vmatpush2.msra.mxu0 0.0
    %3838 = vmatprep.subr.mxu0 0.0
    %3839 = vmatpush2.msra.mxu0 0.0
    %3840 = vmatprep.mubr.f32.mxu0 0.0
    %3841 = vmatmul.mubr.f32.gmra.mxu0 %v3774
    %v3842 = vpop.f32.mrf.mxu0
    %v3843 = vadd.f32 0.0, %v3842
    %v3844 = vpop.f32.mrf.mxu0
    %3845 = vdwg.mxu0
    %v3847 = vrot.slane %v3843, 2
    %v3849 = vadd.f32 %v3025, %v3847
    %v3850 = vtanh.pop %v3849
    %v3851 = vxor.u32 %v3849, 2147483648
    %v3852 = vmul.f32 %v3851, 1.442695
    %v3853 = vpow.pop %v3852
    %v3854 = vadd.f32 %v3853, 1.0
    %v3855 = vrcp.pop %v3854
    %v3856 = vmul.f32 1.0, %v3855
    %v3857 = vsel %vm54, %v3850, %v3856
    %v3859 = vrot.slane %v3857, 6
    %3861 = vrot.lane.b32.xlu0 %v3859, 64
    %v3862 = vpop.permute.xlu0 %3861
    %v3864 = vrot.slane %v3862, 2
    %v3866 = vmul.f32 %v3857, %v3864
    %v3868 = vrot.slane %v3866, 6
    %3870 = vrot.lane.b32.xlu0 %v3868, 96
    %v3871 = vpop.permute.xlu0 %3870
    %v3873 = vrot.slane %v3769, 6
    %v3875 = vmul.f32 %v3857, %v3873
    %v3877 = vrot.slane %v3871, 2
    %v3879 = vadd.f32 %v3875, %v3877
    %v3880 = vtanh.pop %v3879
    %v3882 = vrot.slane %v3880, 6
    %v3884 = vmul.f32 %v3862, %v3882
    %3885 = vst [vmem:[#allocation2 + $0xe] sm:$0x3] %v3884
    %v3886 = vld [vmem:[#allocation2] sm:$0xff]
    %v3887 = vld [vmem:[#allocation2 + $0x8] sm:$0xff]
    %s3888 = scalar_lea.vmem [#allocation3], 384
    %v3889 = vld [vmem:[%s3888] sm:$0xff]
    %v3890 = vld [vmem:[%s3888 + $0x8] sm:$0xff]
    %v3891 = vld [vmem:[%s3888 + $0x10] sm:$0xff]
    %v3892 = vld [vmem:[%s3888 + $0x18] sm:$0xff]
    %v3893 = vld [vmem:[%s3888 + $0x20] sm:$0xff]
    %v3894 = vld [vmem:[%s3888 + $0x28] sm:$0xff]
    %v3895 = vld [vmem:[%s3888 + $0x30] sm:$0xff]
    %v3896 = vld [vmem:[%s3888 + $0x38] sm:$0xff]
    %v3897 = vld [vmem:[%s3888 + $0x40] sm:$0xff]
    %v3898 = vld [vmem:[%s3888 + $0x48] sm:$0xff]
    %v3899 = vld [vmem:[%s3888 + $0x50] sm:$0xff]
    %v3900 = vld [vmem:[%s3888 + $0x58] sm:$0xff]
    %v3901 = vld [vmem:[%s3888 + $0x60] sm:$0xff]
    %v3902 = vld [vmem:[%s3888 + $0x68] sm:$0xff]
    %v3903 = vld [vmem:[%s3888 + $0x70] sm:$0xff]
    %v3904 = vld [vmem:[%s3888 + $0x78] sm:$0xff]
    %s3905 = scalar_lea.vmem %s5, 4
    %v3906 = vld [vmem:[%s3905] sm:$0x1]
    %v3908 = vlaneseq
    %v3909 = vshrl.u32 %v3908, 7
    %v3910 = vsub.s32 0, %v3909
    %v3911 = vrot.slane %v3906, %v3910
    %3913 = vmatprep.subr.mxu0 0.0
    %3914 = vmatpush1.msra.mxu0 %v3904
    %3915 = vmatprep.subr.mxu0 0.0
    %3916 = vmatpush1.msra.mxu0 %v3903
    %3917 = vmatprep.subr.mxu0 0.0
    %3918 = vmatpush1.msra.mxu0 %v3902
    %3919 = vmatprep.subr.mxu0 0.0
    %3920 = vmatpush1.msra.mxu0 %v3901
    %3921 = vmatprep.subr.mxu0 0.0
    %3922 = vmatpush1.msra.mxu0 %v3900
    %3923 = vmatprep.subr.mxu0 0.0
    %3924 = vmatpush1.msra.mxu0 %v3899
    %3925 = vmatprep.subr.mxu0 0.0
    %3926 = vmatpush1.msra.mxu0 %v3898
    %3927 = vmatprep.subr.mxu0 0.0
    %3928 = vmatpush1.msra.mxu0 %v3897
    %3929 = vmatprep.subr.mxu0 0.0
    %3930 = vmatpush1.msra.mxu0 %v3896
    %3931 = vmatprep.subr.mxu0 0.0
    %3932 = vmatpush1.msra.mxu0 %v3895
    %3933 = vmatprep.subr.mxu0 0.0
    %3934 = vmatpush1.msra.mxu0 %v3894
    %3935 = vmatprep.subr.mxu0 0.0
    %3936 = vmatpush1.msra.mxu0 %v3893
    %3937 = vmatprep.subr.mxu0 0.0
    %3938 = vmatpush1.msra.mxu0 %v3892
    %3939 = vmatprep.subr.mxu0 0.0
    %3940 = vmatpush1.msra.mxu0 %v3891
    %3941 = vmatprep.subr.mxu0 0.0
    %3942 = vmatpush1.msra.mxu0 %v3890
    %3943 = vmatprep.subr.mxu0 0.0
    %3944 = vmatpush1.msra.mxu0 %v3889
    %3945 = vmatprep.subr.mxu0 0.0
    %3946 = vmatpush2.msra.mxu0 0.0
    %3947 = vmatprep.subr.mxu0 0.0
    %3948 = vmatpush2.msra.mxu0 0.0
    %3949 = vmatprep.subr.mxu0 0.0
    %3950 = vmatpush2.msra.mxu0 0.0
    %3951 = vmatprep.subr.mxu0 0.0
    %3952 = vmatpush2.msra.mxu0 0.0
    %3953 = vmatprep.subr.mxu0 0.0
    %3954 = vmatpush2.msra.mxu0 0.0
    %3955 = vmatprep.subr.mxu0 0.0
    %3956 = vmatpush2.msra.mxu0 0.0
    %3957 = vmatprep.subr.mxu0 0.0
    %3958 = vmatpush2.msra.mxu0 0.0
    %3959 = vmatprep.subr.mxu0 0.0
    %3960 = vmatpush2.msra.mxu0 0.0
    %3961 = vmatprep.subr.mxu0 0.0
    %3962 = vmatpush2.msra.mxu0 0.0
    %3963 = vmatprep.subr.mxu0 0.0
    %3964 = vmatpush2.msra.mxu0 0.0
    %3965 = vmatprep.subr.mxu0 0.0
    %3966 = vmatpush2.msra.mxu0 0.0
    %3967 = vmatprep.subr.mxu0 0.0
    %3968 = vmatpush2.msra.mxu0 0.0
    %3969 = vmatprep.subr.mxu0 0.0
    %3970 = vmatpush2.msra.mxu0 0.0
    %3971 = vmatprep.subr.mxu0 0.0
    %3972 = vmatpush2.msra.mxu0 0.0
    %3973 = vmatprep.subr.mxu0 0.0
    %3974 = vmatpush2.msra.mxu0 0.0
    %3975 = vmatprep.subr.mxu0 0.0
    %3976 = vmatpush2.msra.mxu0 0.0
    %3977 = vmatprep.mubr.f32.mxu0 0.0
    %3978 = vmatmul.mubr.f32.gmra.mxu0 %v3886
    %v3979 = vpop.f32.mrf.mxu0
    %v3980 = vadd.f32 %v3911, %v3979
    %v3981 = vpop.f32.mrf.mxu0
    %3982 = vmatprep.mubr.f32.mxu0 0.0
    %3983 = vmatmul.mubr.f32.gmra.mxu0 %v3887
    %v3984 = vpop.f32.mrf.mxu0
    %v3985 = vadd.f32 %v3911, %v3984
    %v3986 = vpop.f32.mrf.mxu0
    %3987 = vdwg.mxu0
    %s3988 = scalar_lea.vmem %s4, 512
    %v3989 = vld [vmem:[%s3988] sm:$0xff]
    %v3990 = vld [vmem:[%s3988 + $0x8] sm:$0xff]
    %v3991 = vld [vmem:[%s3988 + $0x10] sm:$0xff]
    %v3992 = vld [vmem:[%s3988 + $0x18] sm:$0xff]
    %v3993 = vld [vmem:[%s3988 + $0x20] sm:$0xff]
    %v3994 = vld [vmem:[%s3988 + $0x28] sm:$0xff]
    %v3995 = vld [vmem:[%s3988 + $0x30] sm:$0xff]
    %v3996 = vld [vmem:[%s3988 + $0x38] sm:$0xff]
    %v3997 = vld [vmem:[%s3988 + $0x40] sm:$0xff]
    %v3998 = vld [vmem:[%s3988 + $0x48] sm:$0xff]
    %v3999 = vld [vmem:[%s3988 + $0x50] sm:$0xff]
    %v4000 = vld [vmem:[%s3988 + $0x58] sm:$0xff]
    %v4001 = vld [vmem:[%s3988 + $0x60] sm:$0xff]
    %v4002 = vld [vmem:[%s3988 + $0x68] sm:$0xff]
    %v4003 = vld [vmem:[%s3988 + $0x70] sm:$0xff]
    %v4004 = vld [vmem:[%s3988 + $0x78] sm:$0xff]
    %4005 = vmatprep.subr.mxu0 0.0
    %4006 = vmatpush1.msra.mxu0 %v4004
    %4007 = vmatprep.subr.mxu0 0.0
    %4008 = vmatpush1.msra.mxu0 %v4003
    %4009 = vmatprep.subr.mxu0 0.0
    %4010 = vmatpush1.msra.mxu0 %v4002
    %4011 = vmatprep.subr.mxu0 0.0
    %4012 = vmatpush1.msra.mxu0 %v4001
    %4013 = vmatprep.subr.mxu0 0.0
    %4014 = vmatpush1.msra.mxu0 %v4000
    %4015 = vmatprep.subr.mxu0 0.0
    %4016 = vmatpush1.msra.mxu0 %v3999
    %4017 = vmatprep.subr.mxu0 0.0
    %4018 = vmatpush1.msra.mxu0 %v3998
    %4019 = vmatprep.subr.mxu0 0.0
    %4020 = vmatpush1.msra.mxu0 %v3997
    %4021 = vmatprep.subr.mxu0 0.0
    %4022 = vmatpush1.msra.mxu0 %v3996
    %4023 = vmatprep.subr.mxu0 0.0
    %4024 = vmatpush1.msra.mxu0 %v3995
    %4025 = vmatprep.subr.mxu0 0.0
    %4026 = vmatpush1.msra.mxu0 %v3994
    %4027 = vmatprep.subr.mxu0 0.0
    %4028 = vmatpush1.msra.mxu0 %v3993
    %4029 = vmatprep.subr.mxu0 0.0
    %4030 = vmatpush1.msra.mxu0 %v3992
    %4031 = vmatprep.subr.mxu0 0.0
    %4032 = vmatpush1.msra.mxu0 %v3991
    %4033 = vmatprep.subr.mxu0 0.0
    %4034 = vmatpush1.msra.mxu0 %v3990
    %4035 = vmatprep.subr.mxu0 0.0
    %4036 = vmatpush1.msra.mxu0 %v3989
    %4037 = vmatprep.subr.mxu0 0.0
    %4038 = vmatpush2.msra.mxu0 0.0
    %4039 = vmatprep.subr.mxu0 0.0
    %4040 = vmatpush2.msra.mxu0 0.0
    %4041 = vmatprep.subr.mxu0 0.0
    %4042 = vmatpush2.msra.mxu0 0.0
    %4043 = vmatprep.subr.mxu0 0.0
    %4044 = vmatpush2.msra.mxu0 0.0
    %4045 = vmatprep.subr.mxu0 0.0
    %4046 = vmatpush2.msra.mxu0 0.0
    %4047 = vmatprep.subr.mxu0 0.0
    %4048 = vmatpush2.msra.mxu0 0.0
    %4049 = vmatprep.subr.mxu0 0.0
    %4050 = vmatpush2.msra.mxu0 0.0
    %4051 = vmatprep.subr.mxu0 0.0
    %4052 = vmatpush2.msra.mxu0 0.0
    %4053 = vmatprep.subr.mxu0 0.0
    %4054 = vmatpush2.msra.mxu0 0.0
    %4055 = vmatprep.subr.mxu0 0.0
    %4056 = vmatpush2.msra.mxu0 0.0
    %4057 = vmatprep.subr.mxu0 0.0
    %4058 = vmatpush2.msra.mxu0 0.0
    %4059 = vmatprep.subr.mxu0 0.0
    %4060 = vmatpush2.msra.mxu0 0.0
    %4061 = vmatprep.subr.mxu0 0.0
    %4062 = vmatpush2.msra.mxu0 0.0
    %4063 = vmatprep.subr.mxu0 0.0
    %4064 = vmatpush2.msra.mxu0 0.0
    %4065 = vmatprep.subr.mxu0 0.0
    %4066 = vmatpush2.msra.mxu0 0.0
    %4067 = vmatprep.subr.mxu0 0.0
    %4068 = vmatpush2.msra.mxu0 0.0
    %4069 = vmatprep.mubr.f32.mxu0 0.0
    %4070 = vmatmul.mubr.f32.gmra.mxu0 0.0
    %v4071 = vpop.f32.mrf.mxu0
    %v4072 = vadd.f32 0.0, %v4071
    %v4073 = vpop.f32.mrf.mxu0
    %4074 = vdwg.mxu0
    %v4075 = vadd.f32 %v3980, %v4072
    %v4076 = vtanh.pop %v4075
    %v4077 = vxor.u32 %v4075, 2147483648
    %v4078 = vmul.f32 %v4077, 1.442695
    %v4079 = vpow.pop %v4078
    %v4080 = vadd.f32 %v4079, 1.0
    %v4081 = vrcp.pop %v4080
    %v4082 = vmul.f32 1.0, %v4081
    %v4083 = vsel %vm54, %v4076, %v4082
    %4084 = vrot.lane.b32.xlu0 %v4083, 64
    %v4085 = vpop.permute.xlu0 %4084
    %v4086 = vmul.f32 %v4083, %v4085
    %4087 = vrot.lane.b32.xlu0 %v4086, 96
    %v4088 = vpop.permute.xlu0 %4087
    %v4089 = vmul.f32 %v4083, 0.0
    %v4090 = vadd.f32 %v4089, %v4088
    %v4091 = vtanh.pop %v4090
    %v4092 = vmul.f32 %v4085, %v4091
    %4093 = vst [vmem:[#allocation2] sm:$0x3] %v4092
    %4094 = vmatprep.subr.mxu0 0.0
    %4095 = vmatpush1.msra.mxu0 %v4004
    %4096 = vmatprep.subr.mxu0 0.0
    %4097 = vmatpush1.msra.mxu0 %v4003
    %4098 = vmatprep.subr.mxu0 0.0
    %4099 = vmatpush1.msra.mxu0 %v4002
    %4100 = vmatprep.subr.mxu0 0.0
    %4101 = vmatpush1.msra.mxu0 %v4001
    %4102 = vmatprep.subr.mxu0 0.0
    %4103 = vmatpush1.msra.mxu0 %v4000
    %4104 = vmatprep.subr.mxu0 0.0
    %4105 = vmatpush1.msra.mxu0 %v3999
    %4106 = vmatprep.subr.mxu0 0.0
    %4107 = vmatpush1.msra.mxu0 %v3998
    %4108 = vmatprep.subr.mxu0 0.0
    %4109 = vmatpush1.msra.mxu0 %v3997
    %4110 = vmatprep.subr.mxu0 0.0
    %4111 = vmatpush1.msra.mxu0 %v3996
    %4112 = vmatprep.subr.mxu0 0.0
    %4113 = vmatpush1.msra.mxu0 %v3995
    %4114 = vmatprep.subr.mxu0 0.0
    %4115 = vmatpush1.msra.mxu0 %v3994
    %4116 = vmatprep.subr.mxu0 0.0
    %4117 = vmatpush1.msra.mxu0 %v3993
    %4118 = vmatprep.subr.mxu0 0.0
    %4119 = vmatpush1.msra.mxu0 %v3992
    %4120 = vmatprep.subr.mxu0 0.0
    %4121 = vmatpush1.msra.mxu0 %v3991
    %4122 = vmatprep.subr.mxu0 0.0
    %4123 = vmatpush1.msra.mxu0 %v3990
    %4124 = vmatprep.subr.mxu0 0.0
    %4125 = vmatpush1.msra.mxu0 %v3989
    %4126 = vmatprep.subr.mxu0 0.0
    %4127 = vmatpush2.msra.mxu0 0.0
    %4128 = vmatprep.subr.mxu0 0.0
    %4129 = vmatpush2.msra.mxu0 0.0
    %4130 = vmatprep.subr.mxu0 0.0
    %4131 = vmatpush2.msra.mxu0 0.0
    %4132 = vmatprep.subr.mxu0 0.0
    %4133 = vmatpush2.msra.mxu0 0.0
    %4134 = vmatprep.subr.mxu0 0.0
    %4135 = vmatpush2.msra.mxu0 0.0
    %4136 = vmatprep.subr.mxu0 0.0
    %4137 = vmatpush2.msra.mxu0 0.0
    %4138 = vmatprep.subr.mxu0 0.0
    %4139 = vmatpush2.msra.mxu0 0.0
    %4140 = vmatprep.subr.mxu0 0.0
    %4141 = vmatpush2.msra.mxu0 0.0
    %4142 = vmatprep.subr.mxu0 0.0
    %4143 = vmatpush2.msra.mxu0 0.0
    %4144 = vmatprep.subr.mxu0 0.0
    %4145 = vmatpush2.msra.mxu0 0.0
    %4146 = vmatprep.subr.mxu0 0.0
    %4147 = vmatpush2.msra.mxu0 0.0
    %4148 = vmatprep.subr.mxu0 0.0
    %4149 = vmatpush2.msra.mxu0 0.0
    %4150 = vmatprep.subr.mxu0 0.0
    %4151 = vmatpush2.msra.mxu0 0.0
    %4152 = vmatprep.subr.mxu0 0.0
    %4153 = vmatpush2.msra.mxu0 0.0
    %4154 = vmatprep.subr.mxu0 0.0
    %4155 = vmatpush2.msra.mxu0 0.0
    %4156 = vmatprep.subr.mxu0 0.0
    %4157 = vmatpush2.msra.mxu0 0.0
    %4158 = vmatprep.mubr.f32.mxu0 0.0
    %4159 = vmatmul.mubr.f32.gmra.mxu0 %v4092
    %v4160 = vpop.f32.mrf.mxu0
    %v4161 = vadd.f32 0.0, %v4160
    %v4162 = vpop.f32.mrf.mxu0
    %4163 = vdwg.mxu0
    %v4165 = vrot.slane %v4161, 6
    %v4167 = vadd.f32 %v3980, %v4165
    %v4168 = vtanh.pop %v4167
    %v4169 = vxor.u32 %v4167, 2147483648
    %v4170 = vmul.f32 %v4169, 1.442695
    %v4171 = vpow.pop %v4170
    %v4172 = vadd.f32 %v4171, 1.0
    %v4173 = vrcp.pop %v4172
    %v4174 = vmul.f32 1.0, %v4173
    %v4175 = vsel %vm54, %v4168, %v4174
    %v4177 = vrot.slane %v4175, 2
    %4179 = vrot.lane.b32.xlu0 %v4177, 64
    %v4180 = vpop.permute.xlu0 %4179
    %v4182 = vrot.slane %v4180, 6
    %v4184 = vmul.f32 %v4175, %v4182
    %v4186 = vrot.slane %v4184, 2
    %4188 = vrot.lane.b32.xlu0 %v4186, 96
    %v4189 = vpop.permute.xlu0 %4188
    %v4191 = vrot.slane %v4090, 6
    %v4193 = vmul.f32 %v4175, %v4191
    %v4195 = vrot.slane %v4189, 6
    %v4197 = vadd.f32 %v4193, %v4195
    %v4198 = vtanh.pop %v4197
    %v4200 = vrot.slane %v4198, 2
    %v4202 = vmul.f32 %v4180, %v4200
    %4203 = vst [vmem:[#allocation2 + $0x2] sm:$0x3] %v4202
    %4204 = vmatprep.subr.mxu0 0.0
    %4205 = vmatpush1.msra.mxu0 %v4004
    %4206 = vmatprep.subr.mxu0 0.0
    %4207 = vmatpush1.msra.mxu0 %v4003
    %4208 = vmatprep.subr.mxu0 0.0
    %4209 = vmatpush1.msra.mxu0 %v4002
    %4210 = vmatprep.subr.mxu0 0.0
    %4211 = vmatpush1.msra.mxu0 %v4001
    %4212 = vmatprep.subr.mxu0 0.0
    %4213 = vmatpush1.msra.mxu0 %v4000
    %4214 = vmatprep.subr.mxu0 0.0
    %4215 = vmatpush1.msra.mxu0 %v3999
    %4216 = vmatprep.subr.mxu0 0.0
    %4217 = vmatpush1.msra.mxu0 %v3998
    %4218 = vmatprep.subr.mxu0 0.0
    %4219 = vmatpush1.msra.mxu0 %v3997
    %4220 = vmatprep.subr.mxu0 0.0
    %4221 = vmatpush1.msra.mxu0 %v3996
    %4222 = vmatprep.subr.mxu0 0.0
    %4223 = vmatpush1.msra.mxu0 %v3995
    %4224 = vmatprep.subr.mxu0 0.0
    %4225 = vmatpush1.msra.mxu0 %v3994
    %4226 = vmatprep.subr.mxu0 0.0
    %4227 = vmatpush1.msra.mxu0 %v3993
    %4228 = vmatprep.subr.mxu0 0.0
    %4229 = vmatpush1.msra.mxu0 %v3992
    %4230 = vmatprep.subr.mxu0 0.0
    %4231 = vmatpush1.msra.mxu0 %v3991
    %4232 = vmatprep.subr.mxu0 0.0
    %4233 = vmatpush1.msra.mxu0 %v3990
    %4234 = vmatprep.subr.mxu0 0.0
    %4235 = vmatpush1.msra.mxu0 %v3989
    %4236 = vmatprep.subr.mxu0 0.0
    %4237 = vmatpush2.msra.mxu0 0.0
    %4238 = vmatprep.subr.mxu0 0.0
    %4239 = vmatpush2.msra.mxu0 0.0
    %4240 = vmatprep.subr.mxu0 0.0
    %4241 = vmatpush2.msra.mxu0 0.0
    %4242 = vmatprep.subr.mxu0 0.0
    %4243 = vmatpush2.msra.mxu0 0.0
    %4244 = vmatprep.subr.mxu0 0.0
    %4245 = vmatpush2.msra.mxu0 0.0
    %4246 = vmatprep.subr.mxu0 0.0
    %4247 = vmatpush2.msra.mxu0 0.0
    %4248 = vmatprep.subr.mxu0 0.0
    %4249 = vmatpush2.msra.mxu0 0.0
    %4250 = vmatprep.subr.mxu0 0.0
    %4251 = vmatpush2.msra.mxu0 0.0
    %4252 = vmatprep.subr.mxu0 0.0
    %4253 = vmatpush2.msra.mxu0 0.0
    %4254 = vmatprep.subr.mxu0 0.0
    %4255 = vmatpush2.msra.mxu0 0.0
    %4256 = vmatprep.subr.mxu0 0.0
    %4257 = vmatpush2.msra.mxu0 0.0
    %4258 = vmatprep.subr.mxu0 0.0
    %4259 = vmatpush2.msra.mxu0 0.0
    %4260 = vmatprep.subr.mxu0 0.0
    %4261 = vmatpush2.msra.mxu0 0.0
    %4262 = vmatprep.subr.mxu0 0.0
    %4263 = vmatpush2.msra.mxu0 0.0
    %4264 = vmatprep.subr.mxu0 0.0
    %4265 = vmatpush2.msra.mxu0 0.0
    %4266 = vmatprep.subr.mxu0 0.0
    %4267 = vmatpush2.msra.mxu0 0.0
    %4268 = vmatprep.mubr.f32.mxu0 0.0
    %4269 = vmatmul.mubr.f32.gmra.mxu0 %v4202
    %v4270 = vpop.f32.mrf.mxu0
    %v4271 = vadd.f32 0.0, %v4270
    %v4272 = vpop.f32.mrf.mxu0
    %4273 = vdwg.mxu0
    %v4275 = vrot.slane %v4271, 4
    %v4277 = vadd.f32 %v3980, %v4275
    %v4278 = vtanh.pop %v4277
    %v4279 = vxor.u32 %v4277, 2147483648
    %v4280 = vmul.f32 %v4279, 1.442695
    %v4281 = vpow.pop %v4280
    %v4282 = vadd.f32 %v4281, 1.0
    %v4283 = vrcp.pop %v4282
    %v4284 = vmul.f32 1.0, %v4283
    %v4285 = vsel %vm54, %v4278, %v4284
    %v4287 = vrot.slane %v4285, 4
    %4289 = vrot.lane.b32.xlu0 %v4287, 64
    %v4290 = vpop.permute.xlu0 %4289
    %v4292 = vrot.slane %v4290, 4
    %v4294 = vmul.f32 %v4285, %v4292
    %v4296 = vrot.slane %v4294, 4
    %4298 = vrot.lane.b32.xlu0 %v4296, 96
    %v4299 = vpop.permute.xlu0 %4298
    %v4301 = vrot.slane %v4197, 6
    %v4303 = vmul.f32 %v4285, %v4301
    %v4305 = vrot.slane %v4299, 4
    %v4307 = vadd.f32 %v4303, %v4305
    %v4308 = vtanh.pop %v4307
    %v4310 = vrot.slane %v4308, 4
    %v4312 = vmul.f32 %v4290, %v4310
    %4313 = vst [vmem:[#allocation2 + $0x4] sm:$0x3] %v4312
    %4314 = vmatprep.subr.mxu0 0.0
    %4315 = vmatpush1.msra.mxu0 %v4004
    %4316 = vmatprep.subr.mxu0 0.0
    %4317 = vmatpush1.msra.mxu0 %v4003
    %4318 = vmatprep.subr.mxu0 0.0
    %4319 = vmatpush1.msra.mxu0 %v4002
    %4320 = vmatprep.subr.mxu0 0.0
    %4321 = vmatpush1.msra.mxu0 %v4001
    %4322 = vmatprep.subr.mxu0 0.0
    %4323 = vmatpush1.msra.mxu0 %v4000
    %4324 = vmatprep.subr.mxu0 0.0
    %4325 = vmatpush1.msra.mxu0 %v3999
    %4326 = vmatprep.subr.mxu0 0.0
    %4327 = vmatpush1.msra.mxu0 %v3998
    %4328 = vmatprep.subr.mxu0 0.0
    %4329 = vmatpush1.msra.mxu0 %v3997
    %4330 = vmatprep.subr.mxu0 0.0
    %4331 = vmatpush1.msra.mxu0 %v3996
    %4332 = vmatprep.subr.mxu0 0.0
    %4333 = vmatpush1.msra.mxu0 %v3995
    %4334 = vmatprep.subr.mxu0 0.0
    %4335 = vmatpush1.msra.mxu0 %v3994
    %4336 = vmatprep.subr.mxu0 0.0
    %4337 = vmatpush1.msra.mxu0 %v3993
    %4338 = vmatprep.subr.mxu0 0.0
    %4339 = vmatpush1.msra.mxu0 %v3992
    %4340 = vmatprep.subr.mxu0 0.0
    %4341 = vmatpush1.msra.mxu0 %v3991
    %4342 = vmatprep.subr.mxu0 0.0
    %4343 = vmatpush1.msra.mxu0 %v3990
    %4344 = vmatprep.subr.mxu0 0.0
    %4345 = vmatpush1.msra.mxu0 %v3989
    %4346 = vmatprep.subr.mxu0 0.0
    %4347 = vmatpush2.msra.mxu0 0.0
    %4348 = vmatprep.subr.mxu0 0.0
    %4349 = vmatpush2.msra.mxu0 0.0
    %4350 = vmatprep.subr.mxu0 0.0
    %4351 = vmatpush2.msra.mxu0 0.0
    %4352 = vmatprep.subr.mxu0 0.0
    %4353 = vmatpush2.msra.mxu0 0.0
    %4354 = vmatprep.subr.mxu0 0.0
    %4355 = vmatpush2.msra.mxu0 0.0
    %4356 = vmatprep.subr.mxu0 0.0
    %4357 = vmatpush2.msra.mxu0 0.0
    %4358 = vmatprep.subr.mxu0 0.0
    %4359 = vmatpush2.msra.mxu0 0.0
    %4360 = vmatprep.subr.mxu0 0.0
    %4361 = vmatpush2.msra.mxu0 0.0
    %4362 = vmatprep.subr.mxu0 0.0
    %4363 = vmatpush2.msra.mxu0 0.0
    %4364 = vmatprep.subr.mxu0 0.0
    %4365 = vmatpush2.msra.mxu0 0.0
    %4366 = vmatprep.subr.mxu0 0.0
    %4367 = vmatpush2.msra.mxu0 0.0
    %4368 = vmatprep.subr.mxu0 0.0
    %4369 = vmatpush2.msra.mxu0 0.0
    %4370 = vmatprep.subr.mxu0 0.0
    %4371 = vmatpush2.msra.mxu0 0.0
    %4372 = vmatprep.subr.mxu0 0.0
    %4373 = vmatpush2.msra.mxu0 0.0
    %4374 = vmatprep.subr.mxu0 0.0
    %4375 = vmatpush2.msra.mxu0 0.0
    %4376 = vmatprep.subr.mxu0 0.0
    %4377 = vmatpush2.msra.mxu0 0.0
    %4378 = vmatprep.mubr.f32.mxu0 0.0
    %4379 = vmatmul.mubr.f32.gmra.mxu0 %v4312
    %v4380 = vpop.f32.mrf.mxu0
    %v4381 = vadd.f32 0.0, %v4380
    %v4382 = vpop.f32.mrf.mxu0
    %4383 = vdwg.mxu0
    %v4385 = vrot.slane %v4381, 2
    %v4387 = vadd.f32 %v3980, %v4385
    %v4388 = vtanh.pop %v4387
    %v4389 = vxor.u32 %v4387, 2147483648
    %v4390 = vmul.f32 %v4389, 1.442695
    %v4391 = vpow.pop %v4390
    %v4392 = vadd.f32 %v4391, 1.0
    %v4393 = vrcp.pop %v4392
    %v4394 = vmul.f32 1.0, %v4393
    %v4395 = vsel %vm54, %v4388, %v4394
    %v4397 = vrot.slane %v4395, 6
    %4399 = vrot.lane.b32.xlu0 %v4397, 64
    %v4400 = vpop.permute.xlu0 %4399
    %v4402 = vrot.slane %v4400, 2
    %v4404 = vmul.f32 %v4395, %v4402
    %v4406 = vrot.slane %v4404, 6
    %4408 = vrot.lane.b32.xlu0 %v4406, 96
    %v4409 = vpop.permute.xlu0 %4408
    %v4411 = vrot.slane %v4307, 6
    %v4413 = vmul.f32 %v4395, %v4411
    %v4415 = vrot.slane %v4409, 2
    %v4417 = vadd.f32 %v4413, %v4415
    %v4418 = vtanh.pop %v4417
    %v4420 = vrot.slane %v4418, 6
    %v4422 = vmul.f32 %v4400, %v4420
    %4423 = vst [vmem:[#allocation2 + $0x6] sm:$0x3] %v4422
    %4424 = vmatprep.subr.mxu0 0.0
    %4425 = vmatpush1.msra.mxu0 %v4004
    %4426 = vmatprep.subr.mxu0 0.0
    %4427 = vmatpush1.msra.mxu0 %v4003
    %4428 = vmatprep.subr.mxu0 0.0
    %4429 = vmatpush1.msra.mxu0 %v4002
    %4430 = vmatprep.subr.mxu0 0.0
    %4431 = vmatpush1.msra.mxu0 %v4001
    %4432 = vmatprep.subr.mxu0 0.0
    %4433 = vmatpush1.msra.mxu0 %v4000
    %4434 = vmatprep.subr.mxu0 0.0
    %4435 = vmatpush1.msra.mxu0 %v3999
    %4436 = vmatprep.subr.mxu0 0.0
    %4437 = vmatpush1.msra.mxu0 %v3998
    %4438 = vmatprep.subr.mxu0 0.0
    %4439 = vmatpush1.msra.mxu0 %v3997
    %4440 = vmatprep.subr.mxu0 0.0
    %4441 = vmatpush1.msra.mxu0 %v3996
    %4442 = vmatprep.subr.mxu0 0.0
    %4443 = vmatpush1.msra.mxu0 %v3995
    %4444 = vmatprep.subr.mxu0 0.0
    %4445 = vmatpush1.msra.mxu0 %v3994
    %4446 = vmatprep.subr.mxu0 0.0
    %4447 = vmatpush1.msra.mxu0 %v3993
    %4448 = vmatprep.subr.mxu0 0.0
    %4449 = vmatpush1.msra.mxu0 %v3992
    %4450 = vmatprep.subr.mxu0 0.0
    %4451 = vmatpush1.msra.mxu0 %v3991
    %4452 = vmatprep.subr.mxu0 0.0
    %4453 = vmatpush1.msra.mxu0 %v3990
    %4454 = vmatprep.subr.mxu0 0.0
    %4455 = vmatpush1.msra.mxu0 %v3989
    %4456 = vmatprep.subr.mxu0 0.0
    %4457 = vmatpush2.msra.mxu0 0.0
    %4458 = vmatprep.subr.mxu0 0.0
    %4459 = vmatpush2.msra.mxu0 0.0
    %4460 = vmatprep.subr.mxu0 0.0
    %4461 = vmatpush2.msra.mxu0 0.0
    %4462 = vmatprep.subr.mxu0 0.0
    %4463 = vmatpush2.msra.mxu0 0.0
    %4464 = vmatprep.subr.mxu0 0.0
    %4465 = vmatpush2.msra.mxu0 0.0
    %4466 = vmatprep.subr.mxu0 0.0
    %4467 = vmatpush2.msra.mxu0 0.0
    %4468 = vmatprep.subr.mxu0 0.0
    %4469 = vmatpush2.msra.mxu0 0.0
    %4470 = vmatprep.subr.mxu0 0.0
    %4471 = vmatpush2.msra.mxu0 0.0
    %4472 = vmatprep.subr.mxu0 0.0
    %4473 = vmatpush2.msra.mxu0 0.0
    %4474 = vmatprep.subr.mxu0 0.0
    %4475 = vmatpush2.msra.mxu0 0.0
    %4476 = vmatprep.subr.mxu0 0.0
    %4477 = vmatpush2.msra.mxu0 0.0
    %4478 = vmatprep.subr.mxu0 0.0
    %4479 = vmatpush2.msra.mxu0 0.0
    %4480 = vmatprep.subr.mxu0 0.0
    %4481 = vmatpush2.msra.mxu0 0.0
    %4482 = vmatprep.subr.mxu0 0.0
    %4483 = vmatpush2.msra.mxu0 0.0
    %4484 = vmatprep.subr.mxu0 0.0
    %4485 = vmatpush2.msra.mxu0 0.0
    %4486 = vmatprep.subr.mxu0 0.0
    %4487 = vmatpush2.msra.mxu0 0.0
    %4488 = vmatprep.mubr.f32.mxu0 0.0
    %4489 = vmatmul.mubr.f32.gmra.mxu0 %v4422
    %v4490 = vpop.f32.mrf.mxu0
    %v4491 = vadd.f32 0.0, %v4490
    %v4492 = vpop.f32.mrf.mxu0
    %4493 = vdwg.mxu0
    %v4494 = vadd.f32 %v3985, %v4491
    %v4495 = vtanh.pop %v4494
    %v4496 = vxor.u32 %v4494, 2147483648
    %v4497 = vmul.f32 %v4496, 1.442695
    %v4498 = vpow.pop %v4497
    %v4499 = vadd.f32 %v4498, 1.0
    %v4500 = vrcp.pop %v4499
    %v4501 = vmul.f32 1.0, %v4500
    %v4502 = vsel %vm54, %v4495, %v4501
    %4503 = vrot.lane.b32.xlu0 %v4502, 64
    %v4504 = vpop.permute.xlu0 %4503
    %v4505 = vmul.f32 %v4502, %v4504
    %4506 = vrot.lane.b32.xlu0 %v4505, 96
    %v4507 = vpop.permute.xlu0 %4506
    %v4509 = vrot.slane %v4417, 6
    %v4511 = vmul.f32 %v4502, %v4509
    %v4512 = vadd.f32 %v4511, %v4507
    %v4513 = vtanh.pop %v4512
    %v4514 = vmul.f32 %v4504, %v4513
    %4515 = vst [vmem:[#allocation2 + $0x8] sm:$0x3] %v4514
    %4516 = vmatprep.subr.mxu0 0.0
    %4517 = vmatpush1.msra.mxu0 %v4004
    %4518 = vmatprep.subr.mxu0 0.0
    %4519 = vmatpush1.msra.mxu0 %v4003
    %4520 = vmatprep.subr.mxu0 0.0
    %4521 = vmatpush1.msra.mxu0 %v4002
    %4522 = vmatprep.subr.mxu0 0.0
    %4523 = vmatpush1.msra.mxu0 %v4001
    %4524 = vmatprep.subr.mxu0 0.0
    %4525 = vmatpush1.msra.mxu0 %v4000
    %4526 = vmatprep.subr.mxu0 0.0
    %4527 = vmatpush1.msra.mxu0 %v3999
    %4528 = vmatprep.subr.mxu0 0.0
    %4529 = vmatpush1.msra.mxu0 %v3998
    %4530 = vmatprep.subr.mxu0 0.0
    %4531 = vmatpush1.msra.mxu0 %v3997
    %4532 = vmatprep.subr.mxu0 0.0
    %4533 = vmatpush1.msra.mxu0 %v3996
    %4534 = vmatprep.subr.mxu0 0.0
    %4535 = vmatpush1.msra.mxu0 %v3995
    %4536 = vmatprep.subr.mxu0 0.0
    %4537 = vmatpush1.msra.mxu0 %v3994
    %4538 = vmatprep.subr.mxu0 0.0
    %4539 = vmatpush1.msra.mxu0 %v3993
    %4540 = vmatprep.subr.mxu0 0.0
    %4541 = vmatpush1.msra.mxu0 %v3992
    %4542 = vmatprep.subr.mxu0 0.0
    %4543 = vmatpush1.msra.mxu0 %v3991
    %4544 = vmatprep.subr.mxu0 0.0
    %4545 = vmatpush1.msra.mxu0 %v3990
    %4546 = vmatprep.subr.mxu0 0.0
    %4547 = vmatpush1.msra.mxu0 %v3989
    %4548 = vmatprep.subr.mxu0 0.0
    %4549 = vmatpush2.msra.mxu0 0.0
    %4550 = vmatprep.subr.mxu0 0.0
    %4551 = vmatpush2.msra.mxu0 0.0
    %4552 = vmatprep.subr.mxu0 0.0
    %4553 = vmatpush2.msra.mxu0 0.0
    %4554 = vmatprep.subr.mxu0 0.0
    %4555 = vmatpush2.msra.mxu0 0.0
    %4556 = vmatprep.subr.mxu0 0.0
    %4557 = vmatpush2.msra.mxu0 0.0
    %4558 = vmatprep.subr.mxu0 0.0
    %4559 = vmatpush2.msra.mxu0 0.0
    %4560 = vmatprep.subr.mxu0 0.0
    %4561 = vmatpush2.msra.mxu0 0.0
    %4562 = vmatprep.subr.mxu0 0.0
    %4563 = vmatpush2.msra.mxu0 0.0
    %4564 = vmatprep.subr.mxu0 0.0
    %4565 = vmatpush2.msra.mxu0 0.0
    %4566 = vmatprep.subr.mxu0 0.0
    %4567 = vmatpush2.msra.mxu0 0.0
    %4568 = vmatprep.subr.mxu0 0.0
    %4569 = vmatpush2.msra.mxu0 0.0
    %4570 = vmatprep.subr.mxu0 0.0
    %4571 = vmatpush2.msra.mxu0 0.0
    %4572 = vmatprep.subr.mxu0 0.0
    %4573 = vmatpush2.msra.mxu0 0.0
    %4574 = vmatprep.subr.mxu0 0.0
    %4575 = vmatpush2.msra.mxu0 0.0
    %4576 = vmatprep.subr.mxu0 0.0
    %4577 = vmatpush2.msra.mxu0 0.0
    %4578 = vmatprep.subr.mxu0 0.0
    %4579 = vmatpush2.msra.mxu0 0.0
    %4580 = vmatprep.mubr.f32.mxu0 0.0
    %4581 = vmatmul.mubr.f32.gmra.mxu0 %v4514
    %v4582 = vpop.f32.mrf.mxu0
    %v4583 = vadd.f32 0.0, %v4582
    %v4584 = vpop.f32.mrf.mxu0
    %4585 = vdwg.mxu0
    %v4587 = vrot.slane %v4583, 6
    %v4589 = vadd.f32 %v3985, %v4587
    %v4590 = vtanh.pop %v4589
    %v4591 = vxor.u32 %v4589, 2147483648
    %v4592 = vmul.f32 %v4591, 1.442695
    %v4593 = vpow.pop %v4592
    %v4594 = vadd.f32 %v4593, 1.0
    %v4595 = vrcp.pop %v4594
    %v4596 = vmul.f32 1.0, %v4595
    %v4597 = vsel %vm54, %v4590, %v4596
    %v4599 = vrot.slane %v4597, 2
    %4601 = vrot.lane.b32.xlu0 %v4599, 64
    %v4602 = vpop.permute.xlu0 %4601
    %v4604 = vrot.slane %v4602, 6
    %v4606 = vmul.f32 %v4597, %v4604
    %v4608 = vrot.slane %v4606, 2
    %4610 = vrot.lane.b32.xlu0 %v4608, 96
    %v4611 = vpop.permute.xlu0 %4610
    %v4613 = vrot.slane %v4512, 6
    %v4615 = vmul.f32 %v4597, %v4613
    %v4617 = vrot.slane %v4611, 6
    %v4619 = vadd.f32 %v4615, %v4617
    %v4620 = vtanh.pop %v4619
    %v4622 = vrot.slane %v4620, 2
    %v4624 = vmul.f32 %v4602, %v4622
    %4625 = vst [vmem:[#allocation2 + $0xa] sm:$0x3] %v4624
    %4626 = vmatprep.subr.mxu0 0.0
    %4627 = vmatpush1.msra.mxu0 %v4004
    %4628 = vmatprep.subr.mxu0 0.0
    %4629 = vmatpush1.msra.mxu0 %v4003
    %4630 = vmatprep.subr.mxu0 0.0
    %4631 = vmatpush1.msra.mxu0 %v4002
    %4632 = vmatprep.subr.mxu0 0.0
    %4633 = vmatpush1.msra.mxu0 %v4001
    %4634 = vmatprep.subr.mxu0 0.0
    %4635 = vmatpush1.msra.mxu0 %v4000
    %4636 = vmatprep.subr.mxu0 0.0
    %4637 = vmatpush1.msra.mxu0 %v3999
    %4638 = vmatprep.subr.mxu0 0.0
    %4639 = vmatpush1.msra.mxu0 %v3998
    %4640 = vmatprep.subr.mxu0 0.0
    %4641 = vmatpush1.msra.mxu0 %v3997
    %4642 = vmatprep.subr.mxu0 0.0
    %4643 = vmatpush1.msra.mxu0 %v3996
    %4644 = vmatprep.subr.mxu0 0.0
    %4645 = vmatpush1.msra.mxu0 %v3995
    %4646 = vmatprep.subr.mxu0 0.0
    %4647 = vmatpush1.msra.mxu0 %v3994
    %4648 = vmatprep.subr.mxu0 0.0
    %4649 = vmatpush1.msra.mxu0 %v3993
    %4650 = vmatprep.subr.mxu0 0.0
    %4651 = vmatpush1.msra.mxu0 %v3992
    %4652 = vmatprep.subr.mxu0 0.0
    %4653 = vmatpush1.msra.mxu0 %v3991
    %4654 = vmatprep.subr.mxu0 0.0
    %4655 = vmatpush1.msra.mxu0 %v3990
    %4656 = vmatprep.subr.mxu0 0.0
    %4657 = vmatpush1.msra.mxu0 %v3989
    %4658 = vmatprep.subr.mxu0 0.0
    %4659 = vmatpush2.msra.mxu0 0.0
    %4660 = vmatprep.subr.mxu0 0.0
    %4661 = vmatpush2.msra.mxu0 0.0
    %4662 = vmatprep.subr.mxu0 0.0
    %4663 = vmatpush2.msra.mxu0 0.0
    %4664 = vmatprep.subr.mxu0 0.0
    %4665 = vmatpush2.msra.mxu0 0.0
    %4666 = vmatprep.subr.mxu0 0.0
    %4667 = vmatpush2.msra.mxu0 0.0
    %4668 = vmatprep.subr.mxu0 0.0
    %4669 = vmatpush2.msra.mxu0 0.0
    %4670 = vmatprep.subr.mxu0 0.0
    %4671 = vmatpush2.msra.mxu0 0.0
    %4672 = vmatprep.subr.mxu0 0.0
    %4673 = vmatpush2.msra.mxu0 0.0
    %4674 = vmatprep.subr.mxu0 0.0
    %4675 = vmatpush2.msra.mxu0 0.0
    %4676 = vmatprep.subr.mxu0 0.0
    %4677 = vmatpush2.msra.mxu0 0.0
    %4678 = vmatprep.subr.mxu0 0.0
    %4679 = vmatpush2.msra.mxu0 0.0
    %4680 = vmatprep.subr.mxu0 0.0
    %4681 = vmatpush2.msra.mxu0 0.0
    %4682 = vmatprep.subr.mxu0 0.0
    %4683 = vmatpush2.msra.mxu0 0.0
    %4684 = vmatprep.subr.mxu0 0.0
    %4685 = vmatpush2.msra.mxu0 0.0
    %4686 = vmatprep.subr.mxu0 0.0
    %4687 = vmatpush2.msra.mxu0 0.0
    %4688 = vmatprep.subr.mxu0 0.0
    %4689 = vmatpush2.msra.mxu0 0.0
    %4690 = vmatprep.mubr.f32.mxu0 0.0
    %4691 = vmatmul.mubr.f32.gmra.mxu0 %v4624
    %v4692 = vpop.f32.mrf.mxu0
    %v4693 = vadd.f32 0.0, %v4692
    %v4694 = vpop.f32.mrf.mxu0
    %4695 = vdwg.mxu0
    %v4697 = vrot.slane %v4693, 4
    %v4699 = vadd.f32 %v3985, %v4697
    %v4700 = vtanh.pop %v4699
    %v4701 = vxor.u32 %v4699, 2147483648
    %v4702 = vmul.f32 %v4701, 1.442695
    %v4703 = vpow.pop %v4702
    %v4704 = vadd.f32 %v4703, 1.0
    %v4705 = vrcp.pop %v4704
    %v4706 = vmul.f32 1.0, %v4705
    %v4707 = vsel %vm54, %v4700, %v4706
    %v4709 = vrot.slane %v4707, 4
    %4711 = vrot.lane.b32.xlu0 %v4709, 64
    %v4712 = vpop.permute.xlu0 %4711
    %v4714 = vrot.slane %v4712, 4
    %v4716 = vmul.f32 %v4707, %v4714
    %v4718 = vrot.slane %v4716, 4
    %4720 = vrot.lane.b32.xlu0 %v4718, 96
    %v4721 = vpop.permute.xlu0 %4720
    %v4723 = vrot.slane %v4619, 6
    %v4725 = vmul.f32 %v4707, %v4723
    %v4727 = vrot.slane %v4721, 4
    %v4729 = vadd.f32 %v4725, %v4727
    %v4730 = vtanh.pop %v4729
    %v4732 = vrot.slane %v4730, 4
    %v4734 = vmul.f32 %v4712, %v4732
    %4735 = vst [vmem:[#allocation2 + $0xc] sm:$0x3] %v4734
    %4736 = vmatprep.subr.mxu0 0.0
    %4737 = vmatpush1.msra.mxu0 %v4004
    %4738 = vmatprep.subr.mxu0 0.0
    %4739 = vmatpush1.msra.mxu0 %v4003
    %4740 = vmatprep.subr.mxu0 0.0
    %4741 = vmatpush1.msra.mxu0 %v4002
    %4742 = vmatprep.subr.mxu0 0.0
    %4743 = vmatpush1.msra.mxu0 %v4001
    %4744 = vmatprep.subr.mxu0 0.0
    %4745 = vmatpush1.msra.mxu0 %v4000
    %4746 = vmatprep.subr.mxu0 0.0
    %4747 = vmatpush1.msra.mxu0 %v3999
    %4748 = vmatprep.subr.mxu0 0.0
    %4749 = vmatpush1.msra.mxu0 %v3998
    %4750 = vmatprep.subr.mxu0 0.0
    %4751 = vmatpush1.msra.mxu0 %v3997
    %4752 = vmatprep.subr.mxu0 0.0
    %4753 = vmatpush1.msra.mxu0 %v3996
    %4754 = vmatprep.subr.mxu0 0.0
    %4755 = vmatpush1.msra.mxu0 %v3995
    %4756 = vmatprep.subr.mxu0 0.0
    %4757 = vmatpush1.msra.mxu0 %v3994
    %4758 = vmatprep.subr.mxu0 0.0
    %4759 = vmatpush1.msra.mxu0 %v3993
    %4760 = vmatprep.subr.mxu0 0.0
    %4761 = vmatpush1.msra.mxu0 %v3992
    %4762 = vmatprep.subr.mxu0 0.0
    %4763 = vmatpush1.msra.mxu0 %v3991
    %4764 = vmatprep.subr.mxu0 0.0
    %4765 = vmatpush1.msra.mxu0 %v3990
    %4766 = vmatprep.subr.mxu0 0.0
    %4767 = vmatpush1.msra.mxu0 %v3989
    %4768 = vmatprep.subr.mxu0 0.0
    %4769 = vmatpush2.msra.mxu0 0.0
    %4770 = vmatprep.subr.mxu0 0.0
    %4771 = vmatpush2.msra.mxu0 0.0
    %4772 = vmatprep.subr.mxu0 0.0
    %4773 = vmatpush2.msra.mxu0 0.0
    %4774 = vmatprep.subr.mxu0 0.0
    %4775 = vmatpush2.msra.mxu0 0.0
    %4776 = vmatprep.subr.mxu0 0.0
    %4777 = vmatpush2.msra.mxu0 0.0
    %4778 = vmatprep.subr.mxu0 0.0
    %4779 = vmatpush2.msra.mxu0 0.0
    %4780 = vmatprep.subr.mxu0 0.0
    %4781 = vmatpush2.msra.mxu0 0.0
    %4782 = vmatprep.subr.mxu0 0.0
    %4783 = vmatpush2.msra.mxu0 0.0
    %4784 = vmatprep.subr.mxu0 0.0
    %4785 = vmatpush2.msra.mxu0 0.0
    %4786 = vmatprep.subr.mxu0 0.0
    %4787 = vmatpush2.msra.mxu0 0.0
    %4788 = vmatprep.subr.mxu0 0.0
    %4789 = vmatpush2.msra.mxu0 0.0
    %4790 = vmatprep.subr.mxu0 0.0
    %4791 = vmatpush2.msra.mxu0 0.0
    %4792 = vmatprep.subr.mxu0 0.0
    %4793 = vmatpush2.msra.mxu0 0.0
    %4794 = vmatprep.subr.mxu0 0.0
    %4795 = vmatpush2.msra.mxu0 0.0
    %4796 = vmatprep.subr.mxu0 0.0
    %4797 = vmatpush2.msra.mxu0 0.0
    %4798 = vmatprep.subr.mxu0 0.0
    %4799 = vmatpush2.msra.mxu0 0.0
    %4800 = vmatprep.mubr.f32.mxu0 0.0
    %4801 = vmatmul.mubr.f32.gmra.mxu0 %v4734
    %v4802 = vpop.f32.mrf.mxu0
    %v4803 = vadd.f32 0.0, %v4802
    %v4804 = vpop.f32.mrf.mxu0
    %4805 = vdwg.mxu0
    %v4807 = vrot.slane %v4803, 2
    %v4809 = vadd.f32 %v3985, %v4807
    %v4810 = vtanh.pop %v4809
    %v4811 = vxor.u32 %v4809, 2147483648
    %v4812 = vmul.f32 %v4811, 1.442695
    %v4813 = vpow.pop %v4812
    %v4814 = vadd.f32 %v4813, 1.0
    %v4815 = vrcp.pop %v4814
    %v4816 = vmul.f32 1.0, %v4815
    %v4817 = vsel %vm54, %v4810, %v4816
    %v4819 = vrot.slane %v4817, 6
    %4821 = vrot.lane.b32.xlu0 %v4819, 64
    %v4822 = vpop.permute.xlu0 %4821
    %v4824 = vrot.slane %v4822, 2
    %v4826 = vmul.f32 %v4817, %v4824
    %v4828 = vrot.slane %v4826, 6
    %4830 = vrot.lane.b32.xlu0 %v4828, 96
    %v4831 = vpop.permute.xlu0 %4830
    %v4833 = vrot.slane %v4729, 6
    %v4835 = vmul.f32 %v4817, %v4833
    %v4837 = vrot.slane %v4831, 2
    %v4839 = vadd.f32 %v4835, %v4837
    %v4840 = vtanh.pop %v4839
    %v4842 = vrot.slane %v4840, 6
    %v4844 = vmul.f32 %v4822, %v4842
    %4845 = vst [vmem:[#allocation2 + $0xe] sm:$0x3] %v4844
    %v4846 = vld [vmem:[#allocation2] sm:$0xff]
    %v4847 = vld [vmem:[#allocation2 + $0x8] sm:$0x3f]
    %v4848 = vld [vmem:[%s1 + $0x2] sm:$0xff]
    %v4849 = vld [vmem:[%s1 + $0xa] sm:$0x3f]
    %v4850 = vld [vmem:[%s6] sm:$0xff]
    %v4851 = vld [vmem:[%s6 + $0x8] sm:$0xff]
    %v4852 = vld [vmem:[%s6 + $0x10] sm:$0xff]
    %v4853 = vld [vmem:[%s6 + $0x18] sm:$0xff]
    %v4854 = vld [vmem:[%s6 + $0x20] sm:$0xff]
    %v4855 = vld [vmem:[%s6 + $0x28] sm:$0xff]
    %v4856 = vld [vmem:[%s6 + $0x30] sm:$0xff]
    %v4857 = vld [vmem:[%s6 + $0x38] sm:$0xff]
    %v4858 = vld [vmem:[%s6 + $0x40] sm:$0xff]
    %v4859 = vld [vmem:[%s6 + $0x48] sm:$0xff]
    %v4860 = vld [vmem:[%s6 + $0x50] sm:$0xff]
    %v4861 = vld [vmem:[%s6 + $0x58] sm:$0xff]
    %v4862 = vld [vmem:[%s6 + $0x60] sm:$0xff]
    %v4863 = vld [vmem:[%s6 + $0x68] sm:$0xff]
    %v4864 = vld [vmem:[%s6 + $0x70] sm:$0xff]
    %v4865 = vld [vmem:[%s6 + $0x78] sm:$0xff]
    %v4866 = vld [vmem:[%s7] sm:$0xff]
    %v4867 = vld [vmem:[%s7 + $0x8] sm:$0xff]
    %v4868 = vld [vmem:[%s7 + $0x10] sm:$0xff]
    %v4869 = vld [vmem:[%s7 + $0x18] sm:$0xff]
    %v4871 = vsel %vm68, %v4848, 0
    %v4874 = vsel %vm68, %v4849, 0
    %4876 = vmatprep.subr.mxu0 0.0
    %4877 = vmatpush1.msra.mxu0 0.0
    %4878 = vmatprep.subr.mxu0 0.0
    %4879 = vmatpush1.msra.mxu0 0.0
    %4880 = vmatprep.subr.mxu0 0.0
    %4881 = vmatpush1.msra.mxu0 0.0
    %4882 = vmatprep.subr.mxu0 0.0
    %4883 = vmatpush1.msra.mxu0 0.0
    %4884 = vmatprep.subr.mxu0 0.0
    %4885 = vmatpush1.msra.mxu0 0.0
    %4886 = vmatprep.subr.mxu0 0.0
    %4887 = vmatpush1.msra.mxu0 0.0
    %4888 = vmatprep.subr.mxu0 0.0
    %4889 = vmatpush1.msra.mxu0 0.0
    %4890 = vmatprep.subr.mxu0 0.0
    %4891 = vmatpush1.msra.mxu0 0.0
    %4892 = vmatprep.subr.mxu0 0.0
    %4893 = vmatpush1.msra.mxu0 0.0
    %4894 = vmatprep.subr.mxu0 0.0
    %4895 = vmatpush1.msra.mxu0 0.0
    %4896 = vmatprep.subr.mxu0 0.0
    %4897 = vmatpush1.msra.mxu0 0.0
    %4898 = vmatprep.subr.mxu0 0.0
    %4899 = vmatpush1.msra.mxu0 0.0
    %4900 = vmatprep.subr.mxu0 0.0
    %4901 = vmatpush1.msra.mxu0 %v4869
    %4902 = vmatprep.subr.mxu0 0.0
    %4903 = vmatpush1.msra.mxu0 %v4868
    %4904 = vmatprep.subr.mxu0 0.0
    %4905 = vmatpush1.msra.mxu0 %v4867
    %4906 = vmatprep.subr.mxu0 0.0
    %4907 = vmatpush1.msra.mxu0 %v4866
    %4908 = vmatprep.subr.mxu0 0.0
    %4909 = vmatpush2.msra.mxu0 0.0
    %4910 = vmatprep.subr.mxu0 0.0
    %4911 = vmatpush2.msra.mxu0 0.0
    %4912 = vmatprep.subr.mxu0 0.0
    %4913 = vmatpush2.msra.mxu0 0.0
    %4914 = vmatprep.subr.mxu0 0.0
    %4915 = vmatpush2.msra.mxu0 0.0
    %4916 = vmatprep.subr.mxu0 0.0
    %4917 = vmatpush2.msra.mxu0 0.0
    %4918 = vmatprep.subr.mxu0 0.0
    %4919 = vmatpush2.msra.mxu0 0.0
    %4920 = vmatprep.subr.mxu0 0.0
    %4921 = vmatpush2.msra.mxu0 0.0
    %4922 = vmatprep.subr.mxu0 0.0
    %4923 = vmatpush2.msra.mxu0 0.0
    %4924 = vmatprep.subr.mxu0 0.0
    %4925 = vmatpush2.msra.mxu0 0.0
    %4926 = vmatprep.subr.mxu0 0.0
    %4927 = vmatpush2.msra.mxu0 0.0
    %4928 = vmatprep.subr.mxu0 0.0
    %4929 = vmatpush2.msra.mxu0 0.0
    %4930 = vmatprep.subr.mxu0 0.0
    %4931 = vmatpush2.msra.mxu0 0.0
    %4932 = vmatprep.subr.mxu0 0.0
    %4933 = vmatpush2.msra.mxu0 0.0
    %4934 = vmatprep.subr.mxu0 0.0
    %4935 = vmatpush2.msra.mxu0 0.0
    %4936 = vmatprep.subr.mxu0 0.0
    %4937 = vmatpush2.msra.mxu0 0.0
    %4938 = vmatprep.subr.mxu0 0.0
    %4939 = vmatpush2.msra.mxu0 0.0
    %4940 = vmatprep.mubr.f32.mxu0 0.0
    %4941 = vmatmul.mubr.f32.gmra.mxu0 %v4871
    %v4942 = vpop.f32.mrf.mxu0
    %v4943 = vadd.f32 0.0, %v4942
    %v4944 = vpop.f32.mrf.mxu0
    %4945 = vmatprep.mubr.f32.mxu0 0.0
    %4946 = vmatmul.mubr.f32.gmra.mxu0 %v4874
    %v4947 = vpop.f32.mrf.mxu0
    %v4948 = vadd.f32 0.0, %v4947
    %v4949 = vpop.f32.mrf.mxu0
    %4950 = vdwg.mxu0
    %4951 = vmatprep.subr.mxu0 0.0
    %4952 = vmatpush1.msra.mxu0 %v4865
    %4953 = vmatprep.subr.mxu0 0.0
    %4954 = vmatpush1.msra.mxu0 %v4864
    %4955 = vmatprep.subr.mxu0 0.0
    %4956 = vmatpush1.msra.mxu0 %v4863
    %4957 = vmatprep.subr.mxu0 0.0
    %4958 = vmatpush1.msra.mxu0 %v4862
    %4959 = vmatprep.subr.mxu0 0.0
    %4960 = vmatpush1.msra.mxu0 %v4861
    %4961 = vmatprep.subr.mxu0 0.0
    %4962 = vmatpush1.msra.mxu0 %v4860
    %4963 = vmatprep.subr.mxu0 0.0
    %4964 = vmatpush1.msra.mxu0 %v4859
    %4965 = vmatprep.subr.mxu0 0.0
    %4966 = vmatpush1.msra.mxu0 %v4858
    %4967 = vmatprep.subr.mxu0 0.0
    %4968 = vmatpush1.msra.mxu0 %v4857
    %4969 = vmatprep.subr.mxu0 0.0
    %4970 = vmatpush1.msra.mxu0 %v4856
    %4971 = vmatprep.subr.mxu0 0.0
    %4972 = vmatpush1.msra.mxu0 %v4855
    %4973 = vmatprep.subr.mxu0 0.0
    %4974 = vmatpush1.msra.mxu0 %v4854
    %4975 = vmatprep.subr.mxu0 0.0
    %4976 = vmatpush1.msra.mxu0 %v4853
    %4977 = vmatprep.subr.mxu0 0.0
    %4978 = vmatpush1.msra.mxu0 %v4852
    %4979 = vmatprep.subr.mxu0 0.0
    %4980 = vmatpush1.msra.mxu0 %v4851
    %4981 = vmatprep.subr.mxu0 0.0
    %4982 = vmatpush1.msra.mxu0 %v4850
    %4983 = vmatprep.subr.mxu0 0.0
    %4984 = vmatpush2.msra.mxu0 0.0
    %4985 = vmatprep.subr.mxu0 0.0
    %4986 = vmatpush2.msra.mxu0 0.0
    %4987 = vmatprep.subr.mxu0 0.0
    %4988 = vmatpush2.msra.mxu0 0.0
    %4989 = vmatprep.subr.mxu0 0.0
    %4990 = vmatpush2.msra.mxu0 0.0
    %4991 = vmatprep.subr.mxu0 0.0
    %4992 = vmatpush2.msra.mxu0 0.0
    %4993 = vmatprep.subr.mxu0 0.0
    %4994 = vmatpush2.msra.mxu0 0.0
    %4995 = vmatprep.subr.mxu0 0.0
    %4996 = vmatpush2.msra.mxu0 0.0
    %4997 = vmatprep.subr.mxu0 0.0
    %4998 = vmatpush2.msra.mxu0 0.0
    %4999 = vmatprep.subr.mxu0 0.0
    %5000 = vmatpush2.msra.mxu0 0.0
    %5001 = vmatprep.subr.mxu0 0.0
    %5002 = vmatpush2.msra.mxu0 0.0
    %5003 = vmatprep.subr.mxu0 0.0
    %5004 = vmatpush2.msra.mxu0 0.0
    %5005 = vmatprep.subr.mxu0 0.0
    %5006 = vmatpush2.msra.mxu0 0.0
    %5007 = vmatprep.subr.mxu0 0.0
    %5008 = vmatpush2.msra.mxu0 0.0
    %5009 = vmatprep.subr.mxu0 0.0
    %5010 = vmatpush2.msra.mxu0 0.0
    %5011 = vmatprep.subr.mxu0 0.0
    %5012 = vmatpush2.msra.mxu0 0.0
    %5013 = vmatprep.subr.mxu0 0.0
    %5014 = vmatpush2.msra.mxu0 0.0
    %5015 = vmatprep.mubr.f32.mxu0 0.0
    %5016 = vmatmul.mubr.f32.gmra.mxu0 %v4846
    %v5017 = vpop.f32.mrf.mxu0
    %v5018 = vadd.f32 %v4943, %v5017
    %v5019 = vpop.f32.mrf.mxu0
    %5020 = vmatprep.mubr.f32.mxu0 0.0
    %5021 = vmatmul.mubr.f32.gmra.mxu0 %v4847
    %v5022 = vpop.f32.mrf.mxu0
    %v5023 = vadd.f32 %v4948, %v5022
    %v5024 = vpop.f32.mrf.mxu0
    %5025 = vdwg.mxu0
    %v5026 = vld [vmem:[%s8] sm:$0x1]
    %v5028 = vlaneseq
    %v5029 = vshrl.u32 %v5028, 7
    %v5030 = vsub.s32 0, %v5029
    %v5031 = vrot.slane %v5026, %v5030
    %v5033 = vadd.f32 %v5018, %v5031
    %v5034 = vadd.f32 %v5023, %v5031
    %v5035 = vmax.f32 %v5033, 0.0
    %v5036 = vmax.f32 %v5034, 0.0
    %v5037 = vld [vmem:[%s9] sm:$0xff]
    %v5038 = vld [vmem:[%s9 + $0x8] sm:$0xff]
    %v5039 = vld [vmem:[%s9 + $0x10] sm:$0xff]
    %v5040 = vld [vmem:[%s9 + $0x18] sm:$0xff]
    %v5041 = vld [vmem:[%s9 + $0x20] sm:$0xff]
    %v5042 = vld [vmem:[%s9 + $0x28] sm:$0xff]
    %v5043 = vld [vmem:[%s9 + $0x30] sm:$0xff]
    %v5044 = vld [vmem:[%s9 + $0x38] sm:$0xff]
    %v5045 = vld [vmem:[%s10] sm:$0x1]
    %v5047 = vlaneseq
    %v5048 = vshrl.u32 %v5047, 7
    %v5049 = vsub.s32 0, %v5048
    %v5050 = vrot.slane %v5045, %v5049
    %vm5052 = vcmask 523264
    %v5054 = vsel %vm5052, %v5035, 0
    %v5057 = vsel %vm5052, %v5036, 0
    %5059 = vmatprep.subr.mxu0 0.0
    %5060 = vmatpush1.msra.mxu0 0.0
    %5061 = vmatprep.subr.mxu0 0.0
    %5062 = vmatpush1.msra.mxu0 0.0
    %5063 = vmatprep.subr.mxu0 0.0
    %5064 = vmatpush1.msra.mxu0 0.0
    %5065 = vmatprep.subr.mxu0 0.0
    %5066 = vmatpush1.msra.mxu0 0.0
    %5067 = vmatprep.subr.mxu0 0.0
    %5068 = vmatpush1.msra.mxu0 0.0
    %5069 = vmatprep.subr.mxu0 0.0
    %5070 = vmatpush1.msra.mxu0 0.0
    %5071 = vmatprep.subr.mxu0 0.0
    %5072 = vmatpush1.msra.mxu0 0.0
    %5073 = vmatprep.subr.mxu0 0.0
    %5074 = vmatpush1.msra.mxu0 0.0
    %5075 = vmatprep.subr.mxu0 0.0
    %5076 = vmatpush1.msra.mxu0 %v5044
    %5077 = vmatprep.subr.mxu0 0.0
    %5078 = vmatpush1.msra.mxu0 %v5043
    %5079 = vmatprep.subr.mxu0 0.0
    %5080 = vmatpush1.msra.mxu0 %v5042
    %5081 = vmatprep.subr.mxu0 0.0
    %5082 = vmatpush1.msra.mxu0 %v5041
    %5083 = vmatprep.subr.mxu0 0.0
    %5084 = vmatpush1.msra.mxu0 %v5040
    %5085 = vmatprep.subr.mxu0 0.0
    %5086 = vmatpush1.msra.mxu0 %v5039
    %5087 = vmatprep.subr.mxu0 0.0
    %5088 = vmatpush1.msra.mxu0 %v5038
    %5089 = vmatprep.subr.mxu0 0.0
    %5090 = vmatpush1.msra.mxu0 %v5037
    %5091 = vmatprep.subr.mxu0 0.0
    %5092 = vmatpush2.msra.mxu0 0.0
    %5093 = vmatprep.subr.mxu0 0.0
    %5094 = vmatpush2.msra.mxu0 0.0
    %5095 = vmatprep.subr.mxu0 0.0
    %5096 = vmatpush2.msra.mxu0 0.0
    %5097 = vmatprep.subr.mxu0 0.0
    %5098 = vmatpush2.msra.mxu0 0.0
    %5099 = vmatprep.subr.mxu0 0.0
    %5100 = vmatpush2.msra.mxu0 0.0
    %5101 = vmatprep.subr.mxu0 0.0
    %5102 = vmatpush2.msra.mxu0 0.0
    %5103 = vmatprep.subr.mxu0 0.0
    %5104 = vmatpush2.msra.mxu0 0.0
    %5105 = vmatprep.subr.mxu0 0.0
    %5106 = vmatpush2.msra.mxu0 0.0
    %5107 = vmatprep.subr.mxu0 0.0
    %5108 = vmatpush2.msra.mxu0 0.0
    %5109 = vmatprep.subr.mxu0 0.0
    %5110 = vmatpush2.msra.mxu0 0.0
    %5111 = vmatprep.subr.mxu0 0.0
    %5112 = vmatpush2.msra.mxu0 0.0
    %5113 = vmatprep.subr.mxu0 0.0
    %5114 = vmatpush2.msra.mxu0 0.0
    %5115 = vmatprep.subr.mxu0 0.0
    %5116 = vmatpush2.msra.mxu0 0.0
    %5117 = vmatprep.subr.mxu0 0.0
    %5118 = vmatpush2.msra.mxu0 0.0
    %5119 = vmatprep.subr.mxu0 0.0
    %5120 = vmatpush2.msra.mxu0 0.0
    %5121 = vmatprep.subr.mxu0 0.0
    %5122 = vmatpush2.msra.mxu0 0.0
    %5123 = vmatprep.mubr.f32.mxu0 0.0
    %5124 = vmatmul.mubr.f32.gmra.mxu0 %v5054
    %v5125 = vpop.f32.mrf.mxu0
    %v5126 = vadd.f32 %v5050, %v5125
    %v5127 = vpop.f32.mrf.mxu0
    %5128 = vmatprep.mubr.f32.mxu0 0.0
    %5129 = vmatmul.mubr.f32.gmra.mxu0 %v5057
    %v5130 = vpop.f32.mrf.mxu0
    %v5131 = vadd.f32 %v5050, %v5130
    %v5132 = vpop.f32.mrf.mxu0
    %5133 = vdwg.mxu0
    %v5134 = vxor.u32 %v5126, 2147483648
    %v5135 = vxor.u32 %v5131, 2147483648
    %v5136 = vmul.f32 %v5134, 1.442695
    %v5137 = vpow.pop %v5136
    %v5138 = vmul.f32 %v5135, 1.442695
    %v5139 = vpow.pop %v5138
    %v5140 = vadd.f32 %v5137, 1.0
    %v5141 = vadd.f32 %v5139, 1.0
    %v5142 = vrcp.pop %v5140
    %v5143 = vmul.f32 1.0, %v5142
    %v5144 = vrcp.pop %v5141
    %v5145 = vmul.f32 1.0, %v5144
    %5146 = vst.msk [vmem:[%s11] sm:$0xff] %vm68, %v5143
    %vm5147 = vcmask 259072
    %5148 = vst.msk [vmem:[%s11 + $0x8] sm:$0x3f] %vm5147, %v5145
    // Predicated region
    $region50: #{gnn4kt_forward.1} parent=1 // pred_check
      _
    $region51: #{gnn4kt_forward.1} parent=1 // pred_check_branch
      %5150 = sbr.rel (0) target = $region53
    $region52: #{gnn4kt_forward.1} parent=1 // pred_region
      _
    $region53: #{gnn4kt_forward.1} parent=1 // pred_fallthru
      _
    // Predicated region
    $region54: #{gnn4kt_forward.1} parent=1 // pred_check
      _
    $region55: #{gnn4kt_forward.1} parent=1 // pred_check_branch
      %5152 = sbr.rel (0) target = $region57
    $region56: #{gnn4kt_forward.1} parent=1 // pred_region
      _
    $region57: #{gnn4kt_forward.1} parent=1 // pred_fallthru
      _
    %5153 = vsyncpa [#allocation4], 1

</llo_original>
